<compile_context>
chip_gen: v7x
topology: tpu7x:2x2x1
jax: 0.10.0
libtpu: 0.0.40
codegen_flags: <defaults>
</compile_context>

<pallas_src>
import jax
import jax.numpy as jnp
import numpy as np
from jax import lax
from jax.experimental import pallas as pl
from jax.experimental.pallas import tpu as pltpu


def _vmem():
    return pl.BlockSpec(memory_space=pltpu.MemorySpace.VMEM)


def _smem():
    return pl.BlockSpec(memory_space=pltpu.MemorySpace.SMEM)


_DILS = (5, 2, 1)  # time dilations of the three decoder GTConvBlocks


# --------------------------------------------------------------------------
# Static bookkeeping: channel-shuffle permutations folded into weights/skips
# --------------------------------------------------------------------------
def _channel_orders():
    """orders[i][j] = logical channel stored at row j of block i's input
    (i=0..2 GT blocks, i=3 conv3 input); runs[i] = contiguous row ranges of
    the (skip-added) block-i input that carry straight through (the x2 half)."""
    orders = [list(range(16))]
    runs = []
    order = list(range(16))
    for _ in range(3):
        rows = sorted(order.index(8 + c) for c in range(8))
        blk_runs = []
        start = prev = rows[0]
        for r in rows[1:]:
            if r == prev + 1:
                prev = r
            else:
                blk_runs.append((start, prev + 1))
                start = prev = r
        blk_runs.append((start, prev + 1))
        runs.append(blk_runs)
        order = [2 * c for c in range(8)] + [(order[j] - 8) * 2 + 1 for j in rows]
        orders.append(order)
    return orders, runs


def _mask_keys(T):
    """All (dt, df) tap-validity masks the kernel needs (causal time pad +
    frequency zero pad), in a fixed order shared by init and the kernel."""
    keys = [(0, -1), (0, 1)]
    for dil in _DILS:
        for it in (1, 2):
            dt = it * dil
            if dt >= T:
                continue
            for df in (-1, 0, 1):
                if (dt, df) not in keys:
                    keys.append((dt, df))
    return keys


def _to_cm(a):
    """(B, C, T, F) -> channel-major (C, B*T*F)."""
    b, c, t, f = a.shape
    return jnp.transpose(a, (1, 0, 2, 3)).reshape(c, b * t * f)


# --------------------------------------------------------------------------
# The single fused decoder kernel
# --------------------------------------------------------------------------
def _make_decoder_kernel(B, T, F, runs):
    M = B * T * F
    R = B * T
    Ch, H, GH = 8, 16, 16
    keys = _mask_keys(T)
    MIDX = {k: i for i, k in enumerate(keys)}
    NM = len(keys)

    def kernel(data_ref, consts_ref, p48_ref, p16_ref, wconv_ref, alphas_ref,
               o_ref):
        cst = consts_ref[...]
        S = cst[0:R, :]          # (R, M) one-hot frame selection (TRA)
        masks = cst[R:R + NM, :]  # (NM, M) tap validity planes

        def rollL(v, shift):
            # result[:, m] = v[:, (m - shift) mod M]
            s = shift % M
            if s == 0:
                return v
            return jnp.concatenate([v[:, M - s:], v[:, :M - s]], axis=1)

        def tap(v, dt, df):
            # source element (t - dt, f + df); zero outside the valid grid
            out = rollL(v, dt * F - df)
            if (dt, df) != (0, 0):
                r0 = MIDX[(dt, df)]
                out = out * masks[r0:r0 + 1, :]
            return out

        # ------------------ 3 fused GTConvBlocks ------------------------
        pieces = [data_ref[0]]                       # decoder input (16, M)
        for i in range(3):
            dil = _DILS[i]
            A = pieces[0] if len(pieces) == 1 else jnp.concatenate(pieces, 0)
            Bm = A + data_ref[1 + i]                 # skip already row-permuted

            p48 = p48_ref[i]                         # (59, 48)
            p16 = p16_ref[i]                         # (24, 16)
            w1f = p48[0:16, :]                       # shuffle + BN folded
            wih = p48[16:24, :]
            whh = p48[24:40, :]
            bih = p48[40:41, :]
            bhh = p48[41:42, :]
            wfc = p48[42:58, 0:8]
            bfc = p48[58:59, 0:8]
            wdw = p16[0:16, 0:9]                     # BN-scaled depthwise taps
            b1 = p16[0:16, 9:10]
            bdw = p16[0:16, 10:11]
            b2 = p16[0:8, 11:12]
            w2 = p16[16:24, 0:16]                    # BN-scaled point_conv2
            a1 = alphas_ref[2 * i]
            a2 = alphas_ref[2 * i + 1]

            # SFE (unfold f-1,f,f+1) + point_conv1 + PReLU (one matmul)
            xs = jnp.concatenate([tap(Bm, 0, -1), Bm, tap(Bm, 0, 1)], axis=0)
            h = jnp.dot(w1f, xs, preferred_element_type=jnp.float32) + b1
            h = jnp.where(h >= 0.0, h, a1 * h)       # (16, M)

            # dilated causal depthwise (3,3) + PReLU
            acc = jnp.zeros((H, M), jnp.float32)
            for it in range(3):
                dt = it * dil
                if dt >= T:                          # tap fully in causal pad
                    continue
                for jf in range(3):
                    col = it * 3 + jf
                    acc = acc + wdw[:, col:col + 1] * tap(h, dt, jf - 1)
            hd = acc + bdw
            hd = jnp.where(hd >= 0.0, hd, a2 * hd)   # (16, M)

            # point_conv2 (no activation)
            h2 = jnp.dot(w2, hd, preferred_element_type=jnp.float32) + b2

            # TRA: frame power -> GRU -> sigmoid attention
            h2sq = h2 * h2
            zt = lax.dot_general(S, h2sq, (((1,), (1,)), ((), ())),
                                 preferred_element_type=jnp.float32) * (1.0 / F)
            xproj = jnp.dot(zt, wih,
                            preferred_element_type=jnp.float32) + bih  # (R,48)
            hstate = jnp.zeros((B, GH), jnp.float32)
            hs = []
            for ts in range(T):                      # T=8, unrolled
                gx = xproj[ts * B:(ts + 1) * B, :]
                gh = jnp.dot(hstate, whh,
                             preferred_element_type=jnp.float32) + bhh
                rz = jax.nn.sigmoid(gx[:, 0:2 * GH] + gh[:, 0:2 * GH])
                r, z = rz[:, 0:GH], rz[:, GH:2 * GH]
                n = jnp.tanh(gx[:, 2 * GH:] + r * gh[:, 2 * GH:])
                hstate = (1.0 - z) * n + z * hstate
                hs.append(hstate)
            hall = jnp.concatenate(hs, axis=0)       # (R, GH)
            at = jax.nn.sigmoid(
                jnp.dot(hall, wfc, preferred_element_type=jnp.float32) + bfc)
            at_full = lax.dot_general(at, S, (((0,), (0,)), ((), ())),
                                      preferred_element_type=jnp.float32)
            y = h2 * at_full                         # (8, M)

            # carry-through half; channel shuffle is folded into the next
            # consumer's weight columns (no permutation op here)
            pieces = [y] + [Bm[a:b, :] for (a, b) in runs[i]]

        # ------------------ ConvBlock 3 (deconv (1,5) stride (1,2)) -----
        A = jnp.concatenate(pieces, axis=0)
        B3 = A + data_ref[4]
        wc = wconv_ref[...]
        w3cat = wc[0:32, 0:48]
        b3cat = wc[0:32, 64:65]
        w4cat = wc[32:40, 0:64]
        b4cat = wc[32:40, 64:65]
        a3 = alphas_ref[6]
        cat3 = jnp.concatenate([tap(B3, 0, 1), B3, tap(B3, 0, -1)], axis=0)
        eo = jnp.dot(w3cat, cat3, preferred_element_type=jnp.float32) + b3cat
        eo = jnp.where(eo >= 0.0, eo, a3 * eo)
        even1, odd1 = eo[0:16, :], eo[16:32, :]      # conv3 output phases

        # ------------------ ConvBlock 4 (tanh), phase-aware -------------
        # F=17 intermediate never materialized: conv4's f+-1 taps are read
        # directly from conv3's even/odd phases (+ phase-split skip).
        ze = even1 + data_ref[5]
        zo = (odd1 + data_ref[6]) * masks[MIDX[(0, 1)]:MIDX[(0, 1)] + 1, :]
        cat4 = jnp.concatenate([zo, ze, tap(zo, 0, -1), tap(ze, 0, 1)], axis=0)
        out8 = jnp.dot(w4cat, cat4, preferred_element_type=jnp.float32) + b4cat
        o_ref[...] = jnp.tanh(out8)                  # 4 phases x 2 channels

    return kernel


# --------------------------------------------------------------------------
# Host wrapper
# --------------------------------------------------------------------------
def decoder_forward(x, en_outs, params):
    B, C, T, F = x.shape                             # (2, 16, 8, 9)
    M = B * T * F
    orders, runs = _channel_orders()

    x_cm = _to_cm(x)
    sgts = []
    for i in range(3):                               # skips for GT blocks
        s = _to_cm(en_outs[4 - i])
        if orders[i] != list(range(16)):
            s = jnp.take(s, jnp.asarray(orders[i], dtype=jnp.int32), axis=0)
        sgts.append(s)
    s3 = jnp.take(_to_cm(en_outs[1]),
                  jnp.asarray(orders[3], dtype=jnp.int32), axis=0)
    s0 = en_outs[0]                                  # (B, 16, T, 17)
    s0e = _to_cm(s0[..., 0::2])                      # even freqs of conv4 skip
    s0o = _to_cm(jnp.pad(s0[..., 1::2],
                         ((0, 0), (0, 0), (0, 0), (0, 1))))  # odd freqs (pad)
    data = jnp.stack([x_cm, sgts[0], sgts[1], sgts[2], s3, s0e, s0o], axis=0)

    out8 = pl.pallas_call(
        _make_decoder_kernel(B, T, F, runs),
        out_shape=jax.ShapeDtypeStruct((8, M), jnp.float32),
        in_specs=[_vmem()] * 5 + [_smem()],
        out_specs=_vmem(),
    )(data, params["consts"], params["p48"], params["p16"], params["wconv"],
      params["alphas"])

    # final 4-phase frequency interleave (tiny, one XLA fusion)
    o = out8.reshape(4, 2, B, T, F)                  # [phase, ch, b, t, r]
    o = jnp.transpose(o, (2, 1, 3, 4, 0)).reshape(B, 2, T, 4 * F)
    return o[..., :4 * F - 3]                        # (B, 2, T, 33)


# --------------------------------------------------------------------------
# Deterministic parameter initialization (torch shapes noted in comments)
# --------------------------------------------------------------------------
def _bn_fold(rng, C):
    """Fold conv bias + BatchNorm2d running stats into (scale, bias)."""
    gamma = rng.uniform(0.8, 1.2, C)
    beta = 0.05 * rng.standard_normal(C)
    mean = 0.05 * rng.standard_normal(C)
    var = rng.uniform(0.8, 1.2, C)
    conv_b = 0.05 * rng.standard_normal(C)
    scale = gamma / np.sqrt(var + 1e-5)
    bias = beta + scale * (conv_b - mean)
    return scale.astype(np.float32), bias.astype(np.float32)


def init_params(B=2, T=8, F=9):
    rng = np.random.default_rng(0)
    orders, _ = _channel_orders()
    M = B * T * F

    p48 = np.zeros((3, 59, 48), np.float32)
    p16 = np.zeros((3, 24, 16), np.float32)
    alphas = np.zeros((8,), np.float32)

    for i in range(3):
        order = orders[i]
        # point_conv1: ConvTranspose2d(24,16,1) weight (24,16,1,1); stored
        # as (out=16, in=24) with inputs in kw-major SFE order, then
        # scattered into 48 columns per the folded channel-shuffle `order`.
        w1 = (0.15 * rng.standard_normal((16, 24))).astype(np.float32)
        s1, b1 = _bn_fold(rng, 16)
        w1f = np.zeros((16, 48), np.float32)
        for kw in range(3):
            for j in range(16):
                c = order[j]
                if c < 8:
                    w1f[:, kw * 16 + j] = w1[:, kw * 8 + c]
        w1f *= s1[:, None]

        # depth_conv: ConvTranspose2d(16,16,(3,3),groups=16) weight (16,1,3,3)
        # stored spatially flipped (forward-conv taps), col = it*3 + jf.
        wdw = (0.15 * rng.standard_normal((16, 9))).astype(np.float32)
        sdw, bdw = _bn_fold(rng, 16)
        wdw *= sdw[:, None]

        # point_conv2: ConvTranspose2d(16,8,1) -> (out=8, in=16)
        w2 = (0.15 * rng.standard_normal((8, 16))).astype(np.float32)
        s2, b2 = _bn_fold(rng, 8)
        w2 *= s2[:, None]

        # TRA: GRU(8,16) w_ih (48,8)/w_hh (48,16)/biases (48,), gate order
        # (r,z,n), stored transposed; Linear(16,8) stored (16,8)/(8,).
        wih = (0.2 * rng.standard_normal((8, 48))).astype(np.float32)
        whh = (0.2 * rng.standard_normal((16, 48))).astype(np.float32)
        bih = (0.1 * rng.standard_normal(48)).astype(np.float32)
        bhh = (0.1 * rng.standard_normal(48)).astype(np.float32)
        wfc = (0.2 * rng.standard_normal((16, 8))).astype(np.float32)
        bfc = (0.1 * rng.standard_normal(8)).astype(np.float32)

        p48[i, 0:16] = w1f
        p48[i, 16:24] = wih
        p48[i, 24:40] = whh
        p48[i, 40] = bih
        p48[i, 41] = bhh
        p48[i, 42:58, 0:8] = wfc
        p48[i, 58, 0:8] = bfc

        p16[i, 0:16, 0:9] = wdw
        p16[i, 0:16, 9] = b1
        p16[i, 0:16, 10] = bdw
        p16[i, 0:8, 11] = b2
        p16[i, 16:24, 0:16] = w2

        alphas[2 * i] = 0.25
        alphas[2 * i + 1] = 0.25

    # conv3: ConvTranspose2d(16,16,(1,5),stride=(1,2),pad=(0,2),groups=2)+BN+PReLU
    wt3 = (0.15 * rng.standard_normal((16, 8, 5))).astype(np.float32)
    s3, b3 = _bn_fold(rng, 16)
    W3d = np.zeros((5, 16, 16), np.float32)
    for o in range(16):
        g = o // 8
        for ii in range(8):
            W3d[:, o, g * 8 + ii] = wt3[g * 8 + ii, o - g * 8, :]
    perm = np.asarray(orders[3])
    w3e = np.concatenate([W3d[0], W3d[2], W3d[4]], axis=1)       # even phase
    w3o = np.concatenate([W3d[1], W3d[3],
                          np.zeros((16, 16), np.float32)], axis=1)  # odd phase

    def _perm_cols(w):
        out = w.copy()
        for blk in range(3):
            out[:, blk * 16:(blk + 1) * 16] = \
                w[:, blk * 16:(blk + 1) * 16][:, perm]
        return out

    w3cat = (np.concatenate([_perm_cols(w3e), _perm_cols(w3o)], axis=0)
             * np.tile(s3, 2)[:, None])                           # (32, 48)
    b3cat = np.tile(b3, 2)
    alphas[6] = 0.25

    # conv4: ConvTranspose2d(16,2,(1,5),stride=(1,2),pad=(0,2)) + BN + Tanh,
    # phase-aware weights acting on cat4 = [zo; ze; zo[f-1]; ze[f+1]].
    wt4 = (0.15 * rng.standard_normal((16, 2, 5))).astype(np.float32)
    s4, b4 = _bn_fold(rng, 2)
    W4d = [np.ascontiguousarray(wt4[:, :, k].T) for k in range(5)]  # (2,16)
    Z = np.zeros((2, 16), np.float32)
    w4cat = np.concatenate([
        np.concatenate([W4d[0], W4d[2], W4d[4], Z], axis=1),      # freq 4r
        np.concatenate([W4d[1], W4d[3], Z, Z], axis=1),           # freq 4r+1
        np.concatenate([W4d[2], W4d[4], Z, W4d[0]], axis=1),      # freq 4r+2
        np.concatenate([W4d[3], Z, Z, W4d[1]], axis=1),           # freq 4r+3
    ], axis=0) * np.tile(s4, 4)[:, None]                          # (8, 64)
    b4cat = np.tile(b4, 4)

    wconv = np.zeros((40, 65), np.float32)
    wconv[0:32, 0:48] = w3cat
    wconv[0:32, 64] = b3cat
    wconv[32:40, 0:64] = w4cat
    wconv[32:40, 64] = b4cat

    # constants: TRA frame-selection matrix S + tap-validity masks
    mvec = np.arange(M)
    f_idx = mvec % F
    t_idx = (mvec // F) % T
    frame = mvec // F
    R = B * T
    S = np.zeros((R, M), np.float32)
    for r in range(R):
        S[r] = (frame == ((r % B) * T + (r // B))).astype(np.float32)
    keys = _mask_keys(T)
    masks = np.zeros((len(keys), M), np.float32)
    for k, (dt, df) in enumerate(keys):
        ok = np.ones(M, bool)
        if dt > 0:
            ok &= t_idx >= dt
        if df == -1:
            ok &= f_idx >= 1
        elif df == 1:
            ok &= f_idx <= F - 2
        masks[k] = ok.astype(np.float32)
    consts = np.concatenate([S, masks], axis=0)

    return {
        "consts": jnp.asarray(consts),
        "p48": jnp.asarray(p48),
        "p16": jnp.asarray(p16),
        "wconv": jnp.asarray(wconv),
        "alphas": jnp.asarray(alphas),
    }


if __name__ == "__main__":
    B, T, F = 2, 8, 9
    params = init_params(B, T, F)

    key = jax.random.PRNGKey(0)
    ks = jax.random.split(key, 6)
    x = jax.random.normal(ks[0], (B, 16, T, F), jnp.float32)
    en_outs = [
        jax.random.normal(ks[1], (B, 16, T, 17), jnp.float32),  # encoder conv1
        jax.random.normal(ks[2], (B, 16, T, 9), jnp.float32),   # encoder conv2
        jax.random.normal(ks[3], (B, 16, T, 9), jnp.float32),   # encoder gt0
        jax.random.normal(ks[4], (B, 16, T, 9), jnp.float32),   # encoder gt1
        jax.random.normal(ks[5], (B, 16, T, 9), jnp.float32),   # encoder gt2
    ]

    fwd = jax.jit(decoder_forward)
    y = fwd(x, en_outs, params)
    jax.block_until_ready(y)

    assert y.shape == (B, 2, T, 33), y.shape
    assert bool(jnp.all(jnp.isfinite(y)))
    print("KERNEL_OK")
</pallas_src>

<mosaic_0001>
module attributes {stable_mosaic.version = 11 : i64} {
  func.func @kernel(%arg0: memref<7x16x144xf32, #tpu.memory_space<vmem>>, %arg1: memref<30x144xf32, #tpu.memory_space<vmem>>, %arg2: memref<3x59x48xf32, #tpu.memory_space<vmem>>, %arg3: memref<3x24x16xf32, #tpu.memory_space<vmem>>, %arg4: memref<40x65xf32, #tpu.memory_space<vmem>>, %arg5: memref<8xf32, #tpu.memory_space<smem>>, %arg6: memref<8x144xf32, #tpu.memory_space<vmem>>) attributes {dimension_semantics = [], scalar_prefetch = 0 : i64, scratch_operands = 0 : i64, tpu.core_type = #tpu.core_type<tc>} {
    %c0 = arith.constant 0 : index
    %c0_0 = arith.constant 0 : index
    %0 = vector.load %arg1[%c0, %c0_0] : memref<30x144xf32, #tpu.memory_space<vmem>>, vector<30x144xf32>
    %1 = vector.extract_strided_slice %0 {offsets = [0, 0], sizes = [16, 144], strides = [1, 1]} : vector<30x144xf32> to vector<16x144xf32>
    %2 = vector.extract_strided_slice %0 {offsets = [16, 0], sizes = [14, 144], strides = [1, 1]} : vector<30x144xf32> to vector<14x144xf32>
    %c0_1 = arith.constant 0 : index
    %c0_2 = arith.constant 0 : index
    %c0_3 = arith.constant 0 : index
    %3 = vector.load %arg0[%c0_1, %c0_2, %c0_3] : memref<7x16x144xf32, #tpu.memory_space<vmem>>, vector<1x16x144xf32>
    %4 = vector.shape_cast %3 : vector<1x16x144xf32> to vector<16x144xf32>
    %c1 = arith.constant 1 : index
    %c0_4 = arith.constant 0 : index
    %c0_5 = arith.constant 0 : index
    %5 = vector.load %arg0[%c1, %c0_4, %c0_5] : memref<7x16x144xf32, #tpu.memory_space<vmem>>, vector<1x16x144xf32>
    %6 = vector.shape_cast %5 : vector<1x16x144xf32> to vector<16x144xf32>
    %7 = arith.addf %4, %6 : vector<16x144xf32>
    %c0_6 = arith.constant 0 : index
    %c0_7 = arith.constant 0 : index
    %c0_8 = arith.constant 0 : index
    %8 = vector.load %arg2[%c0_6, %c0_7, %c0_8] : memref<3x59x48xf32, #tpu.memory_space<vmem>>, vector<1x59x48xf32>
    %9 = vector.shape_cast %8 : vector<1x59x48xf32> to vector<59x48xf32>
    %c0_9 = arith.constant 0 : index
    %c0_10 = arith.constant 0 : index
    %c0_11 = arith.constant 0 : index
    %10 = vector.load %arg3[%c0_9, %c0_10, %c0_11] : memref<3x24x16xf32, #tpu.memory_space<vmem>>, vector<1x24x16xf32>
    %11 = vector.shape_cast %10 : vector<1x24x16xf32> to vector<24x16xf32>
    %12 = vector.extract_strided_slice %9 {offsets = [0, 0], sizes = [16, 48], strides = [1, 1]} : vector<59x48xf32> to vector<16x48xf32>
    %13 = vector.extract_strided_slice %9 {offsets = [16, 0], sizes = [8, 48], strides = [1, 1]} : vector<59x48xf32> to vector<8x48xf32>
    %14 = vector.extract_strided_slice %9 {offsets = [24, 0], sizes = [16, 48], strides = [1, 1]} : vector<59x48xf32> to vector<16x48xf32>
    %15 = vector.extract_strided_slice %9 {offsets = [40, 0], sizes = [1, 48], strides = [1, 1]} : vector<59x48xf32> to vector<1x48xf32>
    %16 = vector.extract_strided_slice %9 {offsets = [41, 0], sizes = [1, 48], strides = [1, 1]} : vector<59x48xf32> to vector<1x48xf32>
    %17 = vector.extract_strided_slice %9 {offsets = [42, 0], sizes = [16, 8], strides = [1, 1]} : vector<59x48xf32> to vector<16x8xf32>
    %18 = vector.extract_strided_slice %9 {offsets = [58, 0], sizes = [1, 8], strides = [1, 1]} : vector<59x48xf32> to vector<1x8xf32>
    %19 = vector.extract_strided_slice %11 {offsets = [0, 0], sizes = [16, 9], strides = [1, 1]} : vector<24x16xf32> to vector<16x9xf32>
    %20 = vector.extract_strided_slice %11 {offsets = [0, 9], sizes = [16, 1], strides = [1, 1]} : vector<24x16xf32> to vector<16x1xf32>
    %21 = vector.extract_strided_slice %11 {offsets = [0, 10], sizes = [16, 1], strides = [1, 1]} : vector<24x16xf32> to vector<16x1xf32>
    %22 = vector.extract_strided_slice %11 {offsets = [0, 11], sizes = [8, 1], strides = [1, 1]} : vector<24x16xf32> to vector<8x1xf32>
    %23 = vector.extract_strided_slice %11 {offsets = [16, 0], sizes = [8, 16], strides = [1, 1]} : vector<24x16xf32> to vector<8x16xf32>
    %c0_12 = arith.constant 0 : index
    %24 = memref.load %arg5[%c0_12] : memref<8xf32, #tpu.memory_space<smem>>
    %c1_13 = arith.constant 1 : index
    %25 = memref.load %arg5[%c1_13] : memref<8xf32, #tpu.memory_space<smem>>
    %26 = vector.extract_strided_slice %7 {offsets = [0, 143], sizes = [16, 1], strides = [1, 1]} : vector<16x144xf32> to vector<16x1xf32>
    %27 = vector.extract_strided_slice %7 {offsets = [0, 0], sizes = [16, 143], strides = [1, 1]} : vector<16x144xf32> to vector<16x143xf32>
    %28 = tpu.concatenate %26, %27 in 1 : vector<16x1xf32>, vector<16x143xf32> -> vector<16x144xf32>
    %29 = vector.extract_strided_slice %2 {offsets = [0, 0], sizes = [1, 144], strides = [1, 1]} : vector<14x144xf32> to vector<1x144xf32>
    %30 = vector.broadcast %29 : vector<1x144xf32> to vector<16x144xf32>
    %31 = arith.mulf %28, %30 : vector<16x144xf32>
    %32 = vector.extract_strided_slice %7 {offsets = [0, 1], sizes = [16, 143], strides = [1, 1]} : vector<16x144xf32> to vector<16x143xf32>
    %33 = vector.extract_strided_slice %7 {offsets = [0, 0], sizes = [16, 1], strides = [1, 1]} : vector<16x144xf32> to vector<16x1xf32>
    %34 = tpu.concatenate %32, %33 in 1 : vector<16x143xf32>, vector<16x1xf32> -> vector<16x144xf32>
    %35 = vector.extract_strided_slice %2 {offsets = [1, 0], sizes = [1, 144], strides = [1, 1]} : vector<14x144xf32> to vector<1x144xf32>
    %36 = vector.broadcast %35 : vector<1x144xf32> to vector<16x144xf32>
    %37 = arith.mulf %34, %36 : vector<16x144xf32>
    %38 = tpu.concatenate %31, %7, %37 in 0 : vector<16x144xf32>, vector<16x144xf32>, vector<16x144xf32> -> vector<48x144xf32>
    %cst = arith.constant dense<0.000000e+00> : vector<16x144xf32>
    %39 = tpu.matmul %12, %38, %cst {dimension_numbers = #tpu.dot_dimension_numbers<[1], [0], [0], [1], [0, 0, 1, 1], [], []>} : vector<16x48xf32>, vector<48x144xf32>, vector<16x144xf32> -> vector<16x144xf32>
    %40 = vector.broadcast %20 : vector<16x1xf32> to vector<16x144xf32>
    %41 = arith.addf %39, %40 : vector<16x144xf32>
    %cst_14 = arith.constant 0.000000e+00 : f32
    %42 = vector.broadcast %cst_14 : f32 to vector<16x144xf32>
    %43 = arith.cmpf oge, %41, %42 : vector<16x144xf32>
    %44 = vector.broadcast %24 : f32 to vector<16x144xf32>
    %45 = arith.mulf %44, %41 : vector<16x144xf32>
    %46 = arith.select %43, %41, %45 : vector<16x144xi1>, vector<16x144xf32>
    %cst_15 = arith.constant 0.000000e+00 : f32
    %47 = vector.broadcast %cst_15 : f32 to vector<16x144xf32>
    %48 = vector.extract_strided_slice %19 {offsets = [0, 0], sizes = [16, 1], strides = [1, 1]} : vector<16x9xf32> to vector<16x1xf32>
    %49 = vector.extract_strided_slice %46 {offsets = [0, 143], sizes = [16, 1], strides = [1, 1]} : vector<16x144xf32> to vector<16x1xf32>
    %50 = vector.extract_strided_slice %46 {offsets = [0, 0], sizes = [16, 143], strides = [1, 1]} : vector<16x144xf32> to vector<16x143xf32>
    %51 = tpu.concatenate %49, %50 in 1 : vector<16x1xf32>, vector<16x143xf32> -> vector<16x144xf32>
    %52 = vector.extract_strided_slice %2 {offsets = [0, 0], sizes = [1, 144], strides = [1, 1]} : vector<14x144xf32> to vector<1x144xf32>
    %53 = vector.broadcast %52 : vector<1x144xf32> to vector<16x144xf32>
    %54 = arith.mulf %51, %53 : vector<16x144xf32>
    %55 = vector.broadcast %48 : vector<16x1xf32> to vector<16x144xf32>
    %56 = arith.mulf %55, %54 : vector<16x144xf32>
    %57 = arith.addf %47, %56 : vector<16x144xf32>
    %58 = vector.extract_strided_slice %19 {offsets = [0, 1], sizes = [16, 1], strides = [1, 1]} : vector<16x9xf32> to vector<16x1xf32>
    %59 = vector.broadcast %58 : vector<16x1xf32> to vector<16x144xf32>
    %60 = arith.mulf %59, %46 : vector<16x144xf32>
    %61 = arith.addf %57, %60 : vector<16x144xf32>
    %62 = vector.extract_strided_slice %19 {offsets = [0, 2], sizes = [16, 1], strides = [1, 1]} : vector<16x9xf32> to vector<16x1xf32>
    %63 = vector.extract_strided_slice %46 {offsets = [0, 1], sizes = [16, 143], strides = [1, 1]} : vector<16x144xf32> to vector<16x143xf32>
    %64 = vector.extract_strided_slice %46 {offsets = [0, 0], sizes = [16, 1], strides = [1, 1]} : vector<16x144xf32> to vector<16x1xf32>
    %65 = tpu.concatenate %63, %64 in 1 : vector<16x143xf32>, vector<16x1xf32> -> vector<16x144xf32>
    %66 = vector.extract_strided_slice %2 {offsets = [1, 0], sizes = [1, 144], strides = [1, 1]} : vector<14x144xf32> to vector<1x144xf32>
    %67 = vector.broadcast %66 : vector<1x144xf32> to vector<16x144xf32>
    %68 = arith.mulf %65, %67 : vector<16x144xf32>
    %69 = vector.broadcast %62 : vector<16x1xf32> to vector<16x144xf32>
    %70 = arith.mulf %69, %68 : vector<16x144xf32>
    %71 = arith.addf %61, %70 : vector<16x144xf32>
    %72 = vector.extract_strided_slice %19 {offsets = [0, 3], sizes = [16, 1], strides = [1, 1]} : vector<16x9xf32> to vector<16x1xf32>
    %73 = vector.extract_strided_slice %46 {offsets = [0, 98], sizes = [16, 46], strides = [1, 1]} : vector<16x144xf32> to vector<16x46xf32>
    %74 = vector.extract_strided_slice %46 {offsets = [0, 0], sizes = [16, 98], strides = [1, 1]} : vector<16x144xf32> to vector<16x98xf32>
    %75 = tpu.concatenate %73, %74 in 1 : vector<16x46xf32>, vector<16x98xf32> -> vector<16x144xf32>
    %76 = vector.extract_strided_slice %2 {offsets = [2, 0], sizes = [1, 144], strides = [1, 1]} : vector<14x144xf32> to vector<1x144xf32>
    %77 = vector.broadcast %76 : vector<1x144xf32> to vector<16x144xf32>
    %78 = arith.mulf %75, %77 : vector<16x144xf32>
    %79 = vector.broadcast %72 : vector<16x1xf32> to vector<16x144xf32>
    %80 = arith.mulf %79, %78 : vector<16x144xf32>
    %81 = arith.addf %71, %80 : vector<16x144xf32>
    %82 = vector.extract_strided_slice %19 {offsets = [0, 4], sizes = [16, 1], strides = [1, 1]} : vector<16x9xf32> to vector<16x1xf32>
    %83 = vector.extract_strided_slice %46 {offsets = [0, 99], sizes = [16, 45], strides = [1, 1]} : vector<16x144xf32> to vector<16x45xf32>
    %84 = vector.extract_strided_slice %46 {offsets = [0, 0], sizes = [16, 99], strides = [1, 1]} : vector<16x144xf32> to vector<16x99xf32>
    %85 = tpu.concatenate %83, %84 in 1 : vector<16x45xf32>, vector<16x99xf32> -> vector<16x144xf32>
    %86 = vector.extract_strided_slice %2 {offsets = [3, 0], sizes = [1, 144], strides = [1, 1]} : vector<14x144xf32> to vector<1x144xf32>
    %87 = vector.broadcast %86 : vector<1x144xf32> to vector<16x144xf32>
    %88 = arith.mulf %85, %87 : vector<16x144xf32>
    %89 = vector.broadcast %82 : vector<16x1xf32> to vector<16x144xf32>
    %90 = arith.mulf %89, %88 : vector<16x144xf32>
    %91 = arith.addf %81, %90 : vector<16x144xf32>
    %92 = vector.extract_strided_slice %19 {offsets = [0, 5], sizes = [16, 1], strides = [1, 1]} : vector<16x9xf32> to vector<16x1xf32>
    %93 = vector.extract_strided_slice %46 {offsets = [0, 100], sizes = [16, 44], strides = [1, 1]} : vector<16x144xf32> to vector<16x44xf32>
    %94 = vector.extract_strided_slice %46 {offsets = [0, 0], sizes = [16, 100], strides = [1, 1]} : vector<16x144xf32> to vector<16x100xf32>
    %95 = tpu.concatenate %93, %94 in 1 : vector<16x44xf32>, vector<16x100xf32> -> vector<16x144xf32>
    %96 = vector.extract_strided_slice %2 {offsets = [4, 0], sizes = [1, 144], strides = [1, 1]} : vector<14x144xf32> to vector<1x144xf32>
    %97 = vector.broadcast %96 : vector<1x144xf32> to vector<16x144xf32>
    %98 = arith.mulf %95, %97 : vector<16x144xf32>
    %99 = vector.broadcast %92 : vector<16x1xf32> to vector<16x144xf32>
    %100 = arith.mulf %99, %98 : vector<16x144xf32>
    %101 = arith.addf %91, %100 : vector<16x144xf32>
    %102 = vector.broadcast %21 : vector<16x1xf32> to vector<16x144xf32>
    %103 = arith.addf %101, %102 : vector<16x144xf32>
    %cst_16 = arith.constant 0.000000e+00 : f32
    %104 = vector.broadcast %cst_16 : f32 to vector<16x144xf32>
    %105 = arith.cmpf oge, %103, %104 : vector<16x144xf32>
    %106 = vector.broadcast %25 : f32 to vector<16x144xf32>
    %107 = arith.mulf %106, %103 : vector<16x144xf32>
    %108 = arith.select %105, %103, %107 : vector<16x144xi1>, vector<16x144xf32>
    %cst_17 = arith.constant dense<0.000000e+00> : vector<8x144xf32>
    %109 = tpu.matmul %23, %108, %cst_17 {dimension_numbers = #tpu.dot_dimension_numbers<[1], [0], [0], [1], [0, 0, 1, 1], [], []>} : vector<8x16xf32>, vector<16x144xf32>, vector<8x144xf32> -> vector<8x144xf32>
    %110 = vector.broadcast %22 : vector<8x1xf32> to vector<8x144xf32>
    %111 = arith.addf %109, %110 : vector<8x144xf32>
    %112 = arith.mulf %111, %111 : vector<8x144xf32>
    %cst_18 = arith.constant dense<0.000000e+00> : vector<16x8xf32>
    %113 = tpu.matmul %1, %112, %cst_18 {dimension_numbers = #tpu.dot_dimension_numbers<[1], [1], [0], [0], [0, 0, 1, 0], [], []>} : vector<16x144xf32>, vector<8x144xf32>, vector<16x8xf32> -> vector<16x8xf32>
    %cst_19 = arith.constant 0.111111112 : f32
    %114 = vector.broadcast %cst_19 : f32 to vector<16x8xf32>
    %115 = arith.mulf %113, %114 : vector<16x8xf32>
    %cst_20 = arith.constant dense<0.000000e+00> : vector<16x48xf32>
    %116 = tpu.matmul %115, %13, %cst_20 {dimension_numbers = #tpu.dot_dimension_numbers<[1], [0], [0], [1], [0, 0, 1, 1], [], []>} : vector<16x8xf32>, vector<8x48xf32>, vector<16x48xf32> -> vector<16x48xf32>
    %117 = vector.broadcast %15 : vector<1x48xf32> to vector<16x48xf32>
    %118 = arith.addf %116, %117 : vector<16x48xf32>
    %cst_21 = arith.constant 0.000000e+00 : f32
    %119 = vector.broadcast %cst_21 : f32 to vector<2x16xf32>
    %120 = vector.extract_strided_slice %118 {offsets = [0, 0], sizes = [2, 48], strides = [1, 1]} : vector<16x48xf32> to vector<2x48xf32>
    %cst_22 = arith.constant dense<0.000000e+00> : vector<2x48xf32>
    %121 = tpu.matmul %119, %14, %cst_22 {dimension_numbers = #tpu.dot_dimension_numbers<[1], [0], [0], [1], [0, 0, 1, 1], [], []>} : vector<2x16xf32>, vector<16x48xf32>, vector<2x48xf32> -> vector<2x48xf32>
    %122 = vector.broadcast %16 : vector<1x48xf32> to vector<2x48xf32>
    %123 = arith.addf %121, %122 : vector<2x48xf32>
    %124 = vector.extract_strided_slice %120 {offsets = [0, 0], sizes = [2, 32], strides = [1, 1]} : vector<2x48xf32> to vector<2x32xf32>
    %125 = vector.extract_strided_slice %123 {offsets = [0, 0], sizes = [2, 32], strides = [1, 1]} : vector<2x48xf32> to vector<2x32xf32>
    %126 = arith.addf %124, %125 : vector<2x32xf32>
    %127 = arith.negf %126 : vector<2x32xf32>
    %128 = math.exp %127 : vector<2x32xf32>
    %cst_23 = arith.constant 1.000000e+00 : f32
    %129 = vector.broadcast %cst_23 : f32 to vector<2x32xf32>
    %130 = arith.addf %129, %128 : vector<2x32xf32>
    %131 = arith.divf %129, %130 : vector<2x32xf32>
    %132 = vector.extract_strided_slice %131 {offsets = [0, 0], sizes = [2, 16], strides = [1, 1]} : vector<2x32xf32> to vector<2x16xf32>
    %133 = vector.extract_strided_slice %131 {offsets = [0, 16], sizes = [2, 16], strides = [1, 1]} : vector<2x32xf32> to vector<2x16xf32>
    %134 = vector.extract_strided_slice %120 {offsets = [0, 32], sizes = [2, 16], strides = [1, 1]} : vector<2x48xf32> to vector<2x16xf32>
    %135 = vector.extract_strided_slice %123 {offsets = [0, 32], sizes = [2, 16], strides = [1, 1]} : vector<2x48xf32> to vector<2x16xf32>
    %136 = arith.mulf %132, %135 : vector<2x16xf32>
    %137 = arith.addf %134, %136 : vector<2x16xf32>
    %138 = math.tanh %137 : vector<2x16xf32>
    %cst_24 = arith.constant 1.000000e+00 : f32
    %139 = vector.broadcast %cst_24 : f32 to vector<2x16xf32>
    %140 = arith.subf %139, %133 : vector<2x16xf32>
    %141 = arith.mulf %140, %138 : vector<2x16xf32>
    %142 = arith.mulf %133, %119 : vector<2x16xf32>
    %143 = arith.addf %141, %142 : vector<2x16xf32>
    %144 = vector.extract_strided_slice %118 {offsets = [2, 0], sizes = [2, 48], strides = [1, 1]} : vector<16x48xf32> to vector<2x48xf32>
    %cst_25 = arith.constant dense<0.000000e+00> : vector<2x48xf32>
    %145 = tpu.matmul %143, %14, %cst_25 {dimension_numbers = #tpu.dot_dimension_numbers<[1], [0], [0], [1], [0, 0, 1, 1], [], []>} : vector<2x16xf32>, vector<16x48xf32>, vector<2x48xf32> -> vector<2x48xf32>
    %146 = vector.broadcast %16 : vector<1x48xf32> to vector<2x48xf32>
    %147 = arith.addf %145, %146 : vector<2x48xf32>
    %148 = vector.extract_strided_slice %144 {offsets = [0, 0], sizes = [2, 32], strides = [1, 1]} : vector<2x48xf32> to vector<2x32xf32>
    %149 = vector.extract_strided_slice %147 {offsets = [0, 0], sizes = [2, 32], strides = [1, 1]} : vector<2x48xf32> to vector<2x32xf32>
    %150 = arith.addf %148, %149 : vector<2x32xf32>
    %151 = arith.negf %150 : vector<2x32xf32>
    %152 = math.exp %151 : vector<2x32xf32>
    %cst_26 = arith.constant 1.000000e+00 : f32
    %153 = vector.broadcast %cst_26 : f32 to vector<2x32xf32>
    %154 = arith.addf %153, %152 : vector<2x32xf32>
    %155 = arith.divf %153, %154 : vector<2x32xf32>
    %156 = vector.extract_strided_slice %155 {offsets = [0, 0], sizes = [2, 16], strides = [1, 1]} : vector<2x32xf32> to vector<2x16xf32>
    %157 = vector.extract_strided_slice %155 {offsets = [0, 16], sizes = [2, 16], strides = [1, 1]} : vector<2x32xf32> to vector<2x16xf32>
    %158 = vector.extract_strided_slice %144 {offsets = [0, 32], sizes = [2, 16], strides = [1, 1]} : vector<2x48xf32> to vector<2x16xf32>
    %159 = vector.extract_strided_slice %147 {offsets = [0, 32], sizes = [2, 16], strides = [1, 1]} : vector<2x48xf32> to vector<2x16xf32>
    %160 = arith.mulf %156, %159 : vector<2x16xf32>
    %161 = arith.addf %158, %160 : vector<2x16xf32>
    %162 = math.tanh %161 : vector<2x16xf32>
    %cst_27 = arith.constant 1.000000e+00 : f32
    %163 = vector.broadcast %cst_27 : f32 to vector<2x16xf32>
    %164 = arith.subf %163, %157 : vector<2x16xf32>
    %165 = arith.mulf %164, %162 : vector<2x16xf32>
    %166 = arith.mulf %157, %143 : vector<2x16xf32>
    %167 = arith.addf %165, %166 : vector<2x16xf32>
    %168 = vector.extract_strided_slice %118 {offsets = [4, 0], sizes = [2, 48], strides = [1, 1]} : vector<16x48xf32> to vector<2x48xf32>
    %cst_28 = arith.constant dense<0.000000e+00> : vector<2x48xf32>
    %169 = tpu.matmul %167, %14, %cst_28 {dimension_numbers = #tpu.dot_dimension_numbers<[1], [0], [0], [1], [0, 0, 1, 1], [], []>} : vector<2x16xf32>, vector<16x48xf32>, vector<2x48xf32> -> vector<2x48xf32>
    %170 = vector.broadcast %16 : vector<1x48xf32> to vector<2x48xf32>
    %171 = arith.addf %169, %170 : vector<2x48xf32>
    %172 = vector.extract_strided_slice %168 {offsets = [0, 0], sizes = [2, 32], strides = [1, 1]} : vector<2x48xf32> to vector<2x32xf32>
    %173 = vector.extract_strided_slice %171 {offsets = [0, 0], sizes = [2, 32], strides = [1, 1]} : vector<2x48xf32> to vector<2x32xf32>
    %174 = arith.addf %172, %173 : vector<2x32xf32>
    %175 = arith.negf %174 : vector<2x32xf32>
    %176 = math.exp %175 : vector<2x32xf32>
    %cst_29 = arith.constant 1.000000e+00 : f32
    %177 = vector.broadcast %cst_29 : f32 to vector<2x32xf32>
    %178 = arith.addf %177, %176 : vector<2x32xf32>
    %179 = arith.divf %177, %178 : vector<2x32xf32>
    %180 = vector.extract_strided_slice %179 {offsets = [0, 0], sizes = [2, 16], strides = [1, 1]} : vector<2x32xf32> to vector<2x16xf32>
    %181 = vector.extract_strided_slice %179 {offsets = [0, 16], sizes = [2, 16], strides = [1, 1]} : vector<2x32xf32> to vector<2x16xf32>
    %182 = vector.extract_strided_slice %168 {offsets = [0, 32], sizes = [2, 16], strides = [1, 1]} : vector<2x48xf32> to vector<2x16xf32>
    %183 = vector.extract_strided_slice %171 {offsets = [0, 32], sizes = [2, 16], strides = [1, 1]} : vector<2x48xf32> to vector<2x16xf32>
    %184 = arith.mulf %180, %183 : vector<2x16xf32>
    %185 = arith.addf %182, %184 : vector<2x16xf32>
    %186 = math.tanh %185 : vector<2x16xf32>
    %cst_30 = arith.constant 1.000000e+00 : f32
    %187 = vector.broadcast %cst_30 : f32 to vector<2x16xf32>
    %188 = arith.subf %187, %181 : vector<2x16xf32>
    %189 = arith.mulf %188, %186 : vector<2x16xf32>
    %190 = arith.mulf %181, %167 : vector<2x16xf32>
    %191 = arith.addf %189, %190 : vector<2x16xf32>
    %192 = vector.extract_strided_slice %118 {offsets = [6, 0], sizes = [2, 48], strides = [1, 1]} : vector<16x48xf32> to vector<2x48xf32>
    %cst_31 = arith.constant dense<0.000000e+00> : vector<2x48xf32>
    %193 = tpu.matmul %191, %14, %cst_31 {dimension_numbers = #tpu.dot_dimension_numbers<[1], [0], [0], [1], [0, 0, 1, 1], [], []>} : vector<2x16xf32>, vector<16x48xf32>, vector<2x48xf32> -> vector<2x48xf32>
    %194 = vector.broadcast %16 : vector<1x48xf32> to vector<2x48xf32>
    %195 = arith.addf %193, %194 : vector<2x48xf32>
    %196 = vector.extract_strided_slice %192 {offsets = [0, 0], sizes = [2, 32], strides = [1, 1]} : vector<2x48xf32> to vector<2x32xf32>
    %197 = vector.extract_strided_slice %195 {offsets = [0, 0], sizes = [2, 32], strides = [1, 1]} : vector<2x48xf32> to vector<2x32xf32>
    %198 = arith.addf %196, %197 : vector<2x32xf32>
    %199 = arith.negf %198 : vector<2x32xf32>
    %200 = math.exp %199 : vector<2x32xf32>
    %cst_32 = arith.constant 1.000000e+00 : f32
    %201 = vector.broadcast %cst_32 : f32 to vector<2x32xf32>
    %202 = arith.addf %201, %200 : vector<2x32xf32>
    %203 = arith.divf %201, %202 : vector<2x32xf32>
    %204 = vector.extract_strided_slice %203 {offsets = [0, 0], sizes = [2, 16], strides = [1, 1]} : vector<2x32xf32> to vector<2x16xf32>
    %205 = vector.extract_strided_slice %203 {offsets = [0, 16], sizes = [2, 16], strides = [1, 1]} : vector<2x32xf32> to vector<2x16xf32>
    %206 = vector.extract_strided_slice %192 {offsets = [0, 32], sizes = [2, 16], strides = [1, 1]} : vector<2x48xf32> to vector<2x16xf32>
    %207 = vector.extract_strided_slice %195 {offsets = [0, 32], sizes = [2, 16], strides = [1, 1]} : vector<2x48xf32> to vector<2x16xf32>
    %208 = arith.mulf %204, %207 : vector<2x16xf32>
    %209 = arith.addf %206, %208 : vector<2x16xf32>
    %210 = math.tanh %209 : vector<2x16xf32>
    %cst_33 = arith.constant 1.000000e+00 : f32
    %211 = vector.broadcast %cst_33 : f32 to vector<2x16xf32>
    %212 = arith.subf %211, %205 : vector<2x16xf32>
    %213 = arith.mulf %212, %210 : vector<2x16xf32>
    %214 = arith.mulf %205, %191 : vector<2x16xf32>
    %215 = arith.addf %213, %214 : vector<2x16xf32>
    %216 = vector.extract_strided_slice %118 {offsets = [8, 0], sizes = [2, 48], strides = [1, 1]} : vector<16x48xf32> to vector<2x48xf32>
    %cst_34 = arith.constant dense<0.000000e+00> : vector<2x48xf32>
    %217 = tpu.matmul %215, %14, %cst_34 {dimension_numbers = #tpu.dot_dimension_numbers<[1], [0], [0], [1], [0, 0, 1, 1], [], []>} : vector<2x16xf32>, vector<16x48xf32>, vector<2x48xf32> -> vector<2x48xf32>
    %218 = vector.broadcast %16 : vector<1x48xf32> to vector<2x48xf32>
    %219 = arith.addf %217, %218 : vector<2x48xf32>
    %220 = vector.extract_strided_slice %216 {offsets = [0, 0], sizes = [2, 32], strides = [1, 1]} : vector<2x48xf32> to vector<2x32xf32>
    %221 = vector.extract_strided_slice %219 {offsets = [0, 0], sizes = [2, 32], strides = [1, 1]} : vector<2x48xf32> to vector<2x32xf32>
    %222 = arith.addf %220, %221 : vector<2x32xf32>
    %223 = arith.negf %222 : vector<2x32xf32>
    %224 = math.exp %223 : vector<2x32xf32>
    %cst_35 = arith.constant 1.000000e+00 : f32
    %225 = vector.broadcast %cst_35 : f32 to vector<2x32xf32>
    %226 = arith.addf %225, %224 : vector<2x32xf32>
    %227 = arith.divf %225, %226 : vector<2x32xf32>
    %228 = vector.extract_strided_slice %227 {offsets = [0, 0], sizes = [2, 16], strides = [1, 1]} : vector<2x32xf32> to vector<2x16xf32>
    %229 = vector.extract_strided_slice %227 {offsets = [0, 16], sizes = [2, 16], strides = [1, 1]} : vector<2x32xf32> to vector<2x16xf32>
    %230 = vector.extract_strided_slice %216 {offsets = [0, 32], sizes = [2, 16], strides = [1, 1]} : vector<2x48xf32> to vector<2x16xf32>
    %231 = vector.extract_strided_slice %219 {offsets = [0, 32], sizes = [2, 16], strides = [1, 1]} : vector<2x48xf32> to vector<2x16xf32>
    %232 = arith.mulf %228, %231 : vector<2x16xf32>
    %233 = arith.addf %230, %232 : vector<2x16xf32>
    %234 = math.tanh %233 : vector<2x16xf32>
    %cst_36 = arith.constant 1.000000e+00 : f32
    %235 = vector.broadcast %cst_36 : f32 to vector<2x16xf32>
    %236 = arith.subf %235, %229 : vector<2x16xf32>
    %237 = arith.mulf %236, %234 : vector<2x16xf32>
    %238 = arith.mulf %229, %215 : vector<2x16xf32>
    %239 = arith.addf %237, %238 : vector<2x16xf32>
    %240 = vector.extract_strided_slice %118 {offsets = [10, 0], sizes = [2, 48], strides = [1, 1]} : vector<16x48xf32> to vector<2x48xf32>
    %cst_37 = arith.constant dense<0.000000e+00> : vector<2x48xf32>
    %241 = tpu.matmul %239, %14, %cst_37 {dimension_numbers = #tpu.dot_dimension_numbers<[1], [0], [0], [1], [0, 0, 1, 1], [], []>} : vector<2x16xf32>, vector<16x48xf32>, vector<2x48xf32> -> vector<2x48xf32>
    %242 = vector.broadcast %16 : vector<1x48xf32> to vector<2x48xf32>
    %243 = arith.addf %241, %242 : vector<2x48xf32>
    %244 = vector.extract_strided_slice %240 {offsets = [0, 0], sizes = [2, 32], strides = [1, 1]} : vector<2x48xf32> to vector<2x32xf32>
    %245 = vector.extract_strided_slice %243 {offsets = [0, 0], sizes = [2, 32], strides = [1, 1]} : vector<2x48xf32> to vector<2x32xf32>
    %246 = arith.addf %244, %245 : vector<2x32xf32>
    %247 = arith.negf %246 : vector<2x32xf32>
    %248 = math.exp %247 : vector<2x32xf32>
    %cst_38 = arith.constant 1.000000e+00 : f32
    %249 = vector.broadcast %cst_38 : f32 to vector<2x32xf32>
    %250 = arith.addf %249, %248 : vector<2x32xf32>
    %251 = arith.divf %249, %250 : vector<2x32xf32>
    %252 = vector.extract_strided_slice %251 {offsets = [0, 0], sizes = [2, 16], strides = [1, 1]} : vector<2x32xf32> to vector<2x16xf32>
    %253 = vector.extract_strided_slice %251 {offsets = [0, 16], sizes = [2, 16], strides = [1, 1]} : vector<2x32xf32> to vector<2x16xf32>
    %254 = vector.extract_strided_slice %240 {offsets = [0, 32], sizes = [2, 16], strides = [1, 1]} : vector<2x48xf32> to vector<2x16xf32>
    %255 = vector.extract_strided_slice %243 {offsets = [0, 32], sizes = [2, 16], strides = [1, 1]} : vector<2x48xf32> to vector<2x16xf32>
    %256 = arith.mulf %252, %255 : vector<2x16xf32>
    %257 = arith.addf %254, %256 : vector<2x16xf32>
    %258 = math.tanh %257 : vector<2x16xf32>
    %cst_39 = arith.constant 1.000000e+00 : f32
    %259 = vector.broadcast %cst_39 : f32 to vector<2x16xf32>
    %260 = arith.subf %259, %253 : vector<2x16xf32>
    %261 = arith.mulf %260, %258 : vector<2x16xf32>
    %262 = arith.mulf %253, %239 : vector<2x16xf32>
    %263 = arith.addf %261, %262 : vector<2x16xf32>
    %264 = vector.extract_strided_slice %118 {offsets = [12, 0], sizes = [2, 48], strides = [1, 1]} : vector<16x48xf32> to vector<2x48xf32>
    %cst_40 = arith.constant dense<0.000000e+00> : vector<2x48xf32>
    %265 = tpu.matmul %263, %14, %cst_40 {dimension_numbers = #tpu.dot_dimension_numbers<[1], [0], [0], [1], [0, 0, 1, 1], [], []>} : vector<2x16xf32>, vector<16x48xf32>, vector<2x48xf32> -> vector<2x48xf32>
    %266 = vector.broadcast %16 : vector<1x48xf32> to vector<2x48xf32>
    %267 = arith.addf %265, %266 : vector<2x48xf32>
    %268 = vector.extract_strided_slice %264 {offsets = [0, 0], sizes = [2, 32], strides = [1, 1]} : vector<2x48xf32> to vector<2x32xf32>
    %269 = vector.extract_strided_slice %267 {offsets = [0, 0], sizes = [2, 32], strides = [1, 1]} : vector<2x48xf32> to vector<2x32xf32>
    %270 = arith.addf %268, %269 : vector<2x32xf32>
    %271 = arith.negf %270 : vector<2x32xf32>
    %272 = math.exp %271 : vector<2x32xf32>
    %cst_41 = arith.constant 1.000000e+00 : f32
    %273 = vector.broadcast %cst_41 : f32 to vector<2x32xf32>
    %274 = arith.addf %273, %272 : vector<2x32xf32>
    %275 = arith.divf %273, %274 : vector<2x32xf32>
    %276 = vector.extract_strided_slice %275 {offsets = [0, 0], sizes = [2, 16], strides = [1, 1]} : vector<2x32xf32> to vector<2x16xf32>
    %277 = vector.extract_strided_slice %275 {offsets = [0, 16], sizes = [2, 16], strides = [1, 1]} : vector<2x32xf32> to vector<2x16xf32>
    %278 = vector.extract_strided_slice %264 {offsets = [0, 32], sizes = [2, 16], strides = [1, 1]} : vector<2x48xf32> to vector<2x16xf32>
    %279 = vector.extract_strided_slice %267 {offsets = [0, 32], sizes = [2, 16], strides = [1, 1]} : vector<2x48xf32> to vector<2x16xf32>
    %280 = arith.mulf %276, %279 : vector<2x16xf32>
    %281 = arith.addf %278, %280 : vector<2x16xf32>
    %282 = math.tanh %281 : vector<2x16xf32>
    %cst_42 = arith.constant 1.000000e+00 : f32
    %283 = vector.broadcast %cst_42 : f32 to vector<2x16xf32>
    %284 = arith.subf %283, %277 : vector<2x16xf32>
    %285 = arith.mulf %284, %282 : vector<2x16xf32>
    %286 = arith.mulf %277, %263 : vector<2x16xf32>
    %287 = arith.addf %285, %286 : vector<2x16xf32>
    %288 = vector.extract_strided_slice %118 {offsets = [14, 0], sizes = [2, 48], strides = [1, 1]} : vector<16x48xf32> to vector<2x48xf32>
    %cst_43 = arith.constant dense<0.000000e+00> : vector<2x48xf32>
    %289 = tpu.matmul %287, %14, %cst_43 {dimension_numbers = #tpu.dot_dimension_numbers<[1], [0], [0], [1], [0, 0, 1, 1], [], []>} : vector<2x16xf32>, vector<16x48xf32>, vector<2x48xf32> -> vector<2x48xf32>
    %290 = vector.broadcast %16 : vector<1x48xf32> to vector<2x48xf32>
    %291 = arith.addf %289, %290 : vector<2x48xf32>
    %292 = vector.extract_strided_slice %288 {offsets = [0, 0], sizes = [2, 32], strides = [1, 1]} : vector<2x48xf32> to vector<2x32xf32>
    %293 = vector.extract_strided_slice %291 {offsets = [0, 0], sizes = [2, 32], strides = [1, 1]} : vector<2x48xf32> to vector<2x32xf32>
    %294 = arith.addf %292, %293 : vector<2x32xf32>
    %295 = arith.negf %294 : vector<2x32xf32>
    %296 = math.exp %295 : vector<2x32xf32>
    %cst_44 = arith.constant 1.000000e+00 : f32
    %297 = vector.broadcast %cst_44 : f32 to vector<2x32xf32>
    %298 = arith.addf %297, %296 : vector<2x32xf32>
    %299 = arith.divf %297, %298 : vector<2x32xf32>
    %300 = vector.extract_strided_slice %299 {offsets = [0, 0], sizes = [2, 16], strides = [1, 1]} : vector<2x32xf32> to vector<2x16xf32>
    %301 = vector.extract_strided_slice %299 {offsets = [0, 16], sizes = [2, 16], strides = [1, 1]} : vector<2x32xf32> to vector<2x16xf32>
    %302 = vector.extract_strided_slice %288 {offsets = [0, 32], sizes = [2, 16], strides = [1, 1]} : vector<2x48xf32> to vector<2x16xf32>
    %303 = vector.extract_strided_slice %291 {offsets = [0, 32], sizes = [2, 16], strides = [1, 1]} : vector<2x48xf32> to vector<2x16xf32>
    %304 = arith.mulf %300, %303 : vector<2x16xf32>
    %305 = arith.addf %302, %304 : vector<2x16xf32>
    %306 = math.tanh %305 : vector<2x16xf32>
    %cst_45 = arith.constant 1.000000e+00 : f32
    %307 = vector.broadcast %cst_45 : f32 to vector<2x16xf32>
    %308 = arith.subf %307, %301 : vector<2x16xf32>
    %309 = arith.mulf %308, %306 : vector<2x16xf32>
    %310 = arith.mulf %301, %287 : vector<2x16xf32>
    %311 = arith.addf %309, %310 : vector<2x16xf32>
    %312 = tpu.concatenate %143, %167, %191, %215, %239, %263, %287, %311 in 0 : vector<2x16xf32>, vector<2x16xf32>, vector<2x16xf32>, vector<2x16xf32>, vector<2x16xf32>, vector<2x16xf32>, vector<2x16xf32>, vector<2x16xf32> -> vector<16x16xf32>
    %cst_46 = arith.constant dense<0.000000e+00> : vector<16x8xf32>
    %313 = tpu.matmul %312, %17, %cst_46 {dimension_numbers = #tpu.dot_dimension_numbers<[1], [0], [0], [1], [0, 0, 1, 1], [], []>} : vector<16x16xf32>, vector<16x8xf32>, vector<16x8xf32> -> vector<16x8xf32>
    %314 = vector.broadcast %18 : vector<1x8xf32> to vector<16x8xf32>
    %315 = arith.addf %313, %314 : vector<16x8xf32>
    %316 = arith.negf %315 : vector<16x8xf32>
    %317 = math.exp %316 : vector<16x8xf32>
    %cst_47 = arith.constant 1.000000e+00 : f32
    %318 = vector.broadcast %cst_47 : f32 to vector<16x8xf32>
    %319 = arith.addf %318, %317 : vector<16x8xf32>
    %320 = arith.divf %318, %319 : vector<16x8xf32>
    %cst_48 = arith.constant dense<0.000000e+00> : vector<8x144xf32>
    %321 = tpu.matmul %320, %1, %cst_48 {dimension_numbers = #tpu.dot_dimension_numbers<[0], [0], [1], [1], [0, 1, 1, 1], [], []>} : vector<16x8xf32>, vector<16x144xf32>, vector<8x144xf32> -> vector<8x144xf32>
    %322 = arith.mulf %111, %321 : vector<8x144xf32>
    %323 = vector.extract_strided_slice %7 {offsets = [8, 0], sizes = [8, 144], strides = [1, 1]} : vector<16x144xf32> to vector<8x144xf32>
    %324 = tpu.concatenate %322, %323 in 0 : vector<8x144xf32>, vector<8x144xf32> -> vector<16x144xf32>
    %c2 = arith.constant 2 : index
    %c0_49 = arith.constant 0 : index
    %c0_50 = arith.constant 0 : index
    %325 = vector.load %arg0[%c2, %c0_49, %c0_50] : memref<7x16x144xf32, #tpu.memory_space<vmem>>, vector<1x16x144xf32>
    %326 = vector.shape_cast %325 : vector<1x16x144xf32> to vector<16x144xf32>
    %327 = arith.addf %324, %326 : vector<16x144xf32>
    %c1_51 = arith.constant 1 : index
    %c0_52 = arith.constant 0 : index
    %c0_53 = arith.constant 0 : index
    %328 = vector.load %arg2[%c1_51, %c0_52, %c0_53] : memref<3x59x48xf32, #tpu.memory_space<vmem>>, vector<1x59x48xf32>
    %329 = vector.shape_cast %328 : vector<1x59x48xf32> to vector<59x48xf32>
    %c1_54 = arith.constant 1 : index
    %c0_55 = arith.constant 0 : index
    %c0_56 = arith.constant 0 : index
    %330 = vector.load %arg3[%c1_54, %c0_55, %c0_56] : memref<3x24x16xf32, #tpu.memory_space<vmem>>, vector<1x24x16xf32>
    %331 = vector.shape_cast %330 : vector<1x24x16xf32> to vector<24x16xf32>
    %332 = vector.extract_strided_slice %329 {offsets = [0, 0], sizes = [16, 48], strides = [1, 1]} : vector<59x48xf32> to vector<16x48xf32>
    %333 = vector.extract_strided_slice %329 {offsets = [16, 0], sizes = [8, 48], strides = [1, 1]} : vector<59x48xf32> to vector<8x48xf32>
    %334 = vector.extract_strided_slice %329 {offsets = [24, 0], sizes = [16, 48], strides = [1, 1]} : vector<59x48xf32> to vector<16x48xf32>
    %335 = vector.extract_strided_slice %329 {offsets = [40, 0], sizes = [1, 48], strides = [1, 1]} : vector<59x48xf32> to vector<1x48xf32>
    %336 = vector.extract_strided_slice %329 {offsets = [41, 0], sizes = [1, 48], strides = [1, 1]} : vector<59x48xf32> to vector<1x48xf32>
    %337 = vector.extract_strided_slice %329 {offsets = [42, 0], sizes = [16, 8], strides = [1, 1]} : vector<59x48xf32> to vector<16x8xf32>
    %338 = vector.extract_strided_slice %329 {offsets = [58, 0], sizes = [1, 8], strides = [1, 1]} : vector<59x48xf32> to vector<1x8xf32>
    %339 = vector.extract_strided_slice %331 {offsets = [0, 0], sizes = [16, 9], strides = [1, 1]} : vector<24x16xf32> to vector<16x9xf32>
    %340 = vector.extract_strided_slice %331 {offsets = [0, 9], sizes = [16, 1], strides = [1, 1]} : vector<24x16xf32> to vector<16x1xf32>
    %341 = vector.extract_strided_slice %331 {offsets = [0, 10], sizes = [16, 1], strides = [1, 1]} : vector<24x16xf32> to vector<16x1xf32>
    %342 = vector.extract_strided_slice %331 {offsets = [0, 11], sizes = [8, 1], strides = [1, 1]} : vector<24x16xf32> to vector<8x1xf32>
    %343 = vector.extract_strided_slice %331 {offsets = [16, 0], sizes = [8, 16], strides = [1, 1]} : vector<24x16xf32> to vector<8x16xf32>
    %c2_57 = arith.constant 2 : index
    %344 = memref.load %arg5[%c2_57] : memref<8xf32, #tpu.memory_space<smem>>
    %c3 = arith.constant 3 : index
    %345 = memref.load %arg5[%c3] : memref<8xf32, #tpu.memory_space<smem>>
    %346 = vector.extract_strided_slice %327 {offsets = [0, 143], sizes = [16, 1], strides = [1, 1]} : vector<16x144xf32> to vector<16x1xf32>
    %347 = vector.extract_strided_slice %327 {offsets = [0, 0], sizes = [16, 143], strides = [1, 1]} : vector<16x144xf32> to vector<16x143xf32>
    %348 = tpu.concatenate %346, %347 in 1 : vector<16x1xf32>, vector<16x143xf32> -> vector<16x144xf32>
    %349 = vector.extract_strided_slice %2 {offsets = [0, 0], sizes = [1, 144], strides = [1, 1]} : vector<14x144xf32> to vector<1x144xf32>
    %350 = vector.broadcast %349 : vector<1x144xf32> to vector<16x144xf32>
    %351 = arith.mulf %348, %350 : vector<16x144xf32>
    %352 = vector.extract_strided_slice %327 {offsets = [0, 1], sizes = [16, 143], strides = [1, 1]} : vector<16x144xf32> to vector<16x143xf32>
    %353 = vector.extract_strided_slice %327 {offsets = [0, 0], sizes = [16, 1], strides = [1, 1]} : vector<16x144xf32> to vector<16x1xf32>
    %354 = tpu.concatenate %352, %353 in 1 : vector<16x143xf32>, vector<16x1xf32> -> vector<16x144xf32>
    %355 = vector.extract_strided_slice %2 {offsets = [1, 0], sizes = [1, 144], strides = [1, 1]} : vector<14x144xf32> to vector<1x144xf32>
    %356 = vector.broadcast %355 : vector<1x144xf32> to vector<16x144xf32>
    %357 = arith.mulf %354, %356 : vector<16x144xf32>
    %358 = tpu.concatenate %351, %327, %357 in 0 : vector<16x144xf32>, vector<16x144xf32>, vector<16x144xf32> -> vector<48x144xf32>
    %cst_58 = arith.constant dense<0.000000e+00> : vector<16x144xf32>
    %359 = tpu.matmul %332, %358, %cst_58 {dimension_numbers = #tpu.dot_dimension_numbers<[1], [0], [0], [1], [0, 0, 1, 1], [], []>} : vector<16x48xf32>, vector<48x144xf32>, vector<16x144xf32> -> vector<16x144xf32>
    %360 = vector.broadcast %340 : vector<16x1xf32> to vector<16x144xf32>
    %361 = arith.addf %359, %360 : vector<16x144xf32>
    %cst_59 = arith.constant 0.000000e+00 : f32
    %362 = vector.broadcast %cst_59 : f32 to vector<16x144xf32>
    %363 = arith.cmpf oge, %361, %362 : vector<16x144xf32>
    %364 = vector.broadcast %344 : f32 to vector<16x144xf32>
    %365 = arith.mulf %364, %361 : vector<16x144xf32>
    %366 = arith.select %363, %361, %365 : vector<16x144xi1>, vector<16x144xf32>
    %cst_60 = arith.constant 0.000000e+00 : f32
    %367 = vector.broadcast %cst_60 : f32 to vector<16x144xf32>
    %368 = vector.extract_strided_slice %339 {offsets = [0, 0], sizes = [16, 1], strides = [1, 1]} : vector<16x9xf32> to vector<16x1xf32>
    %369 = vector.extract_strided_slice %366 {offsets = [0, 143], sizes = [16, 1], strides = [1, 1]} : vector<16x144xf32> to vector<16x1xf32>
    %370 = vector.extract_strided_slice %366 {offsets = [0, 0], sizes = [16, 143], strides = [1, 1]} : vector<16x144xf32> to vector<16x143xf32>
    %371 = tpu.concatenate %369, %370 in 1 : vector<16x1xf32>, vector<16x143xf32> -> vector<16x144xf32>
    %372 = vector.extract_strided_slice %2 {offsets = [0, 0], sizes = [1, 144], strides = [1, 1]} : vector<14x144xf32> to vector<1x144xf32>
    %373 = vector.broadcast %372 : vector<1x144xf32> to vector<16x144xf32>
    %374 = arith.mulf %371, %373 : vector<16x144xf32>
    %375 = vector.broadcast %368 : vector<16x1xf32> to vector<16x144xf32>
    %376 = arith.mulf %375, %374 : vector<16x144xf32>
    %377 = arith.addf %367, %376 : vector<16x144xf32>
    %378 = vector.extract_strided_slice %339 {offsets = [0, 1], sizes = [16, 1], strides = [1, 1]} : vector<16x9xf32> to vector<16x1xf32>
    %379 = vector.broadcast %378 : vector<16x1xf32> to vector<16x144xf32>
    %380 = arith.mulf %379, %366 : vector<16x144xf32>
    %381 = arith.addf %377, %380 : vector<16x144xf32>
    %382 = vector.extract_strided_slice %339 {offsets = [0, 2], sizes = [16, 1], strides = [1, 1]} : vector<16x9xf32> to vector<16x1xf32>
    %383 = vector.extract_strided_slice %366 {offsets = [0, 1], sizes = [16, 143], strides = [1, 1]} : vector<16x144xf32> to vector<16x143xf32>
    %384 = vector.extract_strided_slice %366 {offsets = [0, 0], sizes = [16, 1], strides = [1, 1]} : vector<16x144xf32> to vector<16x1xf32>
    %385 = tpu.concatenate %383, %384 in 1 : vector<16x143xf32>, vector<16x1xf32> -> vector<16x144xf32>
    %386 = vector.extract_strided_slice %2 {offsets = [1, 0], sizes = [1, 144], strides = [1, 1]} : vector<14x144xf32> to vector<1x144xf32>
    %387 = vector.broadcast %386 : vector<1x144xf32> to vector<16x144xf32>
    %388 = arith.mulf %385, %387 : vector<16x144xf32>
    %389 = vector.broadcast %382 : vector<16x1xf32> to vector<16x144xf32>
    %390 = arith.mulf %389, %388 : vector<16x144xf32>
    %391 = arith.addf %381, %390 : vector<16x144xf32>
    %392 = vector.extract_strided_slice %339 {offsets = [0, 3], sizes = [16, 1], strides = [1, 1]} : vector<16x9xf32> to vector<16x1xf32>
    %393 = vector.extract_strided_slice %366 {offsets = [0, 125], sizes = [16, 19], strides = [1, 1]} : vector<16x144xf32> to vector<16x19xf32>
    %394 = vector.extract_strided_slice %366 {offsets = [0, 0], sizes = [16, 125], strides = [1, 1]} : vector<16x144xf32> to vector<16x125xf32>
    %395 = tpu.concatenate %393, %394 in 1 : vector<16x19xf32>, vector<16x125xf32> -> vector<16x144xf32>
    %396 = vector.extract_strided_slice %2 {offsets = [5, 0], sizes = [1, 144], strides = [1, 1]} : vector<14x144xf32> to vector<1x144xf32>
    %397 = vector.broadcast %396 : vector<1x144xf32> to vector<16x144xf32>
    %398 = arith.mulf %395, %397 : vector<16x144xf32>
    %399 = vector.broadcast %392 : vector<16x1xf32> to vector<16x144xf32>
    %400 = arith.mulf %399, %398 : vector<16x144xf32>
    %401 = arith.addf %391, %400 : vector<16x144xf32>
    %402 = vector.extract_strided_slice %339 {offsets = [0, 4], sizes = [16, 1], strides = [1, 1]} : vector<16x9xf32> to vector<16x1xf32>
    %403 = vector.extract_strided_slice %366 {offsets = [0, 126], sizes = [16, 18], strides = [1, 1]} : vector<16x144xf32> to vector<16x18xf32>
    %404 = vector.extract_strided_slice %366 {offsets = [0, 0], sizes = [16, 126], strides = [1, 1]} : vector<16x144xf32> to vector<16x126xf32>
    %405 = tpu.concatenate %403, %404 in 1 : vector<16x18xf32>, vector<16x126xf32> -> vector<16x144xf32>
    %406 = vector.extract_strided_slice %2 {offsets = [6, 0], sizes = [1, 144], strides = [1, 1]} : vector<14x144xf32> to vector<1x144xf32>
    %407 = vector.broadcast %406 : vector<1x144xf32> to vector<16x144xf32>
    %408 = arith.mulf %405, %407 : vector<16x144xf32>
    %409 = vector.broadcast %402 : vector<16x1xf32> to vector<16x144xf32>
    %410 = arith.mulf %409, %408 : vector<16x144xf32>
    %411 = arith.addf %401, %410 : vector<16x144xf32>
    %412 = vector.extract_strided_slice %339 {offsets = [0, 5], sizes = [16, 1], strides = [1, 1]} : vector<16x9xf32> to vector<16x1xf32>
    %413 = vector.extract_strided_slice %366 {offsets = [0, 127], sizes = [16, 17], strides = [1, 1]} : vector<16x144xf32> to vector<16x17xf32>
    %414 = vector.extract_strided_slice %366 {offsets = [0, 0], sizes = [16, 127], strides = [1, 1]} : vector<16x144xf32> to vector<16x127xf32>
    %415 = tpu.concatenate %413, %414 in 1 : vector<16x17xf32>, vector<16x127xf32> -> vector<16x144xf32>
    %416 = vector.extract_strided_slice %2 {offsets = [7, 0], sizes = [1, 144], strides = [1, 1]} : vector<14x144xf32> to vector<1x144xf32>
    %417 = vector.broadcast %416 : vector<1x144xf32> to vector<16x144xf32>
    %418 = arith.mulf %415, %417 : vector<16x144xf32>
    %419 = vector.broadcast %412 : vector<16x1xf32> to vector<16x144xf32>
    %420 = arith.mulf %419, %418 : vector<16x144xf32>
    %421 = arith.addf %411, %420 : vector<16x144xf32>
    %422 = vector.extract_strided_slice %339 {offsets = [0, 6], sizes = [16, 1], strides = [1, 1]} : vector<16x9xf32> to vector<16x1xf32>
    %423 = vector.extract_strided_slice %366 {offsets = [0, 107], sizes = [16, 37], strides = [1, 1]} : vector<16x144xf32> to vector<16x37xf32>
    %424 = vector.extract_strided_slice %366 {offsets = [0, 0], sizes = [16, 107], strides = [1, 1]} : vector<16x144xf32> to vector<16x107xf32>
    %425 = tpu.concatenate %423, %424 in 1 : vector<16x37xf32>, vector<16x107xf32> -> vector<16x144xf32>
    %426 = vector.extract_strided_slice %2 {offsets = [8, 0], sizes = [1, 144], strides = [1, 1]} : vector<14x144xf32> to vector<1x144xf32>
    %427 = vector.broadcast %426 : vector<1x144xf32> to vector<16x144xf32>
    %428 = arith.mulf %425, %427 : vector<16x144xf32>
    %429 = vector.broadcast %422 : vector<16x1xf32> to vector<16x144xf32>
    %430 = arith.mulf %429, %428 : vector<16x144xf32>
    %431 = arith.addf %421, %430 : vector<16x144xf32>
    %432 = vector.extract_strided_slice %339 {offsets = [0, 7], sizes = [16, 1], strides = [1, 1]} : vector<16x9xf32> to vector<16x1xf32>
    %433 = vector.extract_strided_slice %366 {offsets = [0, 108], sizes = [16, 36], strides = [1, 1]} : vector<16x144xf32> to vector<16x36xf32>
    %434 = vector.extract_strided_slice %366 {offsets = [0, 0], sizes = [16, 108], strides = [1, 1]} : vector<16x144xf32> to vector<16x108xf32>
    %435 = tpu.concatenate %433, %434 in 1 : vector<16x36xf32>, vector<16x108xf32> -> vector<16x144xf32>
    %436 = vector.extract_strided_slice %2 {offsets = [9, 0], sizes = [1, 144], strides = [1, 1]} : vector<14x144xf32> to vector<1x144xf32>
    %437 = vector.broadcast %436 : vector<1x144xf32> to vector<16x144xf32>
    %438 = arith.mulf %435, %437 : vector<16x144xf32>
    %439 = vector.broadcast %432 : vector<16x1xf32> to vector<16x144xf32>
    %440 = arith.mulf %439, %438 : vector<16x144xf32>
    %441 = arith.addf %431, %440 : vector<16x144xf32>
    %442 = vector.extract_strided_slice %339 {offsets = [0, 8], sizes = [16, 1], strides = [1, 1]} : vector<16x9xf32> to vector<16x1xf32>
    %443 = vector.extract_strided_slice %366 {offsets = [0, 109], sizes = [16, 35], strides = [1, 1]} : vector<16x144xf32> to vector<16x35xf32>
    %444 = vector.extract_strided_slice %366 {offsets = [0, 0], sizes = [16, 109], strides = [1, 1]} : vector<16x144xf32> to vector<16x109xf32>
    %445 = tpu.concatenate %443, %444 in 1 : vector<16x35xf32>, vector<16x109xf32> -> vector<16x144xf32>
    %446 = vector.extract_strided_slice %2 {offsets = [10, 0], sizes = [1, 144], strides = [1, 1]} : vector<14x144xf32> to vector<1x144xf32>
    %447 = vector.broadcast %446 : vector<1x144xf32> to vector<16x144xf32>
    %448 = arith.mulf %445, %447 : vector<16x144xf32>
    %449 = vector.broadcast %442 : vector<16x1xf32> to vector<16x144xf32>
    %450 = arith.mulf %449, %448 : vector<16x144xf32>
    %451 = arith.addf %441, %450 : vector<16x144xf32>
    %452 = vector.broadcast %341 : vector<16x1xf32> to vector<16x144xf32>
    %453 = arith.addf %451, %452 : vector<16x144xf32>
    %cst_61 = arith.constant 0.000000e+00 : f32
    %454 = vector.broadcast %cst_61 : f32 to vector<16x144xf32>
    %455 = arith.cmpf oge, %453, %454 : vector<16x144xf32>
    %456 = vector.broadcast %345 : f32 to vector<16x144xf32>
    %457 = arith.mulf %456, %453 : vector<16x144xf32>
    %458 = arith.select %455, %453, %457 : vector<16x144xi1>, vector<16x144xf32>
    %cst_62 = arith.constant dense<0.000000e+00> : vector<8x144xf32>
    %459 = tpu.matmul %343, %458, %cst_62 {dimension_numbers = #tpu.dot_dimension_numbers<[1], [0], [0], [1], [0, 0, 1, 1], [], []>} : vector<8x16xf32>, vector<16x144xf32>, vector<8x144xf32> -> vector<8x144xf32>
    %460 = vector.broadcast %342 : vector<8x1xf32> to vector<8x144xf32>
    %461 = arith.addf %459, %460 : vector<8x144xf32>
    %462 = arith.mulf %461, %461 : vector<8x144xf32>
    %cst_63 = arith.constant dense<0.000000e+00> : vector<16x8xf32>
    %463 = tpu.matmul %1, %462, %cst_63 {dimension_numbers = #tpu.dot_dimension_numbers<[1], [1], [0], [0], [0, 0, 1, 0], [], []>} : vector<16x144xf32>, vector<8x144xf32>, vector<16x8xf32> -> vector<16x8xf32>
    %cst_64 = arith.constant 0.111111112 : f32
    %464 = vector.broadcast %cst_64 : f32 to vector<16x8xf32>
    %465 = arith.mulf %463, %464 : vector<16x8xf32>
    %cst_65 = arith.constant dense<0.000000e+00> : vector<16x48xf32>
    %466 = tpu.matmul %465, %333, %cst_65 {dimension_numbers = #tpu.dot_dimension_numbers<[1], [0], [0], [1], [0, 0, 1, 1], [], []>} : vector<16x8xf32>, vector<8x48xf32>, vector<16x48xf32> -> vector<16x48xf32>
    %467 = vector.broadcast %335 : vector<1x48xf32> to vector<16x48xf32>
    %468 = arith.addf %466, %467 : vector<16x48xf32>
    %cst_66 = arith.constant 0.000000e+00 : f32
    %469 = vector.broadcast %cst_66 : f32 to vector<2x16xf32>
    %470 = vector.extract_strided_slice %468 {offsets = [0, 0], sizes = [2, 48], strides = [1, 1]} : vector<16x48xf32> to vector<2x48xf32>
    %cst_67 = arith.constant dense<0.000000e+00> : vector<2x48xf32>
    %471 = tpu.matmul %469, %334, %cst_67 {dimension_numbers = #tpu.dot_dimension_numbers<[1], [0], [0], [1], [0, 0, 1, 1], [], []>} : vector<2x16xf32>, vector<16x48xf32>, vector<2x48xf32> -> vector<2x48xf32>
    %472 = vector.broadcast %336 : vector<1x48xf32> to vector<2x48xf32>
    %473 = arith.addf %471, %472 : vector<2x48xf32>
    %474 = vector.extract_strided_slice %470 {offsets = [0, 0], sizes = [2, 32], strides = [1, 1]} : vector<2x48xf32> to vector<2x32xf32>
    %475 = vector.extract_strided_slice %473 {offsets = [0, 0], sizes = [2, 32], strides = [1, 1]} : vector<2x48xf32> to vector<2x32xf32>
    %476 = arith.addf %474, %475 : vector<2x32xf32>
    %477 = arith.negf %476 : vector<2x32xf32>
    %478 = math.exp %477 : vector<2x32xf32>
    %cst_68 = arith.constant 1.000000e+00 : f32
    %479 = vector.broadcast %cst_68 : f32 to vector<2x32xf32>
    %480 = arith.addf %479, %478 : vector<2x32xf32>
    %481 = arith.divf %479, %480 : vector<2x32xf32>
    %482 = vector.extract_strided_slice %481 {offsets = [0, 0], sizes = [2, 16], strides = [1, 1]} : vector<2x32xf32> to vector<2x16xf32>
    %483 = vector.extract_strided_slice %481 {offsets = [0, 16], sizes = [2, 16], strides = [1, 1]} : vector<2x32xf32> to vector<2x16xf32>
    %484 = vector.extract_strided_slice %470 {offsets = [0, 32], sizes = [2, 16], strides = [1, 1]} : vector<2x48xf32> to vector<2x16xf32>
    %485 = vector.extract_strided_slice %473 {offsets = [0, 32], sizes = [2, 16], strides = [1, 1]} : vector<2x48xf32> to vector<2x16xf32>
    %486 = arith.mulf %482, %485 : vector<2x16xf32>
    %487 = arith.addf %484, %486 : vector<2x16xf32>
    %488 = math.tanh %487 : vector<2x16xf32>
    %cst_69 = arith.constant 1.000000e+00 : f32
    %489 = vector.broadcast %cst_69 : f32 to vector<2x16xf32>
    %490 = arith.subf %489, %483 : vector<2x16xf32>
    %491 = arith.mulf %490, %488 : vector<2x16xf32>
    %492 = arith.mulf %483, %469 : vector<2x16xf32>
    %493 = arith.addf %491, %492 : vector<2x16xf32>
    %494 = vector.extract_strided_slice %468 {offsets = [2, 0], sizes = [2, 48], strides = [1, 1]} : vector<16x48xf32> to vector<2x48xf32>
    %cst_70 = arith.constant dense<0.000000e+00> : vector<2x48xf32>
    %495 = tpu.matmul %493, %334, %cst_70 {dimension_numbers = #tpu.dot_dimension_numbers<[1], [0], [0], [1], [0, 0, 1, 1], [], []>} : vector<2x16xf32>, vector<16x48xf32>, vector<2x48xf32> -> vector<2x48xf32>
    %496 = vector.broadcast %336 : vector<1x48xf32> to vector<2x48xf32>
    %497 = arith.addf %495, %496 : vector<2x48xf32>
    %498 = vector.extract_strided_slice %494 {offsets = [0, 0], sizes = [2, 32], strides = [1, 1]} : vector<2x48xf32> to vector<2x32xf32>
    %499 = vector.extract_strided_slice %497 {offsets = [0, 0], sizes = [2, 32], strides = [1, 1]} : vector<2x48xf32> to vector<2x32xf32>
    %500 = arith.addf %498, %499 : vector<2x32xf32>
    %501 = arith.negf %500 : vector<2x32xf32>
    %502 = math.exp %501 : vector<2x32xf32>
    %cst_71 = arith.constant 1.000000e+00 : f32
    %503 = vector.broadcast %cst_71 : f32 to vector<2x32xf32>
    %504 = arith.addf %503, %502 : vector<2x32xf32>
    %505 = arith.divf %503, %504 : vector<2x32xf32>
    %506 = vector.extract_strided_slice %505 {offsets = [0, 0], sizes = [2, 16], strides = [1, 1]} : vector<2x32xf32> to vector<2x16xf32>
    %507 = vector.extract_strided_slice %505 {offsets = [0, 16], sizes = [2, 16], strides = [1, 1]} : vector<2x32xf32> to vector<2x16xf32>
    %508 = vector.extract_strided_slice %494 {offsets = [0, 32], sizes = [2, 16], strides = [1, 1]} : vector<2x48xf32> to vector<2x16xf32>
    %509 = vector.extract_strided_slice %497 {offsets = [0, 32], sizes = [2, 16], strides = [1, 1]} : vector<2x48xf32> to vector<2x16xf32>
    %510 = arith.mulf %506, %509 : vector<2x16xf32>
    %511 = arith.addf %508, %510 : vector<2x16xf32>
    %512 = math.tanh %511 : vector<2x16xf32>
    %cst_72 = arith.constant 1.000000e+00 : f32
    %513 = vector.broadcast %cst_72 : f32 to vector<2x16xf32>
    %514 = arith.subf %513, %507 : vector<2x16xf32>
    %515 = arith.mulf %514, %512 : vector<2x16xf32>
    %516 = arith.mulf %507, %493 : vector<2x16xf32>
    %517 = arith.addf %515, %516 : vector<2x16xf32>
    %518 = vector.extract_strided_slice %468 {offsets = [4, 0], sizes = [2, 48], strides = [1, 1]} : vector<16x48xf32> to vector<2x48xf32>
    %cst_73 = arith.constant dense<0.000000e+00> : vector<2x48xf32>
    %519 = tpu.matmul %517, %334, %cst_73 {dimension_numbers = #tpu.dot_dimension_numbers<[1], [0], [0], [1], [0, 0, 1, 1], [], []>} : vector<2x16xf32>, vector<16x48xf32>, vector<2x48xf32> -> vector<2x48xf32>
    %520 = vector.broadcast %336 : vector<1x48xf32> to vector<2x48xf32>
    %521 = arith.addf %519, %520 : vector<2x48xf32>
    %522 = vector.extract_strided_slice %518 {offsets = [0, 0], sizes = [2, 32], strides = [1, 1]} : vector<2x48xf32> to vector<2x32xf32>
    %523 = vector.extract_strided_slice %521 {offsets = [0, 0], sizes = [2, 32], strides = [1, 1]} : vector<2x48xf32> to vector<2x32xf32>
    %524 = arith.addf %522, %523 : vector<2x32xf32>
    %525 = arith.negf %524 : vector<2x32xf32>
    %526 = math.exp %525 : vector<2x32xf32>
    %cst_74 = arith.constant 1.000000e+00 : f32
    %527 = vector.broadcast %cst_74 : f32 to vector<2x32xf32>
    %528 = arith.addf %527, %526 : vector<2x32xf32>
    %529 = arith.divf %527, %528 : vector<2x32xf32>
    %530 = vector.extract_strided_slice %529 {offsets = [0, 0], sizes = [2, 16], strides = [1, 1]} : vector<2x32xf32> to vector<2x16xf32>
    %531 = vector.extract_strided_slice %529 {offsets = [0, 16], sizes = [2, 16], strides = [1, 1]} : vector<2x32xf32> to vector<2x16xf32>
    %532 = vector.extract_strided_slice %518 {offsets = [0, 32], sizes = [2, 16], strides = [1, 1]} : vector<2x48xf32> to vector<2x16xf32>
    %533 = vector.extract_strided_slice %521 {offsets = [0, 32], sizes = [2, 16], strides = [1, 1]} : vector<2x48xf32> to vector<2x16xf32>
    %534 = arith.mulf %530, %533 : vector<2x16xf32>
    %535 = arith.addf %532, %534 : vector<2x16xf32>
    %536 = math.tanh %535 : vector<2x16xf32>
    %cst_75 = arith.constant 1.000000e+00 : f32
    %537 = vector.broadcast %cst_75 : f32 to vector<2x16xf32>
    %538 = arith.subf %537, %531 : vector<2x16xf32>
    %539 = arith.mulf %538, %536 : vector<2x16xf32>
    %540 = arith.mulf %531, %517 : vector<2x16xf32>
    %541 = arith.addf %539, %540 : vector<2x16xf32>
    %542 = vector.extract_strided_slice %468 {offsets = [6, 0], sizes = [2, 48], strides = [1, 1]} : vector<16x48xf32> to vector<2x48xf32>
    %cst_76 = arith.constant dense<0.000000e+00> : vector<2x48xf32>
    %543 = tpu.matmul %541, %334, %cst_76 {dimension_numbers = #tpu.dot_dimension_numbers<[1], [0], [0], [1], [0, 0, 1, 1], [], []>} : vector<2x16xf32>, vector<16x48xf32>, vector<2x48xf32> -> vector<2x48xf32>
    %544 = vector.broadcast %336 : vector<1x48xf32> to vector<2x48xf32>
    %545 = arith.addf %543, %544 : vector<2x48xf32>
    %546 = vector.extract_strided_slice %542 {offsets = [0, 0], sizes = [2, 32], strides = [1, 1]} : vector<2x48xf32> to vector<2x32xf32>
    %547 = vector.extract_strided_slice %545 {offsets = [0, 0], sizes = [2, 32], strides = [1, 1]} : vector<2x48xf32> to vector<2x32xf32>
    %548 = arith.addf %546, %547 : vector<2x32xf32>
    %549 = arith.negf %548 : vector<2x32xf32>
    %550 = math.exp %549 : vector<2x32xf32>
    %cst_77 = arith.constant 1.000000e+00 : f32
    %551 = vector.broadcast %cst_77 : f32 to vector<2x32xf32>
    %552 = arith.addf %551, %550 : vector<2x32xf32>
    %553 = arith.divf %551, %552 : vector<2x32xf32>
    %554 = vector.extract_strided_slice %553 {offsets = [0, 0], sizes = [2, 16], strides = [1, 1]} : vector<2x32xf32> to vector<2x16xf32>
    %555 = vector.extract_strided_slice %553 {offsets = [0, 16], sizes = [2, 16], strides = [1, 1]} : vector<2x32xf32> to vector<2x16xf32>
    %556 = vector.extract_strided_slice %542 {offsets = [0, 32], sizes = [2, 16], strides = [1, 1]} : vector<2x48xf32> to vector<2x16xf32>
    %557 = vector.extract_strided_slice %545 {offsets = [0, 32], sizes = [2, 16], strides = [1, 1]} : vector<2x48xf32> to vector<2x16xf32>
    %558 = arith.mulf %554, %557 : vector<2x16xf32>
    %559 = arith.addf %556, %558 : vector<2x16xf32>
    %560 = math.tanh %559 : vector<2x16xf32>
    %cst_78 = arith.constant 1.000000e+00 : f32
    %561 = vector.broadcast %cst_78 : f32 to vector<2x16xf32>
    %562 = arith.subf %561, %555 : vector<2x16xf32>
    %563 = arith.mulf %562, %560 : vector<2x16xf32>
    %564 = arith.mulf %555, %541 : vector<2x16xf32>
    %565 = arith.addf %563, %564 : vector<2x16xf32>
    %566 = vector.extract_strided_slice %468 {offsets = [8, 0], sizes = [2, 48], strides = [1, 1]} : vector<16x48xf32> to vector<2x48xf32>
    %cst_79 = arith.constant dense<0.000000e+00> : vector<2x48xf32>
    %567 = tpu.matmul %565, %334, %cst_79 {dimension_numbers = #tpu.dot_dimension_numbers<[1], [0], [0], [1], [0, 0, 1, 1], [], []>} : vector<2x16xf32>, vector<16x48xf32>, vector<2x48xf32> -> vector<2x48xf32>
    %568 = vector.broadcast %336 : vector<1x48xf32> to vector<2x48xf32>
    %569 = arith.addf %567, %568 : vector<2x48xf32>
    %570 = vector.extract_strided_slice %566 {offsets = [0, 0], sizes = [2, 32], strides = [1, 1]} : vector<2x48xf32> to vector<2x32xf32>
    %571 = vector.extract_strided_slice %569 {offsets = [0, 0], sizes = [2, 32], strides = [1, 1]} : vector<2x48xf32> to vector<2x32xf32>
    %572 = arith.addf %570, %571 : vector<2x32xf32>
    %573 = arith.negf %572 : vector<2x32xf32>
    %574 = math.exp %573 : vector<2x32xf32>
    %cst_80 = arith.constant 1.000000e+00 : f32
    %575 = vector.broadcast %cst_80 : f32 to vector<2x32xf32>
    %576 = arith.addf %575, %574 : vector<2x32xf32>
    %577 = arith.divf %575, %576 : vector<2x32xf32>
    %578 = vector.extract_strided_slice %577 {offsets = [0, 0], sizes = [2, 16], strides = [1, 1]} : vector<2x32xf32> to vector<2x16xf32>
    %579 = vector.extract_strided_slice %577 {offsets = [0, 16], sizes = [2, 16], strides = [1, 1]} : vector<2x32xf32> to vector<2x16xf32>
    %580 = vector.extract_strided_slice %566 {offsets = [0, 32], sizes = [2, 16], strides = [1, 1]} : vector<2x48xf32> to vector<2x16xf32>
    %581 = vector.extract_strided_slice %569 {offsets = [0, 32], sizes = [2, 16], strides = [1, 1]} : vector<2x48xf32> to vector<2x16xf32>
    %582 = arith.mulf %578, %581 : vector<2x16xf32>
    %583 = arith.addf %580, %582 : vector<2x16xf32>
    %584 = math.tanh %583 : vector<2x16xf32>
    %cst_81 = arith.constant 1.000000e+00 : f32
    %585 = vector.broadcast %cst_81 : f32 to vector<2x16xf32>
    %586 = arith.subf %585, %579 : vector<2x16xf32>
    %587 = arith.mulf %586, %584 : vector<2x16xf32>
    %588 = arith.mulf %579, %565 : vector<2x16xf32>
    %589 = arith.addf %587, %588 : vector<2x16xf32>
    %590 = vector.extract_strided_slice %468 {offsets = [10, 0], sizes = [2, 48], strides = [1, 1]} : vector<16x48xf32> to vector<2x48xf32>
    %cst_82 = arith.constant dense<0.000000e+00> : vector<2x48xf32>
    %591 = tpu.matmul %589, %334, %cst_82 {dimension_numbers = #tpu.dot_dimension_numbers<[1], [0], [0], [1], [0, 0, 1, 1], [], []>} : vector<2x16xf32>, vector<16x48xf32>, vector<2x48xf32> -> vector<2x48xf32>
    %592 = vector.broadcast %336 : vector<1x48xf32> to vector<2x48xf32>
    %593 = arith.addf %591, %592 : vector<2x48xf32>
    %594 = vector.extract_strided_slice %590 {offsets = [0, 0], sizes = [2, 32], strides = [1, 1]} : vector<2x48xf32> to vector<2x32xf32>
    %595 = vector.extract_strided_slice %593 {offsets = [0, 0], sizes = [2, 32], strides = [1, 1]} : vector<2x48xf32> to vector<2x32xf32>
    %596 = arith.addf %594, %595 : vector<2x32xf32>
    %597 = arith.negf %596 : vector<2x32xf32>
    %598 = math.exp %597 : vector<2x32xf32>
    %cst_83 = arith.constant 1.000000e+00 : f32
    %599 = vector.broadcast %cst_83 : f32 to vector<2x32xf32>
    %600 = arith.addf %599, %598 : vector<2x32xf32>
    %601 = arith.divf %599, %600 : vector<2x32xf32>
    %602 = vector.extract_strided_slice %601 {offsets = [0, 0], sizes = [2, 16], strides = [1, 1]} : vector<2x32xf32> to vector<2x16xf32>
    %603 = vector.extract_strided_slice %601 {offsets = [0, 16], sizes = [2, 16], strides = [1, 1]} : vector<2x32xf32> to vector<2x16xf32>
    %604 = vector.extract_strided_slice %590 {offsets = [0, 32], sizes = [2, 16], strides = [1, 1]} : vector<2x48xf32> to vector<2x16xf32>
    %605 = vector.extract_strided_slice %593 {offsets = [0, 32], sizes = [2, 16], strides = [1, 1]} : vector<2x48xf32> to vector<2x16xf32>
    %606 = arith.mulf %602, %605 : vector<2x16xf32>
    %607 = arith.addf %604, %606 : vector<2x16xf32>
    %608 = math.tanh %607 : vector<2x16xf32>
    %cst_84 = arith.constant 1.000000e+00 : f32
    %609 = vector.broadcast %cst_84 : f32 to vector<2x16xf32>
    %610 = arith.subf %609, %603 : vector<2x16xf32>
    %611 = arith.mulf %610, %608 : vector<2x16xf32>
    %612 = arith.mulf %603, %589 : vector<2x16xf32>
    %613 = arith.addf %611, %612 : vector<2x16xf32>
    %614 = vector.extract_strided_slice %468 {offsets = [12, 0], sizes = [2, 48], strides = [1, 1]} : vector<16x48xf32> to vector<2x48xf32>
    %cst_85 = arith.constant dense<0.000000e+00> : vector<2x48xf32>
    %615 = tpu.matmul %613, %334, %cst_85 {dimension_numbers = #tpu.dot_dimension_numbers<[1], [0], [0], [1], [0, 0, 1, 1], [], []>} : vector<2x16xf32>, vector<16x48xf32>, vector<2x48xf32> -> vector<2x48xf32>
    %616 = vector.broadcast %336 : vector<1x48xf32> to vector<2x48xf32>
    %617 = arith.addf %615, %616 : vector<2x48xf32>
    %618 = vector.extract_strided_slice %614 {offsets = [0, 0], sizes = [2, 32], strides = [1, 1]} : vector<2x48xf32> to vector<2x32xf32>
    %619 = vector.extract_strided_slice %617 {offsets = [0, 0], sizes = [2, 32], strides = [1, 1]} : vector<2x48xf32> to vector<2x32xf32>
    %620 = arith.addf %618, %619 : vector<2x32xf32>
    %621 = arith.negf %620 : vector<2x32xf32>
    %622 = math.exp %621 : vector<2x32xf32>
    %cst_86 = arith.constant 1.000000e+00 : f32
    %623 = vector.broadcast %cst_86 : f32 to vector<2x32xf32>
    %624 = arith.addf %623, %622 : vector<2x32xf32>
    %625 = arith.divf %623, %624 : vector<2x32xf32>
    %626 = vector.extract_strided_slice %625 {offsets = [0, 0], sizes = [2, 16], strides = [1, 1]} : vector<2x32xf32> to vector<2x16xf32>
    %627 = vector.extract_strided_slice %625 {offsets = [0, 16], sizes = [2, 16], strides = [1, 1]} : vector<2x32xf32> to vector<2x16xf32>
    %628 = vector.extract_strided_slice %614 {offsets = [0, 32], sizes = [2, 16], strides = [1, 1]} : vector<2x48xf32> to vector<2x16xf32>
    %629 = vector.extract_strided_slice %617 {offsets = [0, 32], sizes = [2, 16], strides = [1, 1]} : vector<2x48xf32> to vector<2x16xf32>
    %630 = arith.mulf %626, %629 : vector<2x16xf32>
    %631 = arith.addf %628, %630 : vector<2x16xf32>
    %632 = math.tanh %631 : vector<2x16xf32>
    %cst_87 = arith.constant 1.000000e+00 : f32
    %633 = vector.broadcast %cst_87 : f32 to vector<2x16xf32>
    %634 = arith.subf %633, %627 : vector<2x16xf32>
    %635 = arith.mulf %634, %632 : vector<2x16xf32>
    %636 = arith.mulf %627, %613 : vector<2x16xf32>
    %637 = arith.addf %635, %636 : vector<2x16xf32>
    %638 = vector.extract_strided_slice %468 {offsets = [14, 0], sizes = [2, 48], strides = [1, 1]} : vector<16x48xf32> to vector<2x48xf32>
    %cst_88 = arith.constant dense<0.000000e+00> : vector<2x48xf32>
    %639 = tpu.matmul %637, %334, %cst_88 {dimension_numbers = #tpu.dot_dimension_numbers<[1], [0], [0], [1], [0, 0, 1, 1], [], []>} : vector<2x16xf32>, vector<16x48xf32>, vector<2x48xf32> -> vector<2x48xf32>
    %640 = vector.broadcast %336 : vector<1x48xf32> to vector<2x48xf32>
    %641 = arith.addf %639, %640 : vector<2x48xf32>
    %642 = vector.extract_strided_slice %638 {offsets = [0, 0], sizes = [2, 32], strides = [1, 1]} : vector<2x48xf32> to vector<2x32xf32>
    %643 = vector.extract_strided_slice %641 {offsets = [0, 0], sizes = [2, 32], strides = [1, 1]} : vector<2x48xf32> to vector<2x32xf32>
    %644 = arith.addf %642, %643 : vector<2x32xf32>
    %645 = arith.negf %644 : vector<2x32xf32>
    %646 = math.exp %645 : vector<2x32xf32>
    %cst_89 = arith.constant 1.000000e+00 : f32
    %647 = vector.broadcast %cst_89 : f32 to vector<2x32xf32>
    %648 = arith.addf %647, %646 : vector<2x32xf32>
    %649 = arith.divf %647, %648 : vector<2x32xf32>
    %650 = vector.extract_strided_slice %649 {offsets = [0, 0], sizes = [2, 16], strides = [1, 1]} : vector<2x32xf32> to vector<2x16xf32>
    %651 = vector.extract_strided_slice %649 {offsets = [0, 16], sizes = [2, 16], strides = [1, 1]} : vector<2x32xf32> to vector<2x16xf32>
    %652 = vector.extract_strided_slice %638 {offsets = [0, 32], sizes = [2, 16], strides = [1, 1]} : vector<2x48xf32> to vector<2x16xf32>
    %653 = vector.extract_strided_slice %641 {offsets = [0, 32], sizes = [2, 16], strides = [1, 1]} : vector<2x48xf32> to vector<2x16xf32>
    %654 = arith.mulf %650, %653 : vector<2x16xf32>
    %655 = arith.addf %652, %654 : vector<2x16xf32>
    %656 = math.tanh %655 : vector<2x16xf32>
    %cst_90 = arith.constant 1.000000e+00 : f32
    %657 = vector.broadcast %cst_90 : f32 to vector<2x16xf32>
    %658 = arith.subf %657, %651 : vector<2x16xf32>
    %659 = arith.mulf %658, %656 : vector<2x16xf32>
    %660 = arith.mulf %651, %637 : vector<2x16xf32>
    %661 = arith.addf %659, %660 : vector<2x16xf32>
    %662 = tpu.concatenate %493, %517, %541, %565, %589, %613, %637, %661 in 0 : vector<2x16xf32>, vector<2x16xf32>, vector<2x16xf32>, vector<2x16xf32>, vector<2x16xf32>, vector<2x16xf32>, vector<2x16xf32>, vector<2x16xf32> -> vector<16x16xf32>
    %cst_91 = arith.constant dense<0.000000e+00> : vector<16x8xf32>
    %663 = tpu.matmul %662, %337, %cst_91 {dimension_numbers = #tpu.dot_dimension_numbers<[1], [0], [0], [1], [0, 0, 1, 1], [], []>} : vector<16x16xf32>, vector<16x8xf32>, vector<16x8xf32> -> vector<16x8xf32>
    %664 = vector.broadcast %338 : vector<1x8xf32> to vector<16x8xf32>
    %665 = arith.addf %663, %664 : vector<16x8xf32>
    %666 = arith.negf %665 : vector<16x8xf32>
    %667 = math.exp %666 : vector<16x8xf32>
    %cst_92 = arith.constant 1.000000e+00 : f32
    %668 = vector.broadcast %cst_92 : f32 to vector<16x8xf32>
    %669 = arith.addf %668, %667 : vector<16x8xf32>
    %670 = arith.divf %668, %669 : vector<16x8xf32>
    %cst_93 = arith.constant dense<0.000000e+00> : vector<8x144xf32>
    %671 = tpu.matmul %670, %1, %cst_93 {dimension_numbers = #tpu.dot_dimension_numbers<[0], [0], [1], [1], [0, 1, 1, 1], [], []>} : vector<16x8xf32>, vector<16x144xf32>, vector<8x144xf32> -> vector<8x144xf32>
    %672 = arith.mulf %461, %671 : vector<8x144xf32>
    %673 = vector.extract_strided_slice %327 {offsets = [4, 0], sizes = [4, 144], strides = [1, 1]} : vector<16x144xf32> to vector<4x144xf32>
    %674 = vector.extract_strided_slice %327 {offsets = [12, 0], sizes = [4, 144], strides = [1, 1]} : vector<16x144xf32> to vector<4x144xf32>
    %675 = tpu.concatenate %672, %673, %674 in 0 : vector<8x144xf32>, vector<4x144xf32>, vector<4x144xf32> -> vector<16x144xf32>
    %c3_94 = arith.constant 3 : index
    %c0_95 = arith.constant 0 : index
    %c0_96 = arith.constant 0 : index
    %676 = vector.load %arg0[%c3_94, %c0_95, %c0_96] : memref<7x16x144xf32, #tpu.memory_space<vmem>>, vector<1x16x144xf32>
    %677 = vector.shape_cast %676 : vector<1x16x144xf32> to vector<16x144xf32>
    %678 = arith.addf %675, %677 : vector<16x144xf32>
    %c2_97 = arith.constant 2 : index
    %c0_98 = arith.constant 0 : index
    %c0_99 = arith.constant 0 : index
    %679 = vector.load %arg2[%c2_97, %c0_98, %c0_99] : memref<3x59x48xf32, #tpu.memory_space<vmem>>, vector<1x59x48xf32>
    %680 = vector.shape_cast %679 : vector<1x59x48xf32> to vector<59x48xf32>
    %c2_100 = arith.constant 2 : index
    %c0_101 = arith.constant 0 : index
    %c0_102 = arith.constant 0 : index
    %681 = vector.load %arg3[%c2_100, %c0_101, %c0_102] : memref<3x24x16xf32, #tpu.memory_space<vmem>>, vector<1x24x16xf32>
    %682 = vector.shape_cast %681 : vector<1x24x16xf32> to vector<24x16xf32>
    %683 = vector.extract_strided_slice %680 {offsets = [0, 0], sizes = [16, 48], strides = [1, 1]} : vector<59x48xf32> to vector<16x48xf32>
    %684 = vector.extract_strided_slice %680 {offsets = [16, 0], sizes = [8, 48], strides = [1, 1]} : vector<59x48xf32> to vector<8x48xf32>
    %685 = vector.extract_strided_slice %680 {offsets = [24, 0], sizes = [16, 48], strides = [1, 1]} : vector<59x48xf32> to vector<16x48xf32>
    %686 = vector.extract_strided_slice %680 {offsets = [40, 0], sizes = [1, 48], strides = [1, 1]} : vector<59x48xf32> to vector<1x48xf32>
    %687 = vector.extract_strided_slice %680 {offsets = [41, 0], sizes = [1, 48], strides = [1, 1]} : vector<59x48xf32> to vector<1x48xf32>
    %688 = vector.extract_strided_slice %680 {offsets = [42, 0], sizes = [16, 8], strides = [1, 1]} : vector<59x48xf32> to vector<16x8xf32>
    %689 = vector.extract_strided_slice %680 {offsets = [58, 0], sizes = [1, 8], strides = [1, 1]} : vector<59x48xf32> to vector<1x8xf32>
    %690 = vector.extract_strided_slice %682 {offsets = [0, 0], sizes = [16, 9], strides = [1, 1]} : vector<24x16xf32> to vector<16x9xf32>
    %691 = vector.extract_strided_slice %682 {offsets = [0, 9], sizes = [16, 1], strides = [1, 1]} : vector<24x16xf32> to vector<16x1xf32>
    %692 = vector.extract_strided_slice %682 {offsets = [0, 10], sizes = [16, 1], strides = [1, 1]} : vector<24x16xf32> to vector<16x1xf32>
    %693 = vector.extract_strided_slice %682 {offsets = [0, 11], sizes = [8, 1], strides = [1, 1]} : vector<24x16xf32> to vector<8x1xf32>
    %694 = vector.extract_strided_slice %682 {offsets = [16, 0], sizes = [8, 16], strides = [1, 1]} : vector<24x16xf32> to vector<8x16xf32>
    %c4 = arith.constant 4 : index
    %695 = memref.load %arg5[%c4] : memref<8xf32, #tpu.memory_space<smem>>
    %c5 = arith.constant 5 : index
    %696 = memref.load %arg5[%c5] : memref<8xf32, #tpu.memory_space<smem>>
    %697 = vector.extract_strided_slice %678 {offsets = [0, 143], sizes = [16, 1], strides = [1, 1]} : vector<16x144xf32> to vector<16x1xf32>
    %698 = vector.extract_strided_slice %678 {offsets = [0, 0], sizes = [16, 143], strides = [1, 1]} : vector<16x144xf32> to vector<16x143xf32>
    %699 = tpu.concatenate %697, %698 in 1 : vector<16x1xf32>, vector<16x143xf32> -> vector<16x144xf32>
    %700 = vector.extract_strided_slice %2 {offsets = [0, 0], sizes = [1, 144], strides = [1, 1]} : vector<14x144xf32> to vector<1x144xf32>
    %701 = vector.broadcast %700 : vector<1x144xf32> to vector<16x144xf32>
    %702 = arith.mulf %699, %701 : vector<16x144xf32>
    %703 = vector.extract_strided_slice %678 {offsets = [0, 1], sizes = [16, 143], strides = [1, 1]} : vector<16x144xf32> to vector<16x143xf32>
    %704 = vector.extract_strided_slice %678 {offsets = [0, 0], sizes = [16, 1], strides = [1, 1]} : vector<16x144xf32> to vector<16x1xf32>
    %705 = tpu.concatenate %703, %704 in 1 : vector<16x143xf32>, vector<16x1xf32> -> vector<16x144xf32>
    %706 = vector.extract_strided_slice %2 {offsets = [1, 0], sizes = [1, 144], strides = [1, 1]} : vector<14x144xf32> to vector<1x144xf32>
    %707 = vector.broadcast %706 : vector<1x144xf32> to vector<16x144xf32>
    %708 = arith.mulf %705, %707 : vector<16x144xf32>
    %709 = tpu.concatenate %702, %678, %708 in 0 : vector<16x144xf32>, vector<16x144xf32>, vector<16x144xf32> -> vector<48x144xf32>
    %cst_103 = arith.constant dense<0.000000e+00> : vector<16x144xf32>
    %710 = tpu.matmul %683, %709, %cst_103 {dimension_numbers = #tpu.dot_dimension_numbers<[1], [0], [0], [1], [0, 0, 1, 1], [], []>} : vector<16x48xf32>, vector<48x144xf32>, vector<16x144xf32> -> vector<16x144xf32>
    %711 = vector.broadcast %691 : vector<16x1xf32> to vector<16x144xf32>
    %712 = arith.addf %710, %711 : vector<16x144xf32>
    %cst_104 = arith.constant 0.000000e+00 : f32
    %713 = vector.broadcast %cst_104 : f32 to vector<16x144xf32>
    %714 = arith.cmpf oge, %712, %713 : vector<16x144xf32>
    %715 = vector.broadcast %695 : f32 to vector<16x144xf32>
    %716 = arith.mulf %715, %712 : vector<16x144xf32>
    %717 = arith.select %714, %712, %716 : vector<16x144xi1>, vector<16x144xf32>
    %cst_105 = arith.constant 0.000000e+00 : f32
    %718 = vector.broadcast %cst_105 : f32 to vector<16x144xf32>
    %719 = vector.extract_strided_slice %690 {offsets = [0, 0], sizes = [16, 1], strides = [1, 1]} : vector<16x9xf32> to vector<16x1xf32>
    %720 = vector.extract_strided_slice %717 {offsets = [0, 143], sizes = [16, 1], strides = [1, 1]} : vector<16x144xf32> to vector<16x1xf32>
    %721 = vector.extract_strided_slice %717 {offsets = [0, 0], sizes = [16, 143], strides = [1, 1]} : vector<16x144xf32> to vector<16x143xf32>
    %722 = tpu.concatenate %720, %721 in 1 : vector<16x1xf32>, vector<16x143xf32> -> vector<16x144xf32>
    %723 = vector.extract_strided_slice %2 {offsets = [0, 0], sizes = [1, 144], strides = [1, 1]} : vector<14x144xf32> to vector<1x144xf32>
    %724 = vector.broadcast %723 : vector<1x144xf32> to vector<16x144xf32>
    %725 = arith.mulf %722, %724 : vector<16x144xf32>
    %726 = vector.broadcast %719 : vector<16x1xf32> to vector<16x144xf32>
    %727 = arith.mulf %726, %725 : vector<16x144xf32>
    %728 = arith.addf %718, %727 : vector<16x144xf32>
    %729 = vector.extract_strided_slice %690 {offsets = [0, 1], sizes = [16, 1], strides = [1, 1]} : vector<16x9xf32> to vector<16x1xf32>
    %730 = vector.broadcast %729 : vector<16x1xf32> to vector<16x144xf32>
    %731 = arith.mulf %730, %717 : vector<16x144xf32>
    %732 = arith.addf %728, %731 : vector<16x144xf32>
    %733 = vector.extract_strided_slice %690 {offsets = [0, 2], sizes = [16, 1], strides = [1, 1]} : vector<16x9xf32> to vector<16x1xf32>
    %734 = vector.extract_strided_slice %717 {offsets = [0, 1], sizes = [16, 143], strides = [1, 1]} : vector<16x144xf32> to vector<16x143xf32>
    %735 = vector.extract_strided_slice %717 {offsets = [0, 0], sizes = [16, 1], strides = [1, 1]} : vector<16x144xf32> to vector<16x1xf32>
    %736 = tpu.concatenate %734, %735 in 1 : vector<16x143xf32>, vector<16x1xf32> -> vector<16x144xf32>
    %737 = vector.extract_strided_slice %2 {offsets = [1, 0], sizes = [1, 144], strides = [1, 1]} : vector<14x144xf32> to vector<1x144xf32>
    %738 = vector.broadcast %737 : vector<1x144xf32> to vector<16x144xf32>
    %739 = arith.mulf %736, %738 : vector<16x144xf32>
    %740 = vector.broadcast %733 : vector<16x1xf32> to vector<16x144xf32>
    %741 = arith.mulf %740, %739 : vector<16x144xf32>
    %742 = arith.addf %732, %741 : vector<16x144xf32>
    %743 = vector.extract_strided_slice %690 {offsets = [0, 3], sizes = [16, 1], strides = [1, 1]} : vector<16x9xf32> to vector<16x1xf32>
    %744 = vector.extract_strided_slice %717 {offsets = [0, 134], sizes = [16, 10], strides = [1, 1]} : vector<16x144xf32> to vector<16x10xf32>
    %745 = vector.extract_strided_slice %717 {offsets = [0, 0], sizes = [16, 134], strides = [1, 1]} : vector<16x144xf32> to vector<16x134xf32>
    %746 = tpu.concatenate %744, %745 in 1 : vector<16x10xf32>, vector<16x134xf32> -> vector<16x144xf32>
    %747 = vector.extract_strided_slice %2 {offsets = [11, 0], sizes = [1, 144], strides = [1, 1]} : vector<14x144xf32> to vector<1x144xf32>
    %748 = vector.broadcast %747 : vector<1x144xf32> to vector<16x144xf32>
    %749 = arith.mulf %746, %748 : vector<16x144xf32>
    %750 = vector.broadcast %743 : vector<16x1xf32> to vector<16x144xf32>
    %751 = arith.mulf %750, %749 : vector<16x144xf32>
    %752 = arith.addf %742, %751 : vector<16x144xf32>
    %753 = vector.extract_strided_slice %690 {offsets = [0, 4], sizes = [16, 1], strides = [1, 1]} : vector<16x9xf32> to vector<16x1xf32>
    %754 = vector.extract_strided_slice %717 {offsets = [0, 135], sizes = [16, 9], strides = [1, 1]} : vector<16x144xf32> to vector<16x9xf32>
    %755 = vector.extract_strided_slice %717 {offsets = [0, 0], sizes = [16, 135], strides = [1, 1]} : vector<16x144xf32> to vector<16x135xf32>
    %756 = tpu.concatenate %754, %755 in 1 : vector<16x9xf32>, vector<16x135xf32> -> vector<16x144xf32>
    %757 = vector.extract_strided_slice %2 {offsets = [12, 0], sizes = [1, 144], strides = [1, 1]} : vector<14x144xf32> to vector<1x144xf32>
    %758 = vector.broadcast %757 : vector<1x144xf32> to vector<16x144xf32>
    %759 = arith.mulf %756, %758 : vector<16x144xf32>
    %760 = vector.broadcast %753 : vector<16x1xf32> to vector<16x144xf32>
    %761 = arith.mulf %760, %759 : vector<16x144xf32>
    %762 = arith.addf %752, %761 : vector<16x144xf32>
    %763 = vector.extract_strided_slice %690 {offsets = [0, 5], sizes = [16, 1], strides = [1, 1]} : vector<16x9xf32> to vector<16x1xf32>
    %764 = vector.extract_strided_slice %717 {offsets = [0, 136], sizes = [16, 8], strides = [1, 1]} : vector<16x144xf32> to vector<16x8xf32>
    %765 = vector.extract_strided_slice %717 {offsets = [0, 0], sizes = [16, 136], strides = [1, 1]} : vector<16x144xf32> to vector<16x136xf32>
    %766 = tpu.concatenate %764, %765 in 1 : vector<16x8xf32>, vector<16x136xf32> -> vector<16x144xf32>
    %767 = vector.extract_strided_slice %2 {offsets = [13, 0], sizes = [1, 144], strides = [1, 1]} : vector<14x144xf32> to vector<1x144xf32>
    %768 = vector.broadcast %767 : vector<1x144xf32> to vector<16x144xf32>
    %769 = arith.mulf %766, %768 : vector<16x144xf32>
    %770 = vector.broadcast %763 : vector<16x1xf32> to vector<16x144xf32>
    %771 = arith.mulf %770, %769 : vector<16x144xf32>
    %772 = arith.addf %762, %771 : vector<16x144xf32>
    %773 = vector.extract_strided_slice %690 {offsets = [0, 6], sizes = [16, 1], strides = [1, 1]} : vector<16x9xf32> to vector<16x1xf32>
    %774 = vector.extract_strided_slice %717 {offsets = [0, 125], sizes = [16, 19], strides = [1, 1]} : vector<16x144xf32> to vector<16x19xf32>
    %775 = vector.extract_strided_slice %717 {offsets = [0, 0], sizes = [16, 125], strides = [1, 1]} : vector<16x144xf32> to vector<16x125xf32>
    %776 = tpu.concatenate %774, %775 in 1 : vector<16x19xf32>, vector<16x125xf32> -> vector<16x144xf32>
    %777 = vector.extract_strided_slice %2 {offsets = [5, 0], sizes = [1, 144], strides = [1, 1]} : vector<14x144xf32> to vector<1x144xf32>
    %778 = vector.broadcast %777 : vector<1x144xf32> to vector<16x144xf32>
    %779 = arith.mulf %776, %778 : vector<16x144xf32>
    %780 = vector.broadcast %773 : vector<16x1xf32> to vector<16x144xf32>
    %781 = arith.mulf %780, %779 : vector<16x144xf32>
    %782 = arith.addf %772, %781 : vector<16x144xf32>
    %783 = vector.extract_strided_slice %690 {offsets = [0, 7], sizes = [16, 1], strides = [1, 1]} : vector<16x9xf32> to vector<16x1xf32>
    %784 = vector.extract_strided_slice %717 {offsets = [0, 126], sizes = [16, 18], strides = [1, 1]} : vector<16x144xf32> to vector<16x18xf32>
    %785 = vector.extract_strided_slice %717 {offsets = [0, 0], sizes = [16, 126], strides = [1, 1]} : vector<16x144xf32> to vector<16x126xf32>
    %786 = tpu.concatenate %784, %785 in 1 : vector<16x18xf32>, vector<16x126xf32> -> vector<16x144xf32>
    %787 = vector.extract_strided_slice %2 {offsets = [6, 0], sizes = [1, 144], strides = [1, 1]} : vector<14x144xf32> to vector<1x144xf32>
    %788 = vector.broadcast %787 : vector<1x144xf32> to vector<16x144xf32>
    %789 = arith.mulf %786, %788 : vector<16x144xf32>
    %790 = vector.broadcast %783 : vector<16x1xf32> to vector<16x144xf32>
    %791 = arith.mulf %790, %789 : vector<16x144xf32>
    %792 = arith.addf %782, %791 : vector<16x144xf32>
    %793 = vector.extract_strided_slice %690 {offsets = [0, 8], sizes = [16, 1], strides = [1, 1]} : vector<16x9xf32> to vector<16x1xf32>
    %794 = vector.extract_strided_slice %717 {offsets = [0, 127], sizes = [16, 17], strides = [1, 1]} : vector<16x144xf32> to vector<16x17xf32>
    %795 = vector.extract_strided_slice %717 {offsets = [0, 0], sizes = [16, 127], strides = [1, 1]} : vector<16x144xf32> to vector<16x127xf32>
    %796 = tpu.concatenate %794, %795 in 1 : vector<16x17xf32>, vector<16x127xf32> -> vector<16x144xf32>
    %797 = vector.extract_strided_slice %2 {offsets = [7, 0], sizes = [1, 144], strides = [1, 1]} : vector<14x144xf32> to vector<1x144xf32>
    %798 = vector.broadcast %797 : vector<1x144xf32> to vector<16x144xf32>
    %799 = arith.mulf %796, %798 : vector<16x144xf32>
    %800 = vector.broadcast %793 : vector<16x1xf32> to vector<16x144xf32>
    %801 = arith.mulf %800, %799 : vector<16x144xf32>
    %802 = arith.addf %792, %801 : vector<16x144xf32>
    %803 = vector.broadcast %692 : vector<16x1xf32> to vector<16x144xf32>
    %804 = arith.addf %802, %803 : vector<16x144xf32>
    %cst_106 = arith.constant 0.000000e+00 : f32
    %805 = vector.broadcast %cst_106 : f32 to vector<16x144xf32>
    %806 = arith.cmpf oge, %804, %805 : vector<16x144xf32>
    %807 = vector.broadcast %696 : f32 to vector<16x144xf32>
    %808 = arith.mulf %807, %804 : vector<16x144xf32>
    %809 = arith.select %806, %804, %808 : vector<16x144xi1>, vector<16x144xf32>
    %cst_107 = arith.constant dense<0.000000e+00> : vector<8x144xf32>
    %810 = tpu.matmul %694, %809, %cst_107 {dimension_numbers = #tpu.dot_dimension_numbers<[1], [0], [0], [1], [0, 0, 1, 1], [], []>} : vector<8x16xf32>, vector<16x144xf32>, vector<8x144xf32> -> vector<8x144xf32>
    %811 = vector.broadcast %693 : vector<8x1xf32> to vector<8x144xf32>
    %812 = arith.addf %810, %811 : vector<8x144xf32>
    %813 = arith.mulf %812, %812 : vector<8x144xf32>
    %cst_108 = arith.constant dense<0.000000e+00> : vector<16x8xf32>
    %814 = tpu.matmul %1, %813, %cst_108 {dimension_numbers = #tpu.dot_dimension_numbers<[1], [1], [0], [0], [0, 0, 1, 0], [], []>} : vector<16x144xf32>, vector<8x144xf32>, vector<16x8xf32> -> vector<16x8xf32>
    %cst_109 = arith.constant 0.111111112 : f32
    %815 = vector.broadcast %cst_109 : f32 to vector<16x8xf32>
    %816 = arith.mulf %814, %815 : vector<16x8xf32>
    %cst_110 = arith.constant dense<0.000000e+00> : vector<16x48xf32>
    %817 = tpu.matmul %816, %684, %cst_110 {dimension_numbers = #tpu.dot_dimension_numbers<[1], [0], [0], [1], [0, 0, 1, 1], [], []>} : vector<16x8xf32>, vector<8x48xf32>, vector<16x48xf32> -> vector<16x48xf32>
    %818 = vector.broadcast %686 : vector<1x48xf32> to vector<16x48xf32>
    %819 = arith.addf %817, %818 : vector<16x48xf32>
    %cst_111 = arith.constant 0.000000e+00 : f32
    %820 = vector.broadcast %cst_111 : f32 to vector<2x16xf32>
    %821 = vector.extract_strided_slice %819 {offsets = [0, 0], sizes = [2, 48], strides = [1, 1]} : vector<16x48xf32> to vector<2x48xf32>
    %cst_112 = arith.constant dense<0.000000e+00> : vector<2x48xf32>
    %822 = tpu.matmul %820, %685, %cst_112 {dimension_numbers = #tpu.dot_dimension_numbers<[1], [0], [0], [1], [0, 0, 1, 1], [], []>} : vector<2x16xf32>, vector<16x48xf32>, vector<2x48xf32> -> vector<2x48xf32>
    %823 = vector.broadcast %687 : vector<1x48xf32> to vector<2x48xf32>
    %824 = arith.addf %822, %823 : vector<2x48xf32>
    %825 = vector.extract_strided_slice %821 {offsets = [0, 0], sizes = [2, 32], strides = [1, 1]} : vector<2x48xf32> to vector<2x32xf32>
    %826 = vector.extract_strided_slice %824 {offsets = [0, 0], sizes = [2, 32], strides = [1, 1]} : vector<2x48xf32> to vector<2x32xf32>
    %827 = arith.addf %825, %826 : vector<2x32xf32>
    %828 = arith.negf %827 : vector<2x32xf32>
    %829 = math.exp %828 : vector<2x32xf32>
    %cst_113 = arith.constant 1.000000e+00 : f32
    %830 = vector.broadcast %cst_113 : f32 to vector<2x32xf32>
    %831 = arith.addf %830, %829 : vector<2x32xf32>
    %832 = arith.divf %830, %831 : vector<2x32xf32>
    %833 = vector.extract_strided_slice %832 {offsets = [0, 0], sizes = [2, 16], strides = [1, 1]} : vector<2x32xf32> to vector<2x16xf32>
    %834 = vector.extract_strided_slice %832 {offsets = [0, 16], sizes = [2, 16], strides = [1, 1]} : vector<2x32xf32> to vector<2x16xf32>
    %835 = vector.extract_strided_slice %821 {offsets = [0, 32], sizes = [2, 16], strides = [1, 1]} : vector<2x48xf32> to vector<2x16xf32>
    %836 = vector.extract_strided_slice %824 {offsets = [0, 32], sizes = [2, 16], strides = [1, 1]} : vector<2x48xf32> to vector<2x16xf32>
    %837 = arith.mulf %833, %836 : vector<2x16xf32>
    %838 = arith.addf %835, %837 : vector<2x16xf32>
    %839 = math.tanh %838 : vector<2x16xf32>
    %cst_114 = arith.constant 1.000000e+00 : f32
    %840 = vector.broadcast %cst_114 : f32 to vector<2x16xf32>
    %841 = arith.subf %840, %834 : vector<2x16xf32>
    %842 = arith.mulf %841, %839 : vector<2x16xf32>
    %843 = arith.mulf %834, %820 : vector<2x16xf32>
    %844 = arith.addf %842, %843 : vector<2x16xf32>
    %845 = vector.extract_strided_slice %819 {offsets = [2, 0], sizes = [2, 48], strides = [1, 1]} : vector<16x48xf32> to vector<2x48xf32>
    %cst_115 = arith.constant dense<0.000000e+00> : vector<2x48xf32>
    %846 = tpu.matmul %844, %685, %cst_115 {dimension_numbers = #tpu.dot_dimension_numbers<[1], [0], [0], [1], [0, 0, 1, 1], [], []>} : vector<2x16xf32>, vector<16x48xf32>, vector<2x48xf32> -> vector<2x48xf32>
    %847 = vector.broadcast %687 : vector<1x48xf32> to vector<2x48xf32>
    %848 = arith.addf %846, %847 : vector<2x48xf32>
    %849 = vector.extract_strided_slice %845 {offsets = [0, 0], sizes = [2, 32], strides = [1, 1]} : vector<2x48xf32> to vector<2x32xf32>
    %850 = vector.extract_strided_slice %848 {offsets = [0, 0], sizes = [2, 32], strides = [1, 1]} : vector<2x48xf32> to vector<2x32xf32>
    %851 = arith.addf %849, %850 : vector<2x32xf32>
    %852 = arith.negf %851 : vector<2x32xf32>
    %853 = math.exp %852 : vector<2x32xf32>
    %cst_116 = arith.constant 1.000000e+00 : f32
    %854 = vector.broadcast %cst_116 : f32 to vector<2x32xf32>
    %855 = arith.addf %854, %853 : vector<2x32xf32>
    %856 = arith.divf %854, %855 : vector<2x32xf32>
    %857 = vector.extract_strided_slice %856 {offsets = [0, 0], sizes = [2, 16], strides = [1, 1]} : vector<2x32xf32> to vector<2x16xf32>
    %858 = vector.extract_strided_slice %856 {offsets = [0, 16], sizes = [2, 16], strides = [1, 1]} : vector<2x32xf32> to vector<2x16xf32>
    %859 = vector.extract_strided_slice %845 {offsets = [0, 32], sizes = [2, 16], strides = [1, 1]} : vector<2x48xf32> to vector<2x16xf32>
    %860 = vector.extract_strided_slice %848 {offsets = [0, 32], sizes = [2, 16], strides = [1, 1]} : vector<2x48xf32> to vector<2x16xf32>
    %861 = arith.mulf %857, %860 : vector<2x16xf32>
    %862 = arith.addf %859, %861 : vector<2x16xf32>
    %863 = math.tanh %862 : vector<2x16xf32>
    %cst_117 = arith.constant 1.000000e+00 : f32
    %864 = vector.broadcast %cst_117 : f32 to vector<2x16xf32>
    %865 = arith.subf %864, %858 : vector<2x16xf32>
    %866 = arith.mulf %865, %863 : vector<2x16xf32>
    %867 = arith.mulf %858, %844 : vector<2x16xf32>
    %868 = arith.addf %866, %867 : vector<2x16xf32>
    %869 = vector.extract_strided_slice %819 {offsets = [4, 0], sizes = [2, 48], strides = [1, 1]} : vector<16x48xf32> to vector<2x48xf32>
    %cst_118 = arith.constant dense<0.000000e+00> : vector<2x48xf32>
    %870 = tpu.matmul %868, %685, %cst_118 {dimension_numbers = #tpu.dot_dimension_numbers<[1], [0], [0], [1], [0, 0, 1, 1], [], []>} : vector<2x16xf32>, vector<16x48xf32>, vector<2x48xf32> -> vector<2x48xf32>
    %871 = vector.broadcast %687 : vector<1x48xf32> to vector<2x48xf32>
    %872 = arith.addf %870, %871 : vector<2x48xf32>
    %873 = vector.extract_strided_slice %869 {offsets = [0, 0], sizes = [2, 32], strides = [1, 1]} : vector<2x48xf32> to vector<2x32xf32>
    %874 = vector.extract_strided_slice %872 {offsets = [0, 0], sizes = [2, 32], strides = [1, 1]} : vector<2x48xf32> to vector<2x32xf32>
    %875 = arith.addf %873, %874 : vector<2x32xf32>
    %876 = arith.negf %875 : vector<2x32xf32>
    %877 = math.exp %876 : vector<2x32xf32>
    %cst_119 = arith.constant 1.000000e+00 : f32
    %878 = vector.broadcast %cst_119 : f32 to vector<2x32xf32>
    %879 = arith.addf %878, %877 : vector<2x32xf32>
    %880 = arith.divf %878, %879 : vector<2x32xf32>
    %881 = vector.extract_strided_slice %880 {offsets = [0, 0], sizes = [2, 16], strides = [1, 1]} : vector<2x32xf32> to vector<2x16xf32>
    %882 = vector.extract_strided_slice %880 {offsets = [0, 16], sizes = [2, 16], strides = [1, 1]} : vector<2x32xf32> to vector<2x16xf32>
    %883 = vector.extract_strided_slice %869 {offsets = [0, 32], sizes = [2, 16], strides = [1, 1]} : vector<2x48xf32> to vector<2x16xf32>
    %884 = vector.extract_strided_slice %872 {offsets = [0, 32], sizes = [2, 16], strides = [1, 1]} : vector<2x48xf32> to vector<2x16xf32>
    %885 = arith.mulf %881, %884 : vector<2x16xf32>
    %886 = arith.addf %883, %885 : vector<2x16xf32>
    %887 = math.tanh %886 : vector<2x16xf32>
    %cst_120 = arith.constant 1.000000e+00 : f32
    %888 = vector.broadcast %cst_120 : f32 to vector<2x16xf32>
    %889 = arith.subf %888, %882 : vector<2x16xf32>
    %890 = arith.mulf %889, %887 : vector<2x16xf32>
    %891 = arith.mulf %882, %868 : vector<2x16xf32>
    %892 = arith.addf %890, %891 : vector<2x16xf32>
    %893 = vector.extract_strided_slice %819 {offsets = [6, 0], sizes = [2, 48], strides = [1, 1]} : vector<16x48xf32> to vector<2x48xf32>
    %cst_121 = arith.constant dense<0.000000e+00> : vector<2x48xf32>
    %894 = tpu.matmul %892, %685, %cst_121 {dimension_numbers = #tpu.dot_dimension_numbers<[1], [0], [0], [1], [0, 0, 1, 1], [], []>} : vector<2x16xf32>, vector<16x48xf32>, vector<2x48xf32> -> vector<2x48xf32>
    %895 = vector.broadcast %687 : vector<1x48xf32> to vector<2x48xf32>
    %896 = arith.addf %894, %895 : vector<2x48xf32>
    %897 = vector.extract_strided_slice %893 {offsets = [0, 0], sizes = [2, 32], strides = [1, 1]} : vector<2x48xf32> to vector<2x32xf32>
    %898 = vector.extract_strided_slice %896 {offsets = [0, 0], sizes = [2, 32], strides = [1, 1]} : vector<2x48xf32> to vector<2x32xf32>
    %899 = arith.addf %897, %898 : vector<2x32xf32>
    %900 = arith.negf %899 : vector<2x32xf32>
    %901 = math.exp %900 : vector<2x32xf32>
    %cst_122 = arith.constant 1.000000e+00 : f32
    %902 = vector.broadcast %cst_122 : f32 to vector<2x32xf32>
    %903 = arith.addf %902, %901 : vector<2x32xf32>
    %904 = arith.divf %902, %903 : vector<2x32xf32>
    %905 = vector.extract_strided_slice %904 {offsets = [0, 0], sizes = [2, 16], strides = [1, 1]} : vector<2x32xf32> to vector<2x16xf32>
    %906 = vector.extract_strided_slice %904 {offsets = [0, 16], sizes = [2, 16], strides = [1, 1]} : vector<2x32xf32> to vector<2x16xf32>
    %907 = vector.extract_strided_slice %893 {offsets = [0, 32], sizes = [2, 16], strides = [1, 1]} : vector<2x48xf32> to vector<2x16xf32>
    %908 = vector.extract_strided_slice %896 {offsets = [0, 32], sizes = [2, 16], strides = [1, 1]} : vector<2x48xf32> to vector<2x16xf32>
    %909 = arith.mulf %905, %908 : vector<2x16xf32>
    %910 = arith.addf %907, %909 : vector<2x16xf32>
    %911 = math.tanh %910 : vector<2x16xf32>
    %cst_123 = arith.constant 1.000000e+00 : f32
    %912 = vector.broadcast %cst_123 : f32 to vector<2x16xf32>
    %913 = arith.subf %912, %906 : vector<2x16xf32>
    %914 = arith.mulf %913, %911 : vector<2x16xf32>
    %915 = arith.mulf %906, %892 : vector<2x16xf32>
    %916 = arith.addf %914, %915 : vector<2x16xf32>
    %917 = vector.extract_strided_slice %819 {offsets = [8, 0], sizes = [2, 48], strides = [1, 1]} : vector<16x48xf32> to vector<2x48xf32>
    %cst_124 = arith.constant dense<0.000000e+00> : vector<2x48xf32>
    %918 = tpu.matmul %916, %685, %cst_124 {dimension_numbers = #tpu.dot_dimension_numbers<[1], [0], [0], [1], [0, 0, 1, 1], [], []>} : vector<2x16xf32>, vector<16x48xf32>, vector<2x48xf32> -> vector<2x48xf32>
    %919 = vector.broadcast %687 : vector<1x48xf32> to vector<2x48xf32>
    %920 = arith.addf %918, %919 : vector<2x48xf32>
    %921 = vector.extract_strided_slice %917 {offsets = [0, 0], sizes = [2, 32], strides = [1, 1]} : vector<2x48xf32> to vector<2x32xf32>
    %922 = vector.extract_strided_slice %920 {offsets = [0, 0], sizes = [2, 32], strides = [1, 1]} : vector<2x48xf32> to vector<2x32xf32>
    %923 = arith.addf %921, %922 : vector<2x32xf32>
    %924 = arith.negf %923 : vector<2x32xf32>
    %925 = math.exp %924 : vector<2x32xf32>
    %cst_125 = arith.constant 1.000000e+00 : f32
    %926 = vector.broadcast %cst_125 : f32 to vector<2x32xf32>
    %927 = arith.addf %926, %925 : vector<2x32xf32>
    %928 = arith.divf %926, %927 : vector<2x32xf32>
    %929 = vector.extract_strided_slice %928 {offsets = [0, 0], sizes = [2, 16], strides = [1, 1]} : vector<2x32xf32> to vector<2x16xf32>
    %930 = vector.extract_strided_slice %928 {offsets = [0, 16], sizes = [2, 16], strides = [1, 1]} : vector<2x32xf32> to vector<2x16xf32>
    %931 = vector.extract_strided_slice %917 {offsets = [0, 32], sizes = [2, 16], strides = [1, 1]} : vector<2x48xf32> to vector<2x16xf32>
    %932 = vector.extract_strided_slice %920 {offsets = [0, 32], sizes = [2, 16], strides = [1, 1]} : vector<2x48xf32> to vector<2x16xf32>
    %933 = arith.mulf %929, %932 : vector<2x16xf32>
    %934 = arith.addf %931, %933 : vector<2x16xf32>
    %935 = math.tanh %934 : vector<2x16xf32>
    %cst_126 = arith.constant 1.000000e+00 : f32
    %936 = vector.broadcast %cst_126 : f32 to vector<2x16xf32>
    %937 = arith.subf %936, %930 : vector<2x16xf32>
    %938 = arith.mulf %937, %935 : vector<2x16xf32>
    %939 = arith.mulf %930, %916 : vector<2x16xf32>
    %940 = arith.addf %938, %939 : vector<2x16xf32>
    %941 = vector.extract_strided_slice %819 {offsets = [10, 0], sizes = [2, 48], strides = [1, 1]} : vector<16x48xf32> to vector<2x48xf32>
    %cst_127 = arith.constant dense<0.000000e+00> : vector<2x48xf32>
    %942 = tpu.matmul %940, %685, %cst_127 {dimension_numbers = #tpu.dot_dimension_numbers<[1], [0], [0], [1], [0, 0, 1, 1], [], []>} : vector<2x16xf32>, vector<16x48xf32>, vector<2x48xf32> -> vector<2x48xf32>
    %943 = vector.broadcast %687 : vector<1x48xf32> to vector<2x48xf32>
    %944 = arith.addf %942, %943 : vector<2x48xf32>
    %945 = vector.extract_strided_slice %941 {offsets = [0, 0], sizes = [2, 32], strides = [1, 1]} : vector<2x48xf32> to vector<2x32xf32>
    %946 = vector.extract_strided_slice %944 {offsets = [0, 0], sizes = [2, 32], strides = [1, 1]} : vector<2x48xf32> to vector<2x32xf32>
    %947 = arith.addf %945, %946 : vector<2x32xf32>
    %948 = arith.negf %947 : vector<2x32xf32>
    %949 = math.exp %948 : vector<2x32xf32>
    %cst_128 = arith.constant 1.000000e+00 : f32
    %950 = vector.broadcast %cst_128 : f32 to vector<2x32xf32>
    %951 = arith.addf %950, %949 : vector<2x32xf32>
    %952 = arith.divf %950, %951 : vector<2x32xf32>
    %953 = vector.extract_strided_slice %952 {offsets = [0, 0], sizes = [2, 16], strides = [1, 1]} : vector<2x32xf32> to vector<2x16xf32>
    %954 = vector.extract_strided_slice %952 {offsets = [0, 16], sizes = [2, 16], strides = [1, 1]} : vector<2x32xf32> to vector<2x16xf32>
    %955 = vector.extract_strided_slice %941 {offsets = [0, 32], sizes = [2, 16], strides = [1, 1]} : vector<2x48xf32> to vector<2x16xf32>
    %956 = vector.extract_strided_slice %944 {offsets = [0, 32], sizes = [2, 16], strides = [1, 1]} : vector<2x48xf32> to vector<2x16xf32>
    %957 = arith.mulf %953, %956 : vector<2x16xf32>
    %958 = arith.addf %955, %957 : vector<2x16xf32>
    %959 = math.tanh %958 : vector<2x16xf32>
    %cst_129 = arith.constant 1.000000e+00 : f32
    %960 = vector.broadcast %cst_129 : f32 to vector<2x16xf32>
    %961 = arith.subf %960, %954 : vector<2x16xf32>
    %962 = arith.mulf %961, %959 : vector<2x16xf32>
    %963 = arith.mulf %954, %940 : vector<2x16xf32>
    %964 = arith.addf %962, %963 : vector<2x16xf32>
    %965 = vector.extract_strided_slice %819 {offsets = [12, 0], sizes = [2, 48], strides = [1, 1]} : vector<16x48xf32> to vector<2x48xf32>
    %cst_130 = arith.constant dense<0.000000e+00> : vector<2x48xf32>
    %966 = tpu.matmul %964, %685, %cst_130 {dimension_numbers = #tpu.dot_dimension_numbers<[1], [0], [0], [1], [0, 0, 1, 1], [], []>} : vector<2x16xf32>, vector<16x48xf32>, vector<2x48xf32> -> vector<2x48xf32>
    %967 = vector.broadcast %687 : vector<1x48xf32> to vector<2x48xf32>
    %968 = arith.addf %966, %967 : vector<2x48xf32>
    %969 = vector.extract_strided_slice %965 {offsets = [0, 0], sizes = [2, 32], strides = [1, 1]} : vector<2x48xf32> to vector<2x32xf32>
    %970 = vector.extract_strided_slice %968 {offsets = [0, 0], sizes = [2, 32], strides = [1, 1]} : vector<2x48xf32> to vector<2x32xf32>
    %971 = arith.addf %969, %970 : vector<2x32xf32>
    %972 = arith.negf %971 : vector<2x32xf32>
    %973 = math.exp %972 : vector<2x32xf32>
    %cst_131 = arith.constant 1.000000e+00 : f32
    %974 = vector.broadcast %cst_131 : f32 to vector<2x32xf32>
    %975 = arith.addf %974, %973 : vector<2x32xf32>
    %976 = arith.divf %974, %975 : vector<2x32xf32>
    %977 = vector.extract_strided_slice %976 {offsets = [0, 0], sizes = [2, 16], strides = [1, 1]} : vector<2x32xf32> to vector<2x16xf32>
    %978 = vector.extract_strided_slice %976 {offsets = [0, 16], sizes = [2, 16], strides = [1, 1]} : vector<2x32xf32> to vector<2x16xf32>
    %979 = vector.extract_strided_slice %965 {offsets = [0, 32], sizes = [2, 16], strides = [1, 1]} : vector<2x48xf32> to vector<2x16xf32>
    %980 = vector.extract_strided_slice %968 {offsets = [0, 32], sizes = [2, 16], strides = [1, 1]} : vector<2x48xf32> to vector<2x16xf32>
    %981 = arith.mulf %977, %980 : vector<2x16xf32>
    %982 = arith.addf %979, %981 : vector<2x16xf32>
    %983 = math.tanh %982 : vector<2x16xf32>
    %cst_132 = arith.constant 1.000000e+00 : f32
    %984 = vector.broadcast %cst_132 : f32 to vector<2x16xf32>
    %985 = arith.subf %984, %978 : vector<2x16xf32>
    %986 = arith.mulf %985, %983 : vector<2x16xf32>
    %987 = arith.mulf %978, %964 : vector<2x16xf32>
    %988 = arith.addf %986, %987 : vector<2x16xf32>
    %989 = vector.extract_strided_slice %819 {offsets = [14, 0], sizes = [2, 48], strides = [1, 1]} : vector<16x48xf32> to vector<2x48xf32>
    %cst_133 = arith.constant dense<0.000000e+00> : vector<2x48xf32>
    %990 = tpu.matmul %988, %685, %cst_133 {dimension_numbers = #tpu.dot_dimension_numbers<[1], [0], [0], [1], [0, 0, 1, 1], [], []>} : vector<2x16xf32>, vector<16x48xf32>, vector<2x48xf32> -> vector<2x48xf32>
    %991 = vector.broadcast %687 : vector<1x48xf32> to vector<2x48xf32>
    %992 = arith.addf %990, %991 : vector<2x48xf32>
    %993 = vector.extract_strided_slice %989 {offsets = [0, 0], sizes = [2, 32], strides = [1, 1]} : vector<2x48xf32> to vector<2x32xf32>
    %994 = vector.extract_strided_slice %992 {offsets = [0, 0], sizes = [2, 32], strides = [1, 1]} : vector<2x48xf32> to vector<2x32xf32>
    %995 = arith.addf %993, %994 : vector<2x32xf32>
    %996 = arith.negf %995 : vector<2x32xf32>
    %997 = math.exp %996 : vector<2x32xf32>
    %cst_134 = arith.constant 1.000000e+00 : f32
    %998 = vector.broadcast %cst_134 : f32 to vector<2x32xf32>
    %999 = arith.addf %998, %997 : vector<2x32xf32>
    %1000 = arith.divf %998, %999 : vector<2x32xf32>
    %1001 = vector.extract_strided_slice %1000 {offsets = [0, 0], sizes = [2, 16], strides = [1, 1]} : vector<2x32xf32> to vector<2x16xf32>
    %1002 = vector.extract_strided_slice %1000 {offsets = [0, 16], sizes = [2, 16], strides = [1, 1]} : vector<2x32xf32> to vector<2x16xf32>
    %1003 = vector.extract_strided_slice %989 {offsets = [0, 32], sizes = [2, 16], strides = [1, 1]} : vector<2x48xf32> to vector<2x16xf32>
    %1004 = vector.extract_strided_slice %992 {offsets = [0, 32], sizes = [2, 16], strides = [1, 1]} : vector<2x48xf32> to vector<2x16xf32>
    %1005 = arith.mulf %1001, %1004 : vector<2x16xf32>
    %1006 = arith.addf %1003, %1005 : vector<2x16xf32>
    %1007 = math.tanh %1006 : vector<2x16xf32>
    %cst_135 = arith.constant 1.000000e+00 : f32
    %1008 = vector.broadcast %cst_135 : f32 to vector<2x16xf32>
    %1009 = arith.subf %1008, %1002 : vector<2x16xf32>
    %1010 = arith.mulf %1009, %1007 : vector<2x16xf32>
    %1011 = arith.mulf %1002, %988 : vector<2x16xf32>
    %1012 = arith.addf %1010, %1011 : vector<2x16xf32>
    %1013 = tpu.concatenate %844, %868, %892, %916, %940, %964, %988, %1012 in 0 : vector<2x16xf32>, vector<2x16xf32>, vector<2x16xf32>, vector<2x16xf32>, vector<2x16xf32>, vector<2x16xf32>, vector<2x16xf32>, vector<2x16xf32> -> vector<16x16xf32>
    %cst_136 = arith.constant dense<0.000000e+00> : vector<16x8xf32>
    %1014 = tpu.matmul %1013, %688, %cst_136 {dimension_numbers = #tpu.dot_dimension_numbers<[1], [0], [0], [1], [0, 0, 1, 1], [], []>} : vector<16x16xf32>, vector<16x8xf32>, vector<16x8xf32> -> vector<16x8xf32>
    %1015 = vector.broadcast %689 : vector<1x8xf32> to vector<16x8xf32>
    %1016 = arith.addf %1014, %1015 : vector<16x8xf32>
    %1017 = arith.negf %1016 : vector<16x8xf32>
    %1018 = math.exp %1017 : vector<16x8xf32>
    %cst_137 = arith.constant 1.000000e+00 : f32
    %1019 = vector.broadcast %cst_137 : f32 to vector<16x8xf32>
    %1020 = arith.addf %1019, %1018 : vector<16x8xf32>
    %1021 = arith.divf %1019, %1020 : vector<16x8xf32>
    %cst_138 = arith.constant dense<0.000000e+00> : vector<8x144xf32>
    %1022 = tpu.matmul %1021, %1, %cst_138 {dimension_numbers = #tpu.dot_dimension_numbers<[0], [0], [1], [1], [0, 1, 1, 1], [], []>} : vector<16x8xf32>, vector<16x144xf32>, vector<8x144xf32> -> vector<8x144xf32>
    %1023 = arith.mulf %812, %1022 : vector<8x144xf32>
    %1024 = vector.extract_strided_slice %678 {offsets = [4, 0], sizes = [4, 144], strides = [1, 1]} : vector<16x144xf32> to vector<4x144xf32>
    %1025 = vector.extract_strided_slice %678 {offsets = [10, 0], sizes = [2, 144], strides = [1, 1]} : vector<16x144xf32> to vector<2x144xf32>
    %1026 = vector.extract_strided_slice %678 {offsets = [14, 0], sizes = [2, 144], strides = [1, 1]} : vector<16x144xf32> to vector<2x144xf32>
    %1027 = tpu.concatenate %1023, %1024, %1025, %1026 in 0 : vector<8x144xf32>, vector<4x144xf32>, vector<2x144xf32>, vector<2x144xf32> -> vector<16x144xf32>
    %c4_139 = arith.constant 4 : index
    %c0_140 = arith.constant 0 : index
    %c0_141 = arith.constant 0 : index
    %1028 = vector.load %arg0[%c4_139, %c0_140, %c0_141] : memref<7x16x144xf32, #tpu.memory_space<vmem>>, vector<1x16x144xf32>
    %1029 = vector.shape_cast %1028 : vector<1x16x144xf32> to vector<16x144xf32>
    %1030 = arith.addf %1027, %1029 : vector<16x144xf32>
    %c0_142 = arith.constant 0 : index
    %c0_143 = arith.constant 0 : index
    %1031 = vector.load %arg4[%c0_142, %c0_143] : memref<40x65xf32, #tpu.memory_space<vmem>>, vector<40x65xf32>
    %1032 = vector.extract_strided_slice %1031 {offsets = [0, 0], sizes = [32, 48], strides = [1, 1]} : vector<40x65xf32> to vector<32x48xf32>
    %1033 = vector.extract_strided_slice %1031 {offsets = [0, 64], sizes = [32, 1], strides = [1, 1]} : vector<40x65xf32> to vector<32x1xf32>
    %1034 = vector.extract_strided_slice %1031 {offsets = [32, 0], sizes = [8, 64], strides = [1, 1]} : vector<40x65xf32> to vector<8x64xf32>
    %1035 = vector.extract_strided_slice %1031 {offsets = [32, 64], sizes = [8, 1], strides = [1, 1]} : vector<40x65xf32> to vector<8x1xf32>
    %c6 = arith.constant 6 : index
    %1036 = memref.load %arg5[%c6] : memref<8xf32, #tpu.memory_space<smem>>
    %1037 = vector.extract_strided_slice %1030 {offsets = [0, 1], sizes = [16, 143], strides = [1, 1]} : vector<16x144xf32> to vector<16x143xf32>
    %1038 = vector.extract_strided_slice %1030 {offsets = [0, 0], sizes = [16, 1], strides = [1, 1]} : vector<16x144xf32> to vector<16x1xf32>
    %1039 = tpu.concatenate %1037, %1038 in 1 : vector<16x143xf32>, vector<16x1xf32> -> vector<16x144xf32>
    %1040 = vector.extract_strided_slice %2 {offsets = [1, 0], sizes = [1, 144], strides = [1, 1]} : vector<14x144xf32> to vector<1x144xf32>
    %1041 = vector.broadcast %1040 : vector<1x144xf32> to vector<16x144xf32>
    %1042 = arith.mulf %1039, %1041 : vector<16x144xf32>
    %1043 = vector.extract_strided_slice %1030 {offsets = [0, 143], sizes = [16, 1], strides = [1, 1]} : vector<16x144xf32> to vector<16x1xf32>
    %1044 = vector.extract_strided_slice %1030 {offsets = [0, 0], sizes = [16, 143], strides = [1, 1]} : vector<16x144xf32> to vector<16x143xf32>
    %1045 = tpu.concatenate %1043, %1044 in 1 : vector<16x1xf32>, vector<16x143xf32> -> vector<16x144xf32>
    %1046 = vector.extract_strided_slice %2 {offsets = [0, 0], sizes = [1, 144], strides = [1, 1]} : vector<14x144xf32> to vector<1x144xf32>
    %1047 = vector.broadcast %1046 : vector<1x144xf32> to vector<16x144xf32>
    %1048 = arith.mulf %1045, %1047 : vector<16x144xf32>
    %1049 = tpu.concatenate %1042, %1030, %1048 in 0 : vector<16x144xf32>, vector<16x144xf32>, vector<16x144xf32> -> vector<48x144xf32>
    %cst_144 = arith.constant dense<0.000000e+00> : vector<32x144xf32>
    %1050 = tpu.matmul %1032, %1049, %cst_144 {dimension_numbers = #tpu.dot_dimension_numbers<[1], [0], [0], [1], [0, 0, 1, 1], [], []>} : vector<32x48xf32>, vector<48x144xf32>, vector<32x144xf32> -> vector<32x144xf32>
    %1051 = vector.broadcast %1033 : vector<32x1xf32> to vector<32x144xf32>
    %1052 = arith.addf %1050, %1051 : vector<32x144xf32>
    %cst_145 = arith.constant 0.000000e+00 : f32
    %1053 = vector.broadcast %cst_145 : f32 to vector<32x144xf32>
    %1054 = arith.cmpf oge, %1052, %1053 : vector<32x144xf32>
    %1055 = vector.broadcast %1036 : f32 to vector<32x144xf32>
    %1056 = arith.mulf %1055, %1052 : vector<32x144xf32>
    %1057 = arith.select %1054, %1052, %1056 : vector<32x144xi1>, vector<32x144xf32>
    %1058 = vector.extract_strided_slice %1057 {offsets = [0, 0], sizes = [16, 144], strides = [1, 1]} : vector<32x144xf32> to vector<16x144xf32>
    %1059 = vector.extract_strided_slice %1057 {offsets = [16, 0], sizes = [16, 144], strides = [1, 1]} : vector<32x144xf32> to vector<16x144xf32>
    %c5_146 = arith.constant 5 : index
    %c0_147 = arith.constant 0 : index
    %c0_148 = arith.constant 0 : index
    %1060 = vector.load %arg0[%c5_146, %c0_147, %c0_148] : memref<7x16x144xf32, #tpu.memory_space<vmem>>, vector<1x16x144xf32>
    %1061 = vector.shape_cast %1060 : vector<1x16x144xf32> to vector<16x144xf32>
    %1062 = arith.addf %1058, %1061 : vector<16x144xf32>
    %c6_149 = arith.constant 6 : index
    %c0_150 = arith.constant 0 : index
    %c0_151 = arith.constant 0 : index
    %1063 = vector.load %arg0[%c6_149, %c0_150, %c0_151] : memref<7x16x144xf32, #tpu.memory_space<vmem>>, vector<1x16x144xf32>
    %1064 = vector.shape_cast %1063 : vector<1x16x144xf32> to vector<16x144xf32>
    %1065 = arith.addf %1059, %1064 : vector<16x144xf32>
    %1066 = vector.extract_strided_slice %2 {offsets = [1, 0], sizes = [1, 144], strides = [1, 1]} : vector<14x144xf32> to vector<1x144xf32>
    %1067 = vector.broadcast %1066 : vector<1x144xf32> to vector<16x144xf32>
    %1068 = arith.mulf %1065, %1067 : vector<16x144xf32>
    %1069 = vector.extract_strided_slice %1068 {offsets = [0, 143], sizes = [16, 1], strides = [1, 1]} : vector<16x144xf32> to vector<16x1xf32>
    %1070 = vector.extract_strided_slice %1068 {offsets = [0, 0], sizes = [16, 143], strides = [1, 1]} : vector<16x144xf32> to vector<16x143xf32>
    %1071 = tpu.concatenate %1069, %1070 in 1 : vector<16x1xf32>, vector<16x143xf32> -> vector<16x144xf32>
    %1072 = vector.extract_strided_slice %2 {offsets = [0, 0], sizes = [1, 144], strides = [1, 1]} : vector<14x144xf32> to vector<1x144xf32>
    %1073 = vector.broadcast %1072 : vector<1x144xf32> to vector<16x144xf32>
    %1074 = arith.mulf %1071, %1073 : vector<16x144xf32>
    %1075 = vector.extract_strided_slice %1062 {offsets = [0, 1], sizes = [16, 143], strides = [1, 1]} : vector<16x144xf32> to vector<16x143xf32>
    %1076 = vector.extract_strided_slice %1062 {offsets = [0, 0], sizes = [16, 1], strides = [1, 1]} : vector<16x144xf32> to vector<16x1xf32>
    %1077 = tpu.concatenate %1075, %1076 in 1 : vector<16x143xf32>, vector<16x1xf32> -> vector<16x144xf32>
    %1078 = vector.extract_strided_slice %2 {offsets = [1, 0], sizes = [1, 144], strides = [1, 1]} : vector<14x144xf32> to vector<1x144xf32>
    %1079 = vector.broadcast %1078 : vector<1x144xf32> to vector<16x144xf32>
    %1080 = arith.mulf %1077, %1079 : vector<16x144xf32>
    %1081 = tpu.concatenate %1068, %1062, %1074, %1080 in 0 : vector<16x144xf32>, vector<16x144xf32>, vector<16x144xf32>, vector<16x144xf32> -> vector<64x144xf32>
    %cst_152 = arith.constant dense<0.000000e+00> : vector<8x144xf32>
    %1082 = tpu.matmul %1034, %1081, %cst_152 {dimension_numbers = #tpu.dot_dimension_numbers<[1], [0], [0], [1], [0, 0, 1, 1], [], []>} : vector<8x64xf32>, vector<64x144xf32>, vector<8x144xf32> -> vector<8x144xf32>
    %1083 = vector.broadcast %1035 : vector<8x1xf32> to vector<8x144xf32>
    %1084 = arith.addf %1082, %1083 : vector<8x144xf32>
    %1085 = math.tanh %1084 : vector<8x144xf32>
    %c0_153 = arith.constant 0 : index
    %c0_154 = arith.constant 0 : index
    %1086 = vector.load %arg6[%c0_153, %c0_154] : memref<8x144xf32, #tpu.memory_space<vmem>>, vector<8x144xf32>
    tpu.vector_store %arg6[%c0_153, %c0_154], %1085 {strides = array<i32>} : memref<8x144xf32, #tpu.memory_space<vmem>>, vector<8x144xf32>,
    return
  }
}

</mosaic_0001>

<llo_original>
// kernel: decoder_forward.1
$region0: #{decoder_forward.1}
  #allocation0 [shape = 'u32[]', space=smem, size = 0x4, offset = 0x4, fixed_abs, tag = 'smem constant byte address 0x4 - core index']
  #allocation1 [shape = 'u32[144,128]{1,0:T(1,128)}', space=vmem, size = 0x12000, scoped, tag = 'internal scratch']
  %s0 = inlined_call_operand.vmem [shape: f32[7,16,144], index: 0, kind: input, shape index: {}]
  %s1 = inlined_call_operand.vmem [shape: f32[30,144], index: 1, kind: input, shape index: {}]
  %s2 = inlined_call_operand.vmem [shape: f32[3,59,48], index: 2, kind: input, shape index: {}]
  %s3 = inlined_call_operand.vmem [shape: f32[3,24,16], index: 3, kind: input, shape index: {}]
  %s4 = inlined_call_operand.vmem [shape: f32[40,65], index: 4, kind: input, shape index: {}]
  %s5 = inlined_call_operand.vmem [shape: f32[8], index: 5, kind: input, shape index: {}]
  %s6 = inlined_call_operand.vmem [shape: f32[8,144], index: 6, kind: output, shape index: {}]
  %s7 = sld [smem:[#allocation0]]
  $region38: #{decoder_forward.1} parent=0
    _
  %s9 = ssub.s32 1, %s7
  %s10 = scalar_select 0, %s9, %s7
  $region1: #{decoder_forward.1} parent=0
    #allocation2 [shape = 'u8[512]{0}', space=smem, size = 0x200, scoped, tag = 'input window, operand 5, single buffered']
    #allocation3 [shape = 's32[1]{0}', space=sflag, size = 0x4, scoped, tag = 'scoped memory for decoder_forward.1']
    %11 = vsyncpa [#allocation3], 0
    // Predicated region
    $region2: #{decoder_forward.1} parent=1 // pred_check
      _
    $region3: #{decoder_forward.1} parent=1 // pred_check_branch
      %13 = sbr.rel (0) target = $region5
    $region4: #{decoder_forward.1} parent=1 // pred_region
      _
    $region5: #{decoder_forward.1} parent=1 // pred_fallthru
      _
    // Predicated region
    $region6: #{decoder_forward.1} parent=1 // pred_check
      _
    $region7: #{decoder_forward.1} parent=1 // pred_check_branch
      %15 = sbr.rel (0) target = $region9
    $region8: #{decoder_forward.1} parent=1 // pred_region
      _
    $region9: #{decoder_forward.1} parent=1 // pred_fallthru
      _
    // Predicated region
    $region10: #{decoder_forward.1} parent=1 // pred_check
      _
    $region11: #{decoder_forward.1} parent=1 // pred_check_branch
      %17 = sbr.rel (0) target = $region13
    $region12: #{decoder_forward.1} parent=1 // pred_region
      _
    $region13: #{decoder_forward.1} parent=1 // pred_fallthru
      _
    // Predicated region
    $region14: #{decoder_forward.1} parent=1 // pred_check
      _
    $region15: #{decoder_forward.1} parent=1 // pred_check_branch
      %19 = sbr.rel (0) target = $region17
    $region16: #{decoder_forward.1} parent=1 // pred_region
      _
    $region17: #{decoder_forward.1} parent=1 // pred_fallthru
      _
    // Predicated region
    $region18: #{decoder_forward.1} parent=1 // pred_check
      _
    $region19: #{decoder_forward.1} parent=1 // pred_check_branch
      %21 = sbr.rel (0) target = $region21
    $region20: #{decoder_forward.1} parent=1 // pred_region
      _
    $region21: #{decoder_forward.1} parent=1 // pred_fallthru
      _
    // Predicated region
    $region22: #{decoder_forward.1} parent=1 // pred_check
      _
    $region23: #{decoder_forward.1} parent=1 // pred_check_branch
      %23 = sbr.rel (0) target = $region25
    $region24: #{decoder_forward.1} parent=1 // pred_region
      %s25 = ssub.s32 16, 16
      %26 = vsyncadd [#allocation3], %s25
      %s28 = sshll.u32 %s5, 4
      %s29 = int_to_ptr.vmem [resolvable:$true] %s28
      %31 = dma.vmem_to_smem %s29, 16, [#allocation2], [#allocation3]
    $region25: #{decoder_forward.1} parent=1 // pred_fallthru
      _
    // Predicated region
    $region26: #{decoder_forward.1} parent=1 // pred_check
      _
    $region27: #{decoder_forward.1} parent=1 // pred_check_branch
      %33 = sbr.rel (0) target = $region29
    $region28: #{decoder_forward.1} parent=1 // pred_region
      %34 = dma.done [#allocation3], 16
    $region29: #{decoder_forward.1} parent=1 // pred_fallthru
      _
    %35 = sfence
    %v36 = vld [vmem:[%s1] sm:$0xff]
    %v37 = vld [vmem:[%s1 + $0x8] sm:$0xff]
    %v38 = vld [vmem:[%s1 + $0x10] sm:$0xff]
    %v39 = vld [vmem:[%s1 + $0x18] sm:$0xff]
    %v40 = vld [vmem:[%s1 + $0x20] sm:$0xff]
    %v41 = vld [vmem:[%s1 + $0x28] sm:$0xff]
    %v42 = vld [vmem:[%s1 + $0x30] sm:$0x3f]
    %v43 = vld [vmem:[%s1 + $0x38] sm:$0x3f]
    %v44 = vld [vmem:[%s0] sm:$0xff]
    %v45 = vld [vmem:[%s0 + $0x8] sm:$0xff]
    %v46 = vld [vmem:[%s0 + $0x10] sm:$0xff]
    %v47 = vld [vmem:[%s0 + $0x18] sm:$0xff]
    %s48 = scalar_lea.vmem %s0, 32
    %v49 = vld [vmem:[%s48] sm:$0xff]
    %v50 = vld [vmem:[%s48 + $0x8] sm:$0xff]
    %v51 = vld [vmem:[%s48 + $0x10] sm:$0xff]
    %v52 = vld [vmem:[%s48 + $0x18] sm:$0xff]
    %v53 = vadd.f32 %v44, %v49
    %v54 = vadd.f32 %v45, %v50
    %v55 = vadd.f32 %v46, %v51
    %v56 = vadd.f32 %v47, %v52
    %v57 = vld [vmem:[%s2] sm:$0xff]
    %v58 = vld [vmem:[%s2 + $0x8] sm:$0xff]
    %v59 = vld [vmem:[%s2 + $0x10] sm:$0xff]
    %v60 = vld [vmem:[%s2 + $0x18] sm:$0xff]
    %v61 = vld [vmem:[%s2 + $0x20] sm:$0xff]
    %v62 = vld [vmem:[%s2 + $0x28] sm:$0xff]
    %v63 = vld [vmem:[%s2 + $0x30] sm:$0xff]
    %v64 = vld [vmem:[%s2 + $0x38] sm:$0x7]
    %v65 = vld [vmem:[%s3] sm:$0xff]
    %v66 = vld [vmem:[%s3 + $0x8] sm:$0xff]
    %v67 = vld [vmem:[%s3 + $0x10] sm:$0xff]
    %s68 = sld [smem:[#allocation2]]
    %s69 = sld [smem:[#allocation2 + $0x1]]
    %72 = vrot.lane.b32.xlu0 %v54, 113
    %v73 = vpop.permute.xlu0 %72
    %74 = vrot.lane.b32.xlu0 %v56, 113
    %v75 = vpop.permute.xlu0 %74
    %80 = vrot.lane.b32.xlu0 %v53, 1
    %v81 = vpop.permute.xlu0 %80
    %82 = vrot.lane.b32.xlu0 %v54, 1
    %v83 = vpop.permute.xlu0 %82
    %84 = vrot.lane.b32.xlu0 %v55, 1
    %v85 = vpop.permute.xlu0 %84
    %86 = vrot.lane.b32.xlu0 %v56, 1
    %v87 = vpop.permute.xlu0 %86
    %vm88 = vcmask 7168
    %v89 = vsel %vm88, %v81, %v83
    %v90 = vsel %vm88, %v85, %v87
    %v95 = vsel %vm88, %v73, %v81
    %v96 = vsel %vm88, %v75, %v85
    %v97 = vlaneseq
    %v98 = vshrl.u32 %v97, 7
    %v99 = vsub.s32 0, %v98
    %v100 = vrot.slane %v40, %v99
    %v101 = vlaneseq
    %v102 = vshrl.u32 %v101, 7
    %v103 = vsub.s32 0, %v102
    %v104 = vrot.slane %v41, %v103
    %v105 = vmul.f32 %v95, %v100
    %v106 = vmul.f32 %v89, %v104
    %v107 = vmul.f32 %v96, %v100
    %v108 = vmul.f32 %v90, %v104
    %109 = vrot.lane.b32.xlu0 %v53, 127
    %v110 = vpop.permute.xlu0 %109
    %111 = vrot.lane.b32.xlu0 %v54, 127
    %v112 = vpop.permute.xlu0 %111
    %113 = vrot.lane.b32.xlu0 %v55, 127
    %v114 = vpop.permute.xlu0 %113
    %115 = vrot.lane.b32.xlu0 %v56, 127
    %v116 = vpop.permute.xlu0 %115
    %vm117 = vcmask 1039360
    %v118 = vsel %vm117, %v110, %v112
    %v119 = vsel %vm117, %v114, %v116
    %124 = vrot.lane.b32.xlu0 %v53, 15
    %v125 = vpop.permute.xlu0 %124
    %126 = vrot.lane.b32.xlu0 %v55, 15
    %v127 = vpop.permute.xlu0 %126
    %vm130 = vcmask 121856
    %v131 = vsel %vm130, %v112, %v125
    %v132 = vsel %vm130, %v116, %v127
    %v133 = vlaneseq
    %v134 = vshrl.u32 %v133, 7
    %v135 = vsub.s32 1, %v134
    %v136 = vrot.slane %v40, %v135
    %v137 = vlaneseq
    %v138 = vshrl.u32 %v137, 7
    %v139 = vsub.s32 1, %v138
    %v140 = vrot.slane %v41, %v139
    %v141 = vmul.f32 %v118, %v136
    %v142 = vmul.f32 %v131, %v140
    %v143 = vmul.f32 %v119, %v136
    %v144 = vmul.f32 %v132, %v140
    %146 = vset.pattern.permute.xlu0 9
    %147 = vperm.xlu0 %146, %v65
    %v148 = vpop.permute.xlu0 %147
    %151 = vset.pattern.permute.xlu0 9
    %152 = vperm.xlu0 %151, %v66
    %v153 = vpop.permute.xlu0 %152
    %vm155 = vcmask 392192
    %v157 = vsel %vm155, %v57, 0
    %v160 = vsel %vm155, %v58, 0
    %162 = vmatprep.subr.mxu0 %v106
    %163 = vmatpush1.msra.mxu0 %v105
    %164 = vmatprep.subr.mxu0 %v108
    %165 = vmatpush1.msra.mxu0 %v107
    %166 = vmatprep.subr.mxu0 %v54
    %167 = vmatpush1.msra.mxu0 %v53
    %168 = vmatprep.subr.mxu0 %v56
    %169 = vmatpush1.msra.mxu0 %v55
    %170 = vmatprep.subr.mxu0 %v142
    %171 = vmatpush1.msra.mxu0 %v141
    %172 = vmatprep.subr.mxu0 %v144
    %173 = vmatpush1.msra.mxu0 %v143
    %174 = vmatprep.subr.mxu0 0.0
    %175 = vmatpush1.msra.mxu0 0.0
    %176 = vmatprep.subr.mxu0 0.0
    %177 = vmatpush1.msra.mxu0 0.0
    %178 = vmatprep.subr.mxu0 0.0
    %179 = vmatpush1.msra.mxu0 0.0
    %180 = vmatprep.subr.mxu0 0.0
    %181 = vmatpush1.msra.mxu0 0.0
    %182 = vmatprep.subr.mxu0 0.0
    %183 = vmatpush1.msra.mxu0 0.0
    %184 = vmatprep.subr.mxu0 0.0
    %185 = vmatpush1.msra.mxu0 0.0
    %186 = vmatprep.subr.mxu0 0.0
    %187 = vmatpush1.msra.mxu0 0.0
    %188 = vmatprep.subr.mxu0 0.0
    %189 = vmatpush1.msra.mxu0 0.0
    %190 = vmatprep.subr.mxu0 0.0
    %191 = vmatpush1.msra.mxu0 0.0
    %192 = vmatprep.subr.mxu0 0.0
    %193 = vmatpush1.msra.mxu0 0.0
    %194 = vmatprep.subr.mxu0 0.0
    %195 = vmatpush1.msra.mxu0 0.0
    %196 = vmatprep.subr.mxu0 0.0
    %197 = vmatpush1.msra.mxu0 0.0
    %198 = vmatprep.subr.mxu0 0.0
    %199 = vmatpush1.msra.mxu0 0.0
    %200 = vmatprep.subr.mxu0 0.0
    %201 = vmatpush1.msra.mxu0 0.0
    %202 = vmatprep.subr.mxu0 0.0
    %203 = vmatpush1.msra.mxu0 0.0
    %204 = vmatprep.subr.mxu0 0.0
    %205 = vmatpush1.msra.mxu0 0.0
    %206 = vmatprep.subr.mxu0 0.0
    %207 = vmatpush1.msra.mxu0 0.0
    %208 = vmatprep.subr.mxu0 0.0
    %209 = vmatpush1.msra.mxu0 0.0
    %210 = vmatprep.subr.mxu0 0.0
    %211 = vmatpush1.msra.mxu0 0.0
    %212 = vmatprep.subr.mxu0 0.0
    %213 = vmatpush1.msra.mxu0 0.0
    %214 = vmatprep.subr.mxu0 0.0
    %215 = vmatpush1.msra.mxu0 0.0
    %216 = vmatprep.subr.mxu0 0.0
    %217 = vmatpush1.msra.mxu0 0.0
    %218 = vmatprep.subr.mxu0 0.0
    %219 = vmatpush1.msra.mxu0 0.0
    %220 = vmatprep.subr.mxu0 0.0
    %221 = vmatpush1.msra.mxu0 0.0
    %222 = vmatprep.subr.mxu0 0.0
    %223 = vmatpush1.msra.mxu0 0.0
    %224 = vmatprep.subr.mxu0 0.0
    %225 = vmatpush1.msra.mxu0 0.0
    %226 = vmatprep.mubr.f32.mxu0 0.0
    %227 = vmatmul.mubr.f32.gmra.mrb[0].mxu0 %v157
    %v228 = vpop.f32.mrb[0].mxu0
    %v229 = vadd.f32 %v148, %v228
    %v230 = vpop.f32.mrb[0].mxu0
    %v231 = vadd.f32 %v148, %v230
    %232 = vmatprep.mubr.f32.mxu0 0.0
    %233 = vmatmul.mubr.f32.gmra.mrb[0].mxu0 %v160
    %v234 = vpop.f32.mrb[0].mxu0
    %v235 = vadd.f32 %v153, %v234
    %v236 = vpop.f32.mrb[0].mxu0
    %v237 = vadd.f32 %v153, %v236
    %238 = vdwg.mxu0
    %vm239 = vcmp.ge.f32.partialorder %v229, 0.0
    %vm240 = vcmp.ge.f32.partialorder %v231, 0.0
    %vm241 = vcmp.ge.f32.partialorder %v235, 0.0
    %vm242 = vcmp.ge.f32.partialorder %v237, 0.0
    %v243 = vstv %s68
    %v244 = vmul.f32 %v243, %v229
    %v245 = vmul.f32 %v243, %v231
    %v246 = vmul.f32 %v243, %v235
    %v247 = vmul.f32 %v243, %v237
    %v248 = vsel %vm239, %v229, %v244
    %v249 = vsel %vm240, %v231, %v245
    %v250 = vsel %vm241, %v235, %v246
    %v251 = vsel %vm242, %v237, %v247
    %254 = vrot.lane.b32.xlu0 %v249, 113
    %v255 = vpop.permute.xlu0 %254
    %256 = vrot.lane.b32.xlu0 %v251, 113
    %v257 = vpop.permute.xlu0 %256
    %262 = vrot.lane.b32.xlu0 %v248, 1
    %v263 = vpop.permute.xlu0 %262
    %264 = vrot.lane.b32.xlu0 %v249, 1
    %v265 = vpop.permute.xlu0 %264
    %266 = vrot.lane.b32.xlu0 %v250, 1
    %v267 = vpop.permute.xlu0 %266
    %268 = vrot.lane.b32.xlu0 %v251, 1
    %v269 = vpop.permute.xlu0 %268
    %v270 = vsel %vm88, %v263, %v265
    %v271 = vsel %vm88, %v267, %v269
    %v276 = vsel %vm88, %v255, %v263
    %v277 = vsel %vm88, %v257, %v267
    %v278 = vmul.f32 %v276, %v100
    %v279 = vmul.f32 %v270, %v104
    %v280 = vmul.f32 %v277, %v100
    %v281 = vmul.f32 %v271, %v104
    %282 = vset.pattern.permute.xlu0 0
    %283 = vperm.xlu0 %282, %v65
    %v284 = vpop.permute.xlu0 %283
    %286 = vset.pattern.permute.xlu0 0
    %287 = vperm.xlu0 %286, %v66
    %v288 = vpop.permute.xlu0 %287
    %v290 = vmul.f32 %v284, %v278
    %v291 = vmul.f32 %v284, %v279
    %v292 = vmul.f32 %v288, %v280
    %v293 = vmul.f32 %v288, %v281
    %v294 = vadd.f32 %v290, 0.0
    %v295 = vadd.f32 %v291, 0.0
    %v296 = vadd.f32 %v292, 0.0
    %v297 = vadd.f32 %v293, 0.0
    %298 = vset.pattern.permute.xlu0 1
    %299 = vperm.xlu0 %298, %v65
    %v300 = vpop.permute.xlu0 %299
    %302 = vset.pattern.permute.xlu0 1
    %303 = vperm.xlu0 %302, %v66
    %v304 = vpop.permute.xlu0 %303
    %v306 = vmul.f32 %v300, %v248
    %v307 = vmul.f32 %v300, %v249
    %v308 = vmul.f32 %v304, %v250
    %v309 = vmul.f32 %v304, %v251
    %v310 = vadd.f32 %v294, %v306
    %v311 = vadd.f32 %v295, %v307
    %v312 = vadd.f32 %v296, %v308
    %v313 = vadd.f32 %v297, %v309
    %314 = vrot.lane.b32.xlu0 %v248, 127
    %v315 = vpop.permute.xlu0 %314
    %316 = vrot.lane.b32.xlu0 %v249, 127
    %v317 = vpop.permute.xlu0 %316
    %318 = vrot.lane.b32.xlu0 %v250, 127
    %v319 = vpop.permute.xlu0 %318
    %320 = vrot.lane.b32.xlu0 %v251, 127
    %v321 = vpop.permute.xlu0 %320
    %v322 = vsel %vm117, %v315, %v317
    %v323 = vsel %vm117, %v319, %v321
    %328 = vrot.lane.b32.xlu0 %v248, 15
    %v329 = vpop.permute.xlu0 %328
    %330 = vrot.lane.b32.xlu0 %v250, 15
    %v331 = vpop.permute.xlu0 %330
    %v334 = vsel %vm130, %v317, %v329
    %v335 = vsel %vm130, %v321, %v331
    %v336 = vmul.f32 %v322, %v136
    %v337 = vmul.f32 %v334, %v140
    %v338 = vmul.f32 %v323, %v136
    %v339 = vmul.f32 %v335, %v140
    %340 = vset.pattern.permute.xlu0 2
    %341 = vperm.xlu0 %340, %v65
    %v342 = vpop.permute.xlu0 %341
    %344 = vset.pattern.permute.xlu0 2
    %345 = vperm.xlu0 %344, %v66
    %v346 = vpop.permute.xlu0 %345
    %v348 = vmul.f32 %v342, %v336
    %v349 = vmul.f32 %v342, %v337
    %v350 = vmul.f32 %v346, %v338
    %v351 = vmul.f32 %v346, %v339
    %v352 = vadd.f32 %v310, %v348
    %v353 = vadd.f32 %v311, %v349
    %v354 = vadd.f32 %v312, %v350
    %v355 = vadd.f32 %v313, %v351
    %356 = vrot.lane.b32.xlu0 %v248, 30
    %v357 = vpop.permute.xlu0 %356
    %358 = vrot.lane.b32.xlu0 %v249, 30
    %v359 = vpop.permute.xlu0 %358
    %360 = vrot.lane.b32.xlu0 %v250, 30
    %v361 = vpop.permute.xlu0 %360
    %362 = vrot.lane.b32.xlu0 %v251, 30
    %v363 = vpop.permute.xlu0 %362
    %vm364 = vcmask 244736
    %v365 = vsel %vm364, %v357, %v359
    %v366 = vsel %vm364, %v361, %v363
    %369 = vrot.lane.b32.xlu0 %v248, 46
    %v370 = vpop.permute.xlu0 %369
    %371 = vrot.lane.b32.xlu0 %v250, 46
    %v372 = vpop.permute.xlu0 %371
    %vm375 = vcmask 375808
    %v376 = vsel %vm375, %v365, %v370
    %v377 = vsel %vm375, %v366, %v372
    %v378 = vlaneseq
    %v379 = vshrl.u32 %v378, 7
    %v380 = vsub.s32 2, %v379
    %v381 = vrot.slane %v40, %v380
    %v382 = vlaneseq
    %v383 = vshrl.u32 %v382, 7
    %v384 = vsub.s32 2, %v383
    %v385 = vrot.slane %v41, %v384
    %v386 = vmul.f32 %v376, %v381
    %v387 = vmul.f32 %v370, %v385
    %v388 = vmul.f32 %v377, %v381
    %v389 = vmul.f32 %v372, %v385
    %390 = vset.pattern.permute.xlu0 3
    %391 = vperm.xlu0 %390, %v65
    %v392 = vpop.permute.xlu0 %391
    %394 = vset.pattern.permute.xlu0 3
    %395 = vperm.xlu0 %394, %v66
    %v396 = vpop.permute.xlu0 %395
    %v398 = vmul.f32 %v392, %v386
    %v399 = vmul.f32 %v392, %v387
    %v400 = vmul.f32 %v396, %v388
    %v401 = vmul.f32 %v396, %v389
    %v402 = vadd.f32 %v352, %v398
    %v403 = vadd.f32 %v353, %v399
    %v404 = vadd.f32 %v354, %v400
    %v405 = vadd.f32 %v355, %v401
    %406 = vrot.lane.b32.xlu0 %v248, 29
    %v407 = vpop.permute.xlu0 %406
    %408 = vrot.lane.b32.xlu0 %v249, 29
    %v409 = vpop.permute.xlu0 %408
    %410 = vrot.lane.b32.xlu0 %v250, 29
    %v411 = vpop.permute.xlu0 %410
    %412 = vrot.lane.b32.xlu0 %v251, 29
    %v413 = vpop.permute.xlu0 %412
    %vm414 = vcmask 236544
    %v415 = vsel %vm414, %v407, %v409
    %v416 = vsel %vm414, %v411, %v413
    %419 = vrot.lane.b32.xlu0 %v248, 45
    %v420 = vpop.permute.xlu0 %419
    %421 = vrot.lane.b32.xlu0 %v250, 45
    %v422 = vpop.permute.xlu0 %421
    %vm425 = vcmask 367616
    %v426 = vsel %vm425, %v415, %v420
    %v427 = vsel %vm425, %v416, %v422
    %v428 = vlaneseq
    %v429 = vshrl.u32 %v428, 7
    %v430 = vsub.s32 3, %v429
    %v431 = vrot.slane %v40, %v430
    %v432 = vlaneseq
    %v433 = vshrl.u32 %v432, 7
    %v434 = vsub.s32 3, %v433
    %v435 = vrot.slane %v41, %v434
    %v436 = vmul.f32 %v426, %v431
    %v437 = vmul.f32 %v420, %v435
    %v438 = vmul.f32 %v427, %v431
    %v439 = vmul.f32 %v422, %v435
    %440 = vset.pattern.permute.xlu0 4
    %441 = vperm.xlu0 %440, %v65
    %v442 = vpop.permute.xlu0 %441
    %444 = vset.pattern.permute.xlu0 4
    %445 = vperm.xlu0 %444, %v66
    %v446 = vpop.permute.xlu0 %445
    %v448 = vmul.f32 %v442, %v436
    %v449 = vmul.f32 %v442, %v437
    %v450 = vmul.f32 %v446, %v438
    %v451 = vmul.f32 %v446, %v439
    %v452 = vadd.f32 %v402, %v448
    %v453 = vadd.f32 %v403, %v449
    %v454 = vadd.f32 %v404, %v450
    %v455 = vadd.f32 %v405, %v451
    %456 = vrot.lane.b32.xlu0 %v248, 28
    %v457 = vpop.permute.xlu0 %456
    %458 = vrot.lane.b32.xlu0 %v249, 28
    %v459 = vpop.permute.xlu0 %458
    %460 = vrot.lane.b32.xlu0 %v250, 28
    %v461 = vpop.permute.xlu0 %460
    %462 = vrot.lane.b32.xlu0 %v251, 28
    %v463 = vpop.permute.xlu0 %462
    %vm464 = vcmask 228352
    %v465 = vsel %vm464, %v457, %v459
    %v466 = vsel %vm464, %v461, %v463
    %469 = vrot.lane.b32.xlu0 %v248, 44
    %v470 = vpop.permute.xlu0 %469
    %471 = vrot.lane.b32.xlu0 %v250, 44
    %v472 = vpop.permute.xlu0 %471
    %vm475 = vcmask 359424
    %v476 = vsel %vm475, %v465, %v470
    %v477 = vsel %vm475, %v466, %v472
    %v478 = vlaneseq
    %v479 = vshrl.u32 %v478, 7
    %v480 = vsub.s32 4, %v479
    %v481 = vrot.slane %v40, %v480
    %v482 = vlaneseq
    %v483 = vshrl.u32 %v482, 7
    %v484 = vsub.s32 4, %v483
    %v485 = vrot.slane %v41, %v484
    %v486 = vmul.f32 %v476, %v481
    %v487 = vmul.f32 %v470, %v485
    %v488 = vmul.f32 %v477, %v481
    %v489 = vmul.f32 %v472, %v485
    %490 = vset.pattern.permute.xlu0 5
    %491 = vperm.xlu0 %490, %v65
    %v492 = vpop.permute.xlu0 %491
    %494 = vset.pattern.permute.xlu0 5
    %495 = vperm.xlu0 %494, %v66
    %v496 = vpop.permute.xlu0 %495
    %v498 = vmul.f32 %v492, %v486
    %v499 = vmul.f32 %v492, %v487
    %v500 = vmul.f32 %v496, %v488
    %v501 = vmul.f32 %v496, %v489
    %v502 = vadd.f32 %v452, %v498
    %v503 = vadd.f32 %v453, %v499
    %v504 = vadd.f32 %v454, %v500
    %v505 = vadd.f32 %v455, %v501
    %506 = vset.pattern.permute.xlu0 10
    %507 = vperm.xlu0 %506, %v65
    %v508 = vpop.permute.xlu0 %507
    %510 = vset.pattern.permute.xlu0 10
    %511 = vperm.xlu0 %510, %v66
    %v512 = vpop.permute.xlu0 %511
    %v514 = vadd.f32 %v502, %v508
    %v515 = vadd.f32 %v503, %v508
    %v516 = vadd.f32 %v504, %v512
    %v517 = vadd.f32 %v505, %v512
    %vm518 = vcmp.ge.f32.partialorder %v514, 0.0
    %vm519 = vcmp.ge.f32.partialorder %v515, 0.0
    %vm520 = vcmp.ge.f32.partialorder %v516, 0.0
    %vm521 = vcmp.ge.f32.partialorder %v517, 0.0
    %v522 = vstv %s69
    %v523 = vmul.f32 %v522, %v514
    %v524 = vmul.f32 %v522, %v515
    %v525 = vmul.f32 %v522, %v516
    %v526 = vmul.f32 %v522, %v517
    %v527 = vsel %vm518, %v514, %v523
    %v528 = vsel %vm519, %v515, %v524
    %v529 = vsel %vm520, %v516, %v525
    %v530 = vsel %vm521, %v517, %v526
    %531 = vset.pattern.permute.xlu0 11
    %532 = vperm.xlu0 %531, %v65
    %v533 = vpop.permute.xlu0 %532
    %vm535 = vcmask 130048
    %v537 = vsel %vm535, %v67, 0
    %539 = vmatprep.subr.mxu0 %v528
    %540 = vmatpush1.msra.mxu0 %v527
    %541 = vmatprep.subr.mxu0 %v530
    %542 = vmatpush1.msra.mxu0 %v529
    %543 = vmatprep.subr.mxu0 0.0
    %544 = vmatpush1.msra.mxu0 0.0
    %545 = vmatprep.subr.mxu0 0.0
    %546 = vmatpush1.msra.mxu0 0.0
    %547 = vmatprep.subr.mxu0 0.0
    %548 = vmatpush1.msra.mxu0 0.0
    %549 = vmatprep.subr.mxu0 0.0
    %550 = vmatpush1.msra.mxu0 0.0
    %551 = vmatprep.subr.mxu0 0.0
    %552 = vmatpush1.msra.mxu0 0.0
    %553 = vmatprep.subr.mxu0 0.0
    %554 = vmatpush1.msra.mxu0 0.0
    %555 = vmatprep.subr.mxu0 0.0
    %556 = vmatpush1.msra.mxu0 0.0
    %557 = vmatprep.subr.mxu0 0.0
    %558 = vmatpush1.msra.mxu0 0.0
    %559 = vmatprep.subr.mxu0 0.0
    %560 = vmatpush1.msra.mxu0 0.0
    %561 = vmatprep.subr.mxu0 0.0
    %562 = vmatpush1.msra.mxu0 0.0
    %563 = vmatprep.subr.mxu0 0.0
    %564 = vmatpush1.msra.mxu0 0.0
    %565 = vmatprep.subr.mxu0 0.0
    %566 = vmatpush1.msra.mxu0 0.0
    %567 = vmatprep.subr.mxu0 0.0
    %568 = vmatpush1.msra.mxu0 0.0
    %569 = vmatprep.subr.mxu0 0.0
    %570 = vmatpush1.msra.mxu0 0.0
    %571 = vmatprep.subr.mxu0 0.0
    %572 = vmatpush1.msra.mxu0 0.0
    %573 = vmatprep.subr.mxu0 0.0
    %574 = vmatpush1.msra.mxu0 0.0
    %575 = vmatprep.subr.mxu0 0.0
    %576 = vmatpush1.msra.mxu0 0.0
    %577 = vmatprep.subr.mxu0 0.0
    %578 = vmatpush1.msra.mxu0 0.0
    %579 = vmatprep.subr.mxu0 0.0
    %580 = vmatpush1.msra.mxu0 0.0
    %581 = vmatprep.subr.mxu0 0.0
    %582 = vmatpush1.msra.mxu0 0.0
    %583 = vmatprep.subr.mxu0 0.0
    %584 = vmatpush1.msra.mxu0 0.0
    %585 = vmatprep.subr.mxu0 0.0
    %586 = vmatpush1.msra.mxu0 0.0
    %587 = vmatprep.subr.mxu0 0.0
    %588 = vmatpush1.msra.mxu0 0.0
    %589 = vmatprep.subr.mxu0 0.0
    %590 = vmatpush1.msra.mxu0 0.0
    %591 = vmatprep.subr.mxu0 0.0
    %592 = vmatpush1.msra.mxu0 0.0
    %593 = vmatprep.subr.mxu0 0.0
    %594 = vmatpush1.msra.mxu0 0.0
    %595 = vmatprep.subr.mxu0 0.0
    %596 = vmatpush1.msra.mxu0 0.0
    %597 = vmatprep.subr.mxu0 0.0
    %598 = vmatpush1.msra.mxu0 0.0
    %599 = vmatprep.subr.mxu0 0.0
    %600 = vmatpush1.msra.mxu0 0.0
    %601 = vmatprep.subr.mxu0 0.0
    %602 = vmatpush1.msra.mxu0 0.0
    %603 = vmatprep.mubr.f32.mxu0 0.0
    %604 = vmatmul.mubr.f32.gmra.mrb[0].mxu0 %v537
    %v605 = vpop.f32.mrb[0].mxu0
    %v606 = vadd.f32 %v533, %v605
    %v607 = vpop.f32.mrb[0].mxu0
    %v608 = vadd.f32 %v533, %v607
    %609 = vdwg.mxu0
    %v610 = vmul.f32 %v606, %v606
    %v611 = vmul.f32 %v608, %v608
    %v613 = vsel %vm535, %v37, 0
    %v616 = vsel %vm535, %v39, 0
    %v619 = vsel %vm535, %v611, 0
    %621 = vmatprep.subr.mxu0 %v619
    %622 = vmatpush1.xpose.msra.mxu0 %v610
    %623 = vmatprep.subr.mxu0 0.0
    %624 = vmatpush1.xpose.msra.mxu0 0.0
    %625 = vmatprep.subr.mxu0 0.0
    %626 = vmatpush1.xpose.msra.mxu0 0.0
    %627 = vmatprep.subr.mxu0 0.0
    %628 = vmatpush1.xpose.msra.mxu0 0.0
    %629 = vmatprep.subr.mxu0 0.0
    %630 = vmatpush1.xpose.msra.mxu0 0.0
    %631 = vmatprep.subr.mxu0 0.0
    %632 = vmatpush1.xpose.msra.mxu0 0.0
    %633 = vmatprep.subr.mxu0 0.0
    %634 = vmatpush1.xpose.msra.mxu0 0.0
    %635 = vmatprep.subr.mxu0 0.0
    %636 = vmatpush1.xpose.msra.mxu0 0.0
    %637 = vmatprep.subr.mxu0 0.0
    %638 = vmatpush1.xpose.msra.mxu0 0.0
    %639 = vmatprep.subr.mxu0 0.0
    %640 = vmatpush1.xpose.msra.mxu0 0.0
    %641 = vmatprep.subr.mxu0 0.0
    %642 = vmatpush1.xpose.msra.mxu0 0.0
    %643 = vmatprep.subr.mxu0 0.0
    %644 = vmatpush1.xpose.msra.mxu0 0.0
    %645 = vmatprep.subr.mxu0 0.0
    %646 = vmatpush1.xpose.msra.mxu0 0.0
    %647 = vmatprep.subr.mxu0 0.0
    %648 = vmatpush1.xpose.msra.mxu0 0.0
    %649 = vmatprep.subr.mxu0 0.0
    %650 = vmatpush1.xpose.msra.mxu0 0.0
    %651 = vmatprep.subr.mxu0 0.0
    %652 = vmatpush1.xpose.msra.mxu0 0.0
    %653 = vmatprep.subr.mxu0 0.0
    %654 = vmatpush1.xpose.msra.mxu0 0.0
    %655 = vmatprep.subr.mxu0 0.0
    %656 = vmatpush1.xpose.msra.mxu0 0.0
    %657 = vmatprep.subr.mxu0 0.0
    %658 = vmatpush1.xpose.msra.mxu0 0.0
    %659 = vmatprep.subr.mxu0 0.0
    %660 = vmatpush1.xpose.msra.mxu0 0.0
    %661 = vmatprep.subr.mxu0 0.0
    %662 = vmatpush1.xpose.msra.mxu0 0.0
    %663 = vmatprep.subr.mxu0 0.0
    %664 = vmatpush1.xpose.msra.mxu0 0.0
    %665 = vmatprep.subr.mxu0 0.0
    %666 = vmatpush1.xpose.msra.mxu0 0.0
    %667 = vmatprep.subr.mxu0 0.0
    %668 = vmatpush1.xpose.msra.mxu0 0.0
    %669 = vmatprep.subr.mxu0 0.0
    %670 = vmatpush1.xpose.msra.mxu0 0.0
    %671 = vmatprep.subr.mxu0 0.0
    %672 = vmatpush1.xpose.msra.mxu0 0.0
    %673 = vmatprep.subr.mxu0 0.0
    %674 = vmatpush1.xpose.msra.mxu0 0.0
    %675 = vmatprep.subr.mxu0 0.0
    %676 = vmatpush1.xpose.msra.mxu0 0.0
    %677 = vmatprep.subr.mxu0 0.0
    %678 = vmatpush1.xpose.msra.mxu0 0.0
    %679 = vmatprep.subr.mxu0 0.0
    %680 = vmatpush1.xpose.msra.mxu0 0.0
    %681 = vmatprep.subr.mxu0 0.0
    %682 = vmatpush1.xpose.msra.mxu0 0.0
    %683 = vmatprep.subr.mxu0 0.0
    %684 = vmatpush1.xpose.msra.mxu0 0.0
    %685 = vmatprep.mubr.f32.mxu0 %v613
    %686 = vmatmul.mubr.f32.gmra.mrb[0].mxu0 %v36
    %v687 = vpop.f32.mrb[0].mxu0
    %v688 = vadd.f32 0.0, %v687
    %v689 = vpop.f32.mrb[0].mxu0
    %690 = vmatprep.mubr.f32.mxu0 %v616
    %691 = vmatmul.mubr.f32.gmra.mrb[0].mxu0 %v38
    %v692 = vpop.f32.mrb[0].mxu0
    %v693 = vadd.f32 0.0, %v692
    %v694 = vpop.f32.mrb[0].mxu0
    %695 = vdwg.mxu0
    %v696 = vmul.f32 %v688, 0.11111111
    %v697 = vmul.f32 %v693, 0.11111111
    %v698 = vlaneseq
    %v699 = vshrl.u32 %v698, 7
    %v700 = vsub.s32 0, %v699
    %v701 = vrot.slane %v62, %v700
    %vm702 = vcmask 64512
    %v704 = vsel %vm702, %v696, 0
    %v707 = vsel %vm702, %v697, 0
    %709 = vmatprep.subr.mxu0 0.0
    %710 = vmatpush1.msra.mxu0 %v59
    %711 = vmatprep.subr.mxu0 0.0
    %712 = vmatpush1.msra.mxu0 0.0
    %713 = vmatprep.subr.mxu0 0.0
    %714 = vmatpush1.msra.mxu0 0.0
    %715 = vmatprep.subr.mxu0 0.0
    %716 = vmatpush1.msra.mxu0 0.0
    %717 = vmatprep.subr.mxu0 0.0
    %718 = vmatpush1.msra.mxu0 0.0
    %719 = vmatprep.subr.mxu0 0.0
    %720 = vmatpush1.msra.mxu0 0.0
    %721 = vmatprep.subr.mxu0 0.0
    %722 = vmatpush1.msra.mxu0 0.0
    %723 = vmatprep.subr.mxu0 0.0
    %724 = vmatpush1.msra.mxu0 0.0
    %725 = vmatprep.subr.mxu0 0.0
    %726 = vmatpush1.msra.mxu0 0.0
    %727 = vmatprep.subr.mxu0 0.0
    %728 = vmatpush1.msra.mxu0 0.0
    %729 = vmatprep.subr.mxu0 0.0
    %730 = vmatpush1.msra.mxu0 0.0
    %731 = vmatprep.subr.mxu0 0.0
    %732 = vmatpush1.msra.mxu0 0.0
    %733 = vmatprep.subr.mxu0 0.0
    %734 = vmatpush1.msra.mxu0 0.0
    %735 = vmatprep.subr.mxu0 0.0
    %736 = vmatpush1.msra.mxu0 0.0
    %737 = vmatprep.subr.mxu0 0.0
    %738 = vmatpush1.msra.mxu0 0.0
    %739 = vmatprep.subr.mxu0 0.0
    %740 = vmatpush1.msra.mxu0 0.0
    %741 = vmatprep.subr.mxu0 0.0
    %742 = vmatpush1.msra.mxu0 0.0
    %743 = vmatprep.subr.mxu0 0.0
    %744 = vmatpush1.msra.mxu0 0.0
    %745 = vmatprep.subr.mxu0 0.0
    %746 = vmatpush1.msra.mxu0 0.0
    %747 = vmatprep.subr.mxu0 0.0
    %748 = vmatpush1.msra.mxu0 0.0
    %749 = vmatprep.subr.mxu0 0.0
    %750 = vmatpush1.msra.mxu0 0.0
    %751 = vmatprep.subr.mxu0 0.0
    %752 = vmatpush1.msra.mxu0 0.0
    %753 = vmatprep.subr.mxu0 0.0
    %754 = vmatpush1.msra.mxu0 0.0
    %755 = vmatprep.subr.mxu0 0.0
    %756 = vmatpush1.msra.mxu0 0.0
    %757 = vmatprep.subr.mxu0 0.0
    %758 = vmatpush1.msra.mxu0 0.0
    %759 = vmatprep.subr.mxu0 0.0
    %760 = vmatpush1.msra.mxu0 0.0
    %761 = vmatprep.subr.mxu0 0.0
    %762 = vmatpush1.msra.mxu0 0.0
    %763 = vmatprep.subr.mxu0 0.0
    %764 = vmatpush1.msra.mxu0 0.0
    %765 = vmatprep.subr.mxu0 0.0
    %766 = vmatpush1.msra.mxu0 0.0
    %767 = vmatprep.subr.mxu0 0.0
    %768 = vmatpush1.msra.mxu0 0.0
    %769 = vmatprep.subr.mxu0 0.0
    %770 = vmatpush1.msra.mxu0 0.0
    %771 = vmatprep.subr.mxu0 0.0
    %772 = vmatpush1.msra.mxu0 0.0
    %773 = vmatprep.mubr.f32.mxu0 0.0
    %774 = vmatmul.mubr.f32.gmra.mrb[0].mxu0 %v704
    %v775 = vpop.f32.mrb[0].mxu0
    %v776 = vadd.f32 %v701, %v775
    %v777 = vpop.f32.mrb[0].mxu0
    %778 = vmatprep.mubr.f32.mxu0 0.0
    %779 = vmatmul.mubr.f32.gmra.mrb[0].mxu0 %v707
    %v780 = vpop.f32.mrb[0].mxu0
    %v781 = vadd.f32 %v701, %v780
    %v782 = vpop.f32.mrb[0].mxu0
    %783 = vdwg.mxu0
    %v784 = vlaneseq
    %v785 = vshrl.u32 %v784, 7
    %v786 = vsub.s32 1, %v785
    %v787 = vrot.slane %v62, %v786
    %v789 = vsel %vm535, 0.0, 0
    %791 = vmatprep.subr.mxu0 0.0
    %792 = vmatpush1.msra.mxu0 %v60
    %793 = vmatprep.subr.mxu0 0.0
    %794 = vmatpush1.msra.mxu0 %v61
    %795 = vmatprep.subr.mxu0 0.0
    %796 = vmatpush1.msra.mxu0 0.0
    %797 = vmatprep.subr.mxu0 0.0
    %798 = vmatpush1.msra.mxu0 0.0
    %799 = vmatprep.subr.mxu0 0.0
    %800 = vmatpush1.msra.mxu0 0.0
    %801 = vmatprep.subr.mxu0 0.0
    %802 = vmatpush1.msra.mxu0 0.0
    %803 = vmatprep.subr.mxu0 0.0
    %804 = vmatpush1.msra.mxu0 0.0
    %805 = vmatprep.subr.mxu0 0.0
    %806 = vmatpush1.msra.mxu0 0.0
    %807 = vmatprep.subr.mxu0 0.0
    %808 = vmatpush1.msra.mxu0 0.0
    %809 = vmatprep.subr.mxu0 0.0
    %810 = vmatpush1.msra.mxu0 0.0
    %811 = vmatprep.subr.mxu0 0.0
    %812 = vmatpush1.msra.mxu0 0.0
    %813 = vmatprep.subr.mxu0 0.0
    %814 = vmatpush1.msra.mxu0 0.0
    %815 = vmatprep.subr.mxu0 0.0
    %816 = vmatpush1.msra.mxu0 0.0
    %817 = vmatprep.subr.mxu0 0.0
    %818 = vmatpush1.msra.mxu0 0.0
    %819 = vmatprep.subr.mxu0 0.0
    %820 = vmatpush1.msra.mxu0 0.0
    %821 = vmatprep.subr.mxu0 0.0
    %822 = vmatpush1.msra.mxu0 0.0
    %823 = vmatprep.subr.mxu0 0.0
    %824 = vmatpush1.msra.mxu0 0.0
    %825 = vmatprep.subr.mxu0 0.0
    %826 = vmatpush1.msra.mxu0 0.0
    %827 = vmatprep.subr.mxu0 0.0
    %828 = vmatpush1.msra.mxu0 0.0
    %829 = vmatprep.subr.mxu0 0.0
    %830 = vmatpush1.msra.mxu0 0.0
    %831 = vmatprep.subr.mxu0 0.0
    %832 = vmatpush1.msra.mxu0 0.0
    %833 = vmatprep.subr.mxu0 0.0
    %834 = vmatpush1.msra.mxu0 0.0
    %835 = vmatprep.subr.mxu0 0.0
    %836 = vmatpush1.msra.mxu0 0.0
    %837 = vmatprep.subr.mxu0 0.0
    %838 = vmatpush1.msra.mxu0 0.0
    %839 = vmatprep.subr.mxu0 0.0
    %840 = vmatpush1.msra.mxu0 0.0
    %841 = vmatprep.subr.mxu0 0.0
    %842 = vmatpush1.msra.mxu0 0.0
    %843 = vmatprep.subr.mxu0 0.0
    %844 = vmatpush1.msra.mxu0 0.0
    %845 = vmatprep.subr.mxu0 0.0
    %846 = vmatpush1.msra.mxu0 0.0
    %847 = vmatprep.subr.mxu0 0.0
    %848 = vmatpush1.msra.mxu0 0.0
    %849 = vmatprep.subr.mxu0 0.0
    %850 = vmatpush1.msra.mxu0 0.0
    %851 = vmatprep.subr.mxu0 0.0
    %852 = vmatpush1.msra.mxu0 0.0
    %853 = vmatprep.subr.mxu0 0.0
    %854 = vmatpush1.msra.mxu0 0.0
    %855 = vmatprep.mubr.f32.mxu0 0.0
    %856 = vmatmul.mubr.f32.gmra.mrb[0].mxu0 %v789
    %v857 = vpop.f32.mrb[0].mxu0
    %v858 = vadd.f32 %v787, %v857
    %v859 = vpop.f32.mrb[0].mxu0
    %860 = vdwg.mxu0
    %v861 = vadd.f32 %v776, %v858
    %v862 = vxor.u32 %v861, 2147483648
    %v863 = vmul.f32 %v862, 1.442695
    %v864 = vpow.pop %v863
    %v865 = vadd.f32 %v864, 1.0
    %v866 = vrcp.pop %v865
    %v867 = vmul.f32 1.0, %v866
    %869 = vrot.lane.b32.xlu0 %v858, 96
    %v870 = vpop.permute.xlu0 %869
    %v872 = vmul.f32 %v867, %v870
    %874 = vrot.lane.b32.xlu0 %v872, 32
    %v875 = vpop.permute.xlu0 %874
    %v877 = vadd.f32 %v776, %v875
    %v878 = vtanh.pop %v877
    %v879 = vsub.f32 1.0, %v867
    %881 = vrot.lane.b32.xlu0 %v878, 112
    %v882 = vpop.permute.xlu0 %881
    %v884 = vmul.f32 %v879, %v882
    %v885 = vmul.f32 %v867, 0.0
    %v886 = vadd.f32 %v884, %v885
    %888 = vrot.lane.b32.xlu0 %v886, 112
    %v889 = vpop.permute.xlu0 %888
    %v890 = vsel %vm535, %v889, 0
    %892 = vmatprep.subr.mxu0 0.0
    %893 = vmatpush1.msra.mxu0 %v60
    %894 = vmatprep.subr.mxu0 0.0
    %895 = vmatpush1.msra.mxu0 %v61
    %896 = vmatprep.subr.mxu0 0.0
    %897 = vmatpush1.msra.mxu0 0.0
    %898 = vmatprep.subr.mxu0 0.0
    %899 = vmatpush1.msra.mxu0 0.0
    %900 = vmatprep.subr.mxu0 0.0
    %901 = vmatpush1.msra.mxu0 0.0
    %902 = vmatprep.subr.mxu0 0.0
    %903 = vmatpush1.msra.mxu0 0.0
    %904 = vmatprep.subr.mxu0 0.0
    %905 = vmatpush1.msra.mxu0 0.0
    %906 = vmatprep.subr.mxu0 0.0
    %907 = vmatpush1.msra.mxu0 0.0
    %908 = vmatprep.subr.mxu0 0.0
    %909 = vmatpush1.msra.mxu0 0.0
    %910 = vmatprep.subr.mxu0 0.0
    %911 = vmatpush1.msra.mxu0 0.0
    %912 = vmatprep.subr.mxu0 0.0
    %913 = vmatpush1.msra.mxu0 0.0
    %914 = vmatprep.subr.mxu0 0.0
    %915 = vmatpush1.msra.mxu0 0.0
    %916 = vmatprep.subr.mxu0 0.0
    %917 = vmatpush1.msra.mxu0 0.0
    %918 = vmatprep.subr.mxu0 0.0
    %919 = vmatpush1.msra.mxu0 0.0
    %920 = vmatprep.subr.mxu0 0.0
    %921 = vmatpush1.msra.mxu0 0.0
    %922 = vmatprep.subr.mxu0 0.0
    %923 = vmatpush1.msra.mxu0 0.0
    %924 = vmatprep.subr.mxu0 0.0
    %925 = vmatpush1.msra.mxu0 0.0
    %926 = vmatprep.subr.mxu0 0.0
    %927 = vmatpush1.msra.mxu0 0.0
    %928 = vmatprep.subr.mxu0 0.0
    %929 = vmatpush1.msra.mxu0 0.0
    %930 = vmatprep.subr.mxu0 0.0
    %931 = vmatpush1.msra.mxu0 0.0
    %932 = vmatprep.subr.mxu0 0.0
    %933 = vmatpush1.msra.mxu0 0.0
    %934 = vmatprep.subr.mxu0 0.0
    %935 = vmatpush1.msra.mxu0 0.0
    %936 = vmatprep.subr.mxu0 0.0
    %937 = vmatpush1.msra.mxu0 0.0
    %938 = vmatprep.subr.mxu0 0.0
    %939 = vmatpush1.msra.mxu0 0.0
    %940 = vmatprep.subr.mxu0 0.0
    %941 = vmatpush1.msra.mxu0 0.0
    %942 = vmatprep.subr.mxu0 0.0
    %943 = vmatpush1.msra.mxu0 0.0
    %944 = vmatprep.subr.mxu0 0.0
    %945 = vmatpush1.msra.mxu0 0.0
    %946 = vmatprep.subr.mxu0 0.0
    %947 = vmatpush1.msra.mxu0 0.0
    %948 = vmatprep.subr.mxu0 0.0
    %949 = vmatpush1.msra.mxu0 0.0
    %950 = vmatprep.subr.mxu0 0.0
    %951 = vmatpush1.msra.mxu0 0.0
    %952 = vmatprep.subr.mxu0 0.0
    %953 = vmatpush1.msra.mxu0 0.0
    %954 = vmatprep.subr.mxu0 0.0
    %955 = vmatpush1.msra.mxu0 0.0
    %956 = vmatprep.mubr.f32.mxu0 0.0
    %957 = vmatmul.mubr.f32.gmra.mrb[0].mxu0 %v890
    %v958 = vpop.f32.mrb[0].mxu0
    %v959 = vadd.f32 %v787, %v958
    %v960 = vpop.f32.mrb[0].mxu0
    %961 = vdwg.mxu0
    %v963 = vrot.slane %v959, 6
    %v965 = vadd.f32 %v776, %v963
    %v966 = vxor.u32 %v965, 2147483648
    %v967 = vmul.f32 %v966, 1.442695
    %v968 = vpow.pop %v967
    %v969 = vadd.f32 %v968, 1.0
    %v970 = vrcp.pop %v969
    %v971 = vmul.f32 1.0, %v970
    %972 = vrot.lane.b32.xlu0 %v963, 96
    %v973 = vpop.permute.xlu0 %972
    %v975 = vmul.f32 %v971, %v973
    %977 = vrot.lane.b32.xlu0 %v975, 32
    %v978 = vpop.permute.xlu0 %977
    %v980 = vadd.f32 %v776, %v978
    %v981 = vtanh.pop %v980
    %v982 = vsub.f32 1.0, %v971
    %984 = vrot.lane.b32.xlu0 %v981, 112
    %v985 = vpop.permute.xlu0 %984
    %v987 = vmul.f32 %v982, %v985
    %v988 = vrot.slane %v886, 6
    %v990 = vmul.f32 %v971, %v988
    %v991 = vadd.f32 %v987, %v990
    %v993 = vrot.slane %v991, 2
    %994 = vrot.lane.b32.xlu0 %v993, 112
    %v995 = vpop.permute.xlu0 %994
    %v996 = vsel %vm535, %v995, 0
    %998 = vmatprep.subr.mxu0 0.0
    %999 = vmatpush1.msra.mxu0 %v60
    %1000 = vmatprep.subr.mxu0 0.0
    %1001 = vmatpush1.msra.mxu0 %v61
    %1002 = vmatprep.subr.mxu0 0.0
    %1003 = vmatpush1.msra.mxu0 0.0
    %1004 = vmatprep.subr.mxu0 0.0
    %1005 = vmatpush1.msra.mxu0 0.0
    %1006 = vmatprep.subr.mxu0 0.0
    %1007 = vmatpush1.msra.mxu0 0.0
    %1008 = vmatprep.subr.mxu0 0.0
    %1009 = vmatpush1.msra.mxu0 0.0
    %1010 = vmatprep.subr.mxu0 0.0
    %1011 = vmatpush1.msra.mxu0 0.0
    %1012 = vmatprep.subr.mxu0 0.0
    %1013 = vmatpush1.msra.mxu0 0.0
    %1014 = vmatprep.subr.mxu0 0.0
    %1015 = vmatpush1.msra.mxu0 0.0
    %1016 = vmatprep.subr.mxu0 0.0
    %1017 = vmatpush1.msra.mxu0 0.0
    %1018 = vmatprep.subr.mxu0 0.0
    %1019 = vmatpush1.msra.mxu0 0.0
    %1020 = vmatprep.subr.mxu0 0.0
    %1021 = vmatpush1.msra.mxu0 0.0
    %1022 = vmatprep.subr.mxu0 0.0
    %1023 = vmatpush1.msra.mxu0 0.0
    %1024 = vmatprep.subr.mxu0 0.0
    %1025 = vmatpush1.msra.mxu0 0.0
    %1026 = vmatprep.subr.mxu0 0.0
    %1027 = vmatpush1.msra.mxu0 0.0
    %1028 = vmatprep.subr.mxu0 0.0
    %1029 = vmatpush1.msra.mxu0 0.0
    %1030 = vmatprep.subr.mxu0 0.0
    %1031 = vmatpush1.msra.mxu0 0.0
    %1032 = vmatprep.subr.mxu0 0.0
    %1033 = vmatpush1.msra.mxu0 0.0
    %1034 = vmatprep.subr.mxu0 0.0
    %1035 = vmatpush1.msra.mxu0 0.0
    %1036 = vmatprep.subr.mxu0 0.0
    %1037 = vmatpush1.msra.mxu0 0.0
    %1038 = vmatprep.subr.mxu0 0.0
    %1039 = vmatpush1.msra.mxu0 0.0
    %1040 = vmatprep.subr.mxu0 0.0
    %1041 = vmatpush1.msra.mxu0 0.0
    %1042 = vmatprep.subr.mxu0 0.0
    %1043 = vmatpush1.msra.mxu0 0.0
    %1044 = vmatprep.subr.mxu0 0.0
    %1045 = vmatpush1.msra.mxu0 0.0
    %1046 = vmatprep.subr.mxu0 0.0
    %1047 = vmatpush1.msra.mxu0 0.0
    %1048 = vmatprep.subr.mxu0 0.0
    %1049 = vmatpush1.msra.mxu0 0.0
    %1050 = vmatprep.subr.mxu0 0.0
    %1051 = vmatpush1.msra.mxu0 0.0
    %1052 = vmatprep.subr.mxu0 0.0
    %1053 = vmatpush1.msra.mxu0 0.0
    %1054 = vmatprep.subr.mxu0 0.0
    %1055 = vmatpush1.msra.mxu0 0.0
    %1056 = vmatprep.subr.mxu0 0.0
    %1057 = vmatpush1.msra.mxu0 0.0
    %1058 = vmatprep.subr.mxu0 0.0
    %1059 = vmatpush1.msra.mxu0 0.0
    %1060 = vmatprep.subr.mxu0 0.0
    %1061 = vmatpush1.msra.mxu0 0.0
    %1062 = vmatprep.mubr.f32.mxu0 0.0
    %1063 = vmatmul.mubr.f32.gmra.mrb[0].mxu0 %v996
    %v1064 = vpop.f32.mrb[0].mxu0
    %v1065 = vadd.f32 %v787, %v1064
    %v1066 = vpop.f32.mrb[0].mxu0
    %1067 = vdwg.mxu0
    %v1069 = vrot.slane %v1065, 4
    %v1071 = vadd.f32 %v776, %v1069
    %v1072 = vxor.u32 %v1071, 2147483648
    %v1073 = vmul.f32 %v1072, 1.442695
    %v1074 = vpow.pop %v1073
    %v1075 = vadd.f32 %v1074, 1.0
    %v1076 = vrcp.pop %v1075
    %v1077 = vmul.f32 1.0, %v1076
    %1078 = vrot.lane.b32.xlu0 %v1069, 96
    %v1079 = vpop.permute.xlu0 %1078
    %v1081 = vmul.f32 %v1077, %v1079
    %1083 = vrot.lane.b32.xlu0 %v1081, 32
    %v1084 = vpop.permute.xlu0 %1083
    %v1086 = vadd.f32 %v776, %v1084
    %v1087 = vtanh.pop %v1086
    %v1088 = vsub.f32 1.0, %v1077
    %1090 = vrot.lane.b32.xlu0 %v1087, 112
    %v1091 = vpop.permute.xlu0 %1090
    %v1093 = vmul.f32 %v1088, %v1091
    %v1094 = vrot.slane %v991, 6
    %v1096 = vmul.f32 %v1077, %v1094
    %v1097 = vadd.f32 %v1093, %v1096
    %v1099 = vrot.slane %v1097, 4
    %1100 = vrot.lane.b32.xlu0 %v1099, 112
    %v1101 = vpop.permute.xlu0 %1100
    %v1102 = vsel %vm535, %v1101, 0
    %1104 = vmatprep.subr.mxu0 0.0
    %1105 = vmatpush1.msra.mxu0 %v60
    %1106 = vmatprep.subr.mxu0 0.0
    %1107 = vmatpush1.msra.mxu0 %v61
    %1108 = vmatprep.subr.mxu0 0.0
    %1109 = vmatpush1.msra.mxu0 0.0
    %1110 = vmatprep.subr.mxu0 0.0
    %1111 = vmatpush1.msra.mxu0 0.0
    %1112 = vmatprep.subr.mxu0 0.0
    %1113 = vmatpush1.msra.mxu0 0.0
    %1114 = vmatprep.subr.mxu0 0.0
    %1115 = vmatpush1.msra.mxu0 0.0
    %1116 = vmatprep.subr.mxu0 0.0
    %1117 = vmatpush1.msra.mxu0 0.0
    %1118 = vmatprep.subr.mxu0 0.0
    %1119 = vmatpush1.msra.mxu0 0.0
    %1120 = vmatprep.subr.mxu0 0.0
    %1121 = vmatpush1.msra.mxu0 0.0
    %1122 = vmatprep.subr.mxu0 0.0
    %1123 = vmatpush1.msra.mxu0 0.0
    %1124 = vmatprep.subr.mxu0 0.0
    %1125 = vmatpush1.msra.mxu0 0.0
    %1126 = vmatprep.subr.mxu0 0.0
    %1127 = vmatpush1.msra.mxu0 0.0
    %1128 = vmatprep.subr.mxu0 0.0
    %1129 = vmatpush1.msra.mxu0 0.0
    %1130 = vmatprep.subr.mxu0 0.0
    %1131 = vmatpush1.msra.mxu0 0.0
    %1132 = vmatprep.subr.mxu0 0.0
    %1133 = vmatpush1.msra.mxu0 0.0
    %1134 = vmatprep.subr.mxu0 0.0
    %1135 = vmatpush1.msra.mxu0 0.0
    %1136 = vmatprep.subr.mxu0 0.0
    %1137 = vmatpush1.msra.mxu0 0.0
    %1138 = vmatprep.subr.mxu0 0.0
    %1139 = vmatpush1.msra.mxu0 0.0
    %1140 = vmatprep.subr.mxu0 0.0
    %1141 = vmatpush1.msra.mxu0 0.0
    %1142 = vmatprep.subr.mxu0 0.0
    %1143 = vmatpush1.msra.mxu0 0.0
    %1144 = vmatprep.subr.mxu0 0.0
    %1145 = vmatpush1.msra.mxu0 0.0
    %1146 = vmatprep.subr.mxu0 0.0
    %1147 = vmatpush1.msra.mxu0 0.0
    %1148 = vmatprep.subr.mxu0 0.0
    %1149 = vmatpush1.msra.mxu0 0.0
    %1150 = vmatprep.subr.mxu0 0.0
    %1151 = vmatpush1.msra.mxu0 0.0
    %1152 = vmatprep.subr.mxu0 0.0
    %1153 = vmatpush1.msra.mxu0 0.0
    %1154 = vmatprep.subr.mxu0 0.0
    %1155 = vmatpush1.msra.mxu0 0.0
    %1156 = vmatprep.subr.mxu0 0.0
    %1157 = vmatpush1.msra.mxu0 0.0
    %1158 = vmatprep.subr.mxu0 0.0
    %1159 = vmatpush1.msra.mxu0 0.0
    %1160 = vmatprep.subr.mxu0 0.0
    %1161 = vmatpush1.msra.mxu0 0.0
    %1162 = vmatprep.subr.mxu0 0.0
    %1163 = vmatpush1.msra.mxu0 0.0
    %1164 = vmatprep.subr.mxu0 0.0
    %1165 = vmatpush1.msra.mxu0 0.0
    %1166 = vmatprep.subr.mxu0 0.0
    %1167 = vmatpush1.msra.mxu0 0.0
    %1168 = vmatprep.mubr.f32.mxu0 0.0
    %1169 = vmatmul.mubr.f32.gmra.mrb[0].mxu0 %v1102
    %v1170 = vpop.f32.mrb[0].mxu0
    %v1171 = vadd.f32 %v787, %v1170
    %v1172 = vpop.f32.mrb[0].mxu0
    %1173 = vdwg.mxu0
    %v1175 = vrot.slane %v1171, 2
    %v1177 = vadd.f32 %v776, %v1175
    %v1178 = vxor.u32 %v1177, 2147483648
    %v1179 = vmul.f32 %v1178, 1.442695
    %v1180 = vpow.pop %v1179
    %v1181 = vadd.f32 %v1180, 1.0
    %v1182 = vrcp.pop %v1181
    %v1183 = vmul.f32 1.0, %v1182
    %1184 = vrot.lane.b32.xlu0 %v1175, 96
    %v1185 = vpop.permute.xlu0 %1184
    %v1187 = vmul.f32 %v1183, %v1185
    %1189 = vrot.lane.b32.xlu0 %v1187, 32
    %v1190 = vpop.permute.xlu0 %1189
    %v1192 = vadd.f32 %v776, %v1190
    %v1193 = vtanh.pop %v1192
    %v1194 = vsub.f32 1.0, %v1183
    %1196 = vrot.lane.b32.xlu0 %v1193, 112
    %v1197 = vpop.permute.xlu0 %1196
    %v1199 = vmul.f32 %v1194, %v1197
    %v1200 = vrot.slane %v1097, 6
    %v1202 = vmul.f32 %v1183, %v1200
    %v1203 = vadd.f32 %v1199, %v1202
    %v1205 = vrot.slane %v1203, 6
    %1206 = vrot.lane.b32.xlu0 %v1205, 112
    %v1207 = vpop.permute.xlu0 %1206
    %v1208 = vsel %vm535, %v1207, 0
    %1210 = vmatprep.subr.mxu0 0.0
    %1211 = vmatpush1.msra.mxu0 %v60
    %1212 = vmatprep.subr.mxu0 0.0
    %1213 = vmatpush1.msra.mxu0 %v61
    %1214 = vmatprep.subr.mxu0 0.0
    %1215 = vmatpush1.msra.mxu0 0.0
    %1216 = vmatprep.subr.mxu0 0.0
    %1217 = vmatpush1.msra.mxu0 0.0
    %1218 = vmatprep.subr.mxu0 0.0
    %1219 = vmatpush1.msra.mxu0 0.0
    %1220 = vmatprep.subr.mxu0 0.0
    %1221 = vmatpush1.msra.mxu0 0.0
    %1222 = vmatprep.subr.mxu0 0.0
    %1223 = vmatpush1.msra.mxu0 0.0
    %1224 = vmatprep.subr.mxu0 0.0
    %1225 = vmatpush1.msra.mxu0 0.0
    %1226 = vmatprep.subr.mxu0 0.0
    %1227 = vmatpush1.msra.mxu0 0.0
    %1228 = vmatprep.subr.mxu0 0.0
    %1229 = vmatpush1.msra.mxu0 0.0
    %1230 = vmatprep.subr.mxu0 0.0
    %1231 = vmatpush1.msra.mxu0 0.0
    %1232 = vmatprep.subr.mxu0 0.0
    %1233 = vmatpush1.msra.mxu0 0.0
    %1234 = vmatprep.subr.mxu0 0.0
    %1235 = vmatpush1.msra.mxu0 0.0
    %1236 = vmatprep.subr.mxu0 0.0
    %1237 = vmatpush1.msra.mxu0 0.0
    %1238 = vmatprep.subr.mxu0 0.0
    %1239 = vmatpush1.msra.mxu0 0.0
    %1240 = vmatprep.subr.mxu0 0.0
    %1241 = vmatpush1.msra.mxu0 0.0
    %1242 = vmatprep.subr.mxu0 0.0
    %1243 = vmatpush1.msra.mxu0 0.0
    %1244 = vmatprep.subr.mxu0 0.0
    %1245 = vmatpush1.msra.mxu0 0.0
    %1246 = vmatprep.subr.mxu0 0.0
    %1247 = vmatpush1.msra.mxu0 0.0
    %1248 = vmatprep.subr.mxu0 0.0
    %1249 = vmatpush1.msra.mxu0 0.0
    %1250 = vmatprep.subr.mxu0 0.0
    %1251 = vmatpush1.msra.mxu0 0.0
    %1252 = vmatprep.subr.mxu0 0.0
    %1253 = vmatpush1.msra.mxu0 0.0
    %1254 = vmatprep.subr.mxu0 0.0
    %1255 = vmatpush1.msra.mxu0 0.0
    %1256 = vmatprep.subr.mxu0 0.0
    %1257 = vmatpush1.msra.mxu0 0.0
    %1258 = vmatprep.subr.mxu0 0.0
    %1259 = vmatpush1.msra.mxu0 0.0
    %1260 = vmatprep.subr.mxu0 0.0
    %1261 = vmatpush1.msra.mxu0 0.0
    %1262 = vmatprep.subr.mxu0 0.0
    %1263 = vmatpush1.msra.mxu0 0.0
    %1264 = vmatprep.subr.mxu0 0.0
    %1265 = vmatpush1.msra.mxu0 0.0
    %1266 = vmatprep.subr.mxu0 0.0
    %1267 = vmatpush1.msra.mxu0 0.0
    %1268 = vmatprep.subr.mxu0 0.0
    %1269 = vmatpush1.msra.mxu0 0.0
    %1270 = vmatprep.subr.mxu0 0.0
    %1271 = vmatpush1.msra.mxu0 0.0
    %1272 = vmatprep.subr.mxu0 0.0
    %1273 = vmatpush1.msra.mxu0 0.0
    %1274 = vmatprep.mubr.f32.mxu0 0.0
    %1275 = vmatmul.mubr.f32.gmra.mrb[0].mxu0 %v1208
    %v1276 = vpop.f32.mrb[0].mxu0
    %v1277 = vadd.f32 %v787, %v1276
    %v1278 = vpop.f32.mrb[0].mxu0
    %1279 = vdwg.mxu0
    %v1280 = vadd.f32 %v781, %v1277
    %v1281 = vxor.u32 %v1280, 2147483648
    %v1282 = vmul.f32 %v1281, 1.442695
    %v1283 = vpow.pop %v1282
    %v1284 = vadd.f32 %v1283, 1.0
    %v1285 = vrcp.pop %v1284
    %v1286 = vmul.f32 1.0, %v1285
    %1288 = vrot.lane.b32.xlu0 %v1277, 96
    %v1289 = vpop.permute.xlu0 %1288
    %v1291 = vmul.f32 %v1286, %v1289
    %1293 = vrot.lane.b32.xlu0 %v1291, 32
    %v1294 = vpop.permute.xlu0 %1293
    %v1296 = vadd.f32 %v781, %v1294
    %v1297 = vtanh.pop %v1296
    %v1298 = vsub.f32 1.0, %v1286
    %1300 = vrot.lane.b32.xlu0 %v1297, 112
    %v1301 = vpop.permute.xlu0 %1300
    %v1303 = vmul.f32 %v1298, %v1301
    %v1305 = vmul.f32 %v1286, %v1205
    %v1306 = vadd.f32 %v1303, %v1305
    %1308 = vrot.lane.b32.xlu0 %v1306, 112
    %v1309 = vpop.permute.xlu0 %1308
    %v1310 = vsel %vm535, %v1309, 0
    %1312 = vmatprep.subr.mxu0 0.0
    %1313 = vmatpush1.msra.mxu0 %v60
    %1314 = vmatprep.subr.mxu0 0.0
    %1315 = vmatpush1.msra.mxu0 %v61
    %1316 = vmatprep.subr.mxu0 0.0
    %1317 = vmatpush1.msra.mxu0 0.0
    %1318 = vmatprep.subr.mxu0 0.0
    %1319 = vmatpush1.msra.mxu0 0.0
    %1320 = vmatprep.subr.mxu0 0.0
    %1321 = vmatpush1.msra.mxu0 0.0
    %1322 = vmatprep.subr.mxu0 0.0
    %1323 = vmatpush1.msra.mxu0 0.0
    %1324 = vmatprep.subr.mxu0 0.0
    %1325 = vmatpush1.msra.mxu0 0.0
    %1326 = vmatprep.subr.mxu0 0.0
    %1327 = vmatpush1.msra.mxu0 0.0
    %1328 = vmatprep.subr.mxu0 0.0
    %1329 = vmatpush1.msra.mxu0 0.0
    %1330 = vmatprep.subr.mxu0 0.0
    %1331 = vmatpush1.msra.mxu0 0.0
    %1332 = vmatprep.subr.mxu0 0.0
    %1333 = vmatpush1.msra.mxu0 0.0
    %1334 = vmatprep.subr.mxu0 0.0
    %1335 = vmatpush1.msra.mxu0 0.0
    %1336 = vmatprep.subr.mxu0 0.0
    %1337 = vmatpush1.msra.mxu0 0.0
    %1338 = vmatprep.subr.mxu0 0.0
    %1339 = vmatpush1.msra.mxu0 0.0
    %1340 = vmatprep.subr.mxu0 0.0
    %1341 = vmatpush1.msra.mxu0 0.0
    %1342 = vmatprep.subr.mxu0 0.0
    %1343 = vmatpush1.msra.mxu0 0.0
    %1344 = vmatprep.subr.mxu0 0.0
    %1345 = vmatpush1.msra.mxu0 0.0
    %1346 = vmatprep.subr.mxu0 0.0
    %1347 = vmatpush1.msra.mxu0 0.0
    %1348 = vmatprep.subr.mxu0 0.0
    %1349 = vmatpush1.msra.mxu0 0.0
    %1350 = vmatprep.subr.mxu0 0.0
    %1351 = vmatpush1.msra.mxu0 0.0
    %1352 = vmatprep.subr.mxu0 0.0
    %1353 = vmatpush1.msra.mxu0 0.0
    %1354 = vmatprep.subr.mxu0 0.0
    %1355 = vmatpush1.msra.mxu0 0.0
    %1356 = vmatprep.subr.mxu0 0.0
    %1357 = vmatpush1.msra.mxu0 0.0
    %1358 = vmatprep.subr.mxu0 0.0
    %1359 = vmatpush1.msra.mxu0 0.0
    %1360 = vmatprep.subr.mxu0 0.0
    %1361 = vmatpush1.msra.mxu0 0.0
    %1362 = vmatprep.subr.mxu0 0.0
    %1363 = vmatpush1.msra.mxu0 0.0
    %1364 = vmatprep.subr.mxu0 0.0
    %1365 = vmatpush1.msra.mxu0 0.0
    %1366 = vmatprep.subr.mxu0 0.0
    %1367 = vmatpush1.msra.mxu0 0.0
    %1368 = vmatprep.subr.mxu0 0.0
    %1369 = vmatpush1.msra.mxu0 0.0
    %1370 = vmatprep.subr.mxu0 0.0
    %1371 = vmatpush1.msra.mxu0 0.0
    %1372 = vmatprep.subr.mxu0 0.0
    %1373 = vmatpush1.msra.mxu0 0.0
    %1374 = vmatprep.subr.mxu0 0.0
    %1375 = vmatpush1.msra.mxu0 0.0
    %1376 = vmatprep.mubr.f32.mxu0 0.0
    %1377 = vmatmul.mubr.f32.gmra.mrb[0].mxu0 %v1310
    %v1378 = vpop.f32.mrb[0].mxu0
    %v1379 = vadd.f32 %v787, %v1378
    %v1380 = vpop.f32.mrb[0].mxu0
    %1381 = vdwg.mxu0
    %v1383 = vrot.slane %v1379, 6
    %v1385 = vadd.f32 %v781, %v1383
    %v1386 = vxor.u32 %v1385, 2147483648
    %v1387 = vmul.f32 %v1386, 1.442695
    %v1388 = vpow.pop %v1387
    %v1389 = vadd.f32 %v1388, 1.0
    %v1390 = vrcp.pop %v1389
    %v1391 = vmul.f32 1.0, %v1390
    %1392 = vrot.lane.b32.xlu0 %v1383, 96
    %v1393 = vpop.permute.xlu0 %1392
    %v1395 = vmul.f32 %v1391, %v1393
    %1397 = vrot.lane.b32.xlu0 %v1395, 32
    %v1398 = vpop.permute.xlu0 %1397
    %v1400 = vadd.f32 %v781, %v1398
    %v1401 = vtanh.pop %v1400
    %v1402 = vsub.f32 1.0, %v1391
    %1404 = vrot.lane.b32.xlu0 %v1401, 112
    %v1405 = vpop.permute.xlu0 %1404
    %v1407 = vmul.f32 %v1402, %v1405
    %v1408 = vrot.slane %v1306, 6
    %v1410 = vmul.f32 %v1391, %v1408
    %v1411 = vadd.f32 %v1407, %v1410
    %v1413 = vrot.slane %v1411, 2
    %1414 = vrot.lane.b32.xlu0 %v1413, 112
    %v1415 = vpop.permute.xlu0 %1414
    %v1416 = vsel %vm535, %v1415, 0
    %1418 = vmatprep.subr.mxu0 0.0
    %1419 = vmatpush1.msra.mxu0 %v60
    %1420 = vmatprep.subr.mxu0 0.0
    %1421 = vmatpush1.msra.mxu0 %v61
    %1422 = vmatprep.subr.mxu0 0.0
    %1423 = vmatpush1.msra.mxu0 0.0
    %1424 = vmatprep.subr.mxu0 0.0
    %1425 = vmatpush1.msra.mxu0 0.0
    %1426 = vmatprep.subr.mxu0 0.0
    %1427 = vmatpush1.msra.mxu0 0.0
    %1428 = vmatprep.subr.mxu0 0.0
    %1429 = vmatpush1.msra.mxu0 0.0
    %1430 = vmatprep.subr.mxu0 0.0
    %1431 = vmatpush1.msra.mxu0 0.0
    %1432 = vmatprep.subr.mxu0 0.0
    %1433 = vmatpush1.msra.mxu0 0.0
    %1434 = vmatprep.subr.mxu0 0.0
    %1435 = vmatpush1.msra.mxu0 0.0
    %1436 = vmatprep.subr.mxu0 0.0
    %1437 = vmatpush1.msra.mxu0 0.0
    %1438 = vmatprep.subr.mxu0 0.0
    %1439 = vmatpush1.msra.mxu0 0.0
    %1440 = vmatprep.subr.mxu0 0.0
    %1441 = vmatpush1.msra.mxu0 0.0
    %1442 = vmatprep.subr.mxu0 0.0
    %1443 = vmatpush1.msra.mxu0 0.0
    %1444 = vmatprep.subr.mxu0 0.0
    %1445 = vmatpush1.msra.mxu0 0.0
    %1446 = vmatprep.subr.mxu0 0.0
    %1447 = vmatpush1.msra.mxu0 0.0
    %1448 = vmatprep.subr.mxu0 0.0
    %1449 = vmatpush1.msra.mxu0 0.0
    %1450 = vmatprep.subr.mxu0 0.0
    %1451 = vmatpush1.msra.mxu0 0.0
    %1452 = vmatprep.subr.mxu0 0.0
    %1453 = vmatpush1.msra.mxu0 0.0
    %1454 = vmatprep.subr.mxu0 0.0
    %1455 = vmatpush1.msra.mxu0 0.0
    %1456 = vmatprep.subr.mxu0 0.0
    %1457 = vmatpush1.msra.mxu0 0.0
    %1458 = vmatprep.subr.mxu0 0.0
    %1459 = vmatpush1.msra.mxu0 0.0
    %1460 = vmatprep.subr.mxu0 0.0
    %1461 = vmatpush1.msra.mxu0 0.0
    %1462 = vmatprep.subr.mxu0 0.0
    %1463 = vmatpush1.msra.mxu0 0.0
    %1464 = vmatprep.subr.mxu0 0.0
    %1465 = vmatpush1.msra.mxu0 0.0
    %1466 = vmatprep.subr.mxu0 0.0
    %1467 = vmatpush1.msra.mxu0 0.0
    %1468 = vmatprep.subr.mxu0 0.0
    %1469 = vmatpush1.msra.mxu0 0.0
    %1470 = vmatprep.subr.mxu0 0.0
    %1471 = vmatpush1.msra.mxu0 0.0
    %1472 = vmatprep.subr.mxu0 0.0
    %1473 = vmatpush1.msra.mxu0 0.0
    %1474 = vmatprep.subr.mxu0 0.0
    %1475 = vmatpush1.msra.mxu0 0.0
    %1476 = vmatprep.subr.mxu0 0.0
    %1477 = vmatpush1.msra.mxu0 0.0
    %1478 = vmatprep.subr.mxu0 0.0
    %1479 = vmatpush1.msra.mxu0 0.0
    %1480 = vmatprep.subr.mxu0 0.0
    %1481 = vmatpush1.msra.mxu0 0.0
    %1482 = vmatprep.mubr.f32.mxu0 0.0
    %1483 = vmatmul.mubr.f32.gmra.mrb[0].mxu0 %v1416
    %v1484 = vpop.f32.mrb[0].mxu0
    %v1485 = vadd.f32 %v787, %v1484
    %v1486 = vpop.f32.mrb[0].mxu0
    %1487 = vdwg.mxu0
    %v1489 = vrot.slane %v1485, 4
    %v1491 = vadd.f32 %v781, %v1489
    %v1492 = vxor.u32 %v1491, 2147483648
    %v1493 = vmul.f32 %v1492, 1.442695
    %v1494 = vpow.pop %v1493
    %v1495 = vadd.f32 %v1494, 1.0
    %v1496 = vrcp.pop %v1495
    %v1497 = vmul.f32 1.0, %v1496
    %1498 = vrot.lane.b32.xlu0 %v1489, 96
    %v1499 = vpop.permute.xlu0 %1498
    %v1501 = vmul.f32 %v1497, %v1499
    %1503 = vrot.lane.b32.xlu0 %v1501, 32
    %v1504 = vpop.permute.xlu0 %1503
    %v1506 = vadd.f32 %v781, %v1504
    %v1507 = vtanh.pop %v1506
    %v1508 = vsub.f32 1.0, %v1497
    %1510 = vrot.lane.b32.xlu0 %v1507, 112
    %v1511 = vpop.permute.xlu0 %1510
    %v1513 = vmul.f32 %v1508, %v1511
    %v1514 = vrot.slane %v1411, 6
    %v1516 = vmul.f32 %v1497, %v1514
    %v1517 = vadd.f32 %v1513, %v1516
    %v1519 = vrot.slane %v1517, 4
    %1520 = vrot.lane.b32.xlu0 %v1519, 112
    %v1521 = vpop.permute.xlu0 %1520
    %v1522 = vsel %vm535, %v1521, 0
    %1524 = vmatprep.subr.mxu0 0.0
    %1525 = vmatpush1.msra.mxu0 %v60
    %1526 = vmatprep.subr.mxu0 0.0
    %1527 = vmatpush1.msra.mxu0 %v61
    %1528 = vmatprep.subr.mxu0 0.0
    %1529 = vmatpush1.msra.mxu0 0.0
    %1530 = vmatprep.subr.mxu0 0.0
    %1531 = vmatpush1.msra.mxu0 0.0
    %1532 = vmatprep.subr.mxu0 0.0
    %1533 = vmatpush1.msra.mxu0 0.0
    %1534 = vmatprep.subr.mxu0 0.0
    %1535 = vmatpush1.msra.mxu0 0.0
    %1536 = vmatprep.subr.mxu0 0.0
    %1537 = vmatpush1.msra.mxu0 0.0
    %1538 = vmatprep.subr.mxu0 0.0
    %1539 = vmatpush1.msra.mxu0 0.0
    %1540 = vmatprep.subr.mxu0 0.0
    %1541 = vmatpush1.msra.mxu0 0.0
    %1542 = vmatprep.subr.mxu0 0.0
    %1543 = vmatpush1.msra.mxu0 0.0
    %1544 = vmatprep.subr.mxu0 0.0
    %1545 = vmatpush1.msra.mxu0 0.0
    %1546 = vmatprep.subr.mxu0 0.0
    %1547 = vmatpush1.msra.mxu0 0.0
    %1548 = vmatprep.subr.mxu0 0.0
    %1549 = vmatpush1.msra.mxu0 0.0
    %1550 = vmatprep.subr.mxu0 0.0
    %1551 = vmatpush1.msra.mxu0 0.0
    %1552 = vmatprep.subr.mxu0 0.0
    %1553 = vmatpush1.msra.mxu0 0.0
    %1554 = vmatprep.subr.mxu0 0.0
    %1555 = vmatpush1.msra.mxu0 0.0
    %1556 = vmatprep.subr.mxu0 0.0
    %1557 = vmatpush1.msra.mxu0 0.0
    %1558 = vmatprep.subr.mxu0 0.0
    %1559 = vmatpush1.msra.mxu0 0.0
    %1560 = vmatprep.subr.mxu0 0.0
    %1561 = vmatpush1.msra.mxu0 0.0
    %1562 = vmatprep.subr.mxu0 0.0
    %1563 = vmatpush1.msra.mxu0 0.0
    %1564 = vmatprep.subr.mxu0 0.0
    %1565 = vmatpush1.msra.mxu0 0.0
    %1566 = vmatprep.subr.mxu0 0.0
    %1567 = vmatpush1.msra.mxu0 0.0
    %1568 = vmatprep.subr.mxu0 0.0
    %1569 = vmatpush1.msra.mxu0 0.0
    %1570 = vmatprep.subr.mxu0 0.0
    %1571 = vmatpush1.msra.mxu0 0.0
    %1572 = vmatprep.subr.mxu0 0.0
    %1573 = vmatpush1.msra.mxu0 0.0
    %1574 = vmatprep.subr.mxu0 0.0
    %1575 = vmatpush1.msra.mxu0 0.0
    %1576 = vmatprep.subr.mxu0 0.0
    %1577 = vmatpush1.msra.mxu0 0.0
    %1578 = vmatprep.subr.mxu0 0.0
    %1579 = vmatpush1.msra.mxu0 0.0
    %1580 = vmatprep.subr.mxu0 0.0
    %1581 = vmatpush1.msra.mxu0 0.0
    %1582 = vmatprep.subr.mxu0 0.0
    %1583 = vmatpush1.msra.mxu0 0.0
    %1584 = vmatprep.subr.mxu0 0.0
    %1585 = vmatpush1.msra.mxu0 0.0
    %1586 = vmatprep.subr.mxu0 0.0
    %1587 = vmatpush1.msra.mxu0 0.0
    %1588 = vmatprep.mubr.f32.mxu0 0.0
    %1589 = vmatmul.mubr.f32.gmra.mrb[0].mxu0 %v1522
    %v1590 = vpop.f32.mrb[0].mxu0
    %v1591 = vadd.f32 %v787, %v1590
    %v1592 = vpop.f32.mrb[0].mxu0
    %1593 = vdwg.mxu0
    %v1595 = vrot.slane %v1591, 2
    %v1597 = vadd.f32 %v781, %v1595
    %v1598 = vxor.u32 %v1597, 2147483648
    %v1599 = vmul.f32 %v1598, 1.442695
    %v1600 = vpow.pop %v1599
    %v1601 = vadd.f32 %v1600, 1.0
    %v1602 = vrcp.pop %v1601
    %v1603 = vmul.f32 1.0, %v1602
    %1604 = vrot.lane.b32.xlu0 %v1595, 96
    %v1605 = vpop.permute.xlu0 %1604
    %v1607 = vmul.f32 %v1603, %v1605
    %1609 = vrot.lane.b32.xlu0 %v1607, 32
    %v1610 = vpop.permute.xlu0 %1609
    %v1612 = vadd.f32 %v781, %v1610
    %v1613 = vtanh.pop %v1612
    %v1614 = vsub.f32 1.0, %v1603
    %1616 = vrot.lane.b32.xlu0 %v1613, 112
    %v1617 = vpop.permute.xlu0 %1616
    %v1619 = vmul.f32 %v1614, %v1617
    %v1620 = vrot.slane %v1517, 6
    %v1622 = vmul.f32 %v1603, %v1620
    %v1623 = vadd.f32 %v1619, %v1622
    %vm1624 = vcmask 1041408
    %v1625 = vsel %vm1624, %v886, %v991
    %vm1626 = vcmask 1043456
    %v1627 = vsel %vm1626, %v1625, %v1097
    %vm1628 = vcmask 1045504
    %v1629 = vsel %vm1628, %v1627, %v1203
    %v1630 = vsel %vm1624, %v1306, %v1411
    %v1631 = vsel %vm1626, %v1630, %v1517
    %v1632 = vsel %vm1628, %v1631, %v1623
    %v1633 = vlaneseq
    %v1634 = vshrl.u32 %v1633, 7
    %v1635 = vsub.s32 2, %v1634
    %v1636 = vrot.slane %v64, %v1635
    %1639 = vrot.lane.b32.xlu0 %v1629, 112
    %v1640 = vpop.permute.xlu0 %1639
    %1641 = vrot.lane.b32.xlu0 %v1632, 112
    %v1642 = vpop.permute.xlu0 %1641
    %v1646 = vrot.slane %v62, 2
    %v1647 = vrot.slane %v63, 2
    %v1648 = vsel %vm1628, %v1646, %v1647
    %v1649 = vrot.slane %v64, 2
    %v1650 = vsel %vm1628, %v1647, %v1649
    %v1653 = vsel %vm535, %v1640, 0
    %v1655 = vsel %vm535, %v1642, 0
    %1657 = vmatprep.subr.mxu0 0.0
    %1658 = vmatpush1.msra.mxu0 %v1648
    %1659 = vmatprep.subr.mxu0 0.0
    %1660 = vmatpush1.msra.mxu0 %v1650
    %1661 = vmatprep.subr.mxu0 0.0
    %1662 = vmatpush1.msra.mxu0 0.0
    %1663 = vmatprep.subr.mxu0 0.0
    %1664 = vmatpush1.msra.mxu0 0.0
    %1665 = vmatprep.subr.mxu0 0.0
    %1666 = vmatpush1.msra.mxu0 0.0
    %1667 = vmatprep.subr.mxu0 0.0
    %1668 = vmatpush1.msra.mxu0 0.0
    %1669 = vmatprep.subr.mxu0 0.0
    %1670 = vmatpush1.msra.mxu0 0.0
    %1671 = vmatprep.subr.mxu0 0.0
    %1672 = vmatpush1.msra.mxu0 0.0
    %1673 = vmatprep.subr.mxu0 0.0
    %1674 = vmatpush1.msra.mxu0 0.0
    %1675 = vmatprep.subr.mxu0 0.0
    %1676 = vmatpush1.msra.mxu0 0.0
    %1677 = vmatprep.subr.mxu0 0.0
    %1678 = vmatpush1.msra.mxu0 0.0
    %1679 = vmatprep.subr.mxu0 0.0
    %1680 = vmatpush1.msra.mxu0 0.0
    %1681 = vmatprep.subr.mxu0 0.0
    %1682 = vmatpush1.msra.mxu0 0.0
    %1683 = vmatprep.subr.mxu0 0.0
    %1684 = vmatpush1.msra.mxu0 0.0
    %1685 = vmatprep.subr.mxu0 0.0
    %1686 = vmatpush1.msra.mxu0 0.0
    %1687 = vmatprep.subr.mxu0 0.0
    %1688 = vmatpush1.msra.mxu0 0.0
    %1689 = vmatprep.subr.mxu0 0.0
    %1690 = vmatpush1.msra.mxu0 0.0
    %1691 = vmatprep.subr.mxu0 0.0
    %1692 = vmatpush1.msra.mxu0 0.0
    %1693 = vmatprep.subr.mxu0 0.0
    %1694 = vmatpush1.msra.mxu0 0.0
    %1695 = vmatprep.subr.mxu0 0.0
    %1696 = vmatpush1.msra.mxu0 0.0
    %1697 = vmatprep.subr.mxu0 0.0
    %1698 = vmatpush1.msra.mxu0 0.0
    %1699 = vmatprep.subr.mxu0 0.0
    %1700 = vmatpush1.msra.mxu0 0.0
    %1701 = vmatprep.subr.mxu0 0.0
    %1702 = vmatpush1.msra.mxu0 0.0
    %1703 = vmatprep.subr.mxu0 0.0
    %1704 = vmatpush1.msra.mxu0 0.0
    %1705 = vmatprep.subr.mxu0 0.0
    %1706 = vmatpush1.msra.mxu0 0.0
    %1707 = vmatprep.subr.mxu0 0.0
    %1708 = vmatpush1.msra.mxu0 0.0
    %1709 = vmatprep.subr.mxu0 0.0
    %1710 = vmatpush1.msra.mxu0 0.0
    %1711 = vmatprep.subr.mxu0 0.0
    %1712 = vmatpush1.msra.mxu0 0.0
    %1713 = vmatprep.subr.mxu0 0.0
    %1714 = vmatpush1.msra.mxu0 0.0
    %1715 = vmatprep.subr.mxu0 0.0
    %1716 = vmatpush1.msra.mxu0 0.0
    %1717 = vmatprep.subr.mxu0 0.0
    %1718 = vmatpush1.msra.mxu0 0.0
    %1719 = vmatprep.subr.mxu0 0.0
    %1720 = vmatpush1.msra.mxu0 0.0
    %1721 = vmatprep.mubr.f32.mxu0 0.0
    %1722 = vmatmul.mubr.f32.gmra.mrb[0].mxu0 %v1653
    %v1723 = vpop.f32.mrb[0].mxu0
    %v1724 = vadd.f32 %v1636, %v1723
    %v1725 = vpop.f32.mrb[0].mxu0
    %1726 = vmatprep.mubr.f32.mxu0 0.0
    %1727 = vmatmul.mubr.f32.gmra.mrb[0].mxu0 %v1655
    %v1728 = vpop.f32.mrb[0].mxu0
    %v1729 = vadd.f32 %v1636, %v1728
    %v1730 = vpop.f32.mrb[0].mxu0
    %1731 = vdwg.mxu0
    %v1732 = vxor.u32 %v1724, 2147483648
    %v1733 = vxor.u32 %v1729, 2147483648
    %v1734 = vmul.f32 %v1732, 1.442695
    %v1735 = vpow.pop %v1734
    %v1736 = vmul.f32 %v1733, 1.442695
    %v1737 = vpow.pop %v1736
    %v1738 = vadd.f32 %v1735, 1.0
    %v1739 = vadd.f32 %v1737, 1.0
    %v1740 = vrcp.pop %v1738
    %v1741 = vmul.f32 1.0, %v1740
    %v1742 = vrcp.pop %v1739
    %v1743 = vmul.f32 1.0, %v1742
    %1744 = vxpose.xlu0.b32.start [1/16] %v1741, 128
    %1745 = vxpose.xlu0.b32.cont [2/16] %v1743, 128
    %1746 = vxpose.xlu0.b32.cont [3/16] 0.0, 128
    %1747 = vxpose.xlu0.b32.cont [4/16] 0.0, 128
    %1748 = vxpose.xlu0.b32.cont [5/16] 0.0, 128
    %1749 = vxpose.xlu0.b32.cont [6/16] 0.0, 128
    %1750 = vxpose.xlu0.b32.cont [7/16] 0.0, 128
    %1751 = vxpose.xlu0.b32.cont [8/16] 0.0, 128
    %1752 = vxpose.xlu0.b32.cont [9/16] 0.0, 128
    %1753 = vxpose.xlu0.b32.cont [10/16] 0.0, 128
    %1754 = vxpose.xlu0.b32.cont [11/16] 0.0, 128
    %1755 = vxpose.xlu0.b32.cont [12/16] 0.0, 128
    %1756 = vxpose.xlu0.b32.cont [13/16] 0.0, 128
    %1757 = vxpose.xlu0.b32.cont [14/16] 0.0, 128
    %1758 = vxpose.xlu0.b32.cont [15/16] 0.0, 128
    %1759 = vxpose.xlu0.b32.end [16/16] 0.0, 128
    %v1760 = vpop.trf.xlu0
    %v1761 = vpop.trf.xlu0
    %v1762 = vpop.trf.xlu0
    %v1763 = vpop.trf.xlu0
    %v1764 = vpop.trf.xlu0
    %v1765 = vpop.trf.xlu0
    %v1766 = vpop.trf.xlu0
    %v1767 = vpop.trf.xlu0
    %v1768 = vpop.trf.xlu0
    %v1769 = vpop.trf.xlu0
    %v1770 = vpop.trf.xlu0
    %v1771 = vpop.trf.xlu0
    %v1772 = vpop.trf.xlu0
    %v1773 = vpop.trf.xlu0
    %v1774 = vpop.trf.xlu0
    %v1775 = vpop.trf.xlu0
    %v1777 = vsel %vm535, %v1760, 0
    %1779 = vmatprep.subr.mxu0 %v37
    %1780 = vmatpush1.msra.mxu0 %v36
    %1781 = vmatprep.subr.mxu0 %v39
    %1782 = vmatpush1.msra.mxu0 %v38
    %1783 = vmatprep.subr.mxu0 0.0
    %1784 = vmatpush1.msra.mxu0 0.0
    %1785 = vmatprep.subr.mxu0 0.0
    %1786 = vmatpush1.msra.mxu0 0.0
    %1787 = vmatprep.subr.mxu0 0.0
    %1788 = vmatpush1.msra.mxu0 0.0
    %1789 = vmatprep.subr.mxu0 0.0
    %1790 = vmatpush1.msra.mxu0 0.0
    %1791 = vmatprep.subr.mxu0 0.0
    %1792 = vmatpush1.msra.mxu0 0.0
    %1793 = vmatprep.subr.mxu0 0.0
    %1794 = vmatpush1.msra.mxu0 0.0
    %1795 = vmatprep.subr.mxu0 0.0
    %1796 = vmatpush1.msra.mxu0 0.0
    %1797 = vmatprep.subr.mxu0 0.0
    %1798 = vmatpush1.msra.mxu0 0.0
    %1799 = vmatprep.subr.mxu0 0.0
    %1800 = vmatpush1.msra.mxu0 0.0
    %1801 = vmatprep.subr.mxu0 0.0
    %1802 = vmatpush1.msra.mxu0 0.0
    %1803 = vmatprep.subr.mxu0 0.0
    %1804 = vmatpush1.msra.mxu0 0.0
    %1805 = vmatprep.subr.mxu0 0.0
    %1806 = vmatpush1.msra.mxu0 0.0
    %1807 = vmatprep.subr.mxu0 0.0
    %1808 = vmatpush1.msra.mxu0 0.0
    %1809 = vmatprep.subr.mxu0 0.0
    %1810 = vmatpush1.msra.mxu0 0.0
    %1811 = vmatprep.subr.mxu0 0.0
    %1812 = vmatpush1.msra.mxu0 0.0
    %1813 = vmatprep.subr.mxu0 0.0
    %1814 = vmatpush1.msra.mxu0 0.0
    %1815 = vmatprep.subr.mxu0 0.0
    %1816 = vmatpush1.msra.mxu0 0.0
    %1817 = vmatprep.subr.mxu0 0.0
    %1818 = vmatpush1.msra.mxu0 0.0
    %1819 = vmatprep.subr.mxu0 0.0
    %1820 = vmatpush1.msra.mxu0 0.0
    %1821 = vmatprep.subr.mxu0 0.0
    %1822 = vmatpush1.msra.mxu0 0.0
    %1823 = vmatprep.subr.mxu0 0.0
    %1824 = vmatpush1.msra.mxu0 0.0
    %1825 = vmatprep.subr.mxu0 0.0
    %1826 = vmatpush1.msra.mxu0 0.0
    %1827 = vmatprep.subr.mxu0 0.0
    %1828 = vmatpush1.msra.mxu0 0.0
    %1829 = vmatprep.subr.mxu0 0.0
    %1830 = vmatpush1.msra.mxu0 0.0
    %1831 = vmatprep.subr.mxu0 0.0
    %1832 = vmatpush1.msra.mxu0 0.0
    %1833 = vmatprep.subr.mxu0 0.0
    %1834 = vmatpush1.msra.mxu0 0.0
    %1835 = vmatprep.subr.mxu0 0.0
    %1836 = vmatpush1.msra.mxu0 0.0
    %1837 = vmatprep.subr.mxu0 0.0
    %1838 = vmatpush1.msra.mxu0 0.0
    %1839 = vmatprep.subr.mxu0 0.0
    %1840 = vmatpush1.msra.mxu0 0.0
    %1841 = vmatprep.subr.mxu0 0.0
    %1842 = vmatpush1.msra.mxu0 0.0
    %1843 = vmatprep.mubr.f32.mxu0 0.0
    %1844 = vmatmul.mubr.f32.gmra.mrb[0].mxu0 %v1777
    %v1845 = vpop.f32.mrb[0].mxu0
    %v1846 = vadd.f32 0.0, %v1845
    %v1847 = vpop.f32.mrb[0].mxu0
    %v1848 = vadd.f32 0.0, %v1847
    %1849 = vdwg.mxu0
    %v1850 = vmul.f32 %v606, %v1846
    %v1851 = vmul.f32 %v608, %v1848
    %s1852 = scalar_lea.vmem %s0, 64
    %v1853 = vld [vmem:[%s1852] sm:$0xff]
    %v1854 = vld [vmem:[%s1852 + $0x8] sm:$0xff]
    %v1855 = vld [vmem:[%s1852 + $0x10] sm:$0xff]
    %v1856 = vld [vmem:[%s1852 + $0x18] sm:$0xff]
    %v1857 = vadd.f32 %v1850, %v1853
    %v1858 = vadd.f32 %v1851, %v1854
    %v1859 = vadd.f32 %v55, %v1855
    %v1860 = vadd.f32 %v56, %v1856
    %s1861 = scalar_lea.vmem %s2, 64
    %v1862 = vld [vmem:[%s1861] sm:$0xff]
    %v1863 = vld [vmem:[%s1861 + $0x8] sm:$0xff]
    %v1864 = vld [vmem:[%s1861 + $0x10] sm:$0xff]
    %v1865 = vld [vmem:[%s1861 + $0x18] sm:$0xff]
    %v1866 = vld [vmem:[%s1861 + $0x20] sm:$0xff]
    %v1867 = vld [vmem:[%s1861 + $0x28] sm:$0xff]
    %v1868 = vld [vmem:[%s1861 + $0x30] sm:$0xff]
    %v1869 = vld [vmem:[%s1861 + $0x38] sm:$0x7]
    %s1870 = scalar_lea.vmem %s3, 24
    %v1871 = vld [vmem:[%s1870] sm:$0xff]
    %v1872 = vld [vmem:[%s1870 + $0x8] sm:$0xff]
    %v1873 = vld [vmem:[%s1870 + $0x10] sm:$0xff]
    %s1874 = sld [smem:[#allocation2 + $0x2]]
    %s1875 = sld [smem:[#allocation2 + $0x3]]
    %1878 = vrot.lane.b32.xlu0 %v1858, 113
    %v1879 = vpop.permute.xlu0 %1878
    %1880 = vrot.lane.b32.xlu0 %v1860, 113
    %v1881 = vpop.permute.xlu0 %1880
    %1886 = vrot.lane.b32.xlu0 %v1857, 1
    %v1887 = vpop.permute.xlu0 %1886
    %1888 = vrot.lane.b32.xlu0 %v1858, 1
    %v1889 = vpop.permute.xlu0 %1888
    %1890 = vrot.lane.b32.xlu0 %v1859, 1
    %v1891 = vpop.permute.xlu0 %1890
    %1892 = vrot.lane.b32.xlu0 %v1860, 1
    %v1893 = vpop.permute.xlu0 %1892
    %v1894 = vsel %vm88, %v1887, %v1889
    %v1895 = vsel %vm88, %v1891, %v1893
    %v1900 = vsel %vm88, %v1879, %v1887
    %v1901 = vsel %vm88, %v1881, %v1891
    %v1902 = vmul.f32 %v1900, %v100
    %v1903 = vmul.f32 %v1894, %v104
    %v1904 = vmul.f32 %v1901, %v100
    %v1905 = vmul.f32 %v1895, %v104
    %1906 = vrot.lane.b32.xlu0 %v1857, 127
    %v1907 = vpop.permute.xlu0 %1906
    %1908 = vrot.lane.b32.xlu0 %v1858, 127
    %v1909 = vpop.permute.xlu0 %1908
    %1910 = vrot.lane.b32.xlu0 %v1859, 127
    %v1911 = vpop.permute.xlu0 %1910
    %1912 = vrot.lane.b32.xlu0 %v1860, 127
    %v1913 = vpop.permute.xlu0 %1912
    %v1914 = vsel %vm117, %v1907, %v1909
    %v1915 = vsel %vm117, %v1911, %v1913
    %1920 = vrot.lane.b32.xlu0 %v1857, 15
    %v1921 = vpop.permute.xlu0 %1920
    %1922 = vrot.lane.b32.xlu0 %v1859, 15
    %v1923 = vpop.permute.xlu0 %1922
    %v1926 = vsel %vm130, %v1909, %v1921
    %v1927 = vsel %vm130, %v1913, %v1923
    %v1928 = vmul.f32 %v1914, %v136
    %v1929 = vmul.f32 %v1926, %v140
    %v1930 = vmul.f32 %v1915, %v136
    %v1931 = vmul.f32 %v1927, %v140
    %1933 = vset.pattern.permute.xlu0 9
    %1934 = vperm.xlu0 %1933, %v1871
    %v1935 = vpop.permute.xlu0 %1934
    %1938 = vset.pattern.permute.xlu0 9
    %1939 = vperm.xlu0 %1938, %v1872
    %v1940 = vpop.permute.xlu0 %1939
    %v1943 = vsel %vm155, %v1862, 0
    %v1946 = vsel %vm155, %v1863, 0
    %1948 = vmatprep.subr.mxu0 %v1903
    %1949 = vmatpush1.msra.mxu0 %v1902
    %1950 = vmatprep.subr.mxu0 %v1905
    %1951 = vmatpush1.msra.mxu0 %v1904
    %1952 = vmatprep.subr.mxu0 %v1858
    %1953 = vmatpush1.msra.mxu0 %v1857
    %1954 = vmatprep.subr.mxu0 %v1860
    %1955 = vmatpush1.msra.mxu0 %v1859
    %1956 = vmatprep.subr.mxu0 %v1929
    %1957 = vmatpush1.msra.mxu0 %v1928
    %1958 = vmatprep.subr.mxu0 %v1931
    %1959 = vmatpush1.msra.mxu0 %v1930
    %1960 = vmatprep.subr.mxu0 0.0
    %1961 = vmatpush1.msra.mxu0 0.0
    %1962 = vmatprep.subr.mxu0 0.0
    %1963 = vmatpush1.msra.mxu0 0.0
    %1964 = vmatprep.subr.mxu0 0.0
    %1965 = vmatpush1.msra.mxu0 0.0
    %1966 = vmatprep.subr.mxu0 0.0
    %1967 = vmatpush1.msra.mxu0 0.0
    %1968 = vmatprep.subr.mxu0 0.0
    %1969 = vmatpush1.msra.mxu0 0.0
    %1970 = vmatprep.subr.mxu0 0.0
    %1971 = vmatpush1.msra.mxu0 0.0
    %1972 = vmatprep.subr.mxu0 0.0
    %1973 = vmatpush1.msra.mxu0 0.0
    %1974 = vmatprep.subr.mxu0 0.0
    %1975 = vmatpush1.msra.mxu0 0.0
    %1976 = vmatprep.subr.mxu0 0.0
    %1977 = vmatpush1.msra.mxu0 0.0
    %1978 = vmatprep.subr.mxu0 0.0
    %1979 = vmatpush1.msra.mxu0 0.0
    %1980 = vmatprep.subr.mxu0 0.0
    %1981 = vmatpush1.msra.mxu0 0.0
    %1982 = vmatprep.subr.mxu0 0.0
    %1983 = vmatpush1.msra.mxu0 0.0
    %1984 = vmatprep.subr.mxu0 0.0
    %1985 = vmatpush1.msra.mxu0 0.0
    %1986 = vmatprep.subr.mxu0 0.0
    %1987 = vmatpush1.msra.mxu0 0.0
    %1988 = vmatprep.subr.mxu0 0.0
    %1989 = vmatpush1.msra.mxu0 0.0
    %1990 = vmatprep.subr.mxu0 0.0
    %1991 = vmatpush1.msra.mxu0 0.0
    %1992 = vmatprep.subr.mxu0 0.0
    %1993 = vmatpush1.msra.mxu0 0.0
    %1994 = vmatprep.subr.mxu0 0.0
    %1995 = vmatpush1.msra.mxu0 0.0
    %1996 = vmatprep.subr.mxu0 0.0
    %1997 = vmatpush1.msra.mxu0 0.0
    %1998 = vmatprep.subr.mxu0 0.0
    %1999 = vmatpush1.msra.mxu0 0.0
    %2000 = vmatprep.subr.mxu0 0.0
    %2001 = vmatpush1.msra.mxu0 0.0
    %2002 = vmatprep.subr.mxu0 0.0
    %2003 = vmatpush1.msra.mxu0 0.0
    %2004 = vmatprep.subr.mxu0 0.0
    %2005 = vmatpush1.msra.mxu0 0.0
    %2006 = vmatprep.subr.mxu0 0.0
    %2007 = vmatpush1.msra.mxu0 0.0
    %2008 = vmatprep.subr.mxu0 0.0
    %2009 = vmatpush1.msra.mxu0 0.0
    %2010 = vmatprep.subr.mxu0 0.0
    %2011 = vmatpush1.msra.mxu0 0.0
    %2012 = vmatprep.mubr.f32.mxu0 0.0
    %2013 = vmatmul.mubr.f32.gmra.mrb[0].mxu0 %v1943
    %v2014 = vpop.f32.mrb[0].mxu0
    %v2015 = vadd.f32 %v1935, %v2014
    %v2016 = vpop.f32.mrb[0].mxu0
    %v2017 = vadd.f32 %v1935, %v2016
    %2018 = vmatprep.mubr.f32.mxu0 0.0
    %2019 = vmatmul.mubr.f32.gmra.mrb[0].mxu0 %v1946
    %v2020 = vpop.f32.mrb[0].mxu0
    %v2021 = vadd.f32 %v1940, %v2020
    %v2022 = vpop.f32.mrb[0].mxu0
    %v2023 = vadd.f32 %v1940, %v2022
    %2024 = vdwg.mxu0
    %vm2025 = vcmp.ge.f32.partialorder %v2015, 0.0
    %vm2026 = vcmp.ge.f32.partialorder %v2017, 0.0
    %vm2027 = vcmp.ge.f32.partialorder %v2021, 0.0
    %vm2028 = vcmp.ge.f32.partialorder %v2023, 0.0
    %v2029 = vstv %s1874
    %v2030 = vmul.f32 %v2029, %v2015
    %v2031 = vmul.f32 %v2029, %v2017
    %v2032 = vmul.f32 %v2029, %v2021
    %v2033 = vmul.f32 %v2029, %v2023
    %v2034 = vsel %vm2025, %v2015, %v2030
    %v2035 = vsel %vm2026, %v2017, %v2031
    %v2036 = vsel %vm2027, %v2021, %v2032
    %v2037 = vsel %vm2028, %v2023, %v2033
    %2040 = vrot.lane.b32.xlu0 %v2035, 113
    %v2041 = vpop.permute.xlu0 %2040
    %2042 = vrot.lane.b32.xlu0 %v2037, 113
    %v2043 = vpop.permute.xlu0 %2042
    %2048 = vrot.lane.b32.xlu0 %v2034, 1
    %v2049 = vpop.permute.xlu0 %2048
    %2050 = vrot.lane.b32.xlu0 %v2035, 1
    %v2051 = vpop.permute.xlu0 %2050
    %2052 = vrot.lane.b32.xlu0 %v2036, 1
    %v2053 = vpop.permute.xlu0 %2052
    %2054 = vrot.lane.b32.xlu0 %v2037, 1
    %v2055 = vpop.permute.xlu0 %2054
    %v2056 = vsel %vm88, %v2049, %v2051
    %v2057 = vsel %vm88, %v2053, %v2055
    %v2062 = vsel %vm88, %v2041, %v2049
    %v2063 = vsel %vm88, %v2043, %v2053
    %v2064 = vmul.f32 %v2062, %v100
    %v2065 = vmul.f32 %v2056, %v104
    %v2066 = vmul.f32 %v2063, %v100
    %v2067 = vmul.f32 %v2057, %v104
    %2068 = vset.pattern.permute.xlu0 0
    %2069 = vperm.xlu0 %2068, %v1871
    %v2070 = vpop.permute.xlu0 %2069
    %2072 = vset.pattern.permute.xlu0 0
    %2073 = vperm.xlu0 %2072, %v1872
    %v2074 = vpop.permute.xlu0 %2073
    %v2076 = vmul.f32 %v2070, %v2064
    %v2077 = vmul.f32 %v2070, %v2065
    %v2078 = vmul.f32 %v2074, %v2066
    %v2079 = vmul.f32 %v2074, %v2067
    %v2080 = vadd.f32 %v2076, 0.0
    %v2081 = vadd.f32 %v2077, 0.0
    %v2082 = vadd.f32 %v2078, 0.0
    %v2083 = vadd.f32 %v2079, 0.0
    %2084 = vset.pattern.permute.xlu0 1
    %2085 = vperm.xlu0 %2084, %v1871
    %v2086 = vpop.permute.xlu0 %2085
    %2088 = vset.pattern.permute.xlu0 1
    %2089 = vperm.xlu0 %2088, %v1872
    %v2090 = vpop.permute.xlu0 %2089
    %v2092 = vmul.f32 %v2086, %v2034
    %v2093 = vmul.f32 %v2086, %v2035
    %v2094 = vmul.f32 %v2090, %v2036
    %v2095 = vmul.f32 %v2090, %v2037
    %v2096 = vadd.f32 %v2080, %v2092
    %v2097 = vadd.f32 %v2081, %v2093
    %v2098 = vadd.f32 %v2082, %v2094
    %v2099 = vadd.f32 %v2083, %v2095
    %2100 = vrot.lane.b32.xlu0 %v2034, 127
    %v2101 = vpop.permute.xlu0 %2100
    %2102 = vrot.lane.b32.xlu0 %v2035, 127
    %v2103 = vpop.permute.xlu0 %2102
    %2104 = vrot.lane.b32.xlu0 %v2036, 127
    %v2105 = vpop.permute.xlu0 %2104
    %2106 = vrot.lane.b32.xlu0 %v2037, 127
    %v2107 = vpop.permute.xlu0 %2106
    %v2108 = vsel %vm117, %v2101, %v2103
    %v2109 = vsel %vm117, %v2105, %v2107
    %2114 = vrot.lane.b32.xlu0 %v2034, 15
    %v2115 = vpop.permute.xlu0 %2114
    %2116 = vrot.lane.b32.xlu0 %v2036, 15
    %v2117 = vpop.permute.xlu0 %2116
    %v2120 = vsel %vm130, %v2103, %v2115
    %v2121 = vsel %vm130, %v2107, %v2117
    %v2122 = vmul.f32 %v2108, %v136
    %v2123 = vmul.f32 %v2120, %v140
    %v2124 = vmul.f32 %v2109, %v136
    %v2125 = vmul.f32 %v2121, %v140
    %2126 = vset.pattern.permute.xlu0 2
    %2127 = vperm.xlu0 %2126, %v1871
    %v2128 = vpop.permute.xlu0 %2127
    %2130 = vset.pattern.permute.xlu0 2
    %2131 = vperm.xlu0 %2130, %v1872
    %v2132 = vpop.permute.xlu0 %2131
    %v2134 = vmul.f32 %v2128, %v2122
    %v2135 = vmul.f32 %v2128, %v2123
    %v2136 = vmul.f32 %v2132, %v2124
    %v2137 = vmul.f32 %v2132, %v2125
    %v2138 = vadd.f32 %v2096, %v2134
    %v2139 = vadd.f32 %v2097, %v2135
    %v2140 = vadd.f32 %v2098, %v2136
    %v2141 = vadd.f32 %v2099, %v2137
    %2142 = vrot.lane.b32.xlu0 %v2034, 3
    %v2143 = vpop.permute.xlu0 %2142
    %2144 = vrot.lane.b32.xlu0 %v2035, 3
    %v2145 = vpop.permute.xlu0 %2144
    %2146 = vrot.lane.b32.xlu0 %v2036, 3
    %v2147 = vpop.permute.xlu0 %2146
    %2148 = vrot.lane.b32.xlu0 %v2037, 3
    %v2149 = vpop.permute.xlu0 %2148
    %vm2150 = vcmask 23552
    %v2151 = vsel %vm2150, %v2143, %v2145
    %v2152 = vsel %vm2150, %v2147, %v2149
    %2155 = vrot.lane.b32.xlu0 %v2034, 19
    %v2156 = vpop.permute.xlu0 %2155
    %2157 = vrot.lane.b32.xlu0 %v2036, 19
    %v2158 = vpop.permute.xlu0 %2157
    %vm2161 = vcmask 154624
    %v2162 = vsel %vm2161, %v2151, %v2156
    %v2163 = vsel %vm2161, %v2152, %v2158
    %v2164 = vlaneseq
    %v2165 = vshrl.u32 %v2164, 7
    %v2166 = vsub.s32 5, %v2165
    %v2167 = vrot.slane %v40, %v2166
    %v2168 = vlaneseq
    %v2169 = vshrl.u32 %v2168, 7
    %v2170 = vsub.s32 5, %v2169
    %v2171 = vrot.slane %v41, %v2170
    %v2172 = vmul.f32 %v2162, %v2167
    %v2173 = vmul.f32 %v2156, %v2171
    %v2174 = vmul.f32 %v2163, %v2167
    %v2175 = vmul.f32 %v2158, %v2171
    %2176 = vset.pattern.permute.xlu0 3
    %2177 = vperm.xlu0 %2176, %v1871
    %v2178 = vpop.permute.xlu0 %2177
    %2180 = vset.pattern.permute.xlu0 3
    %2181 = vperm.xlu0 %2180, %v1872
    %v2182 = vpop.permute.xlu0 %2181
    %v2184 = vmul.f32 %v2178, %v2172
    %v2185 = vmul.f32 %v2178, %v2173
    %v2186 = vmul.f32 %v2182, %v2174
    %v2187 = vmul.f32 %v2182, %v2175
    %v2188 = vadd.f32 %v2138, %v2184
    %v2189 = vadd.f32 %v2139, %v2185
    %v2190 = vadd.f32 %v2140, %v2186
    %v2191 = vadd.f32 %v2141, %v2187
    %2192 = vrot.lane.b32.xlu0 %v2034, 2
    %v2193 = vpop.permute.xlu0 %2192
    %2194 = vrot.lane.b32.xlu0 %v2035, 2
    %v2195 = vpop.permute.xlu0 %2194
    %2196 = vrot.lane.b32.xlu0 %v2036, 2
    %v2197 = vpop.permute.xlu0 %2196
    %2198 = vrot.lane.b32.xlu0 %v2037, 2
    %v2199 = vpop.permute.xlu0 %2198
    %vm2200 = vcmask 15360
    %v2201 = vsel %vm2200, %v2193, %v2195
    %v2202 = vsel %vm2200, %v2197, %v2199
    %2205 = vrot.lane.b32.xlu0 %v2034, 18
    %v2206 = vpop.permute.xlu0 %2205
    %2207 = vrot.lane.b32.xlu0 %v2036, 18
    %v2208 = vpop.permute.xlu0 %2207
    %vm2211 = vcmask 146432
    %v2212 = vsel %vm2211, %v2201, %v2206
    %v2213 = vsel %vm2211, %v2202, %v2208
    %v2214 = vlaneseq
    %v2215 = vshrl.u32 %v2214, 7
    %v2216 = vsub.s32 6, %v2215
    %v2217 = vrot.slane %v40, %v2216
    %v2218 = vlaneseq
    %v2219 = vshrl.u32 %v2218, 7
    %v2220 = vsub.s32 6, %v2219
    %v2221 = vrot.slane %v41, %v2220
    %v2222 = vmul.f32 %v2212, %v2217
    %v2223 = vmul.f32 %v2206, %v2221
    %v2224 = vmul.f32 %v2213, %v2217
    %v2225 = vmul.f32 %v2208, %v2221
    %2226 = vset.pattern.permute.xlu0 4
    %2227 = vperm.xlu0 %2226, %v1871
    %v2228 = vpop.permute.xlu0 %2227
    %2230 = vset.pattern.permute.xlu0 4
    %2231 = vperm.xlu0 %2230, %v1872
    %v2232 = vpop.permute.xlu0 %2231
    %v2234 = vmul.f32 %v2228, %v2222
    %v2235 = vmul.f32 %v2228, %v2223
    %v2236 = vmul.f32 %v2232, %v2224
    %v2237 = vmul.f32 %v2232, %v2225
    %v2238 = vadd.f32 %v2188, %v2234
    %v2239 = vadd.f32 %v2189, %v2235
    %v2240 = vadd.f32 %v2190, %v2236
    %v2241 = vadd.f32 %v2191, %v2237
    %2242 = vrot.lane.b32.xlu0 %v2034, 17
    %v2243 = vpop.permute.xlu0 %2242
    %2244 = vrot.lane.b32.xlu0 %v2036, 17
    %v2245 = vpop.permute.xlu0 %2244
    %vm2248 = vcmask 138240
    %v2249 = vsel %vm2248, %v2056, %v2243
    %v2250 = vsel %vm2248, %v2057, %v2245
    %v2251 = vlaneseq
    %v2252 = vshrl.u32 %v2251, 7
    %v2253 = vsub.s32 7, %v2252
    %v2254 = vrot.slane %v40, %v2253
    %v2255 = vlaneseq
    %v2256 = vshrl.u32 %v2255, 7
    %v2257 = vsub.s32 7, %v2256
    %v2258 = vrot.slane %v41, %v2257
    %v2259 = vmul.f32 %v2249, %v2254
    %v2260 = vmul.f32 %v2243, %v2258
    %v2261 = vmul.f32 %v2250, %v2254
    %v2262 = vmul.f32 %v2245, %v2258
    %2263 = vset.pattern.permute.xlu0 5
    %2264 = vperm.xlu0 %2263, %v1871
    %v2265 = vpop.permute.xlu0 %2264
    %2267 = vset.pattern.permute.xlu0 5
    %2268 = vperm.xlu0 %2267, %v1872
    %v2269 = vpop.permute.xlu0 %2268
    %v2271 = vmul.f32 %v2265, %v2259
    %v2272 = vmul.f32 %v2265, %v2260
    %v2273 = vmul.f32 %v2269, %v2261
    %v2274 = vmul.f32 %v2269, %v2262
    %v2275 = vadd.f32 %v2238, %v2271
    %v2276 = vadd.f32 %v2239, %v2272
    %v2277 = vadd.f32 %v2240, %v2273
    %v2278 = vadd.f32 %v2241, %v2274
    %2279 = vrot.lane.b32.xlu0 %v2034, 21
    %v2280 = vpop.permute.xlu0 %2279
    %2281 = vrot.lane.b32.xlu0 %v2035, 21
    %v2282 = vpop.permute.xlu0 %2281
    %2283 = vrot.lane.b32.xlu0 %v2036, 21
    %v2284 = vpop.permute.xlu0 %2283
    %2285 = vrot.lane.b32.xlu0 %v2037, 21
    %v2286 = vpop.permute.xlu0 %2285
    %vm2287 = vcmask 171008
    %v2288 = vsel %vm2287, %v2280, %v2282
    %v2289 = vsel %vm2287, %v2284, %v2286
    %2292 = vrot.lane.b32.xlu0 %v2034, 37
    %v2293 = vpop.permute.xlu0 %2292
    %2294 = vrot.lane.b32.xlu0 %v2036, 37
    %v2295 = vpop.permute.xlu0 %2294
    %vm2298 = vcmask 302080
    %v2299 = vsel %vm2298, %v2288, %v2293
    %v2300 = vsel %vm2298, %v2289, %v2295
    %v2301 = vlaneseq
    %v2302 = vshrl.u32 %v2301, 7
    %v2303 = vsub.s32 0, %v2302
    %v2304 = vrot.slane %v42, %v2303
    %v2305 = vlaneseq
    %v2306 = vshrl.u32 %v2305, 7
    %v2307 = vsub.s32 0, %v2306
    %v2308 = vrot.slane %v43, %v2307
    %v2309 = vmul.f32 %v2299, %v2304
    %v2310 = vmul.f32 %v2293, %v2308
    %v2311 = vmul.f32 %v2300, %v2304
    %v2312 = vmul.f32 %v2295, %v2308
    %2313 = vset.pattern.permute.xlu0 6
    %2314 = vperm.xlu0 %2313, %v1871
    %v2315 = vpop.permute.xlu0 %2314
    %2317 = vset.pattern.permute.xlu0 6
    %2318 = vperm.xlu0 %2317, %v1872
    %v2319 = vpop.permute.xlu0 %2318
    %v2321 = vmul.f32 %v2315, %v2309
    %v2322 = vmul.f32 %v2315, %v2310
    %v2323 = vmul.f32 %v2319, %v2311
    %v2324 = vmul.f32 %v2319, %v2312
    %v2325 = vadd.f32 %v2275, %v2321
    %v2326 = vadd.f32 %v2276, %v2322
    %v2327 = vadd.f32 %v2277, %v2323
    %v2328 = vadd.f32 %v2278, %v2324
    %2329 = vrot.lane.b32.xlu0 %v2034, 20
    %v2330 = vpop.permute.xlu0 %2329
    %2331 = vrot.lane.b32.xlu0 %v2035, 20
    %v2332 = vpop.permute.xlu0 %2331
    %2333 = vrot.lane.b32.xlu0 %v2036, 20
    %v2334 = vpop.permute.xlu0 %2333
    %2335 = vrot.lane.b32.xlu0 %v2037, 20
    %v2336 = vpop.permute.xlu0 %2335
    %vm2337 = vcmask 162816
    %v2338 = vsel %vm2337, %v2330, %v2332
    %v2339 = vsel %vm2337, %v2334, %v2336
    %2342 = vrot.lane.b32.xlu0 %v2034, 36
    %v2343 = vpop.permute.xlu0 %2342
    %2344 = vrot.lane.b32.xlu0 %v2036, 36
    %v2345 = vpop.permute.xlu0 %2344
    %vm2348 = vcmask 293888
    %v2349 = vsel %vm2348, %v2338, %v2343
    %v2350 = vsel %vm2348, %v2339, %v2345
    %v2351 = vlaneseq
    %v2352 = vshrl.u32 %v2351, 7
    %v2353 = vsub.s32 1, %v2352
    %v2354 = vrot.slane %v42, %v2353
    %v2355 = vlaneseq
    %v2356 = vshrl.u32 %v2355, 7
    %v2357 = vsub.s32 1, %v2356
    %v2358 = vrot.slane %v43, %v2357
    %v2359 = vmul.f32 %v2349, %v2354
    %v2360 = vmul.f32 %v2343, %v2358
    %v2361 = vmul.f32 %v2350, %v2354
    %v2362 = vmul.f32 %v2345, %v2358
    %2363 = vset.pattern.permute.xlu0 7
    %2364 = vperm.xlu0 %2363, %v1871
    %v2365 = vpop.permute.xlu0 %2364
    %2367 = vset.pattern.permute.xlu0 7
    %2368 = vperm.xlu0 %2367, %v1872
    %v2369 = vpop.permute.xlu0 %2368
    %v2371 = vmul.f32 %v2365, %v2359
    %v2372 = vmul.f32 %v2365, %v2360
    %v2373 = vmul.f32 %v2369, %v2361
    %v2374 = vmul.f32 %v2369, %v2362
    %v2375 = vadd.f32 %v2325, %v2371
    %v2376 = vadd.f32 %v2326, %v2372
    %v2377 = vadd.f32 %v2327, %v2373
    %v2378 = vadd.f32 %v2328, %v2374
    %2379 = vrot.lane.b32.xlu0 %v2035, 19
    %v2380 = vpop.permute.xlu0 %2379
    %2381 = vrot.lane.b32.xlu0 %v2037, 19
    %v2382 = vpop.permute.xlu0 %2381
    %v2383 = vsel %vm2161, %v2156, %v2380
    %v2384 = vsel %vm2161, %v2158, %v2382
    %2387 = vrot.lane.b32.xlu0 %v2034, 35
    %v2388 = vpop.permute.xlu0 %2387
    %2389 = vrot.lane.b32.xlu0 %v2036, 35
    %v2390 = vpop.permute.xlu0 %2389
    %vm2393 = vcmask 285696
    %v2394 = vsel %vm2393, %v2383, %v2388
    %v2395 = vsel %vm2393, %v2384, %v2390
    %v2396 = vlaneseq
    %v2397 = vshrl.u32 %v2396, 7
    %v2398 = vsub.s32 2, %v2397
    %v2399 = vrot.slane %v42, %v2398
    %v2400 = vlaneseq
    %v2401 = vshrl.u32 %v2400, 7
    %v2402 = vsub.s32 2, %v2401
    %v2403 = vrot.slane %v43, %v2402
    %v2404 = vmul.f32 %v2394, %v2399
    %v2405 = vmul.f32 %v2388, %v2403
    %v2406 = vmul.f32 %v2395, %v2399
    %v2407 = vmul.f32 %v2390, %v2403
    %2408 = vset.pattern.permute.xlu0 8
    %2409 = vperm.xlu0 %2408, %v1871
    %v2410 = vpop.permute.xlu0 %2409
    %2412 = vset.pattern.permute.xlu0 8
    %2413 = vperm.xlu0 %2412, %v1872
    %v2414 = vpop.permute.xlu0 %2413
    %v2416 = vmul.f32 %v2410, %v2404
    %v2417 = vmul.f32 %v2410, %v2405
    %v2418 = vmul.f32 %v2414, %v2406
    %v2419 = vmul.f32 %v2414, %v2407
    %v2420 = vadd.f32 %v2375, %v2416
    %v2421 = vadd.f32 %v2376, %v2417
    %v2422 = vadd.f32 %v2377, %v2418
    %v2423 = vadd.f32 %v2378, %v2419
    %2424 = vset.pattern.permute.xlu0 10
    %2425 = vperm.xlu0 %2424, %v1871
    %v2426 = vpop.permute.xlu0 %2425
    %2428 = vset.pattern.permute.xlu0 10
    %2429 = vperm.xlu0 %2428, %v1872
    %v2430 = vpop.permute.xlu0 %2429
    %v2432 = vadd.f32 %v2420, %v2426
    %v2433 = vadd.f32 %v2421, %v2426
    %v2434 = vadd.f32 %v2422, %v2430
    %v2435 = vadd.f32 %v2423, %v2430
    %vm2436 = vcmp.ge.f32.partialorder %v2432, 0.0
    %vm2437 = vcmp.ge.f32.partialorder %v2433, 0.0
    %vm2438 = vcmp.ge.f32.partialorder %v2434, 0.0
    %vm2439 = vcmp.ge.f32.partialorder %v2435, 0.0
    %v2440 = vstv %s1875
    %v2441 = vmul.f32 %v2440, %v2432
    %v2442 = vmul.f32 %v2440, %v2433
    %v2443 = vmul.f32 %v2440, %v2434
    %v2444 = vmul.f32 %v2440, %v2435
    %v2445 = vsel %vm2436, %v2432, %v2441
    %v2446 = vsel %vm2437, %v2433, %v2442
    %v2447 = vsel %vm2438, %v2434, %v2443
    %v2448 = vsel %vm2439, %v2435, %v2444
    %2449 = vset.pattern.permute.xlu0 11
    %2450 = vperm.xlu0 %2449, %v1871
    %v2451 = vpop.permute.xlu0 %2450
    %v2454 = vsel %vm535, %v1873, 0
    %2456 = vmatprep.subr.mxu0 %v2446
    %2457 = vmatpush1.msra.mxu0 %v2445
    %2458 = vmatprep.subr.mxu0 %v2448
    %2459 = vmatpush1.msra.mxu0 %v2447
    %2460 = vmatprep.subr.mxu0 0.0
    %2461 = vmatpush1.msra.mxu0 0.0
    %2462 = vmatprep.subr.mxu0 0.0
    %2463 = vmatpush1.msra.mxu0 0.0
    %2464 = vmatprep.subr.mxu0 0.0
    %2465 = vmatpush1.msra.mxu0 0.0
    %2466 = vmatprep.subr.mxu0 0.0
    %2467 = vmatpush1.msra.mxu0 0.0
    %2468 = vmatprep.subr.mxu0 0.0
    %2469 = vmatpush1.msra.mxu0 0.0
    %2470 = vmatprep.subr.mxu0 0.0
    %2471 = vmatpush1.msra.mxu0 0.0
    %2472 = vmatprep.subr.mxu0 0.0
    %2473 = vmatpush1.msra.mxu0 0.0
    %2474 = vmatprep.subr.mxu0 0.0
    %2475 = vmatpush1.msra.mxu0 0.0
    %2476 = vmatprep.subr.mxu0 0.0
    %2477 = vmatpush1.msra.mxu0 0.0
    %2478 = vmatprep.subr.mxu0 0.0
    %2479 = vmatpush1.msra.mxu0 0.0
    %2480 = vmatprep.subr.mxu0 0.0
    %2481 = vmatpush1.msra.mxu0 0.0
    %2482 = vmatprep.subr.mxu0 0.0
    %2483 = vmatpush1.msra.mxu0 0.0
    %2484 = vmatprep.subr.mxu0 0.0
    %2485 = vmatpush1.msra.mxu0 0.0
    %2486 = vmatprep.subr.mxu0 0.0
    %2487 = vmatpush1.msra.mxu0 0.0
    %2488 = vmatprep.subr.mxu0 0.0
    %2489 = vmatpush1.msra.mxu0 0.0
    %2490 = vmatprep.subr.mxu0 0.0
    %2491 = vmatpush1.msra.mxu0 0.0
    %2492 = vmatprep.subr.mxu0 0.0
    %2493 = vmatpush1.msra.mxu0 0.0
    %2494 = vmatprep.subr.mxu0 0.0
    %2495 = vmatpush1.msra.mxu0 0.0
    %2496 = vmatprep.subr.mxu0 0.0
    %2497 = vmatpush1.msra.mxu0 0.0
    %2498 = vmatprep.subr.mxu0 0.0
    %2499 = vmatpush1.msra.mxu0 0.0
    %2500 = vmatprep.subr.mxu0 0.0
    %2501 = vmatpush1.msra.mxu0 0.0
    %2502 = vmatprep.subr.mxu0 0.0
    %2503 = vmatpush1.msra.mxu0 0.0
    %2504 = vmatprep.subr.mxu0 0.0
    %2505 = vmatpush1.msra.mxu0 0.0
    %2506 = vmatprep.subr.mxu0 0.0
    %2507 = vmatpush1.msra.mxu0 0.0
    %2508 = vmatprep.subr.mxu0 0.0
    %2509 = vmatpush1.msra.mxu0 0.0
    %2510 = vmatprep.subr.mxu0 0.0
    %2511 = vmatpush1.msra.mxu0 0.0
    %2512 = vmatprep.subr.mxu0 0.0
    %2513 = vmatpush1.msra.mxu0 0.0
    %2514 = vmatprep.subr.mxu0 0.0
    %2515 = vmatpush1.msra.mxu0 0.0
    %2516 = vmatprep.subr.mxu0 0.0
    %2517 = vmatpush1.msra.mxu0 0.0
    %2518 = vmatprep.subr.mxu0 0.0
    %2519 = vmatpush1.msra.mxu0 0.0
    %2520 = vmatprep.mubr.f32.mxu0 0.0
    %2521 = vmatmul.mubr.f32.gmra.mrb[0].mxu0 %v2454
    %v2522 = vpop.f32.mrb[0].mxu0
    %v2523 = vadd.f32 %v2451, %v2522
    %v2524 = vpop.f32.mrb[0].mxu0
    %v2525 = vadd.f32 %v2451, %v2524
    %2526 = vdwg.mxu0
    %v2527 = vmul.f32 %v2523, %v2523
    %v2528 = vmul.f32 %v2525, %v2525
    %v2530 = vsel %vm535, %v2528, 0
    %2532 = vmatprep.subr.mxu0 %v2530
    %2533 = vmatpush1.xpose.msra.mxu0 %v2527
    %2534 = vmatprep.subr.mxu0 0.0
    %2535 = vmatpush1.xpose.msra.mxu0 0.0
    %2536 = vmatprep.subr.mxu0 0.0
    %2537 = vmatpush1.xpose.msra.mxu0 0.0
    %2538 = vmatprep.subr.mxu0 0.0
    %2539 = vmatpush1.xpose.msra.mxu0 0.0
    %2540 = vmatprep.subr.mxu0 0.0
    %2541 = vmatpush1.xpose.msra.mxu0 0.0
    %2542 = vmatprep.subr.mxu0 0.0
    %2543 = vmatpush1.xpose.msra.mxu0 0.0
    %2544 = vmatprep.subr.mxu0 0.0
    %2545 = vmatpush1.xpose.msra.mxu0 0.0
    %2546 = vmatprep.subr.mxu0 0.0
    %2547 = vmatpush1.xpose.msra.mxu0 0.0
    %2548 = vmatprep.subr.mxu0 0.0
    %2549 = vmatpush1.xpose.msra.mxu0 0.0
    %2550 = vmatprep.subr.mxu0 0.0
    %2551 = vmatpush1.xpose.msra.mxu0 0.0
    %2552 = vmatprep.subr.mxu0 0.0
    %2553 = vmatpush1.xpose.msra.mxu0 0.0
    %2554 = vmatprep.subr.mxu0 0.0
    %2555 = vmatpush1.xpose.msra.mxu0 0.0
    %2556 = vmatprep.subr.mxu0 0.0
    %2557 = vmatpush1.xpose.msra.mxu0 0.0
    %2558 = vmatprep.subr.mxu0 0.0
    %2559 = vmatpush1.xpose.msra.mxu0 0.0
    %2560 = vmatprep.subr.mxu0 0.0
    %2561 = vmatpush1.xpose.msra.mxu0 0.0
    %2562 = vmatprep.subr.mxu0 0.0
    %2563 = vmatpush1.xpose.msra.mxu0 0.0
    %2564 = vmatprep.subr.mxu0 0.0
    %2565 = vmatpush1.xpose.msra.mxu0 0.0
    %2566 = vmatprep.subr.mxu0 0.0
    %2567 = vmatpush1.xpose.msra.mxu0 0.0
    %2568 = vmatprep.subr.mxu0 0.0
    %2569 = vmatpush1.xpose.msra.mxu0 0.0
    %2570 = vmatprep.subr.mxu0 0.0
    %2571 = vmatpush1.xpose.msra.mxu0 0.0
    %2572 = vmatprep.subr.mxu0 0.0
    %2573 = vmatpush1.xpose.msra.mxu0 0.0
    %2574 = vmatprep.subr.mxu0 0.0
    %2575 = vmatpush1.xpose.msra.mxu0 0.0
    %2576 = vmatprep.subr.mxu0 0.0
    %2577 = vmatpush1.xpose.msra.mxu0 0.0
    %2578 = vmatprep.subr.mxu0 0.0
    %2579 = vmatpush1.xpose.msra.mxu0 0.0
    %2580 = vmatprep.subr.mxu0 0.0
    %2581 = vmatpush1.xpose.msra.mxu0 0.0
    %2582 = vmatprep.subr.mxu0 0.0
    %2583 = vmatpush1.xpose.msra.mxu0 0.0
    %2584 = vmatprep.subr.mxu0 0.0
    %2585 = vmatpush1.xpose.msra.mxu0 0.0
    %2586 = vmatprep.subr.mxu0 0.0
    %2587 = vmatpush1.xpose.msra.mxu0 0.0
    %2588 = vmatprep.subr.mxu0 0.0
    %2589 = vmatpush1.xpose.msra.mxu0 0.0
    %2590 = vmatprep.subr.mxu0 0.0
    %2591 = vmatpush1.xpose.msra.mxu0 0.0
    %2592 = vmatprep.subr.mxu0 0.0
    %2593 = vmatpush1.xpose.msra.mxu0 0.0
    %2594 = vmatprep.subr.mxu0 0.0
    %2595 = vmatpush1.xpose.msra.mxu0 0.0
    %2596 = vmatprep.mubr.f32.mxu0 %v613
    %2597 = vmatmul.mubr.f32.gmra.mrb[0].mxu0 %v36
    %v2598 = vpop.f32.mrb[0].mxu0
    %v2599 = vadd.f32 0.0, %v2598
    %v2600 = vpop.f32.mrb[0].mxu0
    %2601 = vmatprep.mubr.f32.mxu0 %v616
    %2602 = vmatmul.mubr.f32.gmra.mrb[0].mxu0 %v38
    %v2603 = vpop.f32.mrb[0].mxu0
    %v2604 = vadd.f32 0.0, %v2603
    %v2605 = vpop.f32.mrb[0].mxu0
    %2606 = vdwg.mxu0
    %v2607 = vmul.f32 %v2599, 0.11111111
    %v2608 = vmul.f32 %v2604, 0.11111111
    %v2609 = vlaneseq
    %v2610 = vshrl.u32 %v2609, 7
    %v2611 = vsub.s32 0, %v2610
    %v2612 = vrot.slane %v1867, %v2611
    %v2614 = vsel %vm702, %v2607, 0
    %v2617 = vsel %vm702, %v2608, 0
    %2619 = vmatprep.subr.mxu0 0.0
    %2620 = vmatpush1.msra.mxu0 %v1864
    %2621 = vmatprep.subr.mxu0 0.0
    %2622 = vmatpush1.msra.mxu0 0.0
    %2623 = vmatprep.subr.mxu0 0.0
    %2624 = vmatpush1.msra.mxu0 0.0
    %2625 = vmatprep.subr.mxu0 0.0
    %2626 = vmatpush1.msra.mxu0 0.0
    %2627 = vmatprep.subr.mxu0 0.0
    %2628 = vmatpush1.msra.mxu0 0.0
    %2629 = vmatprep.subr.mxu0 0.0
    %2630 = vmatpush1.msra.mxu0 0.0
    %2631 = vmatprep.subr.mxu0 0.0
    %2632 = vmatpush1.msra.mxu0 0.0
    %2633 = vmatprep.subr.mxu0 0.0
    %2634 = vmatpush1.msra.mxu0 0.0
    %2635 = vmatprep.subr.mxu0 0.0
    %2636 = vmatpush1.msra.mxu0 0.0
    %2637 = vmatprep.subr.mxu0 0.0
    %2638 = vmatpush1.msra.mxu0 0.0
    %2639 = vmatprep.subr.mxu0 0.0
    %2640 = vmatpush1.msra.mxu0 0.0
    %2641 = vmatprep.subr.mxu0 0.0
    %2642 = vmatpush1.msra.mxu0 0.0
    %2643 = vmatprep.subr.mxu0 0.0
    %2644 = vmatpush1.msra.mxu0 0.0
    %2645 = vmatprep.subr.mxu0 0.0
    %2646 = vmatpush1.msra.mxu0 0.0
    %2647 = vmatprep.subr.mxu0 0.0
    %2648 = vmatpush1.msra.mxu0 0.0
    %2649 = vmatprep.subr.mxu0 0.0
    %2650 = vmatpush1.msra.mxu0 0.0
    %2651 = vmatprep.subr.mxu0 0.0
    %2652 = vmatpush1.msra.mxu0 0.0
    %2653 = vmatprep.subr.mxu0 0.0
    %2654 = vmatpush1.msra.mxu0 0.0
    %2655 = vmatprep.subr.mxu0 0.0
    %2656 = vmatpush1.msra.mxu0 0.0
    %2657 = vmatprep.subr.mxu0 0.0
    %2658 = vmatpush1.msra.mxu0 0.0
    %2659 = vmatprep.subr.mxu0 0.0
    %2660 = vmatpush1.msra.mxu0 0.0
    %2661 = vmatprep.subr.mxu0 0.0
    %2662 = vmatpush1.msra.mxu0 0.0
    %2663 = vmatprep.subr.mxu0 0.0
    %2664 = vmatpush1.msra.mxu0 0.0
    %2665 = vmatprep.subr.mxu0 0.0
    %2666 = vmatpush1.msra.mxu0 0.0
    %2667 = vmatprep.subr.mxu0 0.0
    %2668 = vmatpush1.msra.mxu0 0.0
    %2669 = vmatprep.subr.mxu0 0.0
    %2670 = vmatpush1.msra.mxu0 0.0
    %2671 = vmatprep.subr.mxu0 0.0
    %2672 = vmatpush1.msra.mxu0 0.0
    %2673 = vmatprep.subr.mxu0 0.0
    %2674 = vmatpush1.msra.mxu0 0.0
    %2675 = vmatprep.subr.mxu0 0.0
    %2676 = vmatpush1.msra.mxu0 0.0
    %2677 = vmatprep.subr.mxu0 0.0
    %2678 = vmatpush1.msra.mxu0 0.0
    %2679 = vmatprep.subr.mxu0 0.0
    %2680 = vmatpush1.msra.mxu0 0.0
    %2681 = vmatprep.subr.mxu0 0.0
    %2682 = vmatpush1.msra.mxu0 0.0
    %2683 = vmatprep.mubr.f32.mxu0 0.0
    %2684 = vmatmul.mubr.f32.gmra.mrb[0].mxu0 %v2614
    %v2685 = vpop.f32.mrb[0].mxu0
    %v2686 = vadd.f32 %v2612, %v2685
    %v2687 = vpop.f32.mrb[0].mxu0
    %2688 = vmatprep.mubr.f32.mxu0 0.0
    %2689 = vmatmul.mubr.f32.gmra.mrb[0].mxu0 %v2617
    %v2690 = vpop.f32.mrb[0].mxu0
    %v2691 = vadd.f32 %v2612, %v2690
    %v2692 = vpop.f32.mrb[0].mxu0
    %2693 = vdwg.mxu0
    %v2694 = vlaneseq
    %v2695 = vshrl.u32 %v2694, 7
    %v2696 = vsub.s32 1, %v2695
    %v2697 = vrot.slane %v1867, %v2696
    %2698 = vmatprep.subr.mxu0 0.0
    %2699 = vmatpush1.msra.mxu0 %v1865
    %2700 = vmatprep.subr.mxu0 0.0
    %2701 = vmatpush1.msra.mxu0 %v1866
    %2702 = vmatprep.subr.mxu0 0.0
    %2703 = vmatpush1.msra.mxu0 0.0
    %2704 = vmatprep.subr.mxu0 0.0
    %2705 = vmatpush1.msra.mxu0 0.0
    %2706 = vmatprep.subr.mxu0 0.0
    %2707 = vmatpush1.msra.mxu0 0.0
    %2708 = vmatprep.subr.mxu0 0.0
    %2709 = vmatpush1.msra.mxu0 0.0
    %2710 = vmatprep.subr.mxu0 0.0
    %2711 = vmatpush1.msra.mxu0 0.0
    %2712 = vmatprep.subr.mxu0 0.0
    %2713 = vmatpush1.msra.mxu0 0.0
    %2714 = vmatprep.subr.mxu0 0.0
    %2715 = vmatpush1.msra.mxu0 0.0
    %2716 = vmatprep.subr.mxu0 0.0
    %2717 = vmatpush1.msra.mxu0 0.0
    %2718 = vmatprep.subr.mxu0 0.0
    %2719 = vmatpush1.msra.mxu0 0.0
    %2720 = vmatprep.subr.mxu0 0.0
    %2721 = vmatpush1.msra.mxu0 0.0
    %2722 = vmatprep.subr.mxu0 0.0
    %2723 = vmatpush1.msra.mxu0 0.0
    %2724 = vmatprep.subr.mxu0 0.0
    %2725 = vmatpush1.msra.mxu0 0.0
    %2726 = vmatprep.subr.mxu0 0.0
    %2727 = vmatpush1.msra.mxu0 0.0
    %2728 = vmatprep.subr.mxu0 0.0
    %2729 = vmatpush1.msra.mxu0 0.0
    %2730 = vmatprep.subr.mxu0 0.0
    %2731 = vmatpush1.msra.mxu0 0.0
    %2732 = vmatprep.subr.mxu0 0.0
    %2733 = vmatpush1.msra.mxu0 0.0
    %2734 = vmatprep.subr.mxu0 0.0
    %2735 = vmatpush1.msra.mxu0 0.0
    %2736 = vmatprep.subr.mxu0 0.0
    %2737 = vmatpush1.msra.mxu0 0.0
    %2738 = vmatprep.subr.mxu0 0.0
    %2739 = vmatpush1.msra.mxu0 0.0
    %2740 = vmatprep.subr.mxu0 0.0
    %2741 = vmatpush1.msra.mxu0 0.0
    %2742 = vmatprep.subr.mxu0 0.0
    %2743 = vmatpush1.msra.mxu0 0.0
    %2744 = vmatprep.subr.mxu0 0.0
    %2745 = vmatpush1.msra.mxu0 0.0
    %2746 = vmatprep.subr.mxu0 0.0
    %2747 = vmatpush1.msra.mxu0 0.0
    %2748 = vmatprep.subr.mxu0 0.0
    %2749 = vmatpush1.msra.mxu0 0.0
    %2750 = vmatprep.subr.mxu0 0.0
    %2751 = vmatpush1.msra.mxu0 0.0
    %2752 = vmatprep.subr.mxu0 0.0
    %2753 = vmatpush1.msra.mxu0 0.0
    %2754 = vmatprep.subr.mxu0 0.0
    %2755 = vmatpush1.msra.mxu0 0.0
    %2756 = vmatprep.subr.mxu0 0.0
    %2757 = vmatpush1.msra.mxu0 0.0
    %2758 = vmatprep.subr.mxu0 0.0
    %2759 = vmatpush1.msra.mxu0 0.0
    %2760 = vmatprep.subr.mxu0 0.0
    %2761 = vmatpush1.msra.mxu0 0.0
    %2762 = vmatprep.mubr.f32.mxu0 0.0
    %2763 = vmatmul.mubr.f32.gmra.mrb[0].mxu0 %v789
    %v2764 = vpop.f32.mrb[0].mxu0
    %v2765 = vadd.f32 %v2697, %v2764
    %v2766 = vpop.f32.mrb[0].mxu0
    %2767 = vdwg.mxu0
    %v2768 = vadd.f32 %v2686, %v2765
    %v2769 = vxor.u32 %v2768, 2147483648
    %v2770 = vmul.f32 %v2769, 1.442695
    %v2771 = vpow.pop %v2770
    %v2772 = vadd.f32 %v2771, 1.0
    %v2773 = vrcp.pop %v2772
    %v2774 = vmul.f32 1.0, %v2773
    %2776 = vrot.lane.b32.xlu0 %v2765, 96
    %v2777 = vpop.permute.xlu0 %2776
    %v2779 = vmul.f32 %v2774, %v2777
    %2781 = vrot.lane.b32.xlu0 %v2779, 32
    %v2782 = vpop.permute.xlu0 %2781
    %v2784 = vadd.f32 %v2686, %v2782
    %v2785 = vtanh.pop %v2784
    %v2786 = vsub.f32 1.0, %v2774
    %2788 = vrot.lane.b32.xlu0 %v2785, 112
    %v2789 = vpop.permute.xlu0 %2788
    %v2791 = vmul.f32 %v2786, %v2789
    %v2792 = vmul.f32 %v2774, 0.0
    %v2793 = vadd.f32 %v2791, %v2792
    %2795 = vrot.lane.b32.xlu0 %v2793, 112
    %v2796 = vpop.permute.xlu0 %2795
    %v2797 = vsel %vm535, %v2796, 0
    %2799 = vmatprep.subr.mxu0 0.0
    %2800 = vmatpush1.msra.mxu0 %v1865
    %2801 = vmatprep.subr.mxu0 0.0
    %2802 = vmatpush1.msra.mxu0 %v1866
    %2803 = vmatprep.subr.mxu0 0.0
    %2804 = vmatpush1.msra.mxu0 0.0
    %2805 = vmatprep.subr.mxu0 0.0
    %2806 = vmatpush1.msra.mxu0 0.0
    %2807 = vmatprep.subr.mxu0 0.0
    %2808 = vmatpush1.msra.mxu0 0.0
    %2809 = vmatprep.subr.mxu0 0.0
    %2810 = vmatpush1.msra.mxu0 0.0
    %2811 = vmatprep.subr.mxu0 0.0
    %2812 = vmatpush1.msra.mxu0 0.0
    %2813 = vmatprep.subr.mxu0 0.0
    %2814 = vmatpush1.msra.mxu0 0.0
    %2815 = vmatprep.subr.mxu0 0.0
    %2816 = vmatpush1.msra.mxu0 0.0
    %2817 = vmatprep.subr.mxu0 0.0
    %2818 = vmatpush1.msra.mxu0 0.0
    %2819 = vmatprep.subr.mxu0 0.0
    %2820 = vmatpush1.msra.mxu0 0.0
    %2821 = vmatprep.subr.mxu0 0.0
    %2822 = vmatpush1.msra.mxu0 0.0
    %2823 = vmatprep.subr.mxu0 0.0
    %2824 = vmatpush1.msra.mxu0 0.0
    %2825 = vmatprep.subr.mxu0 0.0
    %2826 = vmatpush1.msra.mxu0 0.0
    %2827 = vmatprep.subr.mxu0 0.0
    %2828 = vmatpush1.msra.mxu0 0.0
    %2829 = vmatprep.subr.mxu0 0.0
    %2830 = vmatpush1.msra.mxu0 0.0
    %2831 = vmatprep.subr.mxu0 0.0
    %2832 = vmatpush1.msra.mxu0 0.0
    %2833 = vmatprep.subr.mxu0 0.0
    %2834 = vmatpush1.msra.mxu0 0.0
    %2835 = vmatprep.subr.mxu0 0.0
    %2836 = vmatpush1.msra.mxu0 0.0
    %2837 = vmatprep.subr.mxu0 0.0
    %2838 = vmatpush1.msra.mxu0 0.0
    %2839 = vmatprep.subr.mxu0 0.0
    %2840 = vmatpush1.msra.mxu0 0.0
    %2841 = vmatprep.subr.mxu0 0.0
    %2842 = vmatpush1.msra.mxu0 0.0
    %2843 = vmatprep.subr.mxu0 0.0
    %2844 = vmatpush1.msra.mxu0 0.0
    %2845 = vmatprep.subr.mxu0 0.0
    %2846 = vmatpush1.msra.mxu0 0.0
    %2847 = vmatprep.subr.mxu0 0.0
    %2848 = vmatpush1.msra.mxu0 0.0
    %2849 = vmatprep.subr.mxu0 0.0
    %2850 = vmatpush1.msra.mxu0 0.0
    %2851 = vmatprep.subr.mxu0 0.0
    %2852 = vmatpush1.msra.mxu0 0.0
    %2853 = vmatprep.subr.mxu0 0.0
    %2854 = vmatpush1.msra.mxu0 0.0
    %2855 = vmatprep.subr.mxu0 0.0
    %2856 = vmatpush1.msra.mxu0 0.0
    %2857 = vmatprep.subr.mxu0 0.0
    %2858 = vmatpush1.msra.mxu0 0.0
    %2859 = vmatprep.subr.mxu0 0.0
    %2860 = vmatpush1.msra.mxu0 0.0
    %2861 = vmatprep.subr.mxu0 0.0
    %2862 = vmatpush1.msra.mxu0 0.0
    %2863 = vmatprep.mubr.f32.mxu0 0.0
    %2864 = vmatmul.mubr.f32.gmra.mrb[0].mxu0 %v2797
    %v2865 = vpop.f32.mrb[0].mxu0
    %v2866 = vadd.f32 %v2697, %v2865
    %v2867 = vpop.f32.mrb[0].mxu0
    %2868 = vdwg.mxu0
    %v2870 = vrot.slane %v2866, 6
    %v2872 = vadd.f32 %v2686, %v2870
    %v2873 = vxor.u32 %v2872, 2147483648
    %v2874 = vmul.f32 %v2873, 1.442695
    %v2875 = vpow.pop %v2874
    %v2876 = vadd.f32 %v2875, 1.0
    %v2877 = vrcp.pop %v2876
    %v2878 = vmul.f32 1.0, %v2877
    %2879 = vrot.lane.b32.xlu0 %v2870, 96
    %v2880 = vpop.permute.xlu0 %2879
    %v2882 = vmul.f32 %v2878, %v2880
    %2884 = vrot.lane.b32.xlu0 %v2882, 32
    %v2885 = vpop.permute.xlu0 %2884
    %v2887 = vadd.f32 %v2686, %v2885
    %v2888 = vtanh.pop %v2887
    %v2889 = vsub.f32 1.0, %v2878
    %2891 = vrot.lane.b32.xlu0 %v2888, 112
    %v2892 = vpop.permute.xlu0 %2891
    %v2894 = vmul.f32 %v2889, %v2892
    %v2895 = vrot.slane %v2793, 6
    %v2897 = vmul.f32 %v2878, %v2895
    %v2898 = vadd.f32 %v2894, %v2897
    %v2900 = vrot.slane %v2898, 2
    %2901 = vrot.lane.b32.xlu0 %v2900, 112
    %v2902 = vpop.permute.xlu0 %2901
    %v2903 = vsel %vm535, %v2902, 0
    %2905 = vmatprep.subr.mxu0 0.0
    %2906 = vmatpush1.msra.mxu0 %v1865
    %2907 = vmatprep.subr.mxu0 0.0
    %2908 = vmatpush1.msra.mxu0 %v1866
    %2909 = vmatprep.subr.mxu0 0.0
    %2910 = vmatpush1.msra.mxu0 0.0
    %2911 = vmatprep.subr.mxu0 0.0
    %2912 = vmatpush1.msra.mxu0 0.0
    %2913 = vmatprep.subr.mxu0 0.0
    %2914 = vmatpush1.msra.mxu0 0.0
    %2915 = vmatprep.subr.mxu0 0.0
    %2916 = vmatpush1.msra.mxu0 0.0
    %2917 = vmatprep.subr.mxu0 0.0
    %2918 = vmatpush1.msra.mxu0 0.0
    %2919 = vmatprep.subr.mxu0 0.0
    %2920 = vmatpush1.msra.mxu0 0.0
    %2921 = vmatprep.subr.mxu0 0.0
    %2922 = vmatpush1.msra.mxu0 0.0
    %2923 = vmatprep.subr.mxu0 0.0
    %2924 = vmatpush1.msra.mxu0 0.0
    %2925 = vmatprep.subr.mxu0 0.0
    %2926 = vmatpush1.msra.mxu0 0.0
    %2927 = vmatprep.subr.mxu0 0.0
    %2928 = vmatpush1.msra.mxu0 0.0
    %2929 = vmatprep.subr.mxu0 0.0
    %2930 = vmatpush1.msra.mxu0 0.0
    %2931 = vmatprep.subr.mxu0 0.0
    %2932 = vmatpush1.msra.mxu0 0.0
    %2933 = vmatprep.subr.mxu0 0.0
    %2934 = vmatpush1.msra.mxu0 0.0
    %2935 = vmatprep.subr.mxu0 0.0
    %2936 = vmatpush1.msra.mxu0 0.0
    %2937 = vmatprep.subr.mxu0 0.0
    %2938 = vmatpush1.msra.mxu0 0.0
    %2939 = vmatprep.subr.mxu0 0.0
    %2940 = vmatpush1.msra.mxu0 0.0
    %2941 = vmatprep.subr.mxu0 0.0
    %2942 = vmatpush1.msra.mxu0 0.0
    %2943 = vmatprep.subr.mxu0 0.0
    %2944 = vmatpush1.msra.mxu0 0.0
    %2945 = vmatprep.subr.mxu0 0.0
    %2946 = vmatpush1.msra.mxu0 0.0
    %2947 = vmatprep.subr.mxu0 0.0
    %2948 = vmatpush1.msra.mxu0 0.0
    %2949 = vmatprep.subr.mxu0 0.0
    %2950 = vmatpush1.msra.mxu0 0.0
    %2951 = vmatprep.subr.mxu0 0.0
    %2952 = vmatpush1.msra.mxu0 0.0
    %2953 = vmatprep.subr.mxu0 0.0
    %2954 = vmatpush1.msra.mxu0 0.0
    %2955 = vmatprep.subr.mxu0 0.0
    %2956 = vmatpush1.msra.mxu0 0.0
    %2957 = vmatprep.subr.mxu0 0.0
    %2958 = vmatpush1.msra.mxu0 0.0
    %2959 = vmatprep.subr.mxu0 0.0
    %2960 = vmatpush1.msra.mxu0 0.0
    %2961 = vmatprep.subr.mxu0 0.0
    %2962 = vmatpush1.msra.mxu0 0.0
    %2963 = vmatprep.subr.mxu0 0.0
    %2964 = vmatpush1.msra.mxu0 0.0
    %2965 = vmatprep.subr.mxu0 0.0
    %2966 = vmatpush1.msra.mxu0 0.0
    %2967 = vmatprep.subr.mxu0 0.0
    %2968 = vmatpush1.msra.mxu0 0.0
    %2969 = vmatprep.mubr.f32.mxu0 0.0
    %2970 = vmatmul.mubr.f32.gmra.mrb[0].mxu0 %v2903
    %v2971 = vpop.f32.mrb[0].mxu0
    %v2972 = vadd.f32 %v2697, %v2971
    %v2973 = vpop.f32.mrb[0].mxu0
    %2974 = vdwg.mxu0
    %v2976 = vrot.slane %v2972, 4
    %v2978 = vadd.f32 %v2686, %v2976
    %v2979 = vxor.u32 %v2978, 2147483648
    %v2980 = vmul.f32 %v2979, 1.442695
    %v2981 = vpow.pop %v2980
    %v2982 = vadd.f32 %v2981, 1.0
    %v2983 = vrcp.pop %v2982
    %v2984 = vmul.f32 1.0, %v2983
    %2985 = vrot.lane.b32.xlu0 %v2976, 96
    %v2986 = vpop.permute.xlu0 %2985
    %v2988 = vmul.f32 %v2984, %v2986
    %2990 = vrot.lane.b32.xlu0 %v2988, 32
    %v2991 = vpop.permute.xlu0 %2990
    %v2993 = vadd.f32 %v2686, %v2991
    %v2994 = vtanh.pop %v2993
    %v2995 = vsub.f32 1.0, %v2984
    %2997 = vrot.lane.b32.xlu0 %v2994, 112
    %v2998 = vpop.permute.xlu0 %2997
    %v3000 = vmul.f32 %v2995, %v2998
    %v3001 = vrot.slane %v2898, 6
    %v3003 = vmul.f32 %v2984, %v3001
    %v3004 = vadd.f32 %v3000, %v3003
    %v3006 = vrot.slane %v3004, 4
    %3007 = vrot.lane.b32.xlu0 %v3006, 112
    %v3008 = vpop.permute.xlu0 %3007
    %v3009 = vsel %vm535, %v3008, 0
    %3011 = vmatprep.subr.mxu0 0.0
    %3012 = vmatpush1.msra.mxu0 %v1865
    %3013 = vmatprep.subr.mxu0 0.0
    %3014 = vmatpush1.msra.mxu0 %v1866
    %3015 = vmatprep.subr.mxu0 0.0
    %3016 = vmatpush1.msra.mxu0 0.0
    %3017 = vmatprep.subr.mxu0 0.0
    %3018 = vmatpush1.msra.mxu0 0.0
    %3019 = vmatprep.subr.mxu0 0.0
    %3020 = vmatpush1.msra.mxu0 0.0
    %3021 = vmatprep.subr.mxu0 0.0
    %3022 = vmatpush1.msra.mxu0 0.0
    %3023 = vmatprep.subr.mxu0 0.0
    %3024 = vmatpush1.msra.mxu0 0.0
    %3025 = vmatprep.subr.mxu0 0.0
    %3026 = vmatpush1.msra.mxu0 0.0
    %3027 = vmatprep.subr.mxu0 0.0
    %3028 = vmatpush1.msra.mxu0 0.0
    %3029 = vmatprep.subr.mxu0 0.0
    %3030 = vmatpush1.msra.mxu0 0.0
    %3031 = vmatprep.subr.mxu0 0.0
    %3032 = vmatpush1.msra.mxu0 0.0
    %3033 = vmatprep.subr.mxu0 0.0
    %3034 = vmatpush1.msra.mxu0 0.0
    %3035 = vmatprep.subr.mxu0 0.0
    %3036 = vmatpush1.msra.mxu0 0.0
    %3037 = vmatprep.subr.mxu0 0.0
    %3038 = vmatpush1.msra.mxu0 0.0
    %3039 = vmatprep.subr.mxu0 0.0
    %3040 = vmatpush1.msra.mxu0 0.0
    %3041 = vmatprep.subr.mxu0 0.0
    %3042 = vmatpush1.msra.mxu0 0.0
    %3043 = vmatprep.subr.mxu0 0.0
    %3044 = vmatpush1.msra.mxu0 0.0
    %3045 = vmatprep.subr.mxu0 0.0
    %3046 = vmatpush1.msra.mxu0 0.0
    %3047 = vmatprep.subr.mxu0 0.0
    %3048 = vmatpush1.msra.mxu0 0.0
    %3049 = vmatprep.subr.mxu0 0.0
    %3050 = vmatpush1.msra.mxu0 0.0
    %3051 = vmatprep.subr.mxu0 0.0
    %3052 = vmatpush1.msra.mxu0 0.0
    %3053 = vmatprep.subr.mxu0 0.0
    %3054 = vmatpush1.msra.mxu0 0.0
    %3055 = vmatprep.subr.mxu0 0.0
    %3056 = vmatpush1.msra.mxu0 0.0
    %3057 = vmatprep.subr.mxu0 0.0
    %3058 = vmatpush1.msra.mxu0 0.0
    %3059 = vmatprep.subr.mxu0 0.0
    %3060 = vmatpush1.msra.mxu0 0.0
    %3061 = vmatprep.subr.mxu0 0.0
    %3062 = vmatpush1.msra.mxu0 0.0
    %3063 = vmatprep.subr.mxu0 0.0
    %3064 = vmatpush1.msra.mxu0 0.0
    %3065 = vmatprep.subr.mxu0 0.0
    %3066 = vmatpush1.msra.mxu0 0.0
    %3067 = vmatprep.subr.mxu0 0.0
    %3068 = vmatpush1.msra.mxu0 0.0
    %3069 = vmatprep.subr.mxu0 0.0
    %3070 = vmatpush1.msra.mxu0 0.0
    %3071 = vmatprep.subr.mxu0 0.0
    %3072 = vmatpush1.msra.mxu0 0.0
    %3073 = vmatprep.subr.mxu0 0.0
    %3074 = vmatpush1.msra.mxu0 0.0
    %3075 = vmatprep.mubr.f32.mxu0 0.0
    %3076 = vmatmul.mubr.f32.gmra.mrb[0].mxu0 %v3009
    %v3077 = vpop.f32.mrb[0].mxu0
    %v3078 = vadd.f32 %v2697, %v3077
    %v3079 = vpop.f32.mrb[0].mxu0
    %3080 = vdwg.mxu0
    %v3082 = vrot.slane %v3078, 2
    %v3084 = vadd.f32 %v2686, %v3082
    %v3085 = vxor.u32 %v3084, 2147483648
    %v3086 = vmul.f32 %v3085, 1.442695
    %v3087 = vpow.pop %v3086
    %v3088 = vadd.f32 %v3087, 1.0
    %v3089 = vrcp.pop %v3088
    %v3090 = vmul.f32 1.0, %v3089
    %3091 = vrot.lane.b32.xlu0 %v3082, 96
    %v3092 = vpop.permute.xlu0 %3091
    %v3094 = vmul.f32 %v3090, %v3092
    %3096 = vrot.lane.b32.xlu0 %v3094, 32
    %v3097 = vpop.permute.xlu0 %3096
    %v3099 = vadd.f32 %v2686, %v3097
    %v3100 = vtanh.pop %v3099
    %v3101 = vsub.f32 1.0, %v3090
    %3103 = vrot.lane.b32.xlu0 %v3100, 112
    %v3104 = vpop.permute.xlu0 %3103
    %v3106 = vmul.f32 %v3101, %v3104
    %v3107 = vrot.slane %v3004, 6
    %v3109 = vmul.f32 %v3090, %v3107
    %v3110 = vadd.f32 %v3106, %v3109
    %v3112 = vrot.slane %v3110, 6
    %3113 = vrot.lane.b32.xlu0 %v3112, 112
    %v3114 = vpop.permute.xlu0 %3113
    %v3115 = vsel %vm535, %v3114, 0
    %3117 = vmatprep.subr.mxu0 0.0
    %3118 = vmatpush1.msra.mxu0 %v1865
    %3119 = vmatprep.subr.mxu0 0.0
    %3120 = vmatpush1.msra.mxu0 %v1866
    %3121 = vmatprep.subr.mxu0 0.0
    %3122 = vmatpush1.msra.mxu0 0.0
    %3123 = vmatprep.subr.mxu0 0.0
    %3124 = vmatpush1.msra.mxu0 0.0
    %3125 = vmatprep.subr.mxu0 0.0
    %3126 = vmatpush1.msra.mxu0 0.0
    %3127 = vmatprep.subr.mxu0 0.0
    %3128 = vmatpush1.msra.mxu0 0.0
    %3129 = vmatprep.subr.mxu0 0.0
    %3130 = vmatpush1.msra.mxu0 0.0
    %3131 = vmatprep.subr.mxu0 0.0
    %3132 = vmatpush1.msra.mxu0 0.0
    %3133 = vmatprep.subr.mxu0 0.0
    %3134 = vmatpush1.msra.mxu0 0.0
    %3135 = vmatprep.subr.mxu0 0.0
    %3136 = vmatpush1.msra.mxu0 0.0
    %3137 = vmatprep.subr.mxu0 0.0
    %3138 = vmatpush1.msra.mxu0 0.0
    %3139 = vmatprep.subr.mxu0 0.0
    %3140 = vmatpush1.msra.mxu0 0.0
    %3141 = vmatprep.subr.mxu0 0.0
    %3142 = vmatpush1.msra.mxu0 0.0
    %3143 = vmatprep.subr.mxu0 0.0
    %3144 = vmatpush1.msra.mxu0 0.0
    %3145 = vmatprep.subr.mxu0 0.0
    %3146 = vmatpush1.msra.mxu0 0.0
    %3147 = vmatprep.subr.mxu0 0.0
    %3148 = vmatpush1.msra.mxu0 0.0
    %3149 = vmatprep.subr.mxu0 0.0
    %3150 = vmatpush1.msra.mxu0 0.0
    %3151 = vmatprep.subr.mxu0 0.0
    %3152 = vmatpush1.msra.mxu0 0.0
    %3153 = vmatprep.subr.mxu0 0.0
    %3154 = vmatpush1.msra.mxu0 0.0
    %3155 = vmatprep.subr.mxu0 0.0
    %3156 = vmatpush1.msra.mxu0 0.0
    %3157 = vmatprep.subr.mxu0 0.0
    %3158 = vmatpush1.msra.mxu0 0.0
    %3159 = vmatprep.subr.mxu0 0.0
    %3160 = vmatpush1.msra.mxu0 0.0
    %3161 = vmatprep.subr.mxu0 0.0
    %3162 = vmatpush1.msra.mxu0 0.0
    %3163 = vmatprep.subr.mxu0 0.0
    %3164 = vmatpush1.msra.mxu0 0.0
    %3165 = vmatprep.subr.mxu0 0.0
    %3166 = vmatpush1.msra.mxu0 0.0
    %3167 = vmatprep.subr.mxu0 0.0
    %3168 = vmatpush1.msra.mxu0 0.0
    %3169 = vmatprep.subr.mxu0 0.0
    %3170 = vmatpush1.msra.mxu0 0.0
    %3171 = vmatprep.subr.mxu0 0.0
    %3172 = vmatpush1.msra.mxu0 0.0
    %3173 = vmatprep.subr.mxu0 0.0
    %3174 = vmatpush1.msra.mxu0 0.0
    %3175 = vmatprep.subr.mxu0 0.0
    %3176 = vmatpush1.msra.mxu0 0.0
    %3177 = vmatprep.subr.mxu0 0.0
    %3178 = vmatpush1.msra.mxu0 0.0
    %3179 = vmatprep.subr.mxu0 0.0
    %3180 = vmatpush1.msra.mxu0 0.0
    %3181 = vmatprep.mubr.f32.mxu0 0.0
    %3182 = vmatmul.mubr.f32.gmra.mrb[0].mxu0 %v3115
    %v3183 = vpop.f32.mrb[0].mxu0
    %v3184 = vadd.f32 %v2697, %v3183
    %v3185 = vpop.f32.mrb[0].mxu0
    %3186 = vdwg.mxu0
    %v3187 = vadd.f32 %v2691, %v3184
    %v3188 = vxor.u32 %v3187, 2147483648
    %v3189 = vmul.f32 %v3188, 1.442695
    %v3190 = vpow.pop %v3189
    %v3191 = vadd.f32 %v3190, 1.0
    %v3192 = vrcp.pop %v3191
    %v3193 = vmul.f32 1.0, %v3192
    %3195 = vrot.lane.b32.xlu0 %v3184, 96
    %v3196 = vpop.permute.xlu0 %3195
    %v3198 = vmul.f32 %v3193, %v3196
    %3200 = vrot.lane.b32.xlu0 %v3198, 32
    %v3201 = vpop.permute.xlu0 %3200
    %v3203 = vadd.f32 %v2691, %v3201
    %v3204 = vtanh.pop %v3203
    %v3205 = vsub.f32 1.0, %v3193
    %3207 = vrot.lane.b32.xlu0 %v3204, 112
    %v3208 = vpop.permute.xlu0 %3207
    %v3210 = vmul.f32 %v3205, %v3208
    %v3212 = vmul.f32 %v3193, %v3112
    %v3213 = vadd.f32 %v3210, %v3212
    %3215 = vrot.lane.b32.xlu0 %v3213, 112
    %v3216 = vpop.permute.xlu0 %3215
    %v3217 = vsel %vm535, %v3216, 0
    %3219 = vmatprep.subr.mxu0 0.0
    %3220 = vmatpush1.msra.mxu0 %v1865
    %3221 = vmatprep.subr.mxu0 0.0
    %3222 = vmatpush1.msra.mxu0 %v1866
    %3223 = vmatprep.subr.mxu0 0.0
    %3224 = vmatpush1.msra.mxu0 0.0
    %3225 = vmatprep.subr.mxu0 0.0
    %3226 = vmatpush1.msra.mxu0 0.0
    %3227 = vmatprep.subr.mxu0 0.0
    %3228 = vmatpush1.msra.mxu0 0.0
    %3229 = vmatprep.subr.mxu0 0.0
    %3230 = vmatpush1.msra.mxu0 0.0
    %3231 = vmatprep.subr.mxu0 0.0
    %3232 = vmatpush1.msra.mxu0 0.0
    %3233 = vmatprep.subr.mxu0 0.0
    %3234 = vmatpush1.msra.mxu0 0.0
    %3235 = vmatprep.subr.mxu0 0.0
    %3236 = vmatpush1.msra.mxu0 0.0
    %3237 = vmatprep.subr.mxu0 0.0
    %3238 = vmatpush1.msra.mxu0 0.0
    %3239 = vmatprep.subr.mxu0 0.0
    %3240 = vmatpush1.msra.mxu0 0.0
    %3241 = vmatprep.subr.mxu0 0.0
    %3242 = vmatpush1.msra.mxu0 0.0
    %3243 = vmatprep.subr.mxu0 0.0
    %3244 = vmatpush1.msra.mxu0 0.0
    %3245 = vmatprep.subr.mxu0 0.0
    %3246 = vmatpush1.msra.mxu0 0.0
    %3247 = vmatprep.subr.mxu0 0.0
    %3248 = vmatpush1.msra.mxu0 0.0
    %3249 = vmatprep.subr.mxu0 0.0
    %3250 = vmatpush1.msra.mxu0 0.0
    %3251 = vmatprep.subr.mxu0 0.0
    %3252 = vmatpush1.msra.mxu0 0.0
    %3253 = vmatprep.subr.mxu0 0.0
    %3254 = vmatpush1.msra.mxu0 0.0
    %3255 = vmatprep.subr.mxu0 0.0
    %3256 = vmatpush1.msra.mxu0 0.0
    %3257 = vmatprep.subr.mxu0 0.0
    %3258 = vmatpush1.msra.mxu0 0.0
    %3259 = vmatprep.subr.mxu0 0.0
    %3260 = vmatpush1.msra.mxu0 0.0
    %3261 = vmatprep.subr.mxu0 0.0
    %3262 = vmatpush1.msra.mxu0 0.0
    %3263 = vmatprep.subr.mxu0 0.0
    %3264 = vmatpush1.msra.mxu0 0.0
    %3265 = vmatprep.subr.mxu0 0.0
    %3266 = vmatpush1.msra.mxu0 0.0
    %3267 = vmatprep.subr.mxu0 0.0
    %3268 = vmatpush1.msra.mxu0 0.0
    %3269 = vmatprep.subr.mxu0 0.0
    %3270 = vmatpush1.msra.mxu0 0.0
    %3271 = vmatprep.subr.mxu0 0.0
    %3272 = vmatpush1.msra.mxu0 0.0
    %3273 = vmatprep.subr.mxu0 0.0
    %3274 = vmatpush1.msra.mxu0 0.0
    %3275 = vmatprep.subr.mxu0 0.0
    %3276 = vmatpush1.msra.mxu0 0.0
    %3277 = vmatprep.subr.mxu0 0.0
    %3278 = vmatpush1.msra.mxu0 0.0
    %3279 = vmatprep.subr.mxu0 0.0
    %3280 = vmatpush1.msra.mxu0 0.0
    %3281 = vmatprep.subr.mxu0 0.0
    %3282 = vmatpush1.msra.mxu0 0.0
    %3283 = vmatprep.mubr.f32.mxu0 0.0
    %3284 = vmatmul.mubr.f32.gmra.mrb[0].mxu0 %v3217
    %v3285 = vpop.f32.mrb[0].mxu0
    %v3286 = vadd.f32 %v2697, %v3285
    %v3287 = vpop.f32.mrb[0].mxu0
    %3288 = vdwg.mxu0
    %v3290 = vrot.slane %v3286, 6
    %v3292 = vadd.f32 %v2691, %v3290
    %v3293 = vxor.u32 %v3292, 2147483648
    %v3294 = vmul.f32 %v3293, 1.442695
    %v3295 = vpow.pop %v3294
    %v3296 = vadd.f32 %v3295, 1.0
    %v3297 = vrcp.pop %v3296
    %v3298 = vmul.f32 1.0, %v3297
    %3299 = vrot.lane.b32.xlu0 %v3290, 96
    %v3300 = vpop.permute.xlu0 %3299
    %v3302 = vmul.f32 %v3298, %v3300
    %3304 = vrot.lane.b32.xlu0 %v3302, 32
    %v3305 = vpop.permute.xlu0 %3304
    %v3307 = vadd.f32 %v2691, %v3305
    %v3308 = vtanh.pop %v3307
    %v3309 = vsub.f32 1.0, %v3298
    %3311 = vrot.lane.b32.xlu0 %v3308, 112
    %v3312 = vpop.permute.xlu0 %3311
    %v3314 = vmul.f32 %v3309, %v3312
    %v3315 = vrot.slane %v3213, 6
    %v3317 = vmul.f32 %v3298, %v3315
    %v3318 = vadd.f32 %v3314, %v3317
    %v3320 = vrot.slane %v3318, 2
    %3321 = vrot.lane.b32.xlu0 %v3320, 112
    %v3322 = vpop.permute.xlu0 %3321
    %v3323 = vsel %vm535, %v3322, 0
    %3325 = vmatprep.subr.mxu0 0.0
    %3326 = vmatpush1.msra.mxu0 %v1865
    %3327 = vmatprep.subr.mxu0 0.0
    %3328 = vmatpush1.msra.mxu0 %v1866
    %3329 = vmatprep.subr.mxu0 0.0
    %3330 = vmatpush1.msra.mxu0 0.0
    %3331 = vmatprep.subr.mxu0 0.0
    %3332 = vmatpush1.msra.mxu0 0.0
    %3333 = vmatprep.subr.mxu0 0.0
    %3334 = vmatpush1.msra.mxu0 0.0
    %3335 = vmatprep.subr.mxu0 0.0
    %3336 = vmatpush1.msra.mxu0 0.0
    %3337 = vmatprep.subr.mxu0 0.0
    %3338 = vmatpush1.msra.mxu0 0.0
    %3339 = vmatprep.subr.mxu0 0.0
    %3340 = vmatpush1.msra.mxu0 0.0
    %3341 = vmatprep.subr.mxu0 0.0
    %3342 = vmatpush1.msra.mxu0 0.0
    %3343 = vmatprep.subr.mxu0 0.0
    %3344 = vmatpush1.msra.mxu0 0.0
    %3345 = vmatprep.subr.mxu0 0.0
    %3346 = vmatpush1.msra.mxu0 0.0
    %3347 = vmatprep.subr.mxu0 0.0
    %3348 = vmatpush1.msra.mxu0 0.0
    %3349 = vmatprep.subr.mxu0 0.0
    %3350 = vmatpush1.msra.mxu0 0.0
    %3351 = vmatprep.subr.mxu0 0.0
    %3352 = vmatpush1.msra.mxu0 0.0
    %3353 = vmatprep.subr.mxu0 0.0
    %3354 = vmatpush1.msra.mxu0 0.0
    %3355 = vmatprep.subr.mxu0 0.0
    %3356 = vmatpush1.msra.mxu0 0.0
    %3357 = vmatprep.subr.mxu0 0.0
    %3358 = vmatpush1.msra.mxu0 0.0
    %3359 = vmatprep.subr.mxu0 0.0
    %3360 = vmatpush1.msra.mxu0 0.0
    %3361 = vmatprep.subr.mxu0 0.0
    %3362 = vmatpush1.msra.mxu0 0.0
    %3363 = vmatprep.subr.mxu0 0.0
    %3364 = vmatpush1.msra.mxu0 0.0
    %3365 = vmatprep.subr.mxu0 0.0
    %3366 = vmatpush1.msra.mxu0 0.0
    %3367 = vmatprep.subr.mxu0 0.0
    %3368 = vmatpush1.msra.mxu0 0.0
    %3369 = vmatprep.subr.mxu0 0.0
    %3370 = vmatpush1.msra.mxu0 0.0
    %3371 = vmatprep.subr.mxu0 0.0
    %3372 = vmatpush1.msra.mxu0 0.0
    %3373 = vmatprep.subr.mxu0 0.0
    %3374 = vmatpush1.msra.mxu0 0.0
    %3375 = vmatprep.subr.mxu0 0.0
    %3376 = vmatpush1.msra.mxu0 0.0
    %3377 = vmatprep.subr.mxu0 0.0
    %3378 = vmatpush1.msra.mxu0 0.0
    %3379 = vmatprep.subr.mxu0 0.0
    %3380 = vmatpush1.msra.mxu0 0.0
    %3381 = vmatprep.subr.mxu0 0.0
    %3382 = vmatpush1.msra.mxu0 0.0
    %3383 = vmatprep.subr.mxu0 0.0
    %3384 = vmatpush1.msra.mxu0 0.0
    %3385 = vmatprep.subr.mxu0 0.0
    %3386 = vmatpush1.msra.mxu0 0.0
    %3387 = vmatprep.subr.mxu0 0.0
    %3388 = vmatpush1.msra.mxu0 0.0
    %3389 = vmatprep.mubr.f32.mxu0 0.0
    %3390 = vmatmul.mubr.f32.gmra.mrb[0].mxu0 %v3323
    %v3391 = vpop.f32.mrb[0].mxu0
    %v3392 = vadd.f32 %v2697, %v3391
    %v3393 = vpop.f32.mrb[0].mxu0
    %3394 = vdwg.mxu0
    %v3396 = vrot.slane %v3392, 4
    %v3398 = vadd.f32 %v2691, %v3396
    %v3399 = vxor.u32 %v3398, 2147483648
    %v3400 = vmul.f32 %v3399, 1.442695
    %v3401 = vpow.pop %v3400
    %v3402 = vadd.f32 %v3401, 1.0
    %v3403 = vrcp.pop %v3402
    %v3404 = vmul.f32 1.0, %v3403
    %3405 = vrot.lane.b32.xlu0 %v3396, 96
    %v3406 = vpop.permute.xlu0 %3405
    %v3408 = vmul.f32 %v3404, %v3406
    %3410 = vrot.lane.b32.xlu0 %v3408, 32
    %v3411 = vpop.permute.xlu0 %3410
    %v3413 = vadd.f32 %v2691, %v3411
    %v3414 = vtanh.pop %v3413
    %v3415 = vsub.f32 1.0, %v3404
    %3417 = vrot.lane.b32.xlu0 %v3414, 112
    %v3418 = vpop.permute.xlu0 %3417
    %v3420 = vmul.f32 %v3415, %v3418
    %v3421 = vrot.slane %v3318, 6
    %v3423 = vmul.f32 %v3404, %v3421
    %v3424 = vadd.f32 %v3420, %v3423
    %v3426 = vrot.slane %v3424, 4
    %3427 = vrot.lane.b32.xlu0 %v3426, 112
    %v3428 = vpop.permute.xlu0 %3427
    %v3429 = vsel %vm535, %v3428, 0
    %3431 = vmatprep.subr.mxu0 0.0
    %3432 = vmatpush1.msra.mxu0 %v1865
    %3433 = vmatprep.subr.mxu0 0.0
    %3434 = vmatpush1.msra.mxu0 %v1866
    %3435 = vmatprep.subr.mxu0 0.0
    %3436 = vmatpush1.msra.mxu0 0.0
    %3437 = vmatprep.subr.mxu0 0.0
    %3438 = vmatpush1.msra.mxu0 0.0
    %3439 = vmatprep.subr.mxu0 0.0
    %3440 = vmatpush1.msra.mxu0 0.0
    %3441 = vmatprep.subr.mxu0 0.0
    %3442 = vmatpush1.msra.mxu0 0.0
    %3443 = vmatprep.subr.mxu0 0.0
    %3444 = vmatpush1.msra.mxu0 0.0
    %3445 = vmatprep.subr.mxu0 0.0
    %3446 = vmatpush1.msra.mxu0 0.0
    %3447 = vmatprep.subr.mxu0 0.0
    %3448 = vmatpush1.msra.mxu0 0.0
    %3449 = vmatprep.subr.mxu0 0.0
    %3450 = vmatpush1.msra.mxu0 0.0
    %3451 = vmatprep.subr.mxu0 0.0
    %3452 = vmatpush1.msra.mxu0 0.0
    %3453 = vmatprep.subr.mxu0 0.0
    %3454 = vmatpush1.msra.mxu0 0.0
    %3455 = vmatprep.subr.mxu0 0.0
    %3456 = vmatpush1.msra.mxu0 0.0
    %3457 = vmatprep.subr.mxu0 0.0
    %3458 = vmatpush1.msra.mxu0 0.0
    %3459 = vmatprep.subr.mxu0 0.0
    %3460 = vmatpush1.msra.mxu0 0.0
    %3461 = vmatprep.subr.mxu0 0.0
    %3462 = vmatpush1.msra.mxu0 0.0
    %3463 = vmatprep.subr.mxu0 0.0
    %3464 = vmatpush1.msra.mxu0 0.0
    %3465 = vmatprep.subr.mxu0 0.0
    %3466 = vmatpush1.msra.mxu0 0.0
    %3467 = vmatprep.subr.mxu0 0.0
    %3468 = vmatpush1.msra.mxu0 0.0
    %3469 = vmatprep.subr.mxu0 0.0
    %3470 = vmatpush1.msra.mxu0 0.0
    %3471 = vmatprep.subr.mxu0 0.0
    %3472 = vmatpush1.msra.mxu0 0.0
    %3473 = vmatprep.subr.mxu0 0.0
    %3474 = vmatpush1.msra.mxu0 0.0
    %3475 = vmatprep.subr.mxu0 0.0
    %3476 = vmatpush1.msra.mxu0 0.0
    %3477 = vmatprep.subr.mxu0 0.0
    %3478 = vmatpush1.msra.mxu0 0.0
    %3479 = vmatprep.subr.mxu0 0.0
    %3480 = vmatpush1.msra.mxu0 0.0
    %3481 = vmatprep.subr.mxu0 0.0
    %3482 = vmatpush1.msra.mxu0 0.0
    %3483 = vmatprep.subr.mxu0 0.0
    %3484 = vmatpush1.msra.mxu0 0.0
    %3485 = vmatprep.subr.mxu0 0.0
    %3486 = vmatpush1.msra.mxu0 0.0
    %3487 = vmatprep.subr.mxu0 0.0
    %3488 = vmatpush1.msra.mxu0 0.0
    %3489 = vmatprep.subr.mxu0 0.0
    %3490 = vmatpush1.msra.mxu0 0.0
    %3491 = vmatprep.subr.mxu0 0.0
    %3492 = vmatpush1.msra.mxu0 0.0
    %3493 = vmatprep.subr.mxu0 0.0
    %3494 = vmatpush1.msra.mxu0 0.0
    %3495 = vmatprep.mubr.f32.mxu0 0.0
    %3496 = vmatmul.mubr.f32.gmra.mrb[0].mxu0 %v3429
    %v3497 = vpop.f32.mrb[0].mxu0
    %v3498 = vadd.f32 %v2697, %v3497
    %v3499 = vpop.f32.mrb[0].mxu0
    %3500 = vdwg.mxu0
    %v3502 = vrot.slane %v3498, 2
    %v3504 = vadd.f32 %v2691, %v3502
    %v3505 = vxor.u32 %v3504, 2147483648
    %v3506 = vmul.f32 %v3505, 1.442695
    %v3507 = vpow.pop %v3506
    %v3508 = vadd.f32 %v3507, 1.0
    %v3509 = vrcp.pop %v3508
    %v3510 = vmul.f32 1.0, %v3509
    %3511 = vrot.lane.b32.xlu0 %v3502, 96
    %v3512 = vpop.permute.xlu0 %3511
    %v3514 = vmul.f32 %v3510, %v3512
    %3516 = vrot.lane.b32.xlu0 %v3514, 32
    %v3517 = vpop.permute.xlu0 %3516
    %v3519 = vadd.f32 %v2691, %v3517
    %v3520 = vtanh.pop %v3519
    %v3521 = vsub.f32 1.0, %v3510
    %3523 = vrot.lane.b32.xlu0 %v3520, 112
    %v3524 = vpop.permute.xlu0 %3523
    %v3526 = vmul.f32 %v3521, %v3524
    %v3527 = vrot.slane %v3424, 6
    %v3529 = vmul.f32 %v3510, %v3527
    %v3530 = vadd.f32 %v3526, %v3529
    %v3531 = vsel %vm1624, %v2793, %v2898
    %v3532 = vsel %vm1626, %v3531, %v3004
    %v3533 = vsel %vm1628, %v3532, %v3110
    %v3534 = vsel %vm1624, %v3213, %v3318
    %v3535 = vsel %vm1626, %v3534, %v3424
    %v3536 = vsel %vm1628, %v3535, %v3530
    %v3537 = vlaneseq
    %v3538 = vshrl.u32 %v3537, 7
    %v3539 = vsub.s32 2, %v3538
    %v3540 = vrot.slane %v1869, %v3539
    %3543 = vrot.lane.b32.xlu0 %v3533, 112
    %v3544 = vpop.permute.xlu0 %3543
    %3545 = vrot.lane.b32.xlu0 %v3536, 112
    %v3546 = vpop.permute.xlu0 %3545
    %v3550 = vrot.slane %v1867, 2
    %v3551 = vrot.slane %v1868, 2
    %v3552 = vsel %vm1628, %v3550, %v3551
    %v3553 = vrot.slane %v1869, 2
    %v3554 = vsel %vm1628, %v3551, %v3553
    %v3557 = vsel %vm535, %v3544, 0
    %v3559 = vsel %vm535, %v3546, 0
    %3561 = vmatprep.subr.mxu0 0.0
    %3562 = vmatpush1.msra.mxu0 %v3552
    %3563 = vmatprep.subr.mxu0 0.0
    %3564 = vmatpush1.msra.mxu0 %v3554
    %3565 = vmatprep.subr.mxu0 0.0
    %3566 = vmatpush1.msra.mxu0 0.0
    %3567 = vmatprep.subr.mxu0 0.0
    %3568 = vmatpush1.msra.mxu0 0.0
    %3569 = vmatprep.subr.mxu0 0.0
    %3570 = vmatpush1.msra.mxu0 0.0
    %3571 = vmatprep.subr.mxu0 0.0
    %3572 = vmatpush1.msra.mxu0 0.0
    %3573 = vmatprep.subr.mxu0 0.0
    %3574 = vmatpush1.msra.mxu0 0.0
    %3575 = vmatprep.subr.mxu0 0.0
    %3576 = vmatpush1.msra.mxu0 0.0
    %3577 = vmatprep.subr.mxu0 0.0
    %3578 = vmatpush1.msra.mxu0 0.0
    %3579 = vmatprep.subr.mxu0 0.0
    %3580 = vmatpush1.msra.mxu0 0.0
    %3581 = vmatprep.subr.mxu0 0.0
    %3582 = vmatpush1.msra.mxu0 0.0
    %3583 = vmatprep.subr.mxu0 0.0
    %3584 = vmatpush1.msra.mxu0 0.0
    %3585 = vmatprep.subr.mxu0 0.0
    %3586 = vmatpush1.msra.mxu0 0.0
    %3587 = vmatprep.subr.mxu0 0.0
    %3588 = vmatpush1.msra.mxu0 0.0
    %3589 = vmatprep.subr.mxu0 0.0
    %3590 = vmatpush1.msra.mxu0 0.0
    %3591 = vmatprep.subr.mxu0 0.0
    %3592 = vmatpush1.msra.mxu0 0.0
    %3593 = vmatprep.subr.mxu0 0.0
    %3594 = vmatpush1.msra.mxu0 0.0
    %3595 = vmatprep.subr.mxu0 0.0
    %3596 = vmatpush1.msra.mxu0 0.0
    %3597 = vmatprep.subr.mxu0 0.0
    %3598 = vmatpush1.msra.mxu0 0.0
    %3599 = vmatprep.subr.mxu0 0.0
    %3600 = vmatpush1.msra.mxu0 0.0
    %3601 = vmatprep.subr.mxu0 0.0
    %3602 = vmatpush1.msra.mxu0 0.0
    %3603 = vmatprep.subr.mxu0 0.0
    %3604 = vmatpush1.msra.mxu0 0.0
    %3605 = vmatprep.subr.mxu0 0.0
    %3606 = vmatpush1.msra.mxu0 0.0
    %3607 = vmatprep.subr.mxu0 0.0
    %3608 = vmatpush1.msra.mxu0 0.0
    %3609 = vmatprep.subr.mxu0 0.0
    %3610 = vmatpush1.msra.mxu0 0.0
    %3611 = vmatprep.subr.mxu0 0.0
    %3612 = vmatpush1.msra.mxu0 0.0
    %3613 = vmatprep.subr.mxu0 0.0
    %3614 = vmatpush1.msra.mxu0 0.0
    %3615 = vmatprep.subr.mxu0 0.0
    %3616 = vmatpush1.msra.mxu0 0.0
    %3617 = vmatprep.subr.mxu0 0.0
    %3618 = vmatpush1.msra.mxu0 0.0
    %3619 = vmatprep.subr.mxu0 0.0
    %3620 = vmatpush1.msra.mxu0 0.0
    %3621 = vmatprep.subr.mxu0 0.0
    %3622 = vmatpush1.msra.mxu0 0.0
    %3623 = vmatprep.subr.mxu0 0.0
    %3624 = vmatpush1.msra.mxu0 0.0
    %3625 = vmatprep.mubr.f32.mxu0 0.0
    %3626 = vmatmul.mubr.f32.gmra.mrb[0].mxu0 %v3557
    %v3627 = vpop.f32.mrb[0].mxu0
    %v3628 = vadd.f32 %v3540, %v3627
    %v3629 = vpop.f32.mrb[0].mxu0
    %3630 = vmatprep.mubr.f32.mxu0 0.0
    %3631 = vmatmul.mubr.f32.gmra.mrb[0].mxu0 %v3559
    %v3632 = vpop.f32.mrb[0].mxu0
    %v3633 = vadd.f32 %v3540, %v3632
    %v3634 = vpop.f32.mrb[0].mxu0
    %3635 = vdwg.mxu0
    %v3636 = vxor.u32 %v3628, 2147483648
    %v3637 = vxor.u32 %v3633, 2147483648
    %v3638 = vmul.f32 %v3636, 1.442695
    %v3639 = vpow.pop %v3638
    %v3640 = vmul.f32 %v3637, 1.442695
    %v3641 = vpow.pop %v3640
    %v3642 = vadd.f32 %v3639, 1.0
    %v3643 = vadd.f32 %v3641, 1.0
    %v3644 = vrcp.pop %v3642
    %v3645 = vmul.f32 1.0, %v3644
    %v3646 = vrcp.pop %v3643
    %v3647 = vmul.f32 1.0, %v3646
    %3648 = vxpose.xlu0.b32.start [1/16] %v3645, 128
    %3649 = vxpose.xlu0.b32.cont [2/16] %v3647, 128
    %3650 = vxpose.xlu0.b32.cont [3/16] 0.0, 128
    %3651 = vxpose.xlu0.b32.cont [4/16] 0.0, 128
    %3652 = vxpose.xlu0.b32.cont [5/16] 0.0, 128
    %3653 = vxpose.xlu0.b32.cont [6/16] 0.0, 128
    %3654 = vxpose.xlu0.b32.cont [7/16] 0.0, 128
    %3655 = vxpose.xlu0.b32.cont [8/16] 0.0, 128
    %3656 = vxpose.xlu0.b32.cont [9/16] 0.0, 128
    %3657 = vxpose.xlu0.b32.cont [10/16] 0.0, 128
    %3658 = vxpose.xlu0.b32.cont [11/16] 0.0, 128
    %3659 = vxpose.xlu0.b32.cont [12/16] 0.0, 128
    %3660 = vxpose.xlu0.b32.cont [13/16] 0.0, 128
    %3661 = vxpose.xlu0.b32.cont [14/16] 0.0, 128
    %3662 = vxpose.xlu0.b32.cont [15/16] 0.0, 128
    %3663 = vxpose.xlu0.b32.end [16/16] 0.0, 128
    %v3664 = vpop.trf.xlu0
    %v3665 = vpop.trf.xlu0
    %v3666 = vpop.trf.xlu0
    %v3667 = vpop.trf.xlu0
    %v3668 = vpop.trf.xlu0
    %v3669 = vpop.trf.xlu0
    %v3670 = vpop.trf.xlu0
    %v3671 = vpop.trf.xlu0
    %v3672 = vpop.trf.xlu0
    %v3673 = vpop.trf.xlu0
    %v3674 = vpop.trf.xlu0
    %v3675 = vpop.trf.xlu0
    %v3676 = vpop.trf.xlu0
    %v3677 = vpop.trf.xlu0
    %v3678 = vpop.trf.xlu0
    %v3679 = vpop.trf.xlu0
    %v3681 = vsel %vm535, %v3664, 0
    %3683 = vmatprep.subr.mxu0 %v37
    %3684 = vmatpush1.msra.mxu0 %v36
    %3685 = vmatprep.subr.mxu0 %v39
    %3686 = vmatpush1.msra.mxu0 %v38
    %3687 = vmatprep.subr.mxu0 0.0
    %3688 = vmatpush1.msra.mxu0 0.0
    %3689 = vmatprep.subr.mxu0 0.0
    %3690 = vmatpush1.msra.mxu0 0.0
    %3691 = vmatprep.subr.mxu0 0.0
    %3692 = vmatpush1.msra.mxu0 0.0
    %3693 = vmatprep.subr.mxu0 0.0
    %3694 = vmatpush1.msra.mxu0 0.0
    %3695 = vmatprep.subr.mxu0 0.0
    %3696 = vmatpush1.msra.mxu0 0.0
    %3697 = vmatprep.subr.mxu0 0.0
    %3698 = vmatpush1.msra.mxu0 0.0
    %3699 = vmatprep.subr.mxu0 0.0
    %3700 = vmatpush1.msra.mxu0 0.0
    %3701 = vmatprep.subr.mxu0 0.0
    %3702 = vmatpush1.msra.mxu0 0.0
    %3703 = vmatprep.subr.mxu0 0.0
    %3704 = vmatpush1.msra.mxu0 0.0
    %3705 = vmatprep.subr.mxu0 0.0
    %3706 = vmatpush1.msra.mxu0 0.0
    %3707 = vmatprep.subr.mxu0 0.0
    %3708 = vmatpush1.msra.mxu0 0.0
    %3709 = vmatprep.subr.mxu0 0.0
    %3710 = vmatpush1.msra.mxu0 0.0
    %3711 = vmatprep.subr.mxu0 0.0
    %3712 = vmatpush1.msra.mxu0 0.0
    %3713 = vmatprep.subr.mxu0 0.0
    %3714 = vmatpush1.msra.mxu0 0.0
    %3715 = vmatprep.subr.mxu0 0.0
    %3716 = vmatpush1.msra.mxu0 0.0
    %3717 = vmatprep.subr.mxu0 0.0
    %3718 = vmatpush1.msra.mxu0 0.0
    %3719 = vmatprep.subr.mxu0 0.0
    %3720 = vmatpush1.msra.mxu0 0.0
    %3721 = vmatprep.subr.mxu0 0.0
    %3722 = vmatpush1.msra.mxu0 0.0
    %3723 = vmatprep.subr.mxu0 0.0
    %3724 = vmatpush1.msra.mxu0 0.0
    %3725 = vmatprep.subr.mxu0 0.0
    %3726 = vmatpush1.msra.mxu0 0.0
    %3727 = vmatprep.subr.mxu0 0.0
    %3728 = vmatpush1.msra.mxu0 0.0
    %3729 = vmatprep.subr.mxu0 0.0
    %3730 = vmatpush1.msra.mxu0 0.0
    %3731 = vmatprep.subr.mxu0 0.0
    %3732 = vmatpush1.msra.mxu0 0.0
    %3733 = vmatprep.subr.mxu0 0.0
    %3734 = vmatpush1.msra.mxu0 0.0
    %3735 = vmatprep.subr.mxu0 0.0
    %3736 = vmatpush1.msra.mxu0 0.0
    %3737 = vmatprep.subr.mxu0 0.0
    %3738 = vmatpush1.msra.mxu0 0.0
    %3739 = vmatprep.subr.mxu0 0.0
    %3740 = vmatpush1.msra.mxu0 0.0
    %3741 = vmatprep.subr.mxu0 0.0
    %3742 = vmatpush1.msra.mxu0 0.0
    %3743 = vmatprep.subr.mxu0 0.0
    %3744 = vmatpush1.msra.mxu0 0.0
    %3745 = vmatprep.subr.mxu0 0.0
    %3746 = vmatpush1.msra.mxu0 0.0
    %3747 = vmatprep.mubr.f32.mxu0 0.0
    %3748 = vmatmul.mubr.f32.gmra.mrb[0].mxu0 %v3681
    %v3749 = vpop.f32.mrb[0].mxu0
    %v3750 = vadd.f32 0.0, %v3749
    %v3751 = vpop.f32.mrb[0].mxu0
    %v3752 = vadd.f32 0.0, %v3751
    %3753 = vdwg.mxu0
    %v3754 = vmul.f32 %v2523, %v3750
    %v3755 = vmul.f32 %v2525, %v3752
    %v3756 = vrot.slane %v1857, 4
    %v3757 = vrot.slane %v1858, 4
    %v3760 = vsel %vm1626, %v3756, %v1859
    %v3761 = vsel %vm1626, %v3757, %v1860
    %s3762 = scalar_lea.vmem %s0, 96
    %v3763 = vld [vmem:[%s3762] sm:$0xff]
    %v3764 = vld [vmem:[%s3762 + $0x8] sm:$0xff]
    %v3765 = vld [vmem:[%s3762 + $0x10] sm:$0xff]
    %v3766 = vld [vmem:[%s3762 + $0x18] sm:$0xff]
    %v3767 = vadd.f32 %v3754, %v3763
    %v3768 = vadd.f32 %v3755, %v3764
    %v3769 = vadd.f32 %v3760, %v3765
    %v3770 = vadd.f32 %v3761, %v3766
    %s3771 = scalar_lea.vmem %s2, 128
    %v3772 = vld [vmem:[%s3771] sm:$0xff]
    %v3773 = vld [vmem:[%s3771 + $0x8] sm:$0xff]
    %v3774 = vld [vmem:[%s3771 + $0x10] sm:$0xff]
    %v3775 = vld [vmem:[%s3771 + $0x18] sm:$0xff]
    %v3776 = vld [vmem:[%s3771 + $0x20] sm:$0xff]
    %v3777 = vld [vmem:[%s3771 + $0x28] sm:$0xff]
    %v3778 = vld [vmem:[%s3771 + $0x30] sm:$0xff]
    %v3779 = vld [vmem:[%s3771 + $0x38] sm:$0x7]
    %s3780 = scalar_lea.vmem %s3, 48
    %v3781 = vld [vmem:[%s3780] sm:$0xff]
    %v3782 = vld [vmem:[%s3780 + $0x8] sm:$0xff]
    %v3783 = vld [vmem:[%s3780 + $0x10] sm:$0xff]
    %s3784 = sld [smem:[#allocation2 + $0x4]]
    %s3785 = sld [smem:[#allocation2 + $0x5]]
    %3788 = vrot.lane.b32.xlu0 %v3768, 113
    %v3789 = vpop.permute.xlu0 %3788
    %3790 = vrot.lane.b32.xlu0 %v3770, 113
    %v3791 = vpop.permute.xlu0 %3790
    %3796 = vrot.lane.b32.xlu0 %v3767, 1
    %v3797 = vpop.permute.xlu0 %3796
    %3798 = vrot.lane.b32.xlu0 %v3768, 1
    %v3799 = vpop.permute.xlu0 %3798
    %3800 = vrot.lane.b32.xlu0 %v3769, 1
    %v3801 = vpop.permute.xlu0 %3800
    %3802 = vrot.lane.b32.xlu0 %v3770, 1
    %v3803 = vpop.permute.xlu0 %3802
    %v3804 = vsel %vm88, %v3797, %v3799
    %v3805 = vsel %vm88, %v3801, %v3803
    %v3810 = vsel %vm88, %v3789, %v3797
    %v3811 = vsel %vm88, %v3791, %v3801
    %v3812 = vmul.f32 %v3810, %v100
    %v3813 = vmul.f32 %v3804, %v104
    %v3814 = vmul.f32 %v3811, %v100
    %v3815 = vmul.f32 %v3805, %v104
    %3816 = vrot.lane.b32.xlu0 %v3767, 127
    %v3817 = vpop.permute.xlu0 %3816
    %3818 = vrot.lane.b32.xlu0 %v3768, 127
    %v3819 = vpop.permute.xlu0 %3818
    %3820 = vrot.lane.b32.xlu0 %v3769, 127
    %v3821 = vpop.permute.xlu0 %3820
    %3822 = vrot.lane.b32.xlu0 %v3770, 127
    %v3823 = vpop.permute.xlu0 %3822
    %v3824 = vsel %vm117, %v3817, %v3819
    %v3825 = vsel %vm117, %v3821, %v3823
    %3830 = vrot.lane.b32.xlu0 %v3767, 15
    %v3831 = vpop.permute.xlu0 %3830
    %3832 = vrot.lane.b32.xlu0 %v3769, 15
    %v3833 = vpop.permute.xlu0 %3832
    %v3836 = vsel %vm130, %v3819, %v3831
    %v3837 = vsel %vm130, %v3823, %v3833
    %v3838 = vmul.f32 %v3824, %v136
    %v3839 = vmul.f32 %v3836, %v140
    %v3840 = vmul.f32 %v3825, %v136
    %v3841 = vmul.f32 %v3837, %v140
    %3843 = vset.pattern.permute.xlu0 9
    %3844 = vperm.xlu0 %3843, %v3781
    %v3845 = vpop.permute.xlu0 %3844
    %3848 = vset.pattern.permute.xlu0 9
    %3849 = vperm.xlu0 %3848, %v3782
    %v3850 = vpop.permute.xlu0 %3849
    %v3853 = vsel %vm155, %v3772, 0
    %v3856 = vsel %vm155, %v3773, 0
    %3858 = vmatprep.subr.mxu0 %v3813
    %3859 = vmatpush1.msra.mxu0 %v3812
    %3860 = vmatprep.subr.mxu0 %v3815
    %3861 = vmatpush1.msra.mxu0 %v3814
    %3862 = vmatprep.subr.mxu0 %v3768
    %3863 = vmatpush1.msra.mxu0 %v3767
    %3864 = vmatprep.subr.mxu0 %v3770
    %3865 = vmatpush1.msra.mxu0 %v3769
    %3866 = vmatprep.subr.mxu0 %v3839
    %3867 = vmatpush1.msra.mxu0 %v3838
    %3868 = vmatprep.subr.mxu0 %v3841
    %3869 = vmatpush1.msra.mxu0 %v3840
    %3870 = vmatprep.subr.mxu0 0.0
    %3871 = vmatpush1.msra.mxu0 0.0
    %3872 = vmatprep.subr.mxu0 0.0
    %3873 = vmatpush1.msra.mxu0 0.0
    %3874 = vmatprep.subr.mxu0 0.0
    %3875 = vmatpush1.msra.mxu0 0.0
    %3876 = vmatprep.subr.mxu0 0.0
    %3877 = vmatpush1.msra.mxu0 0.0
    %3878 = vmatprep.subr.mxu0 0.0
    %3879 = vmatpush1.msra.mxu0 0.0
    %3880 = vmatprep.subr.mxu0 0.0
    %3881 = vmatpush1.msra.mxu0 0.0
    %3882 = vmatprep.subr.mxu0 0.0
    %3883 = vmatpush1.msra.mxu0 0.0
    %3884 = vmatprep.subr.mxu0 0.0
    %3885 = vmatpush1.msra.mxu0 0.0
    %3886 = vmatprep.subr.mxu0 0.0
    %3887 = vmatpush1.msra.mxu0 0.0
    %3888 = vmatprep.subr.mxu0 0.0
    %3889 = vmatpush1.msra.mxu0 0.0
    %3890 = vmatprep.subr.mxu0 0.0
    %3891 = vmatpush1.msra.mxu0 0.0
    %3892 = vmatprep.subr.mxu0 0.0
    %3893 = vmatpush1.msra.mxu0 0.0
    %3894 = vmatprep.subr.mxu0 0.0
    %3895 = vmatpush1.msra.mxu0 0.0
    %3896 = vmatprep.subr.mxu0 0.0
    %3897 = vmatpush1.msra.mxu0 0.0
    %3898 = vmatprep.subr.mxu0 0.0
    %3899 = vmatpush1.msra.mxu0 0.0
    %3900 = vmatprep.subr.mxu0 0.0
    %3901 = vmatpush1.msra.mxu0 0.0
    %3902 = vmatprep.subr.mxu0 0.0
    %3903 = vmatpush1.msra.mxu0 0.0
    %3904 = vmatprep.subr.mxu0 0.0
    %3905 = vmatpush1.msra.mxu0 0.0
    %3906 = vmatprep.subr.mxu0 0.0
    %3907 = vmatpush1.msra.mxu0 0.0
    %3908 = vmatprep.subr.mxu0 0.0
    %3909 = vmatpush1.msra.mxu0 0.0
    %3910 = vmatprep.subr.mxu0 0.0
    %3911 = vmatpush1.msra.mxu0 0.0
    %3912 = vmatprep.subr.mxu0 0.0
    %3913 = vmatpush1.msra.mxu0 0.0
    %3914 = vmatprep.subr.mxu0 0.0
    %3915 = vmatpush1.msra.mxu0 0.0
    %3916 = vmatprep.subr.mxu0 0.0
    %3917 = vmatpush1.msra.mxu0 0.0
    %3918 = vmatprep.subr.mxu0 0.0
    %3919 = vmatpush1.msra.mxu0 0.0
    %3920 = vmatprep.subr.mxu0 0.0
    %3921 = vmatpush1.msra.mxu0 0.0
    %3922 = vmatprep.mubr.f32.mxu0 0.0
    %3923 = vmatmul.mubr.f32.gmra.mrb[0].mxu0 %v3853
    %v3924 = vpop.f32.mrb[0].mxu0
    %v3925 = vadd.f32 %v3845, %v3924
    %v3926 = vpop.f32.mrb[0].mxu0
    %v3927 = vadd.f32 %v3845, %v3926
    %3928 = vmatprep.mubr.f32.mxu0 0.0
    %3929 = vmatmul.mubr.f32.gmra.mrb[0].mxu0 %v3856
    %v3930 = vpop.f32.mrb[0].mxu0
    %v3931 = vadd.f32 %v3850, %v3930
    %v3932 = vpop.f32.mrb[0].mxu0
    %v3933 = vadd.f32 %v3850, %v3932
    %3934 = vdwg.mxu0
    %vm3935 = vcmp.ge.f32.partialorder %v3925, 0.0
    %vm3936 = vcmp.ge.f32.partialorder %v3927, 0.0
    %vm3937 = vcmp.ge.f32.partialorder %v3931, 0.0
    %vm3938 = vcmp.ge.f32.partialorder %v3933, 0.0
    %v3939 = vstv %s3784
    %v3940 = vmul.f32 %v3939, %v3925
    %v3941 = vmul.f32 %v3939, %v3927
    %v3942 = vmul.f32 %v3939, %v3931
    %v3943 = vmul.f32 %v3939, %v3933
    %v3944 = vsel %vm3935, %v3925, %v3940
    %v3945 = vsel %vm3936, %v3927, %v3941
    %v3946 = vsel %vm3937, %v3931, %v3942
    %v3947 = vsel %vm3938, %v3933, %v3943
    %3950 = vrot.lane.b32.xlu0 %v3945, 113
    %v3951 = vpop.permute.xlu0 %3950
    %3952 = vrot.lane.b32.xlu0 %v3947, 113
    %v3953 = vpop.permute.xlu0 %3952
    %3958 = vrot.lane.b32.xlu0 %v3944, 1
    %v3959 = vpop.permute.xlu0 %3958
    %3960 = vrot.lane.b32.xlu0 %v3945, 1
    %v3961 = vpop.permute.xlu0 %3960
    %3962 = vrot.lane.b32.xlu0 %v3946, 1
    %v3963 = vpop.permute.xlu0 %3962
    %3964 = vrot.lane.b32.xlu0 %v3947, 1
    %v3965 = vpop.permute.xlu0 %3964
    %v3966 = vsel %vm88, %v3959, %v3961
    %v3967 = vsel %vm88, %v3963, %v3965
    %v3972 = vsel %vm88, %v3951, %v3959
    %v3973 = vsel %vm88, %v3953, %v3963
    %v3974 = vmul.f32 %v3972, %v100
    %v3975 = vmul.f32 %v3966, %v104
    %v3976 = vmul.f32 %v3973, %v100
    %v3977 = vmul.f32 %v3967, %v104
    %3978 = vset.pattern.permute.xlu0 0
    %3979 = vperm.xlu0 %3978, %v3781
    %v3980 = vpop.permute.xlu0 %3979
    %3982 = vset.pattern.permute.xlu0 0
    %3983 = vperm.xlu0 %3982, %v3782
    %v3984 = vpop.permute.xlu0 %3983
    %v3986 = vmul.f32 %v3980, %v3974
    %v3987 = vmul.f32 %v3980, %v3975
    %v3988 = vmul.f32 %v3984, %v3976
    %v3989 = vmul.f32 %v3984, %v3977
    %v3990 = vadd.f32 %v3986, 0.0
    %v3991 = vadd.f32 %v3987, 0.0
    %v3992 = vadd.f32 %v3988, 0.0
    %v3993 = vadd.f32 %v3989, 0.0
    %3994 = vset.pattern.permute.xlu0 1
    %3995 = vperm.xlu0 %3994, %v3781
    %v3996 = vpop.permute.xlu0 %3995
    %3998 = vset.pattern.permute.xlu0 1
    %3999 = vperm.xlu0 %3998, %v3782
    %v4000 = vpop.permute.xlu0 %3999
    %v4002 = vmul.f32 %v3996, %v3944
    %v4003 = vmul.f32 %v3996, %v3945
    %v4004 = vmul.f32 %v4000, %v3946
    %v4005 = vmul.f32 %v4000, %v3947
    %v4006 = vadd.f32 %v3990, %v4002
    %v4007 = vadd.f32 %v3991, %v4003
    %v4008 = vadd.f32 %v3992, %v4004
    %v4009 = vadd.f32 %v3993, %v4005
    %4010 = vrot.lane.b32.xlu0 %v3944, 127
    %v4011 = vpop.permute.xlu0 %4010
    %4012 = vrot.lane.b32.xlu0 %v3945, 127
    %v4013 = vpop.permute.xlu0 %4012
    %4014 = vrot.lane.b32.xlu0 %v3946, 127
    %v4015 = vpop.permute.xlu0 %4014
    %4016 = vrot.lane.b32.xlu0 %v3947, 127
    %v4017 = vpop.permute.xlu0 %4016
    %v4018 = vsel %vm117, %v4011, %v4013
    %v4019 = vsel %vm117, %v4015, %v4017
    %4024 = vrot.lane.b32.xlu0 %v3944, 15
    %v4025 = vpop.permute.xlu0 %4024
    %4026 = vrot.lane.b32.xlu0 %v3946, 15
    %v4027 = vpop.permute.xlu0 %4026
    %v4030 = vsel %vm130, %v4013, %v4025
    %v4031 = vsel %vm130, %v4017, %v4027
    %v4032 = vmul.f32 %v4018, %v136
    %v4033 = vmul.f32 %v4030, %v140
    %v4034 = vmul.f32 %v4019, %v136
    %v4035 = vmul.f32 %v4031, %v140
    %4036 = vset.pattern.permute.xlu0 2
    %4037 = vperm.xlu0 %4036, %v3781
    %v4038 = vpop.permute.xlu0 %4037
    %4040 = vset.pattern.permute.xlu0 2
    %4041 = vperm.xlu0 %4040, %v3782
    %v4042 = vpop.permute.xlu0 %4041
    %v4044 = vmul.f32 %v4038, %v4032
    %v4045 = vmul.f32 %v4038, %v4033
    %v4046 = vmul.f32 %v4042, %v4034
    %v4047 = vmul.f32 %v4042, %v4035
    %v4048 = vadd.f32 %v4006, %v4044
    %v4049 = vadd.f32 %v4007, %v4045
    %v4050 = vadd.f32 %v4008, %v4046
    %v4051 = vadd.f32 %v4009, %v4047
    %4052 = vrot.lane.b32.xlu0 %v3945, 122
    %v4053 = vpop.permute.xlu0 %4052
    %4054 = vrot.lane.b32.xlu0 %v3947, 122
    %v4055 = vpop.permute.xlu0 %4054
    %4058 = vrot.lane.b32.xlu0 %v3944, 10
    %v4059 = vpop.permute.xlu0 %4058
    %4060 = vrot.lane.b32.xlu0 %v3945, 10
    %v4061 = vpop.permute.xlu0 %4060
    %4062 = vrot.lane.b32.xlu0 %v3946, 10
    %v4063 = vpop.permute.xlu0 %4062
    %4064 = vrot.lane.b32.xlu0 %v3947, 10
    %v4065 = vpop.permute.xlu0 %4064
    %vm4066 = vcmask 80896
    %v4067 = vsel %vm4066, %v4059, %v4061
    %v4068 = vsel %vm4066, %v4063, %v4065
    %v4073 = vsel %vm4066, %v4053, %v4059
    %v4074 = vsel %vm4066, %v4055, %v4063
    %v4075 = vlaneseq
    %v4076 = vshrl.u32 %v4075, 7
    %v4077 = vsub.s32 3, %v4076
    %v4078 = vrot.slane %v42, %v4077
    %v4079 = vlaneseq
    %v4080 = vshrl.u32 %v4079, 7
    %v4081 = vsub.s32 3, %v4080
    %v4082 = vrot.slane %v43, %v4081
    %v4083 = vmul.f32 %v4073, %v4078
    %v4084 = vmul.f32 %v4067, %v4082
    %v4085 = vmul.f32 %v4074, %v4078
    %v4086 = vmul.f32 %v4068, %v4082
    %4087 = vset.pattern.permute.xlu0 3
    %4088 = vperm.xlu0 %4087, %v3781
    %v4089 = vpop.permute.xlu0 %4088
    %4091 = vset.pattern.permute.xlu0 3
    %4092 = vperm.xlu0 %4091, %v3782
    %v4093 = vpop.permute.xlu0 %4092
    %v4095 = vmul.f32 %v4089, %v4083
    %v4096 = vmul.f32 %v4089, %v4084
    %v4097 = vmul.f32 %v4093, %v4085
    %v4098 = vmul.f32 %v4093, %v4086
    %v4099 = vadd.f32 %v4048, %v4095
    %v4100 = vadd.f32 %v4049, %v4096
    %v4101 = vadd.f32 %v4050, %v4097
    %v4102 = vadd.f32 %v4051, %v4098
    %4103 = vrot.lane.b32.xlu0 %v3945, 121
    %v4104 = vpop.permute.xlu0 %4103
    %4105 = vrot.lane.b32.xlu0 %v3947, 121
    %v4106 = vpop.permute.xlu0 %4105
    %4109 = vrot.lane.b32.xlu0 %v3944, 9
    %v4110 = vpop.permute.xlu0 %4109
    %4111 = vrot.lane.b32.xlu0 %v3945, 9
    %v4112 = vpop.permute.xlu0 %4111
    %4113 = vrot.lane.b32.xlu0 %v3946, 9
    %v4114 = vpop.permute.xlu0 %4113
    %4115 = vrot.lane.b32.xlu0 %v3947, 9
    %v4116 = vpop.permute.xlu0 %4115
    %vm4117 = vcmask 72704
    %v4118 = vsel %vm4117, %v4110, %v4112
    %v4119 = vsel %vm4117, %v4114, %v4116
    %v4124 = vsel %vm4117, %v4104, %v4110
    %v4125 = vsel %vm4117, %v4106, %v4114
    %v4126 = vlaneseq
    %v4127 = vshrl.u32 %v4126, 7
    %v4128 = vsub.s32 4, %v4127
    %v4129 = vrot.slane %v42, %v4128
    %v4130 = vlaneseq
    %v4131 = vshrl.u32 %v4130, 7
    %v4132 = vsub.s32 4, %v4131
    %v4133 = vrot.slane %v43, %v4132
    %v4134 = vmul.f32 %v4124, %v4129
    %v4135 = vmul.f32 %v4118, %v4133
    %v4136 = vmul.f32 %v4125, %v4129
    %v4137 = vmul.f32 %v4119, %v4133
    %4138 = vset.pattern.permute.xlu0 4
    %4139 = vperm.xlu0 %4138, %v3781
    %v4140 = vpop.permute.xlu0 %4139
    %4142 = vset.pattern.permute.xlu0 4
    %4143 = vperm.xlu0 %4142, %v3782
    %v4144 = vpop.permute.xlu0 %4143
    %v4146 = vmul.f32 %v4140, %v4134
    %v4147 = vmul.f32 %v4140, %v4135
    %v4148 = vmul.f32 %v4144, %v4136
    %v4149 = vmul.f32 %v4144, %v4137
    %v4150 = vadd.f32 %v4099, %v4146
    %v4151 = vadd.f32 %v4100, %v4147
    %v4152 = vadd.f32 %v4101, %v4148
    %v4153 = vadd.f32 %v4102, %v4149
    %4154 = vrot.lane.b32.xlu0 %v3945, 120
    %v4155 = vpop.permute.xlu0 %4154
    %4156 = vrot.lane.b32.xlu0 %v3947, 120
    %v4157 = vpop.permute.xlu0 %4156
    %4160 = vrot.lane.b32.xlu0 %v3944, 8
    %v4161 = vpop.permute.xlu0 %4160
    %4162 = vrot.lane.b32.xlu0 %v3945, 8
    %v4163 = vpop.permute.xlu0 %4162
    %4164 = vrot.lane.b32.xlu0 %v3946, 8
    %v4165 = vpop.permute.xlu0 %4164
    %4166 = vrot.lane.b32.xlu0 %v3947, 8
    %v4167 = vpop.permute.xlu0 %4166
    %v4168 = vsel %vm702, %v4161, %v4163
    %v4169 = vsel %vm702, %v4165, %v4167
    %v4174 = vsel %vm702, %v4155, %v4161
    %v4175 = vsel %vm702, %v4157, %v4165
    %v4176 = vlaneseq
    %v4177 = vshrl.u32 %v4176, 7
    %v4178 = vsub.s32 5, %v4177
    %v4179 = vrot.slane %v42, %v4178
    %v4180 = vlaneseq
    %v4181 = vshrl.u32 %v4180, 7
    %v4182 = vsub.s32 5, %v4181
    %v4183 = vrot.slane %v43, %v4182
    %v4184 = vmul.f32 %v4174, %v4179
    %v4185 = vmul.f32 %v4168, %v4183
    %v4186 = vmul.f32 %v4175, %v4179
    %v4187 = vmul.f32 %v4169, %v4183
    %4188 = vset.pattern.permute.xlu0 5
    %4189 = vperm.xlu0 %4188, %v3781
    %v4190 = vpop.permute.xlu0 %4189
    %4192 = vset.pattern.permute.xlu0 5
    %4193 = vperm.xlu0 %4192, %v3782
    %v4194 = vpop.permute.xlu0 %4193
    %v4196 = vmul.f32 %v4190, %v4184
    %v4197 = vmul.f32 %v4190, %v4185
    %v4198 = vmul.f32 %v4194, %v4186
    %v4199 = vmul.f32 %v4194, %v4187
    %v4200 = vadd.f32 %v4150, %v4196
    %v4201 = vadd.f32 %v4151, %v4197
    %v4202 = vadd.f32 %v4152, %v4198
    %v4203 = vadd.f32 %v4153, %v4199
    %4204 = vrot.lane.b32.xlu0 %v3944, 3
    %v4205 = vpop.permute.xlu0 %4204
    %4206 = vrot.lane.b32.xlu0 %v3945, 3
    %v4207 = vpop.permute.xlu0 %4206
    %4208 = vrot.lane.b32.xlu0 %v3946, 3
    %v4209 = vpop.permute.xlu0 %4208
    %4210 = vrot.lane.b32.xlu0 %v3947, 3
    %v4211 = vpop.permute.xlu0 %4210
    %v4212 = vsel %vm2150, %v4205, %v4207
    %v4213 = vsel %vm2150, %v4209, %v4211
    %4216 = vrot.lane.b32.xlu0 %v3944, 19
    %v4217 = vpop.permute.xlu0 %4216
    %4218 = vrot.lane.b32.xlu0 %v3946, 19
    %v4219 = vpop.permute.xlu0 %4218
    %v4222 = vsel %vm2161, %v4212, %v4217
    %v4223 = vsel %vm2161, %v4213, %v4219
    %v4224 = vmul.f32 %v4222, %v2167
    %v4225 = vmul.f32 %v4217, %v2171
    %v4226 = vmul.f32 %v4223, %v2167
    %v4227 = vmul.f32 %v4219, %v2171
    %4228 = vset.pattern.permute.xlu0 6
    %4229 = vperm.xlu0 %4228, %v3781
    %v4230 = vpop.permute.xlu0 %4229
    %4232 = vset.pattern.permute.xlu0 6
    %4233 = vperm.xlu0 %4232, %v3782
    %v4234 = vpop.permute.xlu0 %4233
    %v4236 = vmul.f32 %v4230, %v4224
    %v4237 = vmul.f32 %v4230, %v4225
    %v4238 = vmul.f32 %v4234, %v4226
    %v4239 = vmul.f32 %v4234, %v4227
    %v4240 = vadd.f32 %v4200, %v4236
    %v4241 = vadd.f32 %v4201, %v4237
    %v4242 = vadd.f32 %v4202, %v4238
    %v4243 = vadd.f32 %v4203, %v4239
    %4244 = vrot.lane.b32.xlu0 %v3944, 2
    %v4245 = vpop.permute.xlu0 %4244
    %4246 = vrot.lane.b32.xlu0 %v3945, 2
    %v4247 = vpop.permute.xlu0 %4246
    %4248 = vrot.lane.b32.xlu0 %v3946, 2
    %v4249 = vpop.permute.xlu0 %4248
    %4250 = vrot.lane.b32.xlu0 %v3947, 2
    %v4251 = vpop.permute.xlu0 %4250
    %v4252 = vsel %vm2200, %v4245, %v4247
    %v4253 = vsel %vm2200, %v4249, %v4251
    %4256 = vrot.lane.b32.xlu0 %v3944, 18
    %v4257 = vpop.permute.xlu0 %4256
    %4258 = vrot.lane.b32.xlu0 %v3946, 18
    %v4259 = vpop.permute.xlu0 %4258
    %v4262 = vsel %vm2211, %v4252, %v4257
    %v4263 = vsel %vm2211, %v4253, %v4259
    %v4264 = vmul.f32 %v4262, %v2217
    %v4265 = vmul.f32 %v4257, %v2221
    %v4266 = vmul.f32 %v4263, %v2217
    %v4267 = vmul.f32 %v4259, %v2221
    %4268 = vset.pattern.permute.xlu0 7
    %4269 = vperm.xlu0 %4268, %v3781
    %v4270 = vpop.permute.xlu0 %4269
    %4272 = vset.pattern.permute.xlu0 7
    %4273 = vperm.xlu0 %4272, %v3782
    %v4274 = vpop.permute.xlu0 %4273
    %v4276 = vmul.f32 %v4270, %v4264
    %v4277 = vmul.f32 %v4270, %v4265
    %v4278 = vmul.f32 %v4274, %v4266
    %v4279 = vmul.f32 %v4274, %v4267
    %v4280 = vadd.f32 %v4240, %v4276
    %v4281 = vadd.f32 %v4241, %v4277
    %v4282 = vadd.f32 %v4242, %v4278
    %v4283 = vadd.f32 %v4243, %v4279
    %4284 = vrot.lane.b32.xlu0 %v3944, 17
    %v4285 = vpop.permute.xlu0 %4284
    %4286 = vrot.lane.b32.xlu0 %v3946, 17
    %v4287 = vpop.permute.xlu0 %4286
    %v4290 = vsel %vm2248, %v3966, %v4285
    %v4291 = vsel %vm2248, %v3967, %v4287
    %v4292 = vmul.f32 %v4290, %v2254
    %v4293 = vmul.f32 %v4285, %v2258
    %v4294 = vmul.f32 %v4291, %v2254
    %v4295 = vmul.f32 %v4287, %v2258
    %4296 = vset.pattern.permute.xlu0 8
    %4297 = vperm.xlu0 %4296, %v3781
    %v4298 = vpop.permute.xlu0 %4297
    %4300 = vset.pattern.permute.xlu0 8
    %4301 = vperm.xlu0 %4300, %v3782
    %v4302 = vpop.permute.xlu0 %4301
    %v4304 = vmul.f32 %v4298, %v4292
    %v4305 = vmul.f32 %v4298, %v4293
    %v4306 = vmul.f32 %v4302, %v4294
    %v4307 = vmul.f32 %v4302, %v4295
    %v4308 = vadd.f32 %v4280, %v4304
    %v4309 = vadd.f32 %v4281, %v4305
    %v4310 = vadd.f32 %v4282, %v4306
    %v4311 = vadd.f32 %v4283, %v4307
    %4312 = vset.pattern.permute.xlu0 10
    %4313 = vperm.xlu0 %4312, %v3781
    %v4314 = vpop.permute.xlu0 %4313
    %4316 = vset.pattern.permute.xlu0 10
    %4317 = vperm.xlu0 %4316, %v3782
    %v4318 = vpop.permute.xlu0 %4317
    %v4320 = vadd.f32 %v4308, %v4314
    %v4321 = vadd.f32 %v4309, %v4314
    %v4322 = vadd.f32 %v4310, %v4318
    %v4323 = vadd.f32 %v4311, %v4318
    %vm4324 = vcmp.ge.f32.partialorder %v4320, 0.0
    %vm4325 = vcmp.ge.f32.partialorder %v4321, 0.0
    %vm4326 = vcmp.ge.f32.partialorder %v4322, 0.0
    %vm4327 = vcmp.ge.f32.partialorder %v4323, 0.0
    %v4328 = vstv %s3785
    %v4329 = vmul.f32 %v4328, %v4320
    %v4330 = vmul.f32 %v4328, %v4321
    %v4331 = vmul.f32 %v4328, %v4322
    %v4332 = vmul.f32 %v4328, %v4323
    %v4333 = vsel %vm4324, %v4320, %v4329
    %v4334 = vsel %vm4325, %v4321, %v4330
    %v4335 = vsel %vm4326, %v4322, %v4331
    %v4336 = vsel %vm4327, %v4323, %v4332
    %4337 = vset.pattern.permute.xlu0 11
    %4338 = vperm.xlu0 %4337, %v3781
    %v4339 = vpop.permute.xlu0 %4338
    %v4342 = vsel %vm535, %v3783, 0
    %4344 = vmatprep.subr.mxu0 %v4334
    %4345 = vmatpush1.msra.mxu0 %v4333
    %4346 = vmatprep.subr.mxu0 %v4336
    %4347 = vmatpush1.msra.mxu0 %v4335
    %4348 = vmatprep.subr.mxu0 0.0
    %4349 = vmatpush1.msra.mxu0 0.0
    %4350 = vmatprep.subr.mxu0 0.0
    %4351 = vmatpush1.msra.mxu0 0.0
    %4352 = vmatprep.subr.mxu0 0.0
    %4353 = vmatpush1.msra.mxu0 0.0
    %4354 = vmatprep.subr.mxu0 0.0
    %4355 = vmatpush1.msra.mxu0 0.0
    %4356 = vmatprep.subr.mxu0 0.0
    %4357 = vmatpush1.msra.mxu0 0.0
    %4358 = vmatprep.subr.mxu0 0.0
    %4359 = vmatpush1.msra.mxu0 0.0
    %4360 = vmatprep.subr.mxu0 0.0
    %4361 = vmatpush1.msra.mxu0 0.0
    %4362 = vmatprep.subr.mxu0 0.0
    %4363 = vmatpush1.msra.mxu0 0.0
    %4364 = vmatprep.subr.mxu0 0.0
    %4365 = vmatpush1.msra.mxu0 0.0
    %4366 = vmatprep.subr.mxu0 0.0
    %4367 = vmatpush1.msra.mxu0 0.0
    %4368 = vmatprep.subr.mxu0 0.0
    %4369 = vmatpush1.msra.mxu0 0.0
    %4370 = vmatprep.subr.mxu0 0.0
    %4371 = vmatpush1.msra.mxu0 0.0
    %4372 = vmatprep.subr.mxu0 0.0
    %4373 = vmatpush1.msra.mxu0 0.0
    %4374 = vmatprep.subr.mxu0 0.0
    %4375 = vmatpush1.msra.mxu0 0.0
    %4376 = vmatprep.subr.mxu0 0.0
    %4377 = vmatpush1.msra.mxu0 0.0
    %4378 = vmatprep.subr.mxu0 0.0
    %4379 = vmatpush1.msra.mxu0 0.0
    %4380 = vmatprep.subr.mxu0 0.0
    %4381 = vmatpush1.msra.mxu0 0.0
    %4382 = vmatprep.subr.mxu0 0.0
    %4383 = vmatpush1.msra.mxu0 0.0
    %4384 = vmatprep.subr.mxu0 0.0
    %4385 = vmatpush1.msra.mxu0 0.0
    %4386 = vmatprep.subr.mxu0 0.0
    %4387 = vmatpush1.msra.mxu0 0.0
    %4388 = vmatprep.subr.mxu0 0.0
    %4389 = vmatpush1.msra.mxu0 0.0
    %4390 = vmatprep.subr.mxu0 0.0
    %4391 = vmatpush1.msra.mxu0 0.0
    %4392 = vmatprep.subr.mxu0 0.0
    %4393 = vmatpush1.msra.mxu0 0.0
    %4394 = vmatprep.subr.mxu0 0.0
    %4395 = vmatpush1.msra.mxu0 0.0
    %4396 = vmatprep.subr.mxu0 0.0
    %4397 = vmatpush1.msra.mxu0 0.0
    %4398 = vmatprep.subr.mxu0 0.0
    %4399 = vmatpush1.msra.mxu0 0.0
    %4400 = vmatprep.subr.mxu0 0.0
    %4401 = vmatpush1.msra.mxu0 0.0
    %4402 = vmatprep.subr.mxu0 0.0
    %4403 = vmatpush1.msra.mxu0 0.0
    %4404 = vmatprep.subr.mxu0 0.0
    %4405 = vmatpush1.msra.mxu0 0.0
    %4406 = vmatprep.subr.mxu0 0.0
    %4407 = vmatpush1.msra.mxu0 0.0
    %4408 = vmatprep.mubr.f32.mxu0 0.0
    %4409 = vmatmul.mubr.f32.gmra.mrb[0].mxu0 %v4342
    %v4410 = vpop.f32.mrb[0].mxu0
    %v4411 = vadd.f32 %v4339, %v4410
    %v4412 = vpop.f32.mrb[0].mxu0
    %v4413 = vadd.f32 %v4339, %v4412
    %4414 = vdwg.mxu0
    %v4415 = vmul.f32 %v4411, %v4411
    %v4416 = vmul.f32 %v4413, %v4413
    %v4418 = vsel %vm535, %v4416, 0
    %4420 = vmatprep.subr.mxu0 %v4418
    %4421 = vmatpush1.xpose.msra.mxu0 %v4415
    %4422 = vmatprep.subr.mxu0 0.0
    %4423 = vmatpush1.xpose.msra.mxu0 0.0
    %4424 = vmatprep.subr.mxu0 0.0
    %4425 = vmatpush1.xpose.msra.mxu0 0.0
    %4426 = vmatprep.subr.mxu0 0.0
    %4427 = vmatpush1.xpose.msra.mxu0 0.0
    %4428 = vmatprep.subr.mxu0 0.0
    %4429 = vmatpush1.xpose.msra.mxu0 0.0
    %4430 = vmatprep.subr.mxu0 0.0
    %4431 = vmatpush1.xpose.msra.mxu0 0.0
    %4432 = vmatprep.subr.mxu0 0.0
    %4433 = vmatpush1.xpose.msra.mxu0 0.0
    %4434 = vmatprep.subr.mxu0 0.0
    %4435 = vmatpush1.xpose.msra.mxu0 0.0
    %4436 = vmatprep.subr.mxu0 0.0
    %4437 = vmatpush1.xpose.msra.mxu0 0.0
    %4438 = vmatprep.subr.mxu0 0.0
    %4439 = vmatpush1.xpose.msra.mxu0 0.0
    %4440 = vmatprep.subr.mxu0 0.0
    %4441 = vmatpush1.xpose.msra.mxu0 0.0
    %4442 = vmatprep.subr.mxu0 0.0
    %4443 = vmatpush1.xpose.msra.mxu0 0.0
    %4444 = vmatprep.subr.mxu0 0.0
    %4445 = vmatpush1.xpose.msra.mxu0 0.0
    %4446 = vmatprep.subr.mxu0 0.0
    %4447 = vmatpush1.xpose.msra.mxu0 0.0
    %4448 = vmatprep.subr.mxu0 0.0
    %4449 = vmatpush1.xpose.msra.mxu0 0.0
    %4450 = vmatprep.subr.mxu0 0.0
    %4451 = vmatpush1.xpose.msra.mxu0 0.0
    %4452 = vmatprep.subr.mxu0 0.0
    %4453 = vmatpush1.xpose.msra.mxu0 0.0
    %4454 = vmatprep.subr.mxu0 0.0
    %4455 = vmatpush1.xpose.msra.mxu0 0.0
    %4456 = vmatprep.subr.mxu0 0.0
    %4457 = vmatpush1.xpose.msra.mxu0 0.0
    %4458 = vmatprep.subr.mxu0 0.0
    %4459 = vmatpush1.xpose.msra.mxu0 0.0
    %4460 = vmatprep.subr.mxu0 0.0
    %4461 = vmatpush1.xpose.msra.mxu0 0.0
    %4462 = vmatprep.subr.mxu0 0.0
    %4463 = vmatpush1.xpose.msra.mxu0 0.0
    %4464 = vmatprep.subr.mxu0 0.0
    %4465 = vmatpush1.xpose.msra.mxu0 0.0
    %4466 = vmatprep.subr.mxu0 0.0
    %4467 = vmatpush1.xpose.msra.mxu0 0.0
    %4468 = vmatprep.subr.mxu0 0.0
    %4469 = vmatpush1.xpose.msra.mxu0 0.0
    %4470 = vmatprep.subr.mxu0 0.0
    %4471 = vmatpush1.xpose.msra.mxu0 0.0
    %4472 = vmatprep.subr.mxu0 0.0
    %4473 = vmatpush1.xpose.msra.mxu0 0.0
    %4474 = vmatprep.subr.mxu0 0.0
    %4475 = vmatpush1.xpose.msra.mxu0 0.0
    %4476 = vmatprep.subr.mxu0 0.0
    %4477 = vmatpush1.xpose.msra.mxu0 0.0
    %4478 = vmatprep.subr.mxu0 0.0
    %4479 = vmatpush1.xpose.msra.mxu0 0.0
    %4480 = vmatprep.subr.mxu0 0.0
    %4481 = vmatpush1.xpose.msra.mxu0 0.0
    %4482 = vmatprep.subr.mxu0 0.0
    %4483 = vmatpush1.xpose.msra.mxu0 0.0
    %4484 = vmatprep.mubr.f32.mxu0 %v613
    %4485 = vmatmul.mubr.f32.gmra.mrb[0].mxu0 %v36
    %v4486 = vpop.f32.mrb[0].mxu0
    %v4487 = vadd.f32 0.0, %v4486
    %v4488 = vpop.f32.mrb[0].mxu0
    %4489 = vmatprep.mubr.f32.mxu0 %v616
    %4490 = vmatmul.mubr.f32.gmra.mrb[0].mxu0 %v38
    %v4491 = vpop.f32.mrb[0].mxu0
    %v4492 = vadd.f32 0.0, %v4491
    %v4493 = vpop.f32.mrb[0].mxu0
    %4494 = vdwg.mxu0
    %v4495 = vmul.f32 %v4487, 0.11111111
    %v4496 = vmul.f32 %v4492, 0.11111111
    %v4497 = vlaneseq
    %v4498 = vshrl.u32 %v4497, 7
    %v4499 = vsub.s32 0, %v4498
    %v4500 = vrot.slane %v3777, %v4499
    %v4502 = vsel %vm702, %v4495, 0
    %v4505 = vsel %vm702, %v4496, 0
    %4507 = vmatprep.subr.mxu0 0.0
    %4508 = vmatpush1.msra.mxu0 %v3774
    %4509 = vmatprep.subr.mxu0 0.0
    %4510 = vmatpush1.msra.mxu0 0.0
    %4511 = vmatprep.subr.mxu0 0.0
    %4512 = vmatpush1.msra.mxu0 0.0
    %4513 = vmatprep.subr.mxu0 0.0
    %4514 = vmatpush1.msra.mxu0 0.0
    %4515 = vmatprep.subr.mxu0 0.0
    %4516 = vmatpush1.msra.mxu0 0.0
    %4517 = vmatprep.subr.mxu0 0.0
    %4518 = vmatpush1.msra.mxu0 0.0
    %4519 = vmatprep.subr.mxu0 0.0
    %4520 = vmatpush1.msra.mxu0 0.0
    %4521 = vmatprep.subr.mxu0 0.0
    %4522 = vmatpush1.msra.mxu0 0.0
    %4523 = vmatprep.subr.mxu0 0.0
    %4524 = vmatpush1.msra.mxu0 0.0
    %4525 = vmatprep.subr.mxu0 0.0
    %4526 = vmatpush1.msra.mxu0 0.0
    %4527 = vmatprep.subr.mxu0 0.0
    %4528 = vmatpush1.msra.mxu0 0.0
    %4529 = vmatprep.subr.mxu0 0.0
    %4530 = vmatpush1.msra.mxu0 0.0
    %4531 = vmatprep.subr.mxu0 0.0
    %4532 = vmatpush1.msra.mxu0 0.0
    %4533 = vmatprep.subr.mxu0 0.0
    %4534 = vmatpush1.msra.mxu0 0.0
    %4535 = vmatprep.subr.mxu0 0.0
    %4536 = vmatpush1.msra.mxu0 0.0
    %4537 = vmatprep.subr.mxu0 0.0
    %4538 = vmatpush1.msra.mxu0 0.0
    %4539 = vmatprep.subr.mxu0 0.0
    %4540 = vmatpush1.msra.mxu0 0.0
    %4541 = vmatprep.subr.mxu0 0.0
    %4542 = vmatpush1.msra.mxu0 0.0
    %4543 = vmatprep.subr.mxu0 0.0
    %4544 = vmatpush1.msra.mxu0 0.0
    %4545 = vmatprep.subr.mxu0 0.0
    %4546 = vmatpush1.msra.mxu0 0.0
    %4547 = vmatprep.subr.mxu0 0.0
    %4548 = vmatpush1.msra.mxu0 0.0
    %4549 = vmatprep.subr.mxu0 0.0
    %4550 = vmatpush1.msra.mxu0 0.0
    %4551 = vmatprep.subr.mxu0 0.0
    %4552 = vmatpush1.msra.mxu0 0.0
    %4553 = vmatprep.subr.mxu0 0.0
    %4554 = vmatpush1.msra.mxu0 0.0
    %4555 = vmatprep.subr.mxu0 0.0
    %4556 = vmatpush1.msra.mxu0 0.0
    %4557 = vmatprep.subr.mxu0 0.0
    %4558 = vmatpush1.msra.mxu0 0.0
    %4559 = vmatprep.subr.mxu0 0.0
    %4560 = vmatpush1.msra.mxu0 0.0
    %4561 = vmatprep.subr.mxu0 0.0
    %4562 = vmatpush1.msra.mxu0 0.0
    %4563 = vmatprep.subr.mxu0 0.0
    %4564 = vmatpush1.msra.mxu0 0.0
    %4565 = vmatprep.subr.mxu0 0.0
    %4566 = vmatpush1.msra.mxu0 0.0
    %4567 = vmatprep.subr.mxu0 0.0
    %4568 = vmatpush1.msra.mxu0 0.0
    %4569 = vmatprep.subr.mxu0 0.0
    %4570 = vmatpush1.msra.mxu0 0.0
    %4571 = vmatprep.mubr.f32.mxu0 0.0
    %4572 = vmatmul.mubr.f32.gmra.mrb[0].mxu0 %v4502
    %v4573 = vpop.f32.mrb[0].mxu0
    %v4574 = vadd.f32 %v4500, %v4573
    %v4575 = vpop.f32.mrb[0].mxu0
    %4576 = vmatprep.mubr.f32.mxu0 0.0
    %4577 = vmatmul.mubr.f32.gmra.mrb[0].mxu0 %v4505
    %v4578 = vpop.f32.mrb[0].mxu0
    %v4579 = vadd.f32 %v4500, %v4578
    %v4580 = vpop.f32.mrb[0].mxu0
    %4581 = vdwg.mxu0
    %v4582 = vlaneseq
    %v4583 = vshrl.u32 %v4582, 7
    %v4584 = vsub.s32 1, %v4583
    %v4585 = vrot.slane %v3777, %v4584
    %4586 = vmatprep.subr.mxu0 0.0
    %4587 = vmatpush1.msra.mxu0 %v3775
    %4588 = vmatprep.subr.mxu0 0.0
    %4589 = vmatpush1.msra.mxu0 %v3776
    %4590 = vmatprep.subr.mxu0 0.0
    %4591 = vmatpush1.msra.mxu0 0.0
    %4592 = vmatprep.subr.mxu0 0.0
    %4593 = vmatpush1.msra.mxu0 0.0
    %4594 = vmatprep.subr.mxu0 0.0
    %4595 = vmatpush1.msra.mxu0 0.0
    %4596 = vmatprep.subr.mxu0 0.0
    %4597 = vmatpush1.msra.mxu0 0.0
    %4598 = vmatprep.subr.mxu0 0.0
    %4599 = vmatpush1.msra.mxu0 0.0
    %4600 = vmatprep.subr.mxu0 0.0
    %4601 = vmatpush1.msra.mxu0 0.0
    %4602 = vmatprep.subr.mxu0 0.0
    %4603 = vmatpush1.msra.mxu0 0.0
    %4604 = vmatprep.subr.mxu0 0.0
    %4605 = vmatpush1.msra.mxu0 0.0
    %4606 = vmatprep.subr.mxu0 0.0
    %4607 = vmatpush1.msra.mxu0 0.0
    %4608 = vmatprep.subr.mxu0 0.0
    %4609 = vmatpush1.msra.mxu0 0.0
    %4610 = vmatprep.subr.mxu0 0.0
    %4611 = vmatpush1.msra.mxu0 0.0
    %4612 = vmatprep.subr.mxu0 0.0
    %4613 = vmatpush1.msra.mxu0 0.0
    %4614 = vmatprep.subr.mxu0 0.0
    %4615 = vmatpush1.msra.mxu0 0.0
    %4616 = vmatprep.subr.mxu0 0.0
    %4617 = vmatpush1.msra.mxu0 0.0
    %4618 = vmatprep.subr.mxu0 0.0
    %4619 = vmatpush1.msra.mxu0 0.0
    %4620 = vmatprep.subr.mxu0 0.0
    %4621 = vmatpush1.msra.mxu0 0.0
    %4622 = vmatprep.subr.mxu0 0.0
    %4623 = vmatpush1.msra.mxu0 0.0
    %4624 = vmatprep.subr.mxu0 0.0
    %4625 = vmatpush1.msra.mxu0 0.0
    %4626 = vmatprep.subr.mxu0 0.0
    %4627 = vmatpush1.msra.mxu0 0.0
    %4628 = vmatprep.subr.mxu0 0.0
    %4629 = vmatpush1.msra.mxu0 0.0
    %4630 = vmatprep.subr.mxu0 0.0
    %4631 = vmatpush1.msra.mxu0 0.0
    %4632 = vmatprep.subr.mxu0 0.0
    %4633 = vmatpush1.msra.mxu0 0.0
    %4634 = vmatprep.subr.mxu0 0.0
    %4635 = vmatpush1.msra.mxu0 0.0
    %4636 = vmatprep.subr.mxu0 0.0
    %4637 = vmatpush1.msra.mxu0 0.0
    %4638 = vmatprep.subr.mxu0 0.0
    %4639 = vmatpush1.msra.mxu0 0.0
    %4640 = vmatprep.subr.mxu0 0.0
    %4641 = vmatpush1.msra.mxu0 0.0
    %4642 = vmatprep.subr.mxu0 0.0
    %4643 = vmatpush1.msra.mxu0 0.0
    %4644 = vmatprep.subr.mxu0 0.0
    %4645 = vmatpush1.msra.mxu0 0.0
    %4646 = vmatprep.subr.mxu0 0.0
    %4647 = vmatpush1.msra.mxu0 0.0
    %4648 = vmatprep.subr.mxu0 0.0
    %4649 = vmatpush1.msra.mxu0 0.0
    %4650 = vmatprep.mubr.f32.mxu0 0.0
    %4651 = vmatmul.mubr.f32.gmra.mrb[0].mxu0 %v789
    %v4652 = vpop.f32.mrb[0].mxu0
    %v4653 = vadd.f32 %v4585, %v4652
    %v4654 = vpop.f32.mrb[0].mxu0
    %4655 = vdwg.mxu0
    %v4656 = vadd.f32 %v4574, %v4653
    %v4657 = vxor.u32 %v4656, 2147483648
    %v4658 = vmul.f32 %v4657, 1.442695
    %v4659 = vpow.pop %v4658
    %v4660 = vadd.f32 %v4659, 1.0
    %v4661 = vrcp.pop %v4660
    %v4662 = vmul.f32 1.0, %v4661
    %4664 = vrot.lane.b32.xlu0 %v4653, 96
    %v4665 = vpop.permute.xlu0 %4664
    %v4667 = vmul.f32 %v4662, %v4665
    %4669 = vrot.lane.b32.xlu0 %v4667, 32
    %v4670 = vpop.permute.xlu0 %4669
    %v4672 = vadd.f32 %v4574, %v4670
    %v4673 = vtanh.pop %v4672
    %v4674 = vsub.f32 1.0, %v4662
    %4676 = vrot.lane.b32.xlu0 %v4673, 112
    %v4677 = vpop.permute.xlu0 %4676
    %v4679 = vmul.f32 %v4674, %v4677
    %v4680 = vmul.f32 %v4662, 0.0
    %v4681 = vadd.f32 %v4679, %v4680
    %4683 = vrot.lane.b32.xlu0 %v4681, 112
    %v4684 = vpop.permute.xlu0 %4683
    %v4685 = vsel %vm535, %v4684, 0
    %4687 = vmatprep.subr.mxu0 0.0
    %4688 = vmatpush1.msra.mxu0 %v3775
    %4689 = vmatprep.subr.mxu0 0.0
    %4690 = vmatpush1.msra.mxu0 %v3776
    %4691 = vmatprep.subr.mxu0 0.0
    %4692 = vmatpush1.msra.mxu0 0.0
    %4693 = vmatprep.subr.mxu0 0.0
    %4694 = vmatpush1.msra.mxu0 0.0
    %4695 = vmatprep.subr.mxu0 0.0
    %4696 = vmatpush1.msra.mxu0 0.0
    %4697 = vmatprep.subr.mxu0 0.0
    %4698 = vmatpush1.msra.mxu0 0.0
    %4699 = vmatprep.subr.mxu0 0.0
    %4700 = vmatpush1.msra.mxu0 0.0
    %4701 = vmatprep.subr.mxu0 0.0
    %4702 = vmatpush1.msra.mxu0 0.0
    %4703 = vmatprep.subr.mxu0 0.0
    %4704 = vmatpush1.msra.mxu0 0.0
    %4705 = vmatprep.subr.mxu0 0.0
    %4706 = vmatpush1.msra.mxu0 0.0
    %4707 = vmatprep.subr.mxu0 0.0
    %4708 = vmatpush1.msra.mxu0 0.0
    %4709 = vmatprep.subr.mxu0 0.0
    %4710 = vmatpush1.msra.mxu0 0.0
    %4711 = vmatprep.subr.mxu0 0.0
    %4712 = vmatpush1.msra.mxu0 0.0
    %4713 = vmatprep.subr.mxu0 0.0
    %4714 = vmatpush1.msra.mxu0 0.0
    %4715 = vmatprep.subr.mxu0 0.0
    %4716 = vmatpush1.msra.mxu0 0.0
    %4717 = vmatprep.subr.mxu0 0.0
    %4718 = vmatpush1.msra.mxu0 0.0
    %4719 = vmatprep.subr.mxu0 0.0
    %4720 = vmatpush1.msra.mxu0 0.0
    %4721 = vmatprep.subr.mxu0 0.0
    %4722 = vmatpush1.msra.mxu0 0.0
    %4723 = vmatprep.subr.mxu0 0.0
    %4724 = vmatpush1.msra.mxu0 0.0
    %4725 = vmatprep.subr.mxu0 0.0
    %4726 = vmatpush1.msra.mxu0 0.0
    %4727 = vmatprep.subr.mxu0 0.0
    %4728 = vmatpush1.msra.mxu0 0.0
    %4729 = vmatprep.subr.mxu0 0.0
    %4730 = vmatpush1.msra.mxu0 0.0
    %4731 = vmatprep.subr.mxu0 0.0
    %4732 = vmatpush1.msra.mxu0 0.0
    %4733 = vmatprep.subr.mxu0 0.0
    %4734 = vmatpush1.msra.mxu0 0.0
    %4735 = vmatprep.subr.mxu0 0.0
    %4736 = vmatpush1.msra.mxu0 0.0
    %4737 = vmatprep.subr.mxu0 0.0
    %4738 = vmatpush1.msra.mxu0 0.0
    %4739 = vmatprep.subr.mxu0 0.0
    %4740 = vmatpush1.msra.mxu0 0.0
    %4741 = vmatprep.subr.mxu0 0.0
    %4742 = vmatpush1.msra.mxu0 0.0
    %4743 = vmatprep.subr.mxu0 0.0
    %4744 = vmatpush1.msra.mxu0 0.0
    %4745 = vmatprep.subr.mxu0 0.0
    %4746 = vmatpush1.msra.mxu0 0.0
    %4747 = vmatprep.subr.mxu0 0.0
    %4748 = vmatpush1.msra.mxu0 0.0
    %4749 = vmatprep.subr.mxu0 0.0
    %4750 = vmatpush1.msra.mxu0 0.0
    %4751 = vmatprep.mubr.f32.mxu0 0.0
    %4752 = vmatmul.mubr.f32.gmra.mrb[0].mxu0 %v4685
    %v4753 = vpop.f32.mrb[0].mxu0
    %v4754 = vadd.f32 %v4585, %v4753
    %v4755 = vpop.f32.mrb[0].mxu0
    %4756 = vdwg.mxu0
    %v4758 = vrot.slane %v4754, 6
    %v4760 = vadd.f32 %v4574, %v4758
    %v4761 = vxor.u32 %v4760, 2147483648
    %v4762 = vmul.f32 %v4761, 1.442695
    %v4763 = vpow.pop %v4762
    %v4764 = vadd.f32 %v4763, 1.0
    %v4765 = vrcp.pop %v4764
    %v4766 = vmul.f32 1.0, %v4765
    %4767 = vrot.lane.b32.xlu0 %v4758, 96
    %v4768 = vpop.permute.xlu0 %4767
    %v4770 = vmul.f32 %v4766, %v4768
    %4772 = vrot.lane.b32.xlu0 %v4770, 32
    %v4773 = vpop.permute.xlu0 %4772
    %v4775 = vadd.f32 %v4574, %v4773
    %v4776 = vtanh.pop %v4775
    %v4777 = vsub.f32 1.0, %v4766
    %4779 = vrot.lane.b32.xlu0 %v4776, 112
    %v4780 = vpop.permute.xlu0 %4779
    %v4782 = vmul.f32 %v4777, %v4780
    %v4783 = vrot.slane %v4681, 6
    %v4785 = vmul.f32 %v4766, %v4783
    %v4786 = vadd.f32 %v4782, %v4785
    %v4788 = vrot.slane %v4786, 2
    %4789 = vrot.lane.b32.xlu0 %v4788, 112
    %v4790 = vpop.permute.xlu0 %4789
    %v4791 = vsel %vm535, %v4790, 0
    %4793 = vmatprep.subr.mxu0 0.0
    %4794 = vmatpush1.msra.mxu0 %v3775
    %4795 = vmatprep.subr.mxu0 0.0
    %4796 = vmatpush1.msra.mxu0 %v3776
    %4797 = vmatprep.subr.mxu0 0.0
    %4798 = vmatpush1.msra.mxu0 0.0
    %4799 = vmatprep.subr.mxu0 0.0
    %4800 = vmatpush1.msra.mxu0 0.0
    %4801 = vmatprep.subr.mxu0 0.0
    %4802 = vmatpush1.msra.mxu0 0.0
    %4803 = vmatprep.subr.mxu0 0.0
    %4804 = vmatpush1.msra.mxu0 0.0
    %4805 = vmatprep.subr.mxu0 0.0
    %4806 = vmatpush1.msra.mxu0 0.0
    %4807 = vmatprep.subr.mxu0 0.0
    %4808 = vmatpush1.msra.mxu0 0.0
    %4809 = vmatprep.subr.mxu0 0.0
    %4810 = vmatpush1.msra.mxu0 0.0
    %4811 = vmatprep.subr.mxu0 0.0
    %4812 = vmatpush1.msra.mxu0 0.0
    %4813 = vmatprep.subr.mxu0 0.0
    %4814 = vmatpush1.msra.mxu0 0.0
    %4815 = vmatprep.subr.mxu0 0.0
    %4816 = vmatpush1.msra.mxu0 0.0
    %4817 = vmatprep.subr.mxu0 0.0
    %4818 = vmatpush1.msra.mxu0 0.0
    %4819 = vmatprep.subr.mxu0 0.0
    %4820 = vmatpush1.msra.mxu0 0.0
    %4821 = vmatprep.subr.mxu0 0.0
    %4822 = vmatpush1.msra.mxu0 0.0
    %4823 = vmatprep.subr.mxu0 0.0
    %4824 = vmatpush1.msra.mxu0 0.0
    %4825 = vmatprep.subr.mxu0 0.0
    %4826 = vmatpush1.msra.mxu0 0.0
    %4827 = vmatprep.subr.mxu0 0.0
    %4828 = vmatpush1.msra.mxu0 0.0
    %4829 = vmatprep.subr.mxu0 0.0
    %4830 = vmatpush1.msra.mxu0 0.0
    %4831 = vmatprep.subr.mxu0 0.0
    %4832 = vmatpush1.msra.mxu0 0.0
    %4833 = vmatprep.subr.mxu0 0.0
    %4834 = vmatpush1.msra.mxu0 0.0
    %4835 = vmatprep.subr.mxu0 0.0
    %4836 = vmatpush1.msra.mxu0 0.0
    %4837 = vmatprep.subr.mxu0 0.0
    %4838 = vmatpush1.msra.mxu0 0.0
    %4839 = vmatprep.subr.mxu0 0.0
    %4840 = vmatpush1.msra.mxu0 0.0
    %4841 = vmatprep.subr.mxu0 0.0
    %4842 = vmatpush1.msra.mxu0 0.0
    %4843 = vmatprep.subr.mxu0 0.0
    %4844 = vmatpush1.msra.mxu0 0.0
    %4845 = vmatprep.subr.mxu0 0.0
    %4846 = vmatpush1.msra.mxu0 0.0
    %4847 = vmatprep.subr.mxu0 0.0
    %4848 = vmatpush1.msra.mxu0 0.0
    %4849 = vmatprep.subr.mxu0 0.0
    %4850 = vmatpush1.msra.mxu0 0.0
    %4851 = vmatprep.subr.mxu0 0.0
    %4852 = vmatpush1.msra.mxu0 0.0
    %4853 = vmatprep.subr.mxu0 0.0
    %4854 = vmatpush1.msra.mxu0 0.0
    %4855 = vmatprep.subr.mxu0 0.0
    %4856 = vmatpush1.msra.mxu0 0.0
    %4857 = vmatprep.mubr.f32.mxu0 0.0
    %4858 = vmatmul.mubr.f32.gmra.mrb[0].mxu0 %v4791
    %v4859 = vpop.f32.mrb[0].mxu0
    %v4860 = vadd.f32 %v4585, %v4859
    %v4861 = vpop.f32.mrb[0].mxu0
    %4862 = vdwg.mxu0
    %v4864 = vrot.slane %v4860, 4
    %v4866 = vadd.f32 %v4574, %v4864
    %v4867 = vxor.u32 %v4866, 2147483648
    %v4868 = vmul.f32 %v4867, 1.442695
    %v4869 = vpow.pop %v4868
    %v4870 = vadd.f32 %v4869, 1.0
    %v4871 = vrcp.pop %v4870
    %v4872 = vmul.f32 1.0, %v4871
    %4873 = vrot.lane.b32.xlu0 %v4864, 96
    %v4874 = vpop.permute.xlu0 %4873
    %v4876 = vmul.f32 %v4872, %v4874
    %4878 = vrot.lane.b32.xlu0 %v4876, 32
    %v4879 = vpop.permute.xlu0 %4878
    %v4881 = vadd.f32 %v4574, %v4879
    %v4882 = vtanh.pop %v4881
    %v4883 = vsub.f32 1.0, %v4872
    %4885 = vrot.lane.b32.xlu0 %v4882, 112
    %v4886 = vpop.permute.xlu0 %4885
    %v4888 = vmul.f32 %v4883, %v4886
    %v4889 = vrot.slane %v4786, 6
    %v4891 = vmul.f32 %v4872, %v4889
    %v4892 = vadd.f32 %v4888, %v4891
    %v4894 = vrot.slane %v4892, 4
    %4895 = vrot.lane.b32.xlu0 %v4894, 112
    %v4896 = vpop.permute.xlu0 %4895
    %v4897 = vsel %vm535, %v4896, 0
    %4899 = vmatprep.subr.mxu0 0.0
    %4900 = vmatpush1.msra.mxu0 %v3775
    %4901 = vmatprep.subr.mxu0 0.0
    %4902 = vmatpush1.msra.mxu0 %v3776
    %4903 = vmatprep.subr.mxu0 0.0
    %4904 = vmatpush1.msra.mxu0 0.0
    %4905 = vmatprep.subr.mxu0 0.0
    %4906 = vmatpush1.msra.mxu0 0.0
    %4907 = vmatprep.subr.mxu0 0.0
    %4908 = vmatpush1.msra.mxu0 0.0
    %4909 = vmatprep.subr.mxu0 0.0
    %4910 = vmatpush1.msra.mxu0 0.0
    %4911 = vmatprep.subr.mxu0 0.0
    %4912 = vmatpush1.msra.mxu0 0.0
    %4913 = vmatprep.subr.mxu0 0.0
    %4914 = vmatpush1.msra.mxu0 0.0
    %4915 = vmatprep.subr.mxu0 0.0
    %4916 = vmatpush1.msra.mxu0 0.0
    %4917 = vmatprep.subr.mxu0 0.0
    %4918 = vmatpush1.msra.mxu0 0.0
    %4919 = vmatprep.subr.mxu0 0.0
    %4920 = vmatpush1.msra.mxu0 0.0
    %4921 = vmatprep.subr.mxu0 0.0
    %4922 = vmatpush1.msra.mxu0 0.0
    %4923 = vmatprep.subr.mxu0 0.0
    %4924 = vmatpush1.msra.mxu0 0.0
    %4925 = vmatprep.subr.mxu0 0.0
    %4926 = vmatpush1.msra.mxu0 0.0
    %4927 = vmatprep.subr.mxu0 0.0
    %4928 = vmatpush1.msra.mxu0 0.0
    %4929 = vmatprep.subr.mxu0 0.0
    %4930 = vmatpush1.msra.mxu0 0.0
    %4931 = vmatprep.subr.mxu0 0.0
    %4932 = vmatpush1.msra.mxu0 0.0
    %4933 = vmatprep.subr.mxu0 0.0
    %4934 = vmatpush1.msra.mxu0 0.0
    %4935 = vmatprep.subr.mxu0 0.0
    %4936 = vmatpush1.msra.mxu0 0.0
    %4937 = vmatprep.subr.mxu0 0.0
    %4938 = vmatpush1.msra.mxu0 0.0
    %4939 = vmatprep.subr.mxu0 0.0
    %4940 = vmatpush1.msra.mxu0 0.0
    %4941 = vmatprep.subr.mxu0 0.0
    %4942 = vmatpush1.msra.mxu0 0.0
    %4943 = vmatprep.subr.mxu0 0.0
    %4944 = vmatpush1.msra.mxu0 0.0
    %4945 = vmatprep.subr.mxu0 0.0
    %4946 = vmatpush1.msra.mxu0 0.0
    %4947 = vmatprep.subr.mxu0 0.0
    %4948 = vmatpush1.msra.mxu0 0.0
    %4949 = vmatprep.subr.mxu0 0.0
    %4950 = vmatpush1.msra.mxu0 0.0
    %4951 = vmatprep.subr.mxu0 0.0
    %4952 = vmatpush1.msra.mxu0 0.0
    %4953 = vmatprep.subr.mxu0 0.0
    %4954 = vmatpush1.msra.mxu0 0.0
    %4955 = vmatprep.subr.mxu0 0.0
    %4956 = vmatpush1.msra.mxu0 0.0
    %4957 = vmatprep.subr.mxu0 0.0
    %4958 = vmatpush1.msra.mxu0 0.0
    %4959 = vmatprep.subr.mxu0 0.0
    %4960 = vmatpush1.msra.mxu0 0.0
    %4961 = vmatprep.subr.mxu0 0.0
    %4962 = vmatpush1.msra.mxu0 0.0
    %4963 = vmatprep.mubr.f32.mxu0 0.0
    %4964 = vmatmul.mubr.f32.gmra.mrb[0].mxu0 %v4897
    %v4965 = vpop.f32.mrb[0].mxu0
    %v4966 = vadd.f32 %v4585, %v4965
    %v4967 = vpop.f32.mrb[0].mxu0
    %4968 = vdwg.mxu0
    %v4970 = vrot.slane %v4966, 2
    %v4972 = vadd.f32 %v4574, %v4970
    %v4973 = vxor.u32 %v4972, 2147483648
    %v4974 = vmul.f32 %v4973, 1.442695
    %v4975 = vpow.pop %v4974
    %v4976 = vadd.f32 %v4975, 1.0
    %v4977 = vrcp.pop %v4976
    %v4978 = vmul.f32 1.0, %v4977
    %4979 = vrot.lane.b32.xlu0 %v4970, 96
    %v4980 = vpop.permute.xlu0 %4979
    %v4982 = vmul.f32 %v4978, %v4980
    %4984 = vrot.lane.b32.xlu0 %v4982, 32
    %v4985 = vpop.permute.xlu0 %4984
    %v4987 = vadd.f32 %v4574, %v4985
    %v4988 = vtanh.pop %v4987
    %v4989 = vsub.f32 1.0, %v4978
    %4991 = vrot.lane.b32.xlu0 %v4988, 112
    %v4992 = vpop.permute.xlu0 %4991
    %v4994 = vmul.f32 %v4989, %v4992
    %v4995 = vrot.slane %v4892, 6
    %v4997 = vmul.f32 %v4978, %v4995
    %v4998 = vadd.f32 %v4994, %v4997
    %v5000 = vrot.slane %v4998, 6
    %5001 = vrot.lane.b32.xlu0 %v5000, 112
    %v5002 = vpop.permute.xlu0 %5001
    %v5003 = vsel %vm535, %v5002, 0
    %5005 = vmatprep.subr.mxu0 0.0
    %5006 = vmatpush1.msra.mxu0 %v3775
    %5007 = vmatprep.subr.mxu0 0.0
    %5008 = vmatpush1.msra.mxu0 %v3776
    %5009 = vmatprep.subr.mxu0 0.0
    %5010 = vmatpush1.msra.mxu0 0.0
    %5011 = vmatprep.subr.mxu0 0.0
    %5012 = vmatpush1.msra.mxu0 0.0
    %5013 = vmatprep.subr.mxu0 0.0
    %5014 = vmatpush1.msra.mxu0 0.0
    %5015 = vmatprep.subr.mxu0 0.0
    %5016 = vmatpush1.msra.mxu0 0.0
    %5017 = vmatprep.subr.mxu0 0.0
    %5018 = vmatpush1.msra.mxu0 0.0
    %5019 = vmatprep.subr.mxu0 0.0
    %5020 = vmatpush1.msra.mxu0 0.0
    %5021 = vmatprep.subr.mxu0 0.0
    %5022 = vmatpush1.msra.mxu0 0.0
    %5023 = vmatprep.subr.mxu0 0.0
    %5024 = vmatpush1.msra.mxu0 0.0
    %5025 = vmatprep.subr.mxu0 0.0
    %5026 = vmatpush1.msra.mxu0 0.0
    %5027 = vmatprep.subr.mxu0 0.0
    %5028 = vmatpush1.msra.mxu0 0.0
    %5029 = vmatprep.subr.mxu0 0.0
    %5030 = vmatpush1.msra.mxu0 0.0
    %5031 = vmatprep.subr.mxu0 0.0
    %5032 = vmatpush1.msra.mxu0 0.0
    %5033 = vmatprep.subr.mxu0 0.0
    %5034 = vmatpush1.msra.mxu0 0.0
    %5035 = vmatprep.subr.mxu0 0.0
    %5036 = vmatpush1.msra.mxu0 0.0
    %5037 = vmatprep.subr.mxu0 0.0
    %5038 = vmatpush1.msra.mxu0 0.0
    %5039 = vmatprep.subr.mxu0 0.0
    %5040 = vmatpush1.msra.mxu0 0.0
    %5041 = vmatprep.subr.mxu0 0.0
    %5042 = vmatpush1.msra.mxu0 0.0
    %5043 = vmatprep.subr.mxu0 0.0
    %5044 = vmatpush1.msra.mxu0 0.0
    %5045 = vmatprep.subr.mxu0 0.0
    %5046 = vmatpush1.msra.mxu0 0.0
    %5047 = vmatprep.subr.mxu0 0.0
    %5048 = vmatpush1.msra.mxu0 0.0
    %5049 = vmatprep.subr.mxu0 0.0
    %5050 = vmatpush1.msra.mxu0 0.0
    %5051 = vmatprep.subr.mxu0 0.0
    %5052 = vmatpush1.msra.mxu0 0.0
    %5053 = vmatprep.subr.mxu0 0.0
    %5054 = vmatpush1.msra.mxu0 0.0
    %5055 = vmatprep.subr.mxu0 0.0
    %5056 = vmatpush1.msra.mxu0 0.0
    %5057 = vmatprep.subr.mxu0 0.0
    %5058 = vmatpush1.msra.mxu0 0.0
    %5059 = vmatprep.subr.mxu0 0.0
    %5060 = vmatpush1.msra.mxu0 0.0
    %5061 = vmatprep.subr.mxu0 0.0
    %5062 = vmatpush1.msra.mxu0 0.0
    %5063 = vmatprep.subr.mxu0 0.0
    %5064 = vmatpush1.msra.mxu0 0.0
    %5065 = vmatprep.subr.mxu0 0.0
    %5066 = vmatpush1.msra.mxu0 0.0
    %5067 = vmatprep.subr.mxu0 0.0
    %5068 = vmatpush1.msra.mxu0 0.0
    %5069 = vmatprep.mubr.f32.mxu0 0.0
    %5070 = vmatmul.mubr.f32.gmra.mrb[0].mxu0 %v5003
    %v5071 = vpop.f32.mrb[0].mxu0
    %v5072 = vadd.f32 %v4585, %v5071
    %v5073 = vpop.f32.mrb[0].mxu0
    %5074 = vdwg.mxu0
    %v5075 = vadd.f32 %v4579, %v5072
    %v5076 = vxor.u32 %v5075, 2147483648
    %v5077 = vmul.f32 %v5076, 1.442695
    %v5078 = vpow.pop %v5077
    %v5079 = vadd.f32 %v5078, 1.0
    %v5080 = vrcp.pop %v5079
    %v5081 = vmul.f32 1.0, %v5080
    %5083 = vrot.lane.b32.xlu0 %v5072, 96
    %v5084 = vpop.permute.xlu0 %5083
    %v5086 = vmul.f32 %v5081, %v5084
    %5088 = vrot.lane.b32.xlu0 %v5086, 32
    %v5089 = vpop.permute.xlu0 %5088
    %v5091 = vadd.f32 %v4579, %v5089
    %v5092 = vtanh.pop %v5091
    %v5093 = vsub.f32 1.0, %v5081
    %5095 = vrot.lane.b32.xlu0 %v5092, 112
    %v5096 = vpop.permute.xlu0 %5095
    %v5098 = vmul.f32 %v5093, %v5096
    %v5100 = vmul.f32 %v5081, %v5000
    %v5101 = vadd.f32 %v5098, %v5100
    %5103 = vrot.lane.b32.xlu0 %v5101, 112
    %v5104 = vpop.permute.xlu0 %5103
    %v5105 = vsel %vm535, %v5104, 0
    %5107 = vmatprep.subr.mxu0 0.0
    %5108 = vmatpush1.msra.mxu0 %v3775
    %5109 = vmatprep.subr.mxu0 0.0
    %5110 = vmatpush1.msra.mxu0 %v3776
    %5111 = vmatprep.subr.mxu0 0.0
    %5112 = vmatpush1.msra.mxu0 0.0
    %5113 = vmatprep.subr.mxu0 0.0
    %5114 = vmatpush1.msra.mxu0 0.0
    %5115 = vmatprep.subr.mxu0 0.0
    %5116 = vmatpush1.msra.mxu0 0.0
    %5117 = vmatprep.subr.mxu0 0.0
    %5118 = vmatpush1.msra.mxu0 0.0
    %5119 = vmatprep.subr.mxu0 0.0
    %5120 = vmatpush1.msra.mxu0 0.0
    %5121 = vmatprep.subr.mxu0 0.0
    %5122 = vmatpush1.msra.mxu0 0.0
    %5123 = vmatprep.subr.mxu0 0.0
    %5124 = vmatpush1.msra.mxu0 0.0
    %5125 = vmatprep.subr.mxu0 0.0
    %5126 = vmatpush1.msra.mxu0 0.0
    %5127 = vmatprep.subr.mxu0 0.0
    %5128 = vmatpush1.msra.mxu0 0.0
    %5129 = vmatprep.subr.mxu0 0.0
    %5130 = vmatpush1.msra.mxu0 0.0
    %5131 = vmatprep.subr.mxu0 0.0
    %5132 = vmatpush1.msra.mxu0 0.0
    %5133 = vmatprep.subr.mxu0 0.0
    %5134 = vmatpush1.msra.mxu0 0.0
    %5135 = vmatprep.subr.mxu0 0.0
    %5136 = vmatpush1.msra.mxu0 0.0
    %5137 = vmatprep.subr.mxu0 0.0
    %5138 = vmatpush1.msra.mxu0 0.0
    %5139 = vmatprep.subr.mxu0 0.0
    %5140 = vmatpush1.msra.mxu0 0.0
    %5141 = vmatprep.subr.mxu0 0.0
    %5142 = vmatpush1.msra.mxu0 0.0
    %5143 = vmatprep.subr.mxu0 0.0
    %5144 = vmatpush1.msra.mxu0 0.0
    %5145 = vmatprep.subr.mxu0 0.0
    %5146 = vmatpush1.msra.mxu0 0.0
    %5147 = vmatprep.subr.mxu0 0.0
    %5148 = vmatpush1.msra.mxu0 0.0
    %5149 = vmatprep.subr.mxu0 0.0
    %5150 = vmatpush1.msra.mxu0 0.0
    %5151 = vmatprep.subr.mxu0 0.0
    %5152 = vmatpush1.msra.mxu0 0.0
    %5153 = vmatprep.subr.mxu0 0.0
    %5154 = vmatpush1.msra.mxu0 0.0
    %5155 = vmatprep.subr.mxu0 0.0
    %5156 = vmatpush1.msra.mxu0 0.0
    %5157 = vmatprep.subr.mxu0 0.0
    %5158 = vmatpush1.msra.mxu0 0.0
    %5159 = vmatprep.subr.mxu0 0.0
    %5160 = vmatpush1.msra.mxu0 0.0
    %5161 = vmatprep.subr.mxu0 0.0
    %5162 = vmatpush1.msra.mxu0 0.0
    %5163 = vmatprep.subr.mxu0 0.0
    %5164 = vmatpush1.msra.mxu0 0.0
    %5165 = vmatprep.subr.mxu0 0.0
    %5166 = vmatpush1.msra.mxu0 0.0
    %5167 = vmatprep.subr.mxu0 0.0
    %5168 = vmatpush1.msra.mxu0 0.0
    %5169 = vmatprep.subr.mxu0 0.0
    %5170 = vmatpush1.msra.mxu0 0.0
    %5171 = vmatprep.mubr.f32.mxu0 0.0
    %5172 = vmatmul.mubr.f32.gmra.mrb[0].mxu0 %v5105
    %v5173 = vpop.f32.mrb[0].mxu0
    %v5174 = vadd.f32 %v4585, %v5173
    %v5175 = vpop.f32.mrb[0].mxu0
    %5176 = vdwg.mxu0
    %v5178 = vrot.slane %v5174, 6
    %v5180 = vadd.f32 %v4579, %v5178
    %v5181 = vxor.u32 %v5180, 2147483648
    %v5182 = vmul.f32 %v5181, 1.442695
    %v5183 = vpow.pop %v5182
    %v5184 = vadd.f32 %v5183, 1.0
    %v5185 = vrcp.pop %v5184
    %v5186 = vmul.f32 1.0, %v5185
    %5187 = vrot.lane.b32.xlu0 %v5178, 96
    %v5188 = vpop.permute.xlu0 %5187
    %v5190 = vmul.f32 %v5186, %v5188
    %5192 = vrot.lane.b32.xlu0 %v5190, 32
    %v5193 = vpop.permute.xlu0 %5192
    %v5195 = vadd.f32 %v4579, %v5193
    %v5196 = vtanh.pop %v5195
    %v5197 = vsub.f32 1.0, %v5186
    %5199 = vrot.lane.b32.xlu0 %v5196, 112
    %v5200 = vpop.permute.xlu0 %5199
    %v5202 = vmul.f32 %v5197, %v5200
    %v5203 = vrot.slane %v5101, 6
    %v5205 = vmul.f32 %v5186, %v5203
    %v5206 = vadd.f32 %v5202, %v5205
    %v5208 = vrot.slane %v5206, 2
    %5209 = vrot.lane.b32.xlu0 %v5208, 112
    %v5210 = vpop.permute.xlu0 %5209
    %v5211 = vsel %vm535, %v5210, 0
    %5213 = vmatprep.subr.mxu0 0.0
    %5214 = vmatpush1.msra.mxu0 %v3775
    %5215 = vmatprep.subr.mxu0 0.0
    %5216 = vmatpush1.msra.mxu0 %v3776
    %5217 = vmatprep.subr.mxu0 0.0
    %5218 = vmatpush1.msra.mxu0 0.0
    %5219 = vmatprep.subr.mxu0 0.0
    %5220 = vmatpush1.msra.mxu0 0.0
    %5221 = vmatprep.subr.mxu0 0.0
    %5222 = vmatpush1.msra.mxu0 0.0
    %5223 = vmatprep.subr.mxu0 0.0
    %5224 = vmatpush1.msra.mxu0 0.0
    %5225 = vmatprep.subr.mxu0 0.0
    %5226 = vmatpush1.msra.mxu0 0.0
    %5227 = vmatprep.subr.mxu0 0.0
    %5228 = vmatpush1.msra.mxu0 0.0
    %5229 = vmatprep.subr.mxu0 0.0
    %5230 = vmatpush1.msra.mxu0 0.0
    %5231 = vmatprep.subr.mxu0 0.0
    %5232 = vmatpush1.msra.mxu0 0.0
    %5233 = vmatprep.subr.mxu0 0.0
    %5234 = vmatpush1.msra.mxu0 0.0
    %5235 = vmatprep.subr.mxu0 0.0
    %5236 = vmatpush1.msra.mxu0 0.0
    %5237 = vmatprep.subr.mxu0 0.0
    %5238 = vmatpush1.msra.mxu0 0.0
    %5239 = vmatprep.subr.mxu0 0.0
    %5240 = vmatpush1.msra.mxu0 0.0
    %5241 = vmatprep.subr.mxu0 0.0
    %5242 = vmatpush1.msra.mxu0 0.0
    %5243 = vmatprep.subr.mxu0 0.0
    %5244 = vmatpush1.msra.mxu0 0.0
    %5245 = vmatprep.subr.mxu0 0.0
    %5246 = vmatpush1.msra.mxu0 0.0
    %5247 = vmatprep.subr.mxu0 0.0
    %5248 = vmatpush1.msra.mxu0 0.0
    %5249 = vmatprep.subr.mxu0 0.0
    %5250 = vmatpush1.msra.mxu0 0.0
    %5251 = vmatprep.subr.mxu0 0.0
    %5252 = vmatpush1.msra.mxu0 0.0
    %5253 = vmatprep.subr.mxu0 0.0
    %5254 = vmatpush1.msra.mxu0 0.0
    %5255 = vmatprep.subr.mxu0 0.0
    %5256 = vmatpush1.msra.mxu0 0.0
    %5257 = vmatprep.subr.mxu0 0.0
    %5258 = vmatpush1.msra.mxu0 0.0
    %5259 = vmatprep.subr.mxu0 0.0
    %5260 = vmatpush1.msra.mxu0 0.0
    %5261 = vmatprep.subr.mxu0 0.0
    %5262 = vmatpush1.msra.mxu0 0.0
    %5263 = vmatprep.subr.mxu0 0.0
    %5264 = vmatpush1.msra.mxu0 0.0
    %5265 = vmatprep.subr.mxu0 0.0
    %5266 = vmatpush1.msra.mxu0 0.0
    %5267 = vmatprep.subr.mxu0 0.0
    %5268 = vmatpush1.msra.mxu0 0.0
    %5269 = vmatprep.subr.mxu0 0.0
    %5270 = vmatpush1.msra.mxu0 0.0
    %5271 = vmatprep.subr.mxu0 0.0
    %5272 = vmatpush1.msra.mxu0 0.0
    %5273 = vmatprep.subr.mxu0 0.0
    %5274 = vmatpush1.msra.mxu0 0.0
    %5275 = vmatprep.subr.mxu0 0.0
    %5276 = vmatpush1.msra.mxu0 0.0
    %5277 = vmatprep.mubr.f32.mxu0 0.0
    %5278 = vmatmul.mubr.f32.gmra.mrb[0].mxu0 %v5211
    %v5279 = vpop.f32.mrb[0].mxu0
    %v5280 = vadd.f32 %v4585, %v5279
    %v5281 = vpop.f32.mrb[0].mxu0
    %5282 = vdwg.mxu0
    %v5284 = vrot.slane %v5280, 4
    %v5286 = vadd.f32 %v4579, %v5284
    %v5287 = vxor.u32 %v5286, 2147483648
    %v5288 = vmul.f32 %v5287, 1.442695
    %v5289 = vpow.pop %v5288
    %v5290 = vadd.f32 %v5289, 1.0
    %v5291 = vrcp.pop %v5290
    %v5292 = vmul.f32 1.0, %v5291
    %5293 = vrot.lane.b32.xlu0 %v5284, 96
    %v5294 = vpop.permute.xlu0 %5293
    %v5296 = vmul.f32 %v5292, %v5294
    %5298 = vrot.lane.b32.xlu0 %v5296, 32
    %v5299 = vpop.permute.xlu0 %5298
    %v5301 = vadd.f32 %v4579, %v5299
    %v5302 = vtanh.pop %v5301
    %v5303 = vsub.f32 1.0, %v5292
    %5305 = vrot.lane.b32.xlu0 %v5302, 112
    %v5306 = vpop.permute.xlu0 %5305
    %v5308 = vmul.f32 %v5303, %v5306
    %v5309 = vrot.slane %v5206, 6
    %v5311 = vmul.f32 %v5292, %v5309
    %v5312 = vadd.f32 %v5308, %v5311
    %v5314 = vrot.slane %v5312, 4
    %5315 = vrot.lane.b32.xlu0 %v5314, 112
    %v5316 = vpop.permute.xlu0 %5315
    %v5317 = vsel %vm535, %v5316, 0
    %5319 = vmatprep.subr.mxu0 0.0
    %5320 = vmatpush1.msra.mxu0 %v3775
    %5321 = vmatprep.subr.mxu0 0.0
    %5322 = vmatpush1.msra.mxu0 %v3776
    %5323 = vmatprep.subr.mxu0 0.0
    %5324 = vmatpush1.msra.mxu0 0.0
    %5325 = vmatprep.subr.mxu0 0.0
    %5326 = vmatpush1.msra.mxu0 0.0
    %5327 = vmatprep.subr.mxu0 0.0
    %5328 = vmatpush1.msra.mxu0 0.0
    %5329 = vmatprep.subr.mxu0 0.0
    %5330 = vmatpush1.msra.mxu0 0.0
    %5331 = vmatprep.subr.mxu0 0.0
    %5332 = vmatpush1.msra.mxu0 0.0
    %5333 = vmatprep.subr.mxu0 0.0
    %5334 = vmatpush1.msra.mxu0 0.0
    %5335 = vmatprep.subr.mxu0 0.0
    %5336 = vmatpush1.msra.mxu0 0.0
    %5337 = vmatprep.subr.mxu0 0.0
    %5338 = vmatpush1.msra.mxu0 0.0
    %5339 = vmatprep.subr.mxu0 0.0
    %5340 = vmatpush1.msra.mxu0 0.0
    %5341 = vmatprep.subr.mxu0 0.0
    %5342 = vmatpush1.msra.mxu0 0.0
    %5343 = vmatprep.subr.mxu0 0.0
    %5344 = vmatpush1.msra.mxu0 0.0
    %5345 = vmatprep.subr.mxu0 0.0
    %5346 = vmatpush1.msra.mxu0 0.0
    %5347 = vmatprep.subr.mxu0 0.0
    %5348 = vmatpush1.msra.mxu0 0.0
    %5349 = vmatprep.subr.mxu0 0.0
    %5350 = vmatpush1.msra.mxu0 0.0
    %5351 = vmatprep.subr.mxu0 0.0
    %5352 = vmatpush1.msra.mxu0 0.0
    %5353 = vmatprep.subr.mxu0 0.0
    %5354 = vmatpush1.msra.mxu0 0.0
    %5355 = vmatprep.subr.mxu0 0.0
    %5356 = vmatpush1.msra.mxu0 0.0
    %5357 = vmatprep.subr.mxu0 0.0
    %5358 = vmatpush1.msra.mxu0 0.0
    %5359 = vmatprep.subr.mxu0 0.0
    %5360 = vmatpush1.msra.mxu0 0.0
    %5361 = vmatprep.subr.mxu0 0.0
    %5362 = vmatpush1.msra.mxu0 0.0
    %5363 = vmatprep.subr.mxu0 0.0
    %5364 = vmatpush1.msra.mxu0 0.0
    %5365 = vmatprep.subr.mxu0 0.0
    %5366 = vmatpush1.msra.mxu0 0.0
    %5367 = vmatprep.subr.mxu0 0.0
    %5368 = vmatpush1.msra.mxu0 0.0
    %5369 = vmatprep.subr.mxu0 0.0
    %5370 = vmatpush1.msra.mxu0 0.0
    %5371 = vmatprep.subr.mxu0 0.0
    %5372 = vmatpush1.msra.mxu0 0.0
    %5373 = vmatprep.subr.mxu0 0.0
    %5374 = vmatpush1.msra.mxu0 0.0
    %5375 = vmatprep.subr.mxu0 0.0
    %5376 = vmatpush1.msra.mxu0 0.0
    %5377 = vmatprep.subr.mxu0 0.0
    %5378 = vmatpush1.msra.mxu0 0.0
    %5379 = vmatprep.subr.mxu0 0.0
    %5380 = vmatpush1.msra.mxu0 0.0
    %5381 = vmatprep.subr.mxu0 0.0
    %5382 = vmatpush1.msra.mxu0 0.0
    %5383 = vmatprep.mubr.f32.mxu0 0.0
    %5384 = vmatmul.mubr.f32.gmra.mrb[0].mxu0 %v5317
    %v5385 = vpop.f32.mrb[0].mxu0
    %v5386 = vadd.f32 %v4585, %v5385
    %v5387 = vpop.f32.mrb[0].mxu0
    %5388 = vdwg.mxu0
    %v5390 = vrot.slane %v5386, 2
    %v5392 = vadd.f32 %v4579, %v5390
    %v5393 = vxor.u32 %v5392, 2147483648
    %v5394 = vmul.f32 %v5393, 1.442695
    %v5395 = vpow.pop %v5394
    %v5396 = vadd.f32 %v5395, 1.0
    %v5397 = vrcp.pop %v5396
    %v5398 = vmul.f32 1.0, %v5397
    %5399 = vrot.lane.b32.xlu0 %v5390, 96
    %v5400 = vpop.permute.xlu0 %5399
    %v5402 = vmul.f32 %v5398, %v5400
    %5404 = vrot.lane.b32.xlu0 %v5402, 32
    %v5405 = vpop.permute.xlu0 %5404
    %v5407 = vadd.f32 %v4579, %v5405
    %v5408 = vtanh.pop %v5407
    %v5409 = vsub.f32 1.0, %v5398
    %5411 = vrot.lane.b32.xlu0 %v5408, 112
    %v5412 = vpop.permute.xlu0 %5411
    %v5414 = vmul.f32 %v5409, %v5412
    %v5415 = vrot.slane %v5312, 6
    %v5417 = vmul.f32 %v5398, %v5415
    %v5418 = vadd.f32 %v5414, %v5417
    %v5419 = vsel %vm1624, %v4681, %v4786
    %v5420 = vsel %vm1626, %v5419, %v4892
    %v5421 = vsel %vm1628, %v5420, %v4998
    %v5422 = vsel %vm1624, %v5101, %v5206
    %v5423 = vsel %vm1626, %v5422, %v5312
    %v5424 = vsel %vm1628, %v5423, %v5418
    %v5425 = vlaneseq
    %v5426 = vshrl.u32 %v5425, 7
    %v5427 = vsub.s32 2, %v5426
    %v5428 = vrot.slane %v3779, %v5427
    %5431 = vrot.lane.b32.xlu0 %v5421, 112
    %v5432 = vpop.permute.xlu0 %5431
    %5433 = vrot.lane.b32.xlu0 %v5424, 112
    %v5434 = vpop.permute.xlu0 %5433
    %v5438 = vrot.slane %v3777, 2
    %v5439 = vrot.slane %v3778, 2
    %v5440 = vsel %vm1628, %v5438, %v5439
    %v5441 = vrot.slane %v3779, 2
    %v5442 = vsel %vm1628, %v5439, %v5441
    %v5445 = vsel %vm535, %v5432, 0
    %v5447 = vsel %vm535, %v5434, 0
    %5449 = vmatprep.subr.mxu0 0.0
    %5450 = vmatpush1.msra.mxu0 %v5440
    %5451 = vmatprep.subr.mxu0 0.0
    %5452 = vmatpush1.msra.mxu0 %v5442
    %5453 = vmatprep.subr.mxu0 0.0
    %5454 = vmatpush1.msra.mxu0 0.0
    %5455 = vmatprep.subr.mxu0 0.0
    %5456 = vmatpush1.msra.mxu0 0.0
    %5457 = vmatprep.subr.mxu0 0.0
    %5458 = vmatpush1.msra.mxu0 0.0
    %5459 = vmatprep.subr.mxu0 0.0
    %5460 = vmatpush1.msra.mxu0 0.0
    %5461 = vmatprep.subr.mxu0 0.0
    %5462 = vmatpush1.msra.mxu0 0.0
    %5463 = vmatprep.subr.mxu0 0.0
    %5464 = vmatpush1.msra.mxu0 0.0
    %5465 = vmatprep.subr.mxu0 0.0
    %5466 = vmatpush1.msra.mxu0 0.0
    %5467 = vmatprep.subr.mxu0 0.0
    %5468 = vmatpush1.msra.mxu0 0.0
    %5469 = vmatprep.subr.mxu0 0.0
    %5470 = vmatpush1.msra.mxu0 0.0
    %5471 = vmatprep.subr.mxu0 0.0
    %5472 = vmatpush1.msra.mxu0 0.0
    %5473 = vmatprep.subr.mxu0 0.0
    %5474 = vmatpush1.msra.mxu0 0.0
    %5475 = vmatprep.subr.mxu0 0.0
    %5476 = vmatpush1.msra.mxu0 0.0
    %5477 = vmatprep.subr.mxu0 0.0
    %5478 = vmatpush1.msra.mxu0 0.0
    %5479 = vmatprep.subr.mxu0 0.0
    %5480 = vmatpush1.msra.mxu0 0.0
    %5481 = vmatprep.subr.mxu0 0.0
    %5482 = vmatpush1.msra.mxu0 0.0
    %5483 = vmatprep.subr.mxu0 0.0
    %5484 = vmatpush1.msra.mxu0 0.0
    %5485 = vmatprep.subr.mxu0 0.0
    %5486 = vmatpush1.msra.mxu0 0.0
    %5487 = vmatprep.subr.mxu0 0.0
    %5488 = vmatpush1.msra.mxu0 0.0
    %5489 = vmatprep.subr.mxu0 0.0
    %5490 = vmatpush1.msra.mxu0 0.0
    %5491 = vmatprep.subr.mxu0 0.0
    %5492 = vmatpush1.msra.mxu0 0.0
    %5493 = vmatprep.subr.mxu0 0.0
    %5494 = vmatpush1.msra.mxu0 0.0
    %5495 = vmatprep.subr.mxu0 0.0
    %5496 = vmatpush1.msra.mxu0 0.0
    %5497 = vmatprep.subr.mxu0 0.0
    %5498 = vmatpush1.msra.mxu0 0.0
    %5499 = vmatprep.subr.mxu0 0.0
    %5500 = vmatpush1.msra.mxu0 0.0
    %5501 = vmatprep.subr.mxu0 0.0
    %5502 = vmatpush1.msra.mxu0 0.0
    %5503 = vmatprep.subr.mxu0 0.0
    %5504 = vmatpush1.msra.mxu0 0.0
    %5505 = vmatprep.subr.mxu0 0.0
    %5506 = vmatpush1.msra.mxu0 0.0
    %5507 = vmatprep.subr.mxu0 0.0
    %5508 = vmatpush1.msra.mxu0 0.0
    %5509 = vmatprep.subr.mxu0 0.0
    %5510 = vmatpush1.msra.mxu0 0.0
    %5511 = vmatprep.subr.mxu0 0.0
    %5512 = vmatpush1.msra.mxu0 0.0
    %5513 = vmatprep.mubr.f32.mxu0 0.0
    %5514 = vmatmul.mubr.f32.gmra.mrb[0].mxu0 %v5445
    %v5515 = vpop.f32.mrb[0].mxu0
    %v5516 = vadd.f32 %v5428, %v5515
    %v5517 = vpop.f32.mrb[0].mxu0
    %5518 = vmatprep.mubr.f32.mxu0 0.0
    %5519 = vmatmul.mubr.f32.gmra.mrb[0].mxu0 %v5447
    %v5520 = vpop.f32.mrb[0].mxu0
    %v5521 = vadd.f32 %v5428, %v5520
    %v5522 = vpop.f32.mrb[0].mxu0
    %5523 = vdwg.mxu0
    %v5524 = vxor.u32 %v5516, 2147483648
    %v5525 = vxor.u32 %v5521, 2147483648
    %v5526 = vmul.f32 %v5524, 1.442695
    %v5527 = vpow.pop %v5526
    %v5528 = vmul.f32 %v5525, 1.442695
    %v5529 = vpow.pop %v5528
    %v5530 = vadd.f32 %v5527, 1.0
    %v5531 = vadd.f32 %v5529, 1.0
    %v5532 = vrcp.pop %v5530
    %v5533 = vmul.f32 1.0, %v5532
    %v5534 = vrcp.pop %v5531
    %v5535 = vmul.f32 1.0, %v5534
    %5536 = vxpose.xlu0.b32.start [1/16] %v5533, 128
    %5537 = vxpose.xlu0.b32.cont [2/16] %v5535, 128
    %5538 = vxpose.xlu0.b32.cont [3/16] 0.0, 128
    %5539 = vxpose.xlu0.b32.cont [4/16] 0.0, 128
    %5540 = vxpose.xlu0.b32.cont [5/16] 0.0, 128
    %5541 = vxpose.xlu0.b32.cont [6/16] 0.0, 128
    %5542 = vxpose.xlu0.b32.cont [7/16] 0.0, 128
    %5543 = vxpose.xlu0.b32.cont [8/16] 0.0, 128
    %5544 = vxpose.xlu0.b32.cont [9/16] 0.0, 128
    %5545 = vxpose.xlu0.b32.cont [10/16] 0.0, 128
    %5546 = vxpose.xlu0.b32.cont [11/16] 0.0, 128
    %5547 = vxpose.xlu0.b32.cont [12/16] 0.0, 128
    %5548 = vxpose.xlu0.b32.cont [13/16] 0.0, 128
    %5549 = vxpose.xlu0.b32.cont [14/16] 0.0, 128
    %5550 = vxpose.xlu0.b32.cont [15/16] 0.0, 128
    %5551 = vxpose.xlu0.b32.end [16/16] 0.0, 128
    %v5552 = vpop.trf.xlu0
    %v5553 = vpop.trf.xlu0
    %v5554 = vpop.trf.xlu0
    %v5555 = vpop.trf.xlu0
    %v5556 = vpop.trf.xlu0
    %v5557 = vpop.trf.xlu0
    %v5558 = vpop.trf.xlu0
    %v5559 = vpop.trf.xlu0
    %v5560 = vpop.trf.xlu0
    %v5561 = vpop.trf.xlu0
    %v5562 = vpop.trf.xlu0
    %v5563 = vpop.trf.xlu0
    %v5564 = vpop.trf.xlu0
    %v5565 = vpop.trf.xlu0
    %v5566 = vpop.trf.xlu0
    %v5567 = vpop.trf.xlu0
    %v5569 = vsel %vm535, %v5552, 0
    %5571 = vmatprep.subr.mxu0 %v37
    %5572 = vmatpush1.msra.mxu0 %v36
    %5573 = vmatprep.subr.mxu0 %v39
    %5574 = vmatpush1.msra.mxu0 %v38
    %5575 = vmatprep.subr.mxu0 0.0
    %5576 = vmatpush1.msra.mxu0 0.0
    %5577 = vmatprep.subr.mxu0 0.0
    %5578 = vmatpush1.msra.mxu0 0.0
    %5579 = vmatprep.subr.mxu0 0.0
    %5580 = vmatpush1.msra.mxu0 0.0
    %5581 = vmatprep.subr.mxu0 0.0
    %5582 = vmatpush1.msra.mxu0 0.0
    %5583 = vmatprep.subr.mxu0 0.0
    %5584 = vmatpush1.msra.mxu0 0.0
    %5585 = vmatprep.subr.mxu0 0.0
    %5586 = vmatpush1.msra.mxu0 0.0
    %5587 = vmatprep.subr.mxu0 0.0
    %5588 = vmatpush1.msra.mxu0 0.0
    %5589 = vmatprep.subr.mxu0 0.0
    %5590 = vmatpush1.msra.mxu0 0.0
    %5591 = vmatprep.subr.mxu0 0.0
    %5592 = vmatpush1.msra.mxu0 0.0
    %5593 = vmatprep.subr.mxu0 0.0
    %5594 = vmatpush1.msra.mxu0 0.0
    %5595 = vmatprep.subr.mxu0 0.0
    %5596 = vmatpush1.msra.mxu0 0.0
    %5597 = vmatprep.subr.mxu0 0.0
    %5598 = vmatpush1.msra.mxu0 0.0
    %5599 = vmatprep.subr.mxu0 0.0
    %5600 = vmatpush1.msra.mxu0 0.0
    %5601 = vmatprep.subr.mxu0 0.0
    %5602 = vmatpush1.msra.mxu0 0.0
    %5603 = vmatprep.subr.mxu0 0.0
    %5604 = vmatpush1.msra.mxu0 0.0
    %5605 = vmatprep.subr.mxu0 0.0
    %5606 = vmatpush1.msra.mxu0 0.0
    %5607 = vmatprep.subr.mxu0 0.0
    %5608 = vmatpush1.msra.mxu0 0.0
    %5609 = vmatprep.subr.mxu0 0.0
    %5610 = vmatpush1.msra.mxu0 0.0
    %5611 = vmatprep.subr.mxu0 0.0
    %5612 = vmatpush1.msra.mxu0 0.0
    %5613 = vmatprep.subr.mxu0 0.0
    %5614 = vmatpush1.msra.mxu0 0.0
    %5615 = vmatprep.subr.mxu0 0.0
    %5616 = vmatpush1.msra.mxu0 0.0
    %5617 = vmatprep.subr.mxu0 0.0
    %5618 = vmatpush1.msra.mxu0 0.0
    %5619 = vmatprep.subr.mxu0 0.0
    %5620 = vmatpush1.msra.mxu0 0.0
    %5621 = vmatprep.subr.mxu0 0.0
    %5622 = vmatpush1.msra.mxu0 0.0
    %5623 = vmatprep.subr.mxu0 0.0
    %5624 = vmatpush1.msra.mxu0 0.0
    %5625 = vmatprep.subr.mxu0 0.0
    %5626 = vmatpush1.msra.mxu0 0.0
    %5627 = vmatprep.subr.mxu0 0.0
    %5628 = vmatpush1.msra.mxu0 0.0
    %5629 = vmatprep.subr.mxu0 0.0
    %5630 = vmatpush1.msra.mxu0 0.0
    %5631 = vmatprep.subr.mxu0 0.0
    %5632 = vmatpush1.msra.mxu0 0.0
    %5633 = vmatprep.subr.mxu0 0.0
    %5634 = vmatpush1.msra.mxu0 0.0
    %5635 = vmatprep.mubr.f32.mxu0 0.0
    %5636 = vmatmul.mubr.f32.gmra.mrb[0].mxu0 %v5569
    %v5637 = vpop.f32.mrb[0].mxu0
    %v5638 = vadd.f32 0.0, %v5637
    %v5639 = vpop.f32.mrb[0].mxu0
    %v5640 = vadd.f32 0.0, %v5639
    %5641 = vdwg.mxu0
    %v5642 = vmul.f32 %v4411, %v5638
    %v5643 = vmul.f32 %v4413, %v5640
    %v5644 = vrot.slane %v3767, 4
    %v5645 = vrot.slane %v3768, 4
    %v5648 = vrot.slane %v3769, 6
    %v5649 = vrot.slane %v3770, 6
    %v5652 = vsel %vm1626, %v5644, %v5648
    %v5653 = vsel %vm1626, %v5645, %v5649
    %v5654 = vsel %vm1628, %v5652, %v3769
    %v5655 = vsel %vm1628, %v5653, %v3770
    %s5656 = scalar_lea.vmem %s0, 128
    %v5657 = vld [vmem:[%s5656] sm:$0xff]
    %v5658 = vld [vmem:[%s5656 + $0x8] sm:$0xff]
    %v5659 = vld [vmem:[%s5656 + $0x10] sm:$0xff]
    %v5660 = vld [vmem:[%s5656 + $0x18] sm:$0xff]
    %v5661 = vadd.f32 %v5642, %v5657
    %v5662 = vadd.f32 %v5643, %v5658
    %v5663 = vadd.f32 %v5654, %v5659
    %v5664 = vadd.f32 %v5655, %v5660
    %v5665 = vld [vmem:[%s4] sm:$0xff]
    %v5666 = vld [vmem:[%s4 + $0x8] sm:$0xff]
    %v5667 = vld [vmem:[%s4 + $0x10] sm:$0xff]
    %v5668 = vld [vmem:[%s4 + $0x18] sm:$0xff]
    %v5669 = vld [vmem:[%s4 + $0x20] sm:$0xff]
    %s5670 = sld [smem:[#allocation2 + $0x6]]
    %5675 = vrot.lane.b32.xlu0 %v5661, 127
    %v5676 = vpop.permute.xlu0 %5675
    %5677 = vrot.lane.b32.xlu0 %v5662, 127
    %v5678 = vpop.permute.xlu0 %5677
    %5679 = vrot.lane.b32.xlu0 %v5663, 127
    %v5680 = vpop.permute.xlu0 %5679
    %5681 = vrot.lane.b32.xlu0 %v5664, 127
    %v5682 = vpop.permute.xlu0 %5681
    %v5683 = vsel %vm117, %v5676, %v5678
    %v5684 = vsel %vm117, %v5680, %v5682
    %5689 = vrot.lane.b32.xlu0 %v5661, 15
    %v5690 = vpop.permute.xlu0 %5689
    %5691 = vrot.lane.b32.xlu0 %v5663, 15
    %v5692 = vpop.permute.xlu0 %5691
    %v5695 = vsel %vm130, %v5678, %v5690
    %v5696 = vsel %vm130, %v5682, %v5692
    %v5697 = vmul.f32 %v5683, %v136
    %v5698 = vmul.f32 %v5695, %v140
    %v5699 = vmul.f32 %v5684, %v136
    %v5700 = vmul.f32 %v5696, %v140
    %5701 = vrot.lane.b32.xlu0 %v5662, 113
    %v5702 = vpop.permute.xlu0 %5701
    %5703 = vrot.lane.b32.xlu0 %v5664, 113
    %v5704 = vpop.permute.xlu0 %5703
    %5707 = vrot.lane.b32.xlu0 %v5661, 1
    %v5708 = vpop.permute.xlu0 %5707
    %5709 = vrot.lane.b32.xlu0 %v5662, 1
    %v5710 = vpop.permute.xlu0 %5709
    %5711 = vrot.lane.b32.xlu0 %v5663, 1
    %v5712 = vpop.permute.xlu0 %5711
    %5713 = vrot.lane.b32.xlu0 %v5664, 1
    %v5714 = vpop.permute.xlu0 %5713
    %v5715 = vsel %vm88, %v5708, %v5710
    %v5716 = vsel %vm88, %v5712, %v5714
    %v5721 = vsel %vm88, %v5702, %v5708
    %v5722 = vsel %vm88, %v5704, %v5712
    %v5723 = vmul.f32 %v5721, %v100
    %v5724 = vmul.f32 %v5715, %v104
    %v5725 = vmul.f32 %v5722, %v100
    %v5726 = vmul.f32 %v5716, %v104
    %5728 = vset.pattern.permute.xlu0 64
    %5729 = vperm.xlu0 %5728, %v5665
    %v5730 = vpop.permute.xlu0 %5729
    %5733 = vset.pattern.permute.xlu0 64
    %5734 = vperm.xlu0 %5733, %v5666
    %v5735 = vpop.permute.xlu0 %5734
    %5738 = vset.pattern.permute.xlu0 64
    %5739 = vperm.xlu0 %5738, %v5667
    %v5740 = vpop.permute.xlu0 %5739
    %5743 = vset.pattern.permute.xlu0 64
    %5744 = vperm.xlu0 %5743, %v5668
    %v5745 = vpop.permute.xlu0 %5744
    %v5747 = vsel %vm155, %v5665, 0
    %v5749 = vsel %vm155, %v5666, 0
    %v5751 = vsel %vm155, %v5667, 0
    %v5753 = vsel %vm155, %v5668, 0
    %5755 = vmatprep.subr.mxu0 %v5698
    %5756 = vmatpush1.msra.mxu0 %v5697
    %5757 = vmatprep.subr.mxu0 %v5700
    %5758 = vmatpush1.msra.mxu0 %v5699
    %5759 = vmatprep.subr.mxu0 %v5662
    %5760 = vmatpush1.msra.mxu0 %v5661
    %5761 = vmatprep.subr.mxu0 %v5664
    %5762 = vmatpush1.msra.mxu0 %v5663
    %5763 = vmatprep.subr.mxu0 %v5724
    %5764 = vmatpush1.msra.mxu0 %v5723
    %5765 = vmatprep.subr.mxu0 %v5726
    %5766 = vmatpush1.msra.mxu0 %v5725
    %5767 = vmatprep.subr.mxu0 0.0
    %5768 = vmatpush1.msra.mxu0 0.0
    %5769 = vmatprep.subr.mxu0 0.0
    %5770 = vmatpush1.msra.mxu0 0.0
    %5771 = vmatprep.subr.mxu0 0.0
    %5772 = vmatpush1.msra.mxu0 0.0
    %5773 = vmatprep.subr.mxu0 0.0
    %5774 = vmatpush1.msra.mxu0 0.0
    %5775 = vmatprep.subr.mxu0 0.0
    %5776 = vmatpush1.msra.mxu0 0.0
    %5777 = vmatprep.subr.mxu0 0.0
    %5778 = vmatpush1.msra.mxu0 0.0
    %5779 = vmatprep.subr.mxu0 0.0
    %5780 = vmatpush1.msra.mxu0 0.0
    %5781 = vmatprep.subr.mxu0 0.0
    %5782 = vmatpush1.msra.mxu0 0.0
    %5783 = vmatprep.subr.mxu0 0.0
    %5784 = vmatpush1.msra.mxu0 0.0
    %5785 = vmatprep.subr.mxu0 0.0
    %5786 = vmatpush1.msra.mxu0 0.0
    %5787 = vmatprep.subr.mxu0 0.0
    %5788 = vmatpush1.msra.mxu0 0.0
    %5789 = vmatprep.subr.mxu0 0.0
    %5790 = vmatpush1.msra.mxu0 0.0
    %5791 = vmatprep.subr.mxu0 0.0
    %5792 = vmatpush1.msra.mxu0 0.0
    %5793 = vmatprep.subr.mxu0 0.0
    %5794 = vmatpush1.msra.mxu0 0.0
    %5795 = vmatprep.subr.mxu0 0.0
    %5796 = vmatpush1.msra.mxu0 0.0
    %5797 = vmatprep.subr.mxu0 0.0
    %5798 = vmatpush1.msra.mxu0 0.0
    %5799 = vmatprep.subr.mxu0 0.0
    %5800 = vmatpush1.msra.mxu0 0.0
    %5801 = vmatprep.subr.mxu0 0.0
    %5802 = vmatpush1.msra.mxu0 0.0
    %5803 = vmatprep.subr.mxu0 0.0
    %5804 = vmatpush1.msra.mxu0 0.0
    %5805 = vmatprep.subr.mxu0 0.0
    %5806 = vmatpush1.msra.mxu0 0.0
    %5807 = vmatprep.subr.mxu0 0.0
    %5808 = vmatpush1.msra.mxu0 0.0
    %5809 = vmatprep.subr.mxu0 0.0
    %5810 = vmatpush1.msra.mxu0 0.0
    %5811 = vmatprep.subr.mxu0 0.0
    %5812 = vmatpush1.msra.mxu0 0.0
    %5813 = vmatprep.subr.mxu0 0.0
    %5814 = vmatpush1.msra.mxu0 0.0
    %5815 = vmatprep.subr.mxu0 0.0
    %5816 = vmatpush1.msra.mxu0 0.0
    %5817 = vmatprep.subr.mxu0 0.0
    %5818 = vmatpush1.msra.mxu0 0.0
    %5819 = vmatprep.mubr.f32.mxu0 0.0
    %5820 = vmatmul.mubr.f32.gmra.mrb[0].mxu0 %v5747
    %v5821 = vpop.f32.mrb[0].mxu0
    %v5822 = vadd.f32 %v5730, %v5821
    %v5823 = vpop.f32.mrb[0].mxu0
    %v5824 = vadd.f32 %v5730, %v5823
    %5825 = vmatprep.mubr.f32.mxu0 0.0
    %5826 = vmatmul.mubr.f32.gmra.mrb[0].mxu0 %v5749
    %v5827 = vpop.f32.mrb[0].mxu0
    %v5828 = vadd.f32 %v5735, %v5827
    %v5829 = vpop.f32.mrb[0].mxu0
    %v5830 = vadd.f32 %v5735, %v5829
    %5831 = vmatprep.mubr.f32.mxu0 0.0
    %5832 = vmatmul.mubr.f32.gmra.mrb[0].mxu0 %v5751
    %v5833 = vpop.f32.mrb[0].mxu0
    %v5834 = vadd.f32 %v5740, %v5833
    %v5835 = vpop.f32.mrb[0].mxu0
    %v5836 = vadd.f32 %v5740, %v5835
    %5837 = vmatprep.mubr.f32.mxu0 0.0
    %5838 = vmatmul.mubr.f32.gmra.mrb[0].mxu0 %v5753
    %v5839 = vpop.f32.mrb[0].mxu0
    %v5840 = vadd.f32 %v5745, %v5839
    %v5841 = vpop.f32.mrb[0].mxu0
    %v5842 = vadd.f32 %v5745, %v5841
    %5843 = vdwg.mxu0
    %vm5844 = vcmp.ge.f32.partialorder %v5822, 0.0
    %vm5845 = vcmp.ge.f32.partialorder %v5824, 0.0
    %vm5846 = vcmp.ge.f32.partialorder %v5828, 0.0
    %vm5847 = vcmp.ge.f32.partialorder %v5830, 0.0
    %vm5848 = vcmp.ge.f32.partialorder %v5834, 0.0
    %vm5849 = vcmp.ge.f32.partialorder %v5836, 0.0
    %vm5850 = vcmp.ge.f32.partialorder %v5840, 0.0
    %vm5851 = vcmp.ge.f32.partialorder %v5842, 0.0
    %v5852 = vstv %s5670
    %v5853 = vmul.f32 %v5852, %v5822
    %v5854 = vmul.f32 %v5852, %v5824
    %v5855 = vmul.f32 %v5852, %v5828
    %v5856 = vmul.f32 %v5852, %v5830
    %v5857 = vmul.f32 %v5852, %v5834
    %v5858 = vmul.f32 %v5852, %v5836
    %v5859 = vmul.f32 %v5852, %v5840
    %v5860 = vmul.f32 %v5852, %v5842
    %v5861 = vsel %vm5844, %v5822, %v5853
    %v5862 = vsel %vm5845, %v5824, %v5854
    %v5863 = vsel %vm5846, %v5828, %v5855
    %v5864 = vsel %vm5847, %v5830, %v5856
    %v5865 = vsel %vm5848, %v5834, %v5857
    %v5866 = vsel %vm5849, %v5836, %v5858
    %v5867 = vsel %vm5850, %v5840, %v5859
    %v5868 = vsel %vm5851, %v5842, %v5860
    %s5869 = scalar_lea.vmem %s0, 160
    %v5870 = vld [vmem:[%s5869] sm:$0xff]
    %v5871 = vld [vmem:[%s5869 + $0x8] sm:$0xff]
    %v5872 = vld [vmem:[%s5869 + $0x10] sm:$0xff]
    %v5873 = vld [vmem:[%s5869 + $0x18] sm:$0xff]
    %v5874 = vadd.f32 %v5861, %v5870
    %v5875 = vadd.f32 %v5862, %v5871
    %v5876 = vadd.f32 %v5863, %v5872
    %v5877 = vadd.f32 %v5864, %v5873
    %s5878 = scalar_lea.vmem %s0, 192
    %v5879 = vld [vmem:[%s5878] sm:$0xff]
    %v5880 = vld [vmem:[%s5878 + $0x8] sm:$0xff]
    %v5881 = vld [vmem:[%s5878 + $0x10] sm:$0xff]
    %v5882 = vld [vmem:[%s5878 + $0x18] sm:$0xff]
    %v5883 = vadd.f32 %v5865, %v5879
    %v5884 = vadd.f32 %v5866, %v5880
    %v5885 = vadd.f32 %v5867, %v5881
    %v5886 = vadd.f32 %v5868, %v5882
    %v5887 = vmul.f32 %v5883, %v136
    %v5888 = vmul.f32 %v5884, %v140
    %v5889 = vmul.f32 %v5885, %v136
    %v5890 = vmul.f32 %v5886, %v140
    %5893 = vrot.lane.b32.xlu0 %v5888, 113
    %v5894 = vpop.permute.xlu0 %5893
    %5895 = vrot.lane.b32.xlu0 %v5890, 113
    %v5896 = vpop.permute.xlu0 %5895
    %5901 = vrot.lane.b32.xlu0 %v5887, 1
    %v5902 = vpop.permute.xlu0 %5901
    %5903 = vrot.lane.b32.xlu0 %v5888, 1
    %v5904 = vpop.permute.xlu0 %5903
    %5905 = vrot.lane.b32.xlu0 %v5889, 1
    %v5906 = vpop.permute.xlu0 %5905
    %5907 = vrot.lane.b32.xlu0 %v5890, 1
    %v5908 = vpop.permute.xlu0 %5907
    %v5909 = vsel %vm88, %v5902, %v5904
    %v5910 = vsel %vm88, %v5906, %v5908
    %v5915 = vsel %vm88, %v5894, %v5902
    %v5916 = vsel %vm88, %v5896, %v5906
    %v5917 = vmul.f32 %v5915, %v100
    %v5918 = vmul.f32 %v5909, %v104
    %v5919 = vmul.f32 %v5916, %v100
    %v5920 = vmul.f32 %v5910, %v104
    %5925 = vrot.lane.b32.xlu0 %v5874, 127
    %v5926 = vpop.permute.xlu0 %5925
    %5927 = vrot.lane.b32.xlu0 %v5875, 127
    %v5928 = vpop.permute.xlu0 %5927
    %5929 = vrot.lane.b32.xlu0 %v5876, 127
    %v5930 = vpop.permute.xlu0 %5929
    %5931 = vrot.lane.b32.xlu0 %v5877, 127
    %v5932 = vpop.permute.xlu0 %5931
    %v5933 = vsel %vm117, %v5926, %v5928
    %v5934 = vsel %vm117, %v5930, %v5932
    %5939 = vrot.lane.b32.xlu0 %v5874, 15
    %v5940 = vpop.permute.xlu0 %5939
    %5941 = vrot.lane.b32.xlu0 %v5876, 15
    %v5942 = vpop.permute.xlu0 %5941
    %v5945 = vsel %vm130, %v5928, %v5940
    %v5946 = vsel %vm130, %v5932, %v5942
    %v5947 = vmul.f32 %v5933, %v136
    %v5948 = vmul.f32 %v5945, %v140
    %v5949 = vmul.f32 %v5934, %v136
    %v5950 = vmul.f32 %v5946, %v140
    %5952 = vset.pattern.permute.xlu0 64
    %5953 = vperm.xlu0 %5952, %v5669
    %v5954 = vpop.permute.xlu0 %5953
    %vm5956 = vcmask 523264
    %v5957 = vsel %vm5956, %v5669, 0
    %5959 = vmatprep.subr.mxu0 %v5888
    %5960 = vmatpush1.msra.mxu0 %v5887
    %5961 = vmatprep.subr.mxu0 %v5890
    %5962 = vmatpush1.msra.mxu0 %v5889
    %5963 = vmatprep.subr.mxu0 %v5875
    %5964 = vmatpush1.msra.mxu0 %v5874
    %5965 = vmatprep.subr.mxu0 %v5877
    %5966 = vmatpush1.msra.mxu0 %v5876
    %5967 = vmatprep.subr.mxu0 %v5918
    %5968 = vmatpush1.msra.mxu0 %v5917
    %5969 = vmatprep.subr.mxu0 %v5920
    %5970 = vmatpush1.msra.mxu0 %v5919
    %5971 = vmatprep.subr.mxu0 %v5948
    %5972 = vmatpush1.msra.mxu0 %v5947
    %5973 = vmatprep.subr.mxu0 %v5950
    %5974 = vmatpush1.msra.mxu0 %v5949
    %5975 = vmatprep.subr.mxu0 0.0
    %5976 = vmatpush1.msra.mxu0 0.0
    %5977 = vmatprep.subr.mxu0 0.0
    %5978 = vmatpush1.msra.mxu0 0.0
    %5979 = vmatprep.subr.mxu0 0.0
    %5980 = vmatpush1.msra.mxu0 0.0
    %5981 = vmatprep.subr.mxu0 0.0
    %5982 = vmatpush1.msra.mxu0 0.0
    %5983 = vmatprep.subr.mxu0 0.0
    %5984 = vmatpush1.msra.mxu0 0.0
    %5985 = vmatprep.subr.mxu0 0.0
    %5986 = vmatpush1.msra.mxu0 0.0
    %5987 = vmatprep.subr.mxu0 0.0
    %5988 = vmatpush1.msra.mxu0 0.0
    %5989 = vmatprep.subr.mxu0 0.0
    %5990 = vmatpush1.msra.mxu0 0.0
    %5991 = vmatprep.subr.mxu0 0.0
    %5992 = vmatpush1.msra.mxu0 0.0
    %5993 = vmatprep.subr.mxu0 0.0
    %5994 = vmatpush1.msra.mxu0 0.0
    %5995 = vmatprep.subr.mxu0 0.0
    %5996 = vmatpush1.msra.mxu0 0.0
    %5997 = vmatprep.subr.mxu0 0.0
    %5998 = vmatpush1.msra.mxu0 0.0
    %5999 = vmatprep.subr.mxu0 0.0
    %6000 = vmatpush1.msra.mxu0 0.0
    %6001 = vmatprep.subr.mxu0 0.0
    %6002 = vmatpush1.msra.mxu0 0.0
    %6003 = vmatprep.subr.mxu0 0.0
    %6004 = vmatpush1.msra.mxu0 0.0
    %6005 = vmatprep.subr.mxu0 0.0
    %6006 = vmatpush1.msra.mxu0 0.0
    %6007 = vmatprep.subr.mxu0 0.0
    %6008 = vmatpush1.msra.mxu0 0.0
    %6009 = vmatprep.subr.mxu0 0.0
    %6010 = vmatpush1.msra.mxu0 0.0
    %6011 = vmatprep.subr.mxu0 0.0
    %6012 = vmatpush1.msra.mxu0 0.0
    %6013 = vmatprep.subr.mxu0 0.0
    %6014 = vmatpush1.msra.mxu0 0.0
    %6015 = vmatprep.subr.mxu0 0.0
    %6016 = vmatpush1.msra.mxu0 0.0
    %6017 = vmatprep.subr.mxu0 0.0
    %6018 = vmatpush1.msra.mxu0 0.0
    %6019 = vmatprep.subr.mxu0 0.0
    %6020 = vmatpush1.msra.mxu0 0.0
    %6021 = vmatprep.subr.mxu0 0.0
    %6022 = vmatpush1.msra.mxu0 0.0
    %6023 = vmatprep.mubr.f32.mxu0 0.0
    %6024 = vmatmul.mubr.f32.gmra.mrb[0].mxu0 %v5957
    %v6025 = vpop.f32.mrb[0].mxu0
    %v6026 = vadd.f32 %v5954, %v6025
    %v6027 = vpop.f32.mrb[0].mxu0
    %v6028 = vadd.f32 %v5954, %v6027
    %6029 = vdwg.mxu0
    %v6030 = vtanh.pop %v6026
    %v6031 = vtanh.pop %v6028
    %6032 = vst [vmem:[%s6] sm:$0xff] %v6030
    %6033 = vst.msk [vmem:[%s6 + $0x8] sm:$0xff] %vm535, %v6031
    // Predicated region
    $region30: #{decoder_forward.1} parent=1 // pred_check
      _
    $region31: #{decoder_forward.1} parent=1 // pred_check_branch
      %6035 = sbr.rel (0) target = $region33
    $region32: #{decoder_forward.1} parent=1 // pred_region
      _
    $region33: #{decoder_forward.1} parent=1 // pred_fallthru
      _
    // Predicated region
    $region34: #{decoder_forward.1} parent=1 // pred_check
      _
    $region35: #{decoder_forward.1} parent=1 // pred_check_branch
      %6037 = sbr.rel (0) target = $region37
    $region36: #{decoder_forward.1} parent=1 // pred_region
      _
    $region37: #{decoder_forward.1} parent=1 // pred_fallthru
      _
    %6038 = vsyncpa [#allocation3], 1

</llo_original>
